<compile_context>
chip_gen: v7x
topology: tpu7x:2x2x1
jax: 0.10.0
libtpu: 0.0.40
codegen_flags: <defaults>
</compile_context>

<pallas_src>
import functools

import jax
import jax.numpy as jnp
from jax import lax
from jax.experimental import pallas as pl
from jax.experimental.pallas import tpu as pltpu

EPS = 1e-5          # nn.BatchNorm2d default eps
KH = KW = 3


# ---------------------------------------------------------------- helpers ---
def _bn2d_train(plane, mask, count, gamma, beta):
    """Training-mode BatchNorm2d for one channel.

    plane : (N, P) f32 flat spatial window (lane-dense).
    mask  : (1, P) f32 {0,1} selecting the spatially valid positions.
    count : python float, N * Ho * Wo (number of valid positions).
    Two-pass statistics (mean, then centered biased variance, like PyTorch's
    normalization) for numerical robustness.  gamma/beta are SMEM scalars;
    rsqrt rides the EUP slot.
    """
    inv = 1.0 / count
    s = jnp.sum(plane * mask, axis=1, keepdims=True)
    mean = jnp.sum(s, axis=0, keepdims=True) * inv            # (1, 1)
    cen = (plane - mean) * mask
    ss = jnp.sum(cen * cen, axis=1, keepdims=True)
    var = jnp.sum(ss, axis=0, keepdims=True) * inv            # biased variance
    scale = gamma * lax.rsqrt(var + EPS)
    shift = beta - mean * scale
    return plane * scale + shift


# ----------------------------------------------------------------- kernel ---
def residual_block_kernel(x_ref, p_ref, o_ref, *, h, w):
    """Whole ResidualBlock in one kernel, flat lane-dense spatial layout.

    x_ref : (N, C, H*W) VMEM   -- NCHW with H,W flattened onto the lane axis.
    p_ref : (P,)        SMEM   -- packed [w1, w2, g1, be1, g2, be2] (pack_params).
    o_ref : (C, N, P2)  VMEM   -- flat conv2-output windows, one per output
                                  channel (lane-dense store); wrapper converts
                                  back to NCHW.
    """
    n, c, hw = x_ref.shape
    ho1, wo1 = h - 2, w - 2                      # conv1 VALID output extent
    ho2, wo2 = h - 4, w - 4                      # conv2 VALID output extent
    p2 = (ho2 - 1) * w + wo2                     # conv2 flat window (== o_ref dim 2)
    p1 = (ho1 - 1) * w + wo1                     # conv1 flat window (= p2 + 2*w + 2)

    wsz = KH * KW * c * c
    w1_off, w2_off = 0, wsz
    g1_off, be1_off = 2 * wsz, 2 * wsz + c
    g2_off, be2_off = 2 * wsz + 2 * c, 2 * wsz + 3 * c

    # Spatial-validity masks over the flat windows.  By construction of p1/p2
    # the row index is always in range; only the column needs masking.
    col1 = lax.broadcasted_iota(jnp.int32, (1, p1), 1) % w
    mask1 = (col1 < wo1).astype(jnp.float32)
    col2 = lax.broadcasted_iota(jnp.int32, (1, p2), 1) % w
    mask2 = (col2 < wo2).astype(jnp.float32)
    cnt1 = float(n * ho1 * wo1)
    cnt2 = float(n * ho2 * wo2)

    xv = x_ref[...]
    if xv.dtype != jnp.float32:                  # no redundant cast when already f32
        xv = xv.astype(jnp.float32)
    # Per-channel lane-dense planes (N, H*W): 2 vregs each at this size.  For
    # much larger C/H/W, stream taps straight from x_ref (or tile with a grid)
    # instead of keeping all planes live.
    xp = [xv[:, j, :] for j in range(c)]

    # ---- conv1 (bias elided; BN cancels it) -> BN1 -> ReLU -------------------
    # Output channel is the outermost loop so a single (N, p1) accumulator is
    # live at a time.  The C-wide channel contraction stays on the VPU as
    # SMEM-scalar * plane FMAs: at C=4 the MXU would be <4% utilized.  Once
    # C >= ~64, reformulate as 9 accumulated (N*Ho*Wo, C) x (C, C) MXU matmuls.
    y = []
    for co in range(c):
        acc = jnp.zeros((n, p1), jnp.float32)
        for ky in range(KH):
            for kx in range(KW):
                s = ky * w + kx                              # flat tap offset
                base = w1_off + (ky * KW + kx) * c * c
                for ci in range(c):
                    acc = acc + xp[ci][:, s:s + p1] * p_ref[base + ci * c + co]
        yb = _bn2d_train(acc, mask1, cnt1,
                         p_ref[g1_off + co], p_ref[be1_off + co])
        y.append(jnp.maximum(yb, 0.0))

    # ---- conv2 -> BN2 -> + center-cropped identity ---------------------------
    # CenterCrop(ho2, wo2) of the input: offset ((h-ho2)//2, (w-wo2)//2) = (2, 2).
    crop = ((h - ho2) // 2) * w + (w - wo2) // 2
    for co in range(c):
        acc = jnp.zeros((n, p2), jnp.float32)
        for ky in range(KH):
            for kx in range(KW):
                s = ky * w + kx
                base = w2_off + (ky * KW + kx) * c * c
                for ci in range(c):
                    acc = acc + y[ci][:, s:s + p2] * p_ref[base + ci * c + co]
        zb = _bn2d_train(acc, mask2, cnt2,
                         p_ref[g2_off + co], p_ref[be2_off + co])
        ident = xp[co][:, crop:crop + p2]
        o_ref[co] = (zb + ident).astype(o_ref.dtype)         # lane-dense store


# ---------------------------------------------------------------- wrapper ---
def residual_block(x, p_flat):
    """x: (N, C, H, W) float32 (PyTorch NCHW).  Returns (N, C, H-4, W-4).

    Single grid point: the whole problem (~8 KiB) fits comfortably in VMEM and
    training-mode BN couples N/H/W, so wall-clock here is dominated by fixed
    pallas_call + DMA overhead.  When scaling up -- especially on v7x
    (2 TensorCores, 64 MiB VMEM) -- add a "parallel" grid axis with a two-phase
    BN (pass 1: per-channel sum/sumsq partials; pass 2: normalize + conv2) and
    (8,128)-aligned BlockSpec tiling, re-budgeting vmem_limit_bytes.
    """
    n, c, h, w = x.shape
    ho, wo = h - 4, w - 4
    assert h >= 5 and w >= 5, "need >=5x5 spatial extent for two VALID 3x3 convs"
    p2 = (ho - 1) * w + wo                        # flat conv2-output window length
    itemsize = jnp.dtype(x.dtype).itemsize

    out_win = pl.pallas_call(
        functools.partial(residual_block_kernel, h=h, w=w),
        out_shape=jax.ShapeDtypeStruct((c, n, p2), x.dtype),
        in_specs=[
            pl.BlockSpec(memory_space=pltpu.MemorySpace.VMEM),   # x, flattened HW
            pl.BlockSpec(memory_space=pltpu.MemorySpace.SMEM),   # packed params
        ],
        out_specs=pl.BlockSpec(memory_space=pltpu.MemorySpace.VMEM),
        compiler_params=pltpu.CompilerParams(vmem_limit_bytes=32 * 1024 * 1024),
        cost_estimate=pl.CostEstimate(
            flops=int(2 * 9 * c * c * n * ((h - 2) * (w - 2) + ho * wo)
                      + 12 * n * c * h * w),
            transcendentals=int(2 * c),
            bytes_accessed=int(x.size * itemsize + p_flat.size * 4
                               + c * n * p2 * itemsize),
        ),
    )(x.reshape(n, c, h * w), p_flat)

    # Layout plumbing back to NCHW (outside the kernel): pad the flat window to
    # full rows, reshape, crop valid columns, and put N first.
    out = jnp.pad(out_win, ((0, 0), (0, 0), (0, ho * w - p2)))
    out = out.reshape(c, n, ho, w)[..., :wo]
    return jnp.transpose(out, (1, 0, 2, 3))


def pack_params(p):
    """Pack all parameters needed by the kernel into one flat f32 vector.

    Layout: [w1 (3*3*C*C, HWIO-flattened), w2 (same), g1(C), be1(C), g2(C), be2(C)].
    Conv biases b1/b2 are intentionally omitted: the training-mode BatchNorm
    right after each conv subtracts the per-channel batch mean, which cancels
    any constant channel bias exactly.
    """
    return jnp.concatenate([
        p["w1"].reshape(-1), p["w2"].reshape(-1),
        p["g1"].reshape(-1), p["be1"].reshape(-1),
        p["g2"].reshape(-1), p["be2"].reshape(-1),
    ]).astype(jnp.float32)


# --------------------------------------------------------- pure-JAX ref -----
def _reference(x, p):
    def conv(y, wgt, b):
        out = lax.conv_general_dilated(
            y, wgt, (1, 1), "VALID",
            dimension_numbers=("NCHW", "HWIO", "NCHW"))
        return out + b.reshape(1, -1, 1, 1)

    def bn(y, g, b):
        mean = jnp.mean(y, axis=(0, 2, 3), keepdims=True)
        var = jnp.mean((y - mean) ** 2, axis=(0, 2, 3), keepdims=True)
        return (y - mean) / jnp.sqrt(var + EPS) * g.reshape(1, -1, 1, 1) \
            + b.reshape(1, -1, 1, 1)

    y = jnp.maximum(bn(conv(x, p["w1"], p["b1"]), p["g1"], p["be1"]), 0.0)
    y = bn(conv(y, p["w2"], p["b2"]), p["g2"], p["be2"])
    return y + x[:, :, 2:-2, 2:-2]


# ------------------------------------------------------------------ main ----
if __name__ == "__main__":
    N, C, H, W = 2, 4, 16, 16
    key = jax.random.PRNGKey(0)
    kx, k1, kb1, k2, kb2, kg1, kbe1, kg2, kbe2 = jax.random.split(key, 9)

    x = jax.random.normal(kx, (N, C, H, W), jnp.float32)     # PyTorch NCHW

    # Deterministic init (Conv2d-like uniform bound; BN affine mildly perturbed
    # from the default gamma=1 / beta=0 so the affine path is exercised).
    fan_in = C * 3 * 3
    bound = 1.0 / (fan_in ** 0.5)
    params = dict(
        w1=jax.random.uniform(k1, (3, 3, C, C), jnp.float32, -bound, bound),   # HWIO
        b1=jax.random.uniform(kb1, (C,), jnp.float32, -bound, bound),
        g1=1.0 + 0.1 * jax.random.normal(kg1, (C,), jnp.float32),
        be1=0.1 * jax.random.normal(kbe1, (C,), jnp.float32),
        w2=jax.random.uniform(k2, (3, 3, C, C), jnp.float32, -bound, bound),
        b2=jax.random.uniform(kb2, (C,), jnp.float32, -bound, bound),
        g2=1.0 + 0.1 * jax.random.normal(kg2, (C,), jnp.float32),
        be2=0.1 * jax.random.normal(kbe2, (C,), jnp.float32),
    )

    p_flat = pack_params(params)                 # done once, off the hot path
    out = jax.jit(residual_block)(x, p_flat)
    out = jax.block_until_ready(out)

    ref = _reference(x, params)
    assert out.shape == (N, C, H - 4, W - 4), out.shape
    assert jnp.allclose(out, ref, atol=1e-3, rtol=1e-3), \
        float(jnp.max(jnp.abs(out - ref)))
    print("KERNEL_OK")
</pallas_src>

<mosaic_0001>
module attributes {stable_mosaic.version = 11 : i64} {
  func.func @residual_block_kernel(%arg0: memref<2x4x256xf32, #tpu.memory_space<vmem>>, %arg1: memref<304xf32, #tpu.memory_space<smem>>, %arg2: memref<4x2x188xf32, #tpu.memory_space<vmem>>) attributes {dimension_semantics = [], scalar_prefetch = 0 : i64, scratch_operands = 0 : i64, tpu.core_type = #tpu.core_type<tc>} {
    %0 = tpu.iota {dimensions = array<i32: 1>} : vector<1x222xi32>
    %c16_i32 = arith.constant 16 : i32
    %c0_i32 = arith.constant 0 : i32
    %1 = arith.cmpi eq, %c16_i32, %c0_i32 : i32
    %c1_i32 = arith.constant 1 : i32
    %2 = arith.select %1, %c1_i32, %c16_i32 : i32
    %3 = vector.broadcast %2 : i32 to vector<1x222xi32>
    %4 = arith.remsi %0, %3 : vector<1x222xi32>
    %c0_i32_0 = arith.constant 0 : i32
    %5 = vector.broadcast %c0_i32_0 : i32 to vector<1x222xi32>
    %6 = arith.cmpi ne, %4, %5 : vector<1x222xi32>
    %c0_i32_1 = arith.constant 0 : i32
    %7 = vector.broadcast %c0_i32_1 : i32 to vector<1x222xi32>
    %8 = arith.cmpi slt, %4, %7 : vector<1x222xi32>
    %c0_i32_2 = arith.constant 0 : i32
    %9 = arith.cmpi slt, %2, %c0_i32_2 : i32
    %10 = vector.broadcast %9 : i1 to vector<1x222xi1>
    %11 = vector.broadcast %10 : vector<1x222xi1> to vector<1x222xi1>
    %12 = arith.xori %8, %11 : vector<1x222xi1>
    %13 = arith.andi %12, %6 : vector<1x222xi1>
    %14 = vector.broadcast %2 : i32 to vector<1x222xi32>
    %15 = arith.addi %4, %14 : vector<1x222xi32>
    %16 = arith.select %13, %15, %4 : vector<1x222xi1>, vector<1x222xi32>
    %c14_i32 = arith.constant 14 : i32
    %17 = vector.broadcast %c14_i32 : i32 to vector<1x222xi32>
    %18 = arith.cmpi slt, %16, %17 : vector<1x222xi32>
    %19 = arith.extui %18 : vector<1x222xi1> to vector<1x222xi32>
    %20 = arith.sitofp %19 : vector<1x222xi32> to vector<1x222xf32>
    %21 = tpu.iota {dimensions = array<i32: 1>} : vector<1x188xi32>
    %c16_i32_3 = arith.constant 16 : i32
    %c0_i32_4 = arith.constant 0 : i32
    %22 = arith.cmpi eq, %c16_i32_3, %c0_i32_4 : i32
    %c1_i32_5 = arith.constant 1 : i32
    %23 = arith.select %22, %c1_i32_5, %c16_i32_3 : i32
    %24 = vector.broadcast %23 : i32 to vector<1x188xi32>
    %25 = arith.remsi %21, %24 : vector<1x188xi32>
    %c0_i32_6 = arith.constant 0 : i32
    %26 = vector.broadcast %c0_i32_6 : i32 to vector<1x188xi32>
    %27 = arith.cmpi ne, %25, %26 : vector<1x188xi32>
    %c0_i32_7 = arith.constant 0 : i32
    %28 = vector.broadcast %c0_i32_7 : i32 to vector<1x188xi32>
    %29 = arith.cmpi slt, %25, %28 : vector<1x188xi32>
    %c0_i32_8 = arith.constant 0 : i32
    %30 = arith.cmpi slt, %23, %c0_i32_8 : i32
    %31 = vector.broadcast %30 : i1 to vector<1x188xi1>
    %32 = vector.broadcast %31 : vector<1x188xi1> to vector<1x188xi1>
    %33 = arith.xori %29, %32 : vector<1x188xi1>
    %34 = arith.andi %33, %27 : vector<1x188xi1>
    %35 = vector.broadcast %23 : i32 to vector<1x188xi32>
    %36 = arith.addi %25, %35 : vector<1x188xi32>
    %37 = arith.select %34, %36, %25 : vector<1x188xi1>, vector<1x188xi32>
    %c12_i32 = arith.constant 12 : i32
    %38 = vector.broadcast %c12_i32 : i32 to vector<1x188xi32>
    %39 = arith.cmpi slt, %37, %38 : vector<1x188xi32>
    %40 = arith.extui %39 : vector<1x188xi1> to vector<1x188xi32>
    %41 = arith.sitofp %40 : vector<1x188xi32> to vector<1x188xf32>
    %c0 = arith.constant 0 : index
    %c0_9 = arith.constant 0 : index
    %c0_10 = arith.constant 0 : index
    %42 = vector.load %arg0[%c0, %c0_9, %c0_10] : memref<2x4x256xf32, #tpu.memory_space<vmem>>, vector<2x4x256xf32>
    %43 = vector.extract_strided_slice %42 {offsets = [0, 0, 0], sizes = [2, 1, 256], strides = [1, 1, 1]} : vector<2x4x256xf32> to vector<2x1x256xf32>
    %44 = vector.shape_cast %43 : vector<2x1x256xf32> to vector<2x256xf32>
    %45 = vector.extract_strided_slice %42 {offsets = [0, 1, 0], sizes = [2, 1, 256], strides = [1, 1, 1]} : vector<2x4x256xf32> to vector<2x1x256xf32>
    %46 = vector.shape_cast %45 : vector<2x1x256xf32> to vector<2x256xf32>
    %47 = vector.extract_strided_slice %42 {offsets = [0, 2, 0], sizes = [2, 1, 256], strides = [1, 1, 1]} : vector<2x4x256xf32> to vector<2x1x256xf32>
    %48 = vector.shape_cast %47 : vector<2x1x256xf32> to vector<2x256xf32>
    %49 = vector.extract_strided_slice %42 {offsets = [0, 3, 0], sizes = [2, 1, 256], strides = [1, 1, 1]} : vector<2x4x256xf32> to vector<2x1x256xf32>
    %50 = vector.shape_cast %49 : vector<2x1x256xf32> to vector<2x256xf32>
    %cst = arith.constant 0.000000e+00 : f32
    %51 = vector.broadcast %cst : f32 to vector<2x222xf32>
    %52 = vector.extract_strided_slice %44 {offsets = [0, 0], sizes = [2, 222], strides = [1, 1]} : vector<2x256xf32> to vector<2x222xf32>
    %c0_11 = arith.constant 0 : index
    %53 = memref.load %arg1[%c0_11] : memref<304xf32, #tpu.memory_space<smem>>
    %54 = vector.broadcast %53 : f32 to vector<2x222xf32>
    %55 = arith.mulf %52, %54 : vector<2x222xf32>
    %56 = arith.addf %51, %55 : vector<2x222xf32>
    %57 = vector.extract_strided_slice %46 {offsets = [0, 0], sizes = [2, 222], strides = [1, 1]} : vector<2x256xf32> to vector<2x222xf32>
    %c4 = arith.constant 4 : index
    %58 = memref.load %arg1[%c4] : memref<304xf32, #tpu.memory_space<smem>>
    %59 = vector.broadcast %58 : f32 to vector<2x222xf32>
    %60 = arith.mulf %57, %59 : vector<2x222xf32>
    %61 = arith.addf %56, %60 : vector<2x222xf32>
    %62 = vector.extract_strided_slice %48 {offsets = [0, 0], sizes = [2, 222], strides = [1, 1]} : vector<2x256xf32> to vector<2x222xf32>
    %c8 = arith.constant 8 : index
    %63 = memref.load %arg1[%c8] : memref<304xf32, #tpu.memory_space<smem>>
    %64 = vector.broadcast %63 : f32 to vector<2x222xf32>
    %65 = arith.mulf %62, %64 : vector<2x222xf32>
    %66 = arith.addf %61, %65 : vector<2x222xf32>
    %67 = vector.extract_strided_slice %50 {offsets = [0, 0], sizes = [2, 222], strides = [1, 1]} : vector<2x256xf32> to vector<2x222xf32>
    %c12 = arith.constant 12 : index
    %68 = memref.load %arg1[%c12] : memref<304xf32, #tpu.memory_space<smem>>
    %69 = vector.broadcast %68 : f32 to vector<2x222xf32>
    %70 = arith.mulf %67, %69 : vector<2x222xf32>
    %71 = arith.addf %66, %70 : vector<2x222xf32>
    %72 = vector.extract_strided_slice %44 {offsets = [0, 1], sizes = [2, 222], strides = [1, 1]} : vector<2x256xf32> to vector<2x222xf32>
    %c16 = arith.constant 16 : index
    %73 = memref.load %arg1[%c16] : memref<304xf32, #tpu.memory_space<smem>>
    %74 = vector.broadcast %73 : f32 to vector<2x222xf32>
    %75 = arith.mulf %72, %74 : vector<2x222xf32>
    %76 = arith.addf %71, %75 : vector<2x222xf32>
    %77 = vector.extract_strided_slice %46 {offsets = [0, 1], sizes = [2, 222], strides = [1, 1]} : vector<2x256xf32> to vector<2x222xf32>
    %c20 = arith.constant 20 : index
    %78 = memref.load %arg1[%c20] : memref<304xf32, #tpu.memory_space<smem>>
    %79 = vector.broadcast %78 : f32 to vector<2x222xf32>
    %80 = arith.mulf %77, %79 : vector<2x222xf32>
    %81 = arith.addf %76, %80 : vector<2x222xf32>
    %82 = vector.extract_strided_slice %48 {offsets = [0, 1], sizes = [2, 222], strides = [1, 1]} : vector<2x256xf32> to vector<2x222xf32>
    %c24 = arith.constant 24 : index
    %83 = memref.load %arg1[%c24] : memref<304xf32, #tpu.memory_space<smem>>
    %84 = vector.broadcast %83 : f32 to vector<2x222xf32>
    %85 = arith.mulf %82, %84 : vector<2x222xf32>
    %86 = arith.addf %81, %85 : vector<2x222xf32>
    %87 = vector.extract_strided_slice %50 {offsets = [0, 1], sizes = [2, 222], strides = [1, 1]} : vector<2x256xf32> to vector<2x222xf32>
    %c28 = arith.constant 28 : index
    %88 = memref.load %arg1[%c28] : memref<304xf32, #tpu.memory_space<smem>>
    %89 = vector.broadcast %88 : f32 to vector<2x222xf32>
    %90 = arith.mulf %87, %89 : vector<2x222xf32>
    %91 = arith.addf %86, %90 : vector<2x222xf32>
    %92 = vector.extract_strided_slice %44 {offsets = [0, 2], sizes = [2, 222], strides = [1, 1]} : vector<2x256xf32> to vector<2x222xf32>
    %c32 = arith.constant 32 : index
    %93 = memref.load %arg1[%c32] : memref<304xf32, #tpu.memory_space<smem>>
    %94 = vector.broadcast %93 : f32 to vector<2x222xf32>
    %95 = arith.mulf %92, %94 : vector<2x222xf32>
    %96 = arith.addf %91, %95 : vector<2x222xf32>
    %97 = vector.extract_strided_slice %46 {offsets = [0, 2], sizes = [2, 222], strides = [1, 1]} : vector<2x256xf32> to vector<2x222xf32>
    %c36 = arith.constant 36 : index
    %98 = memref.load %arg1[%c36] : memref<304xf32, #tpu.memory_space<smem>>
    %99 = vector.broadcast %98 : f32 to vector<2x222xf32>
    %100 = arith.mulf %97, %99 : vector<2x222xf32>
    %101 = arith.addf %96, %100 : vector<2x222xf32>
    %102 = vector.extract_strided_slice %48 {offsets = [0, 2], sizes = [2, 222], strides = [1, 1]} : vector<2x256xf32> to vector<2x222xf32>
    %c40 = arith.constant 40 : index
    %103 = memref.load %arg1[%c40] : memref<304xf32, #tpu.memory_space<smem>>
    %104 = vector.broadcast %103 : f32 to vector<2x222xf32>
    %105 = arith.mulf %102, %104 : vector<2x222xf32>
    %106 = arith.addf %101, %105 : vector<2x222xf32>
    %107 = vector.extract_strided_slice %50 {offsets = [0, 2], sizes = [2, 222], strides = [1, 1]} : vector<2x256xf32> to vector<2x222xf32>
    %c44 = arith.constant 44 : index
    %108 = memref.load %arg1[%c44] : memref<304xf32, #tpu.memory_space<smem>>
    %109 = vector.broadcast %108 : f32 to vector<2x222xf32>
    %110 = arith.mulf %107, %109 : vector<2x222xf32>
    %111 = arith.addf %106, %110 : vector<2x222xf32>
    %112 = vector.extract_strided_slice %44 {offsets = [0, 16], sizes = [2, 222], strides = [1, 1]} : vector<2x256xf32> to vector<2x222xf32>
    %c48 = arith.constant 48 : index
    %113 = memref.load %arg1[%c48] : memref<304xf32, #tpu.memory_space<smem>>
    %114 = vector.broadcast %113 : f32 to vector<2x222xf32>
    %115 = arith.mulf %112, %114 : vector<2x222xf32>
    %116 = arith.addf %111, %115 : vector<2x222xf32>
    %117 = vector.extract_strided_slice %46 {offsets = [0, 16], sizes = [2, 222], strides = [1, 1]} : vector<2x256xf32> to vector<2x222xf32>
    %c52 = arith.constant 52 : index
    %118 = memref.load %arg1[%c52] : memref<304xf32, #tpu.memory_space<smem>>
    %119 = vector.broadcast %118 : f32 to vector<2x222xf32>
    %120 = arith.mulf %117, %119 : vector<2x222xf32>
    %121 = arith.addf %116, %120 : vector<2x222xf32>
    %122 = vector.extract_strided_slice %48 {offsets = [0, 16], sizes = [2, 222], strides = [1, 1]} : vector<2x256xf32> to vector<2x222xf32>
    %c56 = arith.constant 56 : index
    %123 = memref.load %arg1[%c56] : memref<304xf32, #tpu.memory_space<smem>>
    %124 = vector.broadcast %123 : f32 to vector<2x222xf32>
    %125 = arith.mulf %122, %124 : vector<2x222xf32>
    %126 = arith.addf %121, %125 : vector<2x222xf32>
    %127 = vector.extract_strided_slice %50 {offsets = [0, 16], sizes = [2, 222], strides = [1, 1]} : vector<2x256xf32> to vector<2x222xf32>
    %c60 = arith.constant 60 : index
    %128 = memref.load %arg1[%c60] : memref<304xf32, #tpu.memory_space<smem>>
    %129 = vector.broadcast %128 : f32 to vector<2x222xf32>
    %130 = arith.mulf %127, %129 : vector<2x222xf32>
    %131 = arith.addf %126, %130 : vector<2x222xf32>
    %132 = vector.extract_strided_slice %44 {offsets = [0, 17], sizes = [2, 222], strides = [1, 1]} : vector<2x256xf32> to vector<2x222xf32>
    %c64 = arith.constant 64 : index
    %133 = memref.load %arg1[%c64] : memref<304xf32, #tpu.memory_space<smem>>
    %134 = vector.broadcast %133 : f32 to vector<2x222xf32>
    %135 = arith.mulf %132, %134 : vector<2x222xf32>
    %136 = arith.addf %131, %135 : vector<2x222xf32>
    %137 = vector.extract_strided_slice %46 {offsets = [0, 17], sizes = [2, 222], strides = [1, 1]} : vector<2x256xf32> to vector<2x222xf32>
    %c68 = arith.constant 68 : index
    %138 = memref.load %arg1[%c68] : memref<304xf32, #tpu.memory_space<smem>>
    %139 = vector.broadcast %138 : f32 to vector<2x222xf32>
    %140 = arith.mulf %137, %139 : vector<2x222xf32>
    %141 = arith.addf %136, %140 : vector<2x222xf32>
    %142 = vector.extract_strided_slice %48 {offsets = [0, 17], sizes = [2, 222], strides = [1, 1]} : vector<2x256xf32> to vector<2x222xf32>
    %c72 = arith.constant 72 : index
    %143 = memref.load %arg1[%c72] : memref<304xf32, #tpu.memory_space<smem>>
    %144 = vector.broadcast %143 : f32 to vector<2x222xf32>
    %145 = arith.mulf %142, %144 : vector<2x222xf32>
    %146 = arith.addf %141, %145 : vector<2x222xf32>
    %147 = vector.extract_strided_slice %50 {offsets = [0, 17], sizes = [2, 222], strides = [1, 1]} : vector<2x256xf32> to vector<2x222xf32>
    %c76 = arith.constant 76 : index
    %148 = memref.load %arg1[%c76] : memref<304xf32, #tpu.memory_space<smem>>
    %149 = vector.broadcast %148 : f32 to vector<2x222xf32>
    %150 = arith.mulf %147, %149 : vector<2x222xf32>
    %151 = arith.addf %146, %150 : vector<2x222xf32>
    %152 = vector.extract_strided_slice %44 {offsets = [0, 18], sizes = [2, 222], strides = [1, 1]} : vector<2x256xf32> to vector<2x222xf32>
    %c80 = arith.constant 80 : index
    %153 = memref.load %arg1[%c80] : memref<304xf32, #tpu.memory_space<smem>>
    %154 = vector.broadcast %153 : f32 to vector<2x222xf32>
    %155 = arith.mulf %152, %154 : vector<2x222xf32>
    %156 = arith.addf %151, %155 : vector<2x222xf32>
    %157 = vector.extract_strided_slice %46 {offsets = [0, 18], sizes = [2, 222], strides = [1, 1]} : vector<2x256xf32> to vector<2x222xf32>
    %c84 = arith.constant 84 : index
    %158 = memref.load %arg1[%c84] : memref<304xf32, #tpu.memory_space<smem>>
    %159 = vector.broadcast %158 : f32 to vector<2x222xf32>
    %160 = arith.mulf %157, %159 : vector<2x222xf32>
    %161 = arith.addf %156, %160 : vector<2x222xf32>
    %162 = vector.extract_strided_slice %48 {offsets = [0, 18], sizes = [2, 222], strides = [1, 1]} : vector<2x256xf32> to vector<2x222xf32>
    %c88 = arith.constant 88 : index
    %163 = memref.load %arg1[%c88] : memref<304xf32, #tpu.memory_space<smem>>
    %164 = vector.broadcast %163 : f32 to vector<2x222xf32>
    %165 = arith.mulf %162, %164 : vector<2x222xf32>
    %166 = arith.addf %161, %165 : vector<2x222xf32>
    %167 = vector.extract_strided_slice %50 {offsets = [0, 18], sizes = [2, 222], strides = [1, 1]} : vector<2x256xf32> to vector<2x222xf32>
    %c92 = arith.constant 92 : index
    %168 = memref.load %arg1[%c92] : memref<304xf32, #tpu.memory_space<smem>>
    %169 = vector.broadcast %168 : f32 to vector<2x222xf32>
    %170 = arith.mulf %167, %169 : vector<2x222xf32>
    %171 = arith.addf %166, %170 : vector<2x222xf32>
    %172 = vector.extract_strided_slice %44 {offsets = [0, 32], sizes = [2, 222], strides = [1, 1]} : vector<2x256xf32> to vector<2x222xf32>
    %c96 = arith.constant 96 : index
    %173 = memref.load %arg1[%c96] : memref<304xf32, #tpu.memory_space<smem>>
    %174 = vector.broadcast %173 : f32 to vector<2x222xf32>
    %175 = arith.mulf %172, %174 : vector<2x222xf32>
    %176 = arith.addf %171, %175 : vector<2x222xf32>
    %177 = vector.extract_strided_slice %46 {offsets = [0, 32], sizes = [2, 222], strides = [1, 1]} : vector<2x256xf32> to vector<2x222xf32>
    %c100 = arith.constant 100 : index
    %178 = memref.load %arg1[%c100] : memref<304xf32, #tpu.memory_space<smem>>
    %179 = vector.broadcast %178 : f32 to vector<2x222xf32>
    %180 = arith.mulf %177, %179 : vector<2x222xf32>
    %181 = arith.addf %176, %180 : vector<2x222xf32>
    %182 = vector.extract_strided_slice %48 {offsets = [0, 32], sizes = [2, 222], strides = [1, 1]} : vector<2x256xf32> to vector<2x222xf32>
    %c104 = arith.constant 104 : index
    %183 = memref.load %arg1[%c104] : memref<304xf32, #tpu.memory_space<smem>>
    %184 = vector.broadcast %183 : f32 to vector<2x222xf32>
    %185 = arith.mulf %182, %184 : vector<2x222xf32>
    %186 = arith.addf %181, %185 : vector<2x222xf32>
    %187 = vector.extract_strided_slice %50 {offsets = [0, 32], sizes = [2, 222], strides = [1, 1]} : vector<2x256xf32> to vector<2x222xf32>
    %c108 = arith.constant 108 : index
    %188 = memref.load %arg1[%c108] : memref<304xf32, #tpu.memory_space<smem>>
    %189 = vector.broadcast %188 : f32 to vector<2x222xf32>
    %190 = arith.mulf %187, %189 : vector<2x222xf32>
    %191 = arith.addf %186, %190 : vector<2x222xf32>
    %192 = vector.extract_strided_slice %44 {offsets = [0, 33], sizes = [2, 222], strides = [1, 1]} : vector<2x256xf32> to vector<2x222xf32>
    %c112 = arith.constant 112 : index
    %193 = memref.load %arg1[%c112] : memref<304xf32, #tpu.memory_space<smem>>
    %194 = vector.broadcast %193 : f32 to vector<2x222xf32>
    %195 = arith.mulf %192, %194 : vector<2x222xf32>
    %196 = arith.addf %191, %195 : vector<2x222xf32>
    %197 = vector.extract_strided_slice %46 {offsets = [0, 33], sizes = [2, 222], strides = [1, 1]} : vector<2x256xf32> to vector<2x222xf32>
    %c116 = arith.constant 116 : index
    %198 = memref.load %arg1[%c116] : memref<304xf32, #tpu.memory_space<smem>>
    %199 = vector.broadcast %198 : f32 to vector<2x222xf32>
    %200 = arith.mulf %197, %199 : vector<2x222xf32>
    %201 = arith.addf %196, %200 : vector<2x222xf32>
    %202 = vector.extract_strided_slice %48 {offsets = [0, 33], sizes = [2, 222], strides = [1, 1]} : vector<2x256xf32> to vector<2x222xf32>
    %c120 = arith.constant 120 : index
    %203 = memref.load %arg1[%c120] : memref<304xf32, #tpu.memory_space<smem>>
    %204 = vector.broadcast %203 : f32 to vector<2x222xf32>
    %205 = arith.mulf %202, %204 : vector<2x222xf32>
    %206 = arith.addf %201, %205 : vector<2x222xf32>
    %207 = vector.extract_strided_slice %50 {offsets = [0, 33], sizes = [2, 222], strides = [1, 1]} : vector<2x256xf32> to vector<2x222xf32>
    %c124 = arith.constant 124 : index
    %208 = memref.load %arg1[%c124] : memref<304xf32, #tpu.memory_space<smem>>
    %209 = vector.broadcast %208 : f32 to vector<2x222xf32>
    %210 = arith.mulf %207, %209 : vector<2x222xf32>
    %211 = arith.addf %206, %210 : vector<2x222xf32>
    %212 = vector.extract_strided_slice %44 {offsets = [0, 34], sizes = [2, 222], strides = [1, 1]} : vector<2x256xf32> to vector<2x222xf32>
    %c128 = arith.constant 128 : index
    %213 = memref.load %arg1[%c128] : memref<304xf32, #tpu.memory_space<smem>>
    %214 = vector.broadcast %213 : f32 to vector<2x222xf32>
    %215 = arith.mulf %212, %214 : vector<2x222xf32>
    %216 = arith.addf %211, %215 : vector<2x222xf32>
    %217 = vector.extract_strided_slice %46 {offsets = [0, 34], sizes = [2, 222], strides = [1, 1]} : vector<2x256xf32> to vector<2x222xf32>
    %c132 = arith.constant 132 : index
    %218 = memref.load %arg1[%c132] : memref<304xf32, #tpu.memory_space<smem>>
    %219 = vector.broadcast %218 : f32 to vector<2x222xf32>
    %220 = arith.mulf %217, %219 : vector<2x222xf32>
    %221 = arith.addf %216, %220 : vector<2x222xf32>
    %222 = vector.extract_strided_slice %48 {offsets = [0, 34], sizes = [2, 222], strides = [1, 1]} : vector<2x256xf32> to vector<2x222xf32>
    %c136 = arith.constant 136 : index
    %223 = memref.load %arg1[%c136] : memref<304xf32, #tpu.memory_space<smem>>
    %224 = vector.broadcast %223 : f32 to vector<2x222xf32>
    %225 = arith.mulf %222, %224 : vector<2x222xf32>
    %226 = arith.addf %221, %225 : vector<2x222xf32>
    %227 = vector.extract_strided_slice %50 {offsets = [0, 34], sizes = [2, 222], strides = [1, 1]} : vector<2x256xf32> to vector<2x222xf32>
    %c140 = arith.constant 140 : index
    %228 = memref.load %arg1[%c140] : memref<304xf32, #tpu.memory_space<smem>>
    %229 = vector.broadcast %228 : f32 to vector<2x222xf32>
    %230 = arith.mulf %227, %229 : vector<2x222xf32>
    %231 = arith.addf %226, %230 : vector<2x222xf32>
    %c288 = arith.constant 288 : index
    %232 = memref.load %arg1[%c288] : memref<304xf32, #tpu.memory_space<smem>>
    %c292 = arith.constant 292 : index
    %233 = memref.load %arg1[%c292] : memref<304xf32, #tpu.memory_space<smem>>
    %234 = vector.broadcast %20 : vector<1x222xf32> to vector<2x222xf32>
    %235 = arith.mulf %231, %234 : vector<2x222xf32>
    %cst_12 = arith.constant dense<0.000000e+00> : vector<2xf32>
    %236 = vector.multi_reduction <add>, %235, %cst_12 [1] : vector<2x222xf32> to vector<2xf32>
    %237 = vector.shape_cast %236 : vector<2xf32> to vector<2x1xf32>
    %cst_13 = arith.constant dense<0.000000e+00> : vector<1xf32>
    %238 = vector.multi_reduction <add>, %237, %cst_13 [0] : vector<2x1xf32> to vector<1xf32>
    %239 = vector.shape_cast %238 : vector<1xf32> to vector<1x1xf32>
    %cst_14 = arith.constant 0.00255102036 : f32
    %240 = vector.broadcast %cst_14 : f32 to vector<1x1xf32>
    %241 = arith.mulf %239, %240 : vector<1x1xf32>
    %242 = vector.broadcast %241 : vector<1x1xf32> to vector<2x222xf32>
    %243 = arith.subf %231, %242 : vector<2x222xf32>
    %244 = vector.broadcast %20 : vector<1x222xf32> to vector<2x222xf32>
    %245 = arith.mulf %243, %244 : vector<2x222xf32>
    %246 = arith.mulf %245, %245 : vector<2x222xf32>
    %cst_15 = arith.constant dense<0.000000e+00> : vector<2xf32>
    %247 = vector.multi_reduction <add>, %246, %cst_15 [1] : vector<2x222xf32> to vector<2xf32>
    %248 = vector.shape_cast %247 : vector<2xf32> to vector<2x1xf32>
    %cst_16 = arith.constant dense<0.000000e+00> : vector<1xf32>
    %249 = vector.multi_reduction <add>, %248, %cst_16 [0] : vector<2x1xf32> to vector<1xf32>
    %250 = vector.shape_cast %249 : vector<1xf32> to vector<1x1xf32>
    %cst_17 = arith.constant 0.00255102036 : f32
    %251 = vector.broadcast %cst_17 : f32 to vector<1x1xf32>
    %252 = arith.mulf %250, %251 : vector<1x1xf32>
    %cst_18 = arith.constant 9.99999974E-6 : f32
    %253 = vector.broadcast %cst_18 : f32 to vector<1x1xf32>
    %254 = arith.addf %252, %253 : vector<1x1xf32>
    %255 = math.rsqrt %254 : vector<1x1xf32>
    %256 = vector.broadcast %232 : f32 to vector<1x1xf32>
    %257 = arith.mulf %256, %255 : vector<1x1xf32>
    %258 = arith.mulf %241, %257 : vector<1x1xf32>
    %259 = vector.broadcast %233 : f32 to vector<1x1xf32>
    %260 = arith.subf %259, %258 : vector<1x1xf32>
    %261 = vector.broadcast %257 : vector<1x1xf32> to vector<2x222xf32>
    %262 = arith.mulf %231, %261 : vector<2x222xf32>
    %263 = vector.broadcast %260 : vector<1x1xf32> to vector<2x222xf32>
    %264 = arith.addf %262, %263 : vector<2x222xf32>
    %cst_19 = arith.constant 0.000000e+00 : f32
    %265 = vector.broadcast %cst_19 : f32 to vector<2x222xf32>
    %266 = arith.maximumf %264, %265 : vector<2x222xf32>
    %cst_20 = arith.constant 0.000000e+00 : f32
    %267 = vector.broadcast %cst_20 : f32 to vector<2x222xf32>
    %268 = vector.extract_strided_slice %44 {offsets = [0, 0], sizes = [2, 222], strides = [1, 1]} : vector<2x256xf32> to vector<2x222xf32>
    %c1 = arith.constant 1 : index
    %269 = memref.load %arg1[%c1] : memref<304xf32, #tpu.memory_space<smem>>
    %270 = vector.broadcast %269 : f32 to vector<2x222xf32>
    %271 = arith.mulf %268, %270 : vector<2x222xf32>
    %272 = arith.addf %267, %271 : vector<2x222xf32>
    %273 = vector.extract_strided_slice %46 {offsets = [0, 0], sizes = [2, 222], strides = [1, 1]} : vector<2x256xf32> to vector<2x222xf32>
    %c5 = arith.constant 5 : index
    %274 = memref.load %arg1[%c5] : memref<304xf32, #tpu.memory_space<smem>>
    %275 = vector.broadcast %274 : f32 to vector<2x222xf32>
    %276 = arith.mulf %273, %275 : vector<2x222xf32>
    %277 = arith.addf %272, %276 : vector<2x222xf32>
    %278 = vector.extract_strided_slice %48 {offsets = [0, 0], sizes = [2, 222], strides = [1, 1]} : vector<2x256xf32> to vector<2x222xf32>
    %c9 = arith.constant 9 : index
    %279 = memref.load %arg1[%c9] : memref<304xf32, #tpu.memory_space<smem>>
    %280 = vector.broadcast %279 : f32 to vector<2x222xf32>
    %281 = arith.mulf %278, %280 : vector<2x222xf32>
    %282 = arith.addf %277, %281 : vector<2x222xf32>
    %283 = vector.extract_strided_slice %50 {offsets = [0, 0], sizes = [2, 222], strides = [1, 1]} : vector<2x256xf32> to vector<2x222xf32>
    %c13 = arith.constant 13 : index
    %284 = memref.load %arg1[%c13] : memref<304xf32, #tpu.memory_space<smem>>
    %285 = vector.broadcast %284 : f32 to vector<2x222xf32>
    %286 = arith.mulf %283, %285 : vector<2x222xf32>
    %287 = arith.addf %282, %286 : vector<2x222xf32>
    %288 = vector.extract_strided_slice %44 {offsets = [0, 1], sizes = [2, 222], strides = [1, 1]} : vector<2x256xf32> to vector<2x222xf32>
    %c17 = arith.constant 17 : index
    %289 = memref.load %arg1[%c17] : memref<304xf32, #tpu.memory_space<smem>>
    %290 = vector.broadcast %289 : f32 to vector<2x222xf32>
    %291 = arith.mulf %288, %290 : vector<2x222xf32>
    %292 = arith.addf %287, %291 : vector<2x222xf32>
    %293 = vector.extract_strided_slice %46 {offsets = [0, 1], sizes = [2, 222], strides = [1, 1]} : vector<2x256xf32> to vector<2x222xf32>
    %c21 = arith.constant 21 : index
    %294 = memref.load %arg1[%c21] : memref<304xf32, #tpu.memory_space<smem>>
    %295 = vector.broadcast %294 : f32 to vector<2x222xf32>
    %296 = arith.mulf %293, %295 : vector<2x222xf32>
    %297 = arith.addf %292, %296 : vector<2x222xf32>
    %298 = vector.extract_strided_slice %48 {offsets = [0, 1], sizes = [2, 222], strides = [1, 1]} : vector<2x256xf32> to vector<2x222xf32>
    %c25 = arith.constant 25 : index
    %299 = memref.load %arg1[%c25] : memref<304xf32, #tpu.memory_space<smem>>
    %300 = vector.broadcast %299 : f32 to vector<2x222xf32>
    %301 = arith.mulf %298, %300 : vector<2x222xf32>
    %302 = arith.addf %297, %301 : vector<2x222xf32>
    %303 = vector.extract_strided_slice %50 {offsets = [0, 1], sizes = [2, 222], strides = [1, 1]} : vector<2x256xf32> to vector<2x222xf32>
    %c29 = arith.constant 29 : index
    %304 = memref.load %arg1[%c29] : memref<304xf32, #tpu.memory_space<smem>>
    %305 = vector.broadcast %304 : f32 to vector<2x222xf32>
    %306 = arith.mulf %303, %305 : vector<2x222xf32>
    %307 = arith.addf %302, %306 : vector<2x222xf32>
    %308 = vector.extract_strided_slice %44 {offsets = [0, 2], sizes = [2, 222], strides = [1, 1]} : vector<2x256xf32> to vector<2x222xf32>
    %c33 = arith.constant 33 : index
    %309 = memref.load %arg1[%c33] : memref<304xf32, #tpu.memory_space<smem>>
    %310 = vector.broadcast %309 : f32 to vector<2x222xf32>
    %311 = arith.mulf %308, %310 : vector<2x222xf32>
    %312 = arith.addf %307, %311 : vector<2x222xf32>
    %313 = vector.extract_strided_slice %46 {offsets = [0, 2], sizes = [2, 222], strides = [1, 1]} : vector<2x256xf32> to vector<2x222xf32>
    %c37 = arith.constant 37 : index
    %314 = memref.load %arg1[%c37] : memref<304xf32, #tpu.memory_space<smem>>
    %315 = vector.broadcast %314 : f32 to vector<2x222xf32>
    %316 = arith.mulf %313, %315 : vector<2x222xf32>
    %317 = arith.addf %312, %316 : vector<2x222xf32>
    %318 = vector.extract_strided_slice %48 {offsets = [0, 2], sizes = [2, 222], strides = [1, 1]} : vector<2x256xf32> to vector<2x222xf32>
    %c41 = arith.constant 41 : index
    %319 = memref.load %arg1[%c41] : memref<304xf32, #tpu.memory_space<smem>>
    %320 = vector.broadcast %319 : f32 to vector<2x222xf32>
    %321 = arith.mulf %318, %320 : vector<2x222xf32>
    %322 = arith.addf %317, %321 : vector<2x222xf32>
    %323 = vector.extract_strided_slice %50 {offsets = [0, 2], sizes = [2, 222], strides = [1, 1]} : vector<2x256xf32> to vector<2x222xf32>
    %c45 = arith.constant 45 : index
    %324 = memref.load %arg1[%c45] : memref<304xf32, #tpu.memory_space<smem>>
    %325 = vector.broadcast %324 : f32 to vector<2x222xf32>
    %326 = arith.mulf %323, %325 : vector<2x222xf32>
    %327 = arith.addf %322, %326 : vector<2x222xf32>
    %328 = vector.extract_strided_slice %44 {offsets = [0, 16], sizes = [2, 222], strides = [1, 1]} : vector<2x256xf32> to vector<2x222xf32>
    %c49 = arith.constant 49 : index
    %329 = memref.load %arg1[%c49] : memref<304xf32, #tpu.memory_space<smem>>
    %330 = vector.broadcast %329 : f32 to vector<2x222xf32>
    %331 = arith.mulf %328, %330 : vector<2x222xf32>
    %332 = arith.addf %327, %331 : vector<2x222xf32>
    %333 = vector.extract_strided_slice %46 {offsets = [0, 16], sizes = [2, 222], strides = [1, 1]} : vector<2x256xf32> to vector<2x222xf32>
    %c53 = arith.constant 53 : index
    %334 = memref.load %arg1[%c53] : memref<304xf32, #tpu.memory_space<smem>>
    %335 = vector.broadcast %334 : f32 to vector<2x222xf32>
    %336 = arith.mulf %333, %335 : vector<2x222xf32>
    %337 = arith.addf %332, %336 : vector<2x222xf32>
    %338 = vector.extract_strided_slice %48 {offsets = [0, 16], sizes = [2, 222], strides = [1, 1]} : vector<2x256xf32> to vector<2x222xf32>
    %c57 = arith.constant 57 : index
    %339 = memref.load %arg1[%c57] : memref<304xf32, #tpu.memory_space<smem>>
    %340 = vector.broadcast %339 : f32 to vector<2x222xf32>
    %341 = arith.mulf %338, %340 : vector<2x222xf32>
    %342 = arith.addf %337, %341 : vector<2x222xf32>
    %343 = vector.extract_strided_slice %50 {offsets = [0, 16], sizes = [2, 222], strides = [1, 1]} : vector<2x256xf32> to vector<2x222xf32>
    %c61 = arith.constant 61 : index
    %344 = memref.load %arg1[%c61] : memref<304xf32, #tpu.memory_space<smem>>
    %345 = vector.broadcast %344 : f32 to vector<2x222xf32>
    %346 = arith.mulf %343, %345 : vector<2x222xf32>
    %347 = arith.addf %342, %346 : vector<2x222xf32>
    %348 = vector.extract_strided_slice %44 {offsets = [0, 17], sizes = [2, 222], strides = [1, 1]} : vector<2x256xf32> to vector<2x222xf32>
    %c65 = arith.constant 65 : index
    %349 = memref.load %arg1[%c65] : memref<304xf32, #tpu.memory_space<smem>>
    %350 = vector.broadcast %349 : f32 to vector<2x222xf32>
    %351 = arith.mulf %348, %350 : vector<2x222xf32>
    %352 = arith.addf %347, %351 : vector<2x222xf32>
    %353 = vector.extract_strided_slice %46 {offsets = [0, 17], sizes = [2, 222], strides = [1, 1]} : vector<2x256xf32> to vector<2x222xf32>
    %c69 = arith.constant 69 : index
    %354 = memref.load %arg1[%c69] : memref<304xf32, #tpu.memory_space<smem>>
    %355 = vector.broadcast %354 : f32 to vector<2x222xf32>
    %356 = arith.mulf %353, %355 : vector<2x222xf32>
    %357 = arith.addf %352, %356 : vector<2x222xf32>
    %358 = vector.extract_strided_slice %48 {offsets = [0, 17], sizes = [2, 222], strides = [1, 1]} : vector<2x256xf32> to vector<2x222xf32>
    %c73 = arith.constant 73 : index
    %359 = memref.load %arg1[%c73] : memref<304xf32, #tpu.memory_space<smem>>
    %360 = vector.broadcast %359 : f32 to vector<2x222xf32>
    %361 = arith.mulf %358, %360 : vector<2x222xf32>
    %362 = arith.addf %357, %361 : vector<2x222xf32>
    %363 = vector.extract_strided_slice %50 {offsets = [0, 17], sizes = [2, 222], strides = [1, 1]} : vector<2x256xf32> to vector<2x222xf32>
    %c77 = arith.constant 77 : index
    %364 = memref.load %arg1[%c77] : memref<304xf32, #tpu.memory_space<smem>>
    %365 = vector.broadcast %364 : f32 to vector<2x222xf32>
    %366 = arith.mulf %363, %365 : vector<2x222xf32>
    %367 = arith.addf %362, %366 : vector<2x222xf32>
    %368 = vector.extract_strided_slice %44 {offsets = [0, 18], sizes = [2, 222], strides = [1, 1]} : vector<2x256xf32> to vector<2x222xf32>
    %c81 = arith.constant 81 : index
    %369 = memref.load %arg1[%c81] : memref<304xf32, #tpu.memory_space<smem>>
    %370 = vector.broadcast %369 : f32 to vector<2x222xf32>
    %371 = arith.mulf %368, %370 : vector<2x222xf32>
    %372 = arith.addf %367, %371 : vector<2x222xf32>
    %373 = vector.extract_strided_slice %46 {offsets = [0, 18], sizes = [2, 222], strides = [1, 1]} : vector<2x256xf32> to vector<2x222xf32>
    %c85 = arith.constant 85 : index
    %374 = memref.load %arg1[%c85] : memref<304xf32, #tpu.memory_space<smem>>
    %375 = vector.broadcast %374 : f32 to vector<2x222xf32>
    %376 = arith.mulf %373, %375 : vector<2x222xf32>
    %377 = arith.addf %372, %376 : vector<2x222xf32>
    %378 = vector.extract_strided_slice %48 {offsets = [0, 18], sizes = [2, 222], strides = [1, 1]} : vector<2x256xf32> to vector<2x222xf32>
    %c89 = arith.constant 89 : index
    %379 = memref.load %arg1[%c89] : memref<304xf32, #tpu.memory_space<smem>>
    %380 = vector.broadcast %379 : f32 to vector<2x222xf32>
    %381 = arith.mulf %378, %380 : vector<2x222xf32>
    %382 = arith.addf %377, %381 : vector<2x222xf32>
    %383 = vector.extract_strided_slice %50 {offsets = [0, 18], sizes = [2, 222], strides = [1, 1]} : vector<2x256xf32> to vector<2x222xf32>
    %c93 = arith.constant 93 : index
    %384 = memref.load %arg1[%c93] : memref<304xf32, #tpu.memory_space<smem>>
    %385 = vector.broadcast %384 : f32 to vector<2x222xf32>
    %386 = arith.mulf %383, %385 : vector<2x222xf32>
    %387 = arith.addf %382, %386 : vector<2x222xf32>
    %388 = vector.extract_strided_slice %44 {offsets = [0, 32], sizes = [2, 222], strides = [1, 1]} : vector<2x256xf32> to vector<2x222xf32>
    %c97 = arith.constant 97 : index
    %389 = memref.load %arg1[%c97] : memref<304xf32, #tpu.memory_space<smem>>
    %390 = vector.broadcast %389 : f32 to vector<2x222xf32>
    %391 = arith.mulf %388, %390 : vector<2x222xf32>
    %392 = arith.addf %387, %391 : vector<2x222xf32>
    %393 = vector.extract_strided_slice %46 {offsets = [0, 32], sizes = [2, 222], strides = [1, 1]} : vector<2x256xf32> to vector<2x222xf32>
    %c101 = arith.constant 101 : index
    %394 = memref.load %arg1[%c101] : memref<304xf32, #tpu.memory_space<smem>>
    %395 = vector.broadcast %394 : f32 to vector<2x222xf32>
    %396 = arith.mulf %393, %395 : vector<2x222xf32>
    %397 = arith.addf %392, %396 : vector<2x222xf32>
    %398 = vector.extract_strided_slice %48 {offsets = [0, 32], sizes = [2, 222], strides = [1, 1]} : vector<2x256xf32> to vector<2x222xf32>
    %c105 = arith.constant 105 : index
    %399 = memref.load %arg1[%c105] : memref<304xf32, #tpu.memory_space<smem>>
    %400 = vector.broadcast %399 : f32 to vector<2x222xf32>
    %401 = arith.mulf %398, %400 : vector<2x222xf32>
    %402 = arith.addf %397, %401 : vector<2x222xf32>
    %403 = vector.extract_strided_slice %50 {offsets = [0, 32], sizes = [2, 222], strides = [1, 1]} : vector<2x256xf32> to vector<2x222xf32>
    %c109 = arith.constant 109 : index
    %404 = memref.load %arg1[%c109] : memref<304xf32, #tpu.memory_space<smem>>
    %405 = vector.broadcast %404 : f32 to vector<2x222xf32>
    %406 = arith.mulf %403, %405 : vector<2x222xf32>
    %407 = arith.addf %402, %406 : vector<2x222xf32>
    %408 = vector.extract_strided_slice %44 {offsets = [0, 33], sizes = [2, 222], strides = [1, 1]} : vector<2x256xf32> to vector<2x222xf32>
    %c113 = arith.constant 113 : index
    %409 = memref.load %arg1[%c113] : memref<304xf32, #tpu.memory_space<smem>>
    %410 = vector.broadcast %409 : f32 to vector<2x222xf32>
    %411 = arith.mulf %408, %410 : vector<2x222xf32>
    %412 = arith.addf %407, %411 : vector<2x222xf32>
    %413 = vector.extract_strided_slice %46 {offsets = [0, 33], sizes = [2, 222], strides = [1, 1]} : vector<2x256xf32> to vector<2x222xf32>
    %c117 = arith.constant 117 : index
    %414 = memref.load %arg1[%c117] : memref<304xf32, #tpu.memory_space<smem>>
    %415 = vector.broadcast %414 : f32 to vector<2x222xf32>
    %416 = arith.mulf %413, %415 : vector<2x222xf32>
    %417 = arith.addf %412, %416 : vector<2x222xf32>
    %418 = vector.extract_strided_slice %48 {offsets = [0, 33], sizes = [2, 222], strides = [1, 1]} : vector<2x256xf32> to vector<2x222xf32>
    %c121 = arith.constant 121 : index
    %419 = memref.load %arg1[%c121] : memref<304xf32, #tpu.memory_space<smem>>
    %420 = vector.broadcast %419 : f32 to vector<2x222xf32>
    %421 = arith.mulf %418, %420 : vector<2x222xf32>
    %422 = arith.addf %417, %421 : vector<2x222xf32>
    %423 = vector.extract_strided_slice %50 {offsets = [0, 33], sizes = [2, 222], strides = [1, 1]} : vector<2x256xf32> to vector<2x222xf32>
    %c125 = arith.constant 125 : index
    %424 = memref.load %arg1[%c125] : memref<304xf32, #tpu.memory_space<smem>>
    %425 = vector.broadcast %424 : f32 to vector<2x222xf32>
    %426 = arith.mulf %423, %425 : vector<2x222xf32>
    %427 = arith.addf %422, %426 : vector<2x222xf32>
    %428 = vector.extract_strided_slice %44 {offsets = [0, 34], sizes = [2, 222], strides = [1, 1]} : vector<2x256xf32> to vector<2x222xf32>
    %c129 = arith.constant 129 : index
    %429 = memref.load %arg1[%c129] : memref<304xf32, #tpu.memory_space<smem>>
    %430 = vector.broadcast %429 : f32 to vector<2x222xf32>
    %431 = arith.mulf %428, %430 : vector<2x222xf32>
    %432 = arith.addf %427, %431 : vector<2x222xf32>
    %433 = vector.extract_strided_slice %46 {offsets = [0, 34], sizes = [2, 222], strides = [1, 1]} : vector<2x256xf32> to vector<2x222xf32>
    %c133 = arith.constant 133 : index
    %434 = memref.load %arg1[%c133] : memref<304xf32, #tpu.memory_space<smem>>
    %435 = vector.broadcast %434 : f32 to vector<2x222xf32>
    %436 = arith.mulf %433, %435 : vector<2x222xf32>
    %437 = arith.addf %432, %436 : vector<2x222xf32>
    %438 = vector.extract_strided_slice %48 {offsets = [0, 34], sizes = [2, 222], strides = [1, 1]} : vector<2x256xf32> to vector<2x222xf32>
    %c137 = arith.constant 137 : index
    %439 = memref.load %arg1[%c137] : memref<304xf32, #tpu.memory_space<smem>>
    %440 = vector.broadcast %439 : f32 to vector<2x222xf32>
    %441 = arith.mulf %438, %440 : vector<2x222xf32>
    %442 = arith.addf %437, %441 : vector<2x222xf32>
    %443 = vector.extract_strided_slice %50 {offsets = [0, 34], sizes = [2, 222], strides = [1, 1]} : vector<2x256xf32> to vector<2x222xf32>
    %c141 = arith.constant 141 : index
    %444 = memref.load %arg1[%c141] : memref<304xf32, #tpu.memory_space<smem>>
    %445 = vector.broadcast %444 : f32 to vector<2x222xf32>
    %446 = arith.mulf %443, %445 : vector<2x222xf32>
    %447 = arith.addf %442, %446 : vector<2x222xf32>
    %c289 = arith.constant 289 : index
    %448 = memref.load %arg1[%c289] : memref<304xf32, #tpu.memory_space<smem>>
    %c293 = arith.constant 293 : index
    %449 = memref.load %arg1[%c293] : memref<304xf32, #tpu.memory_space<smem>>
    %450 = vector.broadcast %20 : vector<1x222xf32> to vector<2x222xf32>
    %451 = arith.mulf %447, %450 : vector<2x222xf32>
    %cst_21 = arith.constant dense<0.000000e+00> : vector<2xf32>
    %452 = vector.multi_reduction <add>, %451, %cst_21 [1] : vector<2x222xf32> to vector<2xf32>
    %453 = vector.shape_cast %452 : vector<2xf32> to vector<2x1xf32>
    %cst_22 = arith.constant dense<0.000000e+00> : vector<1xf32>
    %454 = vector.multi_reduction <add>, %453, %cst_22 [0] : vector<2x1xf32> to vector<1xf32>
    %455 = vector.shape_cast %454 : vector<1xf32> to vector<1x1xf32>
    %cst_23 = arith.constant 0.00255102036 : f32
    %456 = vector.broadcast %cst_23 : f32 to vector<1x1xf32>
    %457 = arith.mulf %455, %456 : vector<1x1xf32>
    %458 = vector.broadcast %457 : vector<1x1xf32> to vector<2x222xf32>
    %459 = arith.subf %447, %458 : vector<2x222xf32>
    %460 = vector.broadcast %20 : vector<1x222xf32> to vector<2x222xf32>
    %461 = arith.mulf %459, %460 : vector<2x222xf32>
    %462 = arith.mulf %461, %461 : vector<2x222xf32>
    %cst_24 = arith.constant dense<0.000000e+00> : vector<2xf32>
    %463 = vector.multi_reduction <add>, %462, %cst_24 [1] : vector<2x222xf32> to vector<2xf32>
    %464 = vector.shape_cast %463 : vector<2xf32> to vector<2x1xf32>
    %cst_25 = arith.constant dense<0.000000e+00> : vector<1xf32>
    %465 = vector.multi_reduction <add>, %464, %cst_25 [0] : vector<2x1xf32> to vector<1xf32>
    %466 = vector.shape_cast %465 : vector<1xf32> to vector<1x1xf32>
    %cst_26 = arith.constant 0.00255102036 : f32
    %467 = vector.broadcast %cst_26 : f32 to vector<1x1xf32>
    %468 = arith.mulf %466, %467 : vector<1x1xf32>
    %cst_27 = arith.constant 9.99999974E-6 : f32
    %469 = vector.broadcast %cst_27 : f32 to vector<1x1xf32>
    %470 = arith.addf %468, %469 : vector<1x1xf32>
    %471 = math.rsqrt %470 : vector<1x1xf32>
    %472 = vector.broadcast %448 : f32 to vector<1x1xf32>
    %473 = arith.mulf %472, %471 : vector<1x1xf32>
    %474 = arith.mulf %457, %473 : vector<1x1xf32>
    %475 = vector.broadcast %449 : f32 to vector<1x1xf32>
    %476 = arith.subf %475, %474 : vector<1x1xf32>
    %477 = vector.broadcast %473 : vector<1x1xf32> to vector<2x222xf32>
    %478 = arith.mulf %447, %477 : vector<2x222xf32>
    %479 = vector.broadcast %476 : vector<1x1xf32> to vector<2x222xf32>
    %480 = arith.addf %478, %479 : vector<2x222xf32>
    %cst_28 = arith.constant 0.000000e+00 : f32
    %481 = vector.broadcast %cst_28 : f32 to vector<2x222xf32>
    %482 = arith.maximumf %480, %481 : vector<2x222xf32>
    %cst_29 = arith.constant 0.000000e+00 : f32
    %483 = vector.broadcast %cst_29 : f32 to vector<2x222xf32>
    %484 = vector.extract_strided_slice %44 {offsets = [0, 0], sizes = [2, 222], strides = [1, 1]} : vector<2x256xf32> to vector<2x222xf32>
    %c2 = arith.constant 2 : index
    %485 = memref.load %arg1[%c2] : memref<304xf32, #tpu.memory_space<smem>>
    %486 = vector.broadcast %485 : f32 to vector<2x222xf32>
    %487 = arith.mulf %484, %486 : vector<2x222xf32>
    %488 = arith.addf %483, %487 : vector<2x222xf32>
    %489 = vector.extract_strided_slice %46 {offsets = [0, 0], sizes = [2, 222], strides = [1, 1]} : vector<2x256xf32> to vector<2x222xf32>
    %c6 = arith.constant 6 : index
    %490 = memref.load %arg1[%c6] : memref<304xf32, #tpu.memory_space<smem>>
    %491 = vector.broadcast %490 : f32 to vector<2x222xf32>
    %492 = arith.mulf %489, %491 : vector<2x222xf32>
    %493 = arith.addf %488, %492 : vector<2x222xf32>
    %494 = vector.extract_strided_slice %48 {offsets = [0, 0], sizes = [2, 222], strides = [1, 1]} : vector<2x256xf32> to vector<2x222xf32>
    %c10 = arith.constant 10 : index
    %495 = memref.load %arg1[%c10] : memref<304xf32, #tpu.memory_space<smem>>
    %496 = vector.broadcast %495 : f32 to vector<2x222xf32>
    %497 = arith.mulf %494, %496 : vector<2x222xf32>
    %498 = arith.addf %493, %497 : vector<2x222xf32>
    %499 = vector.extract_strided_slice %50 {offsets = [0, 0], sizes = [2, 222], strides = [1, 1]} : vector<2x256xf32> to vector<2x222xf32>
    %c14 = arith.constant 14 : index
    %500 = memref.load %arg1[%c14] : memref<304xf32, #tpu.memory_space<smem>>
    %501 = vector.broadcast %500 : f32 to vector<2x222xf32>
    %502 = arith.mulf %499, %501 : vector<2x222xf32>
    %503 = arith.addf %498, %502 : vector<2x222xf32>
    %504 = vector.extract_strided_slice %44 {offsets = [0, 1], sizes = [2, 222], strides = [1, 1]} : vector<2x256xf32> to vector<2x222xf32>
    %c18 = arith.constant 18 : index
    %505 = memref.load %arg1[%c18] : memref<304xf32, #tpu.memory_space<smem>>
    %506 = vector.broadcast %505 : f32 to vector<2x222xf32>
    %507 = arith.mulf %504, %506 : vector<2x222xf32>
    %508 = arith.addf %503, %507 : vector<2x222xf32>
    %509 = vector.extract_strided_slice %46 {offsets = [0, 1], sizes = [2, 222], strides = [1, 1]} : vector<2x256xf32> to vector<2x222xf32>
    %c22 = arith.constant 22 : index
    %510 = memref.load %arg1[%c22] : memref<304xf32, #tpu.memory_space<smem>>
    %511 = vector.broadcast %510 : f32 to vector<2x222xf32>
    %512 = arith.mulf %509, %511 : vector<2x222xf32>
    %513 = arith.addf %508, %512 : vector<2x222xf32>
    %514 = vector.extract_strided_slice %48 {offsets = [0, 1], sizes = [2, 222], strides = [1, 1]} : vector<2x256xf32> to vector<2x222xf32>
    %c26 = arith.constant 26 : index
    %515 = memref.load %arg1[%c26] : memref<304xf32, #tpu.memory_space<smem>>
    %516 = vector.broadcast %515 : f32 to vector<2x222xf32>
    %517 = arith.mulf %514, %516 : vector<2x222xf32>
    %518 = arith.addf %513, %517 : vector<2x222xf32>
    %519 = vector.extract_strided_slice %50 {offsets = [0, 1], sizes = [2, 222], strides = [1, 1]} : vector<2x256xf32> to vector<2x222xf32>
    %c30 = arith.constant 30 : index
    %520 = memref.load %arg1[%c30] : memref<304xf32, #tpu.memory_space<smem>>
    %521 = vector.broadcast %520 : f32 to vector<2x222xf32>
    %522 = arith.mulf %519, %521 : vector<2x222xf32>
    %523 = arith.addf %518, %522 : vector<2x222xf32>
    %524 = vector.extract_strided_slice %44 {offsets = [0, 2], sizes = [2, 222], strides = [1, 1]} : vector<2x256xf32> to vector<2x222xf32>
    %c34 = arith.constant 34 : index
    %525 = memref.load %arg1[%c34] : memref<304xf32, #tpu.memory_space<smem>>
    %526 = vector.broadcast %525 : f32 to vector<2x222xf32>
    %527 = arith.mulf %524, %526 : vector<2x222xf32>
    %528 = arith.addf %523, %527 : vector<2x222xf32>
    %529 = vector.extract_strided_slice %46 {offsets = [0, 2], sizes = [2, 222], strides = [1, 1]} : vector<2x256xf32> to vector<2x222xf32>
    %c38 = arith.constant 38 : index
    %530 = memref.load %arg1[%c38] : memref<304xf32, #tpu.memory_space<smem>>
    %531 = vector.broadcast %530 : f32 to vector<2x222xf32>
    %532 = arith.mulf %529, %531 : vector<2x222xf32>
    %533 = arith.addf %528, %532 : vector<2x222xf32>
    %534 = vector.extract_strided_slice %48 {offsets = [0, 2], sizes = [2, 222], strides = [1, 1]} : vector<2x256xf32> to vector<2x222xf32>
    %c42 = arith.constant 42 : index
    %535 = memref.load %arg1[%c42] : memref<304xf32, #tpu.memory_space<smem>>
    %536 = vector.broadcast %535 : f32 to vector<2x222xf32>
    %537 = arith.mulf %534, %536 : vector<2x222xf32>
    %538 = arith.addf %533, %537 : vector<2x222xf32>
    %539 = vector.extract_strided_slice %50 {offsets = [0, 2], sizes = [2, 222], strides = [1, 1]} : vector<2x256xf32> to vector<2x222xf32>
    %c46 = arith.constant 46 : index
    %540 = memref.load %arg1[%c46] : memref<304xf32, #tpu.memory_space<smem>>
    %541 = vector.broadcast %540 : f32 to vector<2x222xf32>
    %542 = arith.mulf %539, %541 : vector<2x222xf32>
    %543 = arith.addf %538, %542 : vector<2x222xf32>
    %544 = vector.extract_strided_slice %44 {offsets = [0, 16], sizes = [2, 222], strides = [1, 1]} : vector<2x256xf32> to vector<2x222xf32>
    %c50 = arith.constant 50 : index
    %545 = memref.load %arg1[%c50] : memref<304xf32, #tpu.memory_space<smem>>
    %546 = vector.broadcast %545 : f32 to vector<2x222xf32>
    %547 = arith.mulf %544, %546 : vector<2x222xf32>
    %548 = arith.addf %543, %547 : vector<2x222xf32>
    %549 = vector.extract_strided_slice %46 {offsets = [0, 16], sizes = [2, 222], strides = [1, 1]} : vector<2x256xf32> to vector<2x222xf32>
    %c54 = arith.constant 54 : index
    %550 = memref.load %arg1[%c54] : memref<304xf32, #tpu.memory_space<smem>>
    %551 = vector.broadcast %550 : f32 to vector<2x222xf32>
    %552 = arith.mulf %549, %551 : vector<2x222xf32>
    %553 = arith.addf %548, %552 : vector<2x222xf32>
    %554 = vector.extract_strided_slice %48 {offsets = [0, 16], sizes = [2, 222], strides = [1, 1]} : vector<2x256xf32> to vector<2x222xf32>
    %c58 = arith.constant 58 : index
    %555 = memref.load %arg1[%c58] : memref<304xf32, #tpu.memory_space<smem>>
    %556 = vector.broadcast %555 : f32 to vector<2x222xf32>
    %557 = arith.mulf %554, %556 : vector<2x222xf32>
    %558 = arith.addf %553, %557 : vector<2x222xf32>
    %559 = vector.extract_strided_slice %50 {offsets = [0, 16], sizes = [2, 222], strides = [1, 1]} : vector<2x256xf32> to vector<2x222xf32>
    %c62 = arith.constant 62 : index
    %560 = memref.load %arg1[%c62] : memref<304xf32, #tpu.memory_space<smem>>
    %561 = vector.broadcast %560 : f32 to vector<2x222xf32>
    %562 = arith.mulf %559, %561 : vector<2x222xf32>
    %563 = arith.addf %558, %562 : vector<2x222xf32>
    %564 = vector.extract_strided_slice %44 {offsets = [0, 17], sizes = [2, 222], strides = [1, 1]} : vector<2x256xf32> to vector<2x222xf32>
    %c66 = arith.constant 66 : index
    %565 = memref.load %arg1[%c66] : memref<304xf32, #tpu.memory_space<smem>>
    %566 = vector.broadcast %565 : f32 to vector<2x222xf32>
    %567 = arith.mulf %564, %566 : vector<2x222xf32>
    %568 = arith.addf %563, %567 : vector<2x222xf32>
    %569 = vector.extract_strided_slice %46 {offsets = [0, 17], sizes = [2, 222], strides = [1, 1]} : vector<2x256xf32> to vector<2x222xf32>
    %c70 = arith.constant 70 : index
    %570 = memref.load %arg1[%c70] : memref<304xf32, #tpu.memory_space<smem>>
    %571 = vector.broadcast %570 : f32 to vector<2x222xf32>
    %572 = arith.mulf %569, %571 : vector<2x222xf32>
    %573 = arith.addf %568, %572 : vector<2x222xf32>
    %574 = vector.extract_strided_slice %48 {offsets = [0, 17], sizes = [2, 222], strides = [1, 1]} : vector<2x256xf32> to vector<2x222xf32>
    %c74 = arith.constant 74 : index
    %575 = memref.load %arg1[%c74] : memref<304xf32, #tpu.memory_space<smem>>
    %576 = vector.broadcast %575 : f32 to vector<2x222xf32>
    %577 = arith.mulf %574, %576 : vector<2x222xf32>
    %578 = arith.addf %573, %577 : vector<2x222xf32>
    %579 = vector.extract_strided_slice %50 {offsets = [0, 17], sizes = [2, 222], strides = [1, 1]} : vector<2x256xf32> to vector<2x222xf32>
    %c78 = arith.constant 78 : index
    %580 = memref.load %arg1[%c78] : memref<304xf32, #tpu.memory_space<smem>>
    %581 = vector.broadcast %580 : f32 to vector<2x222xf32>
    %582 = arith.mulf %579, %581 : vector<2x222xf32>
    %583 = arith.addf %578, %582 : vector<2x222xf32>
    %584 = vector.extract_strided_slice %44 {offsets = [0, 18], sizes = [2, 222], strides = [1, 1]} : vector<2x256xf32> to vector<2x222xf32>
    %c82 = arith.constant 82 : index
    %585 = memref.load %arg1[%c82] : memref<304xf32, #tpu.memory_space<smem>>
    %586 = vector.broadcast %585 : f32 to vector<2x222xf32>
    %587 = arith.mulf %584, %586 : vector<2x222xf32>
    %588 = arith.addf %583, %587 : vector<2x222xf32>
    %589 = vector.extract_strided_slice %46 {offsets = [0, 18], sizes = [2, 222], strides = [1, 1]} : vector<2x256xf32> to vector<2x222xf32>
    %c86 = arith.constant 86 : index
    %590 = memref.load %arg1[%c86] : memref<304xf32, #tpu.memory_space<smem>>
    %591 = vector.broadcast %590 : f32 to vector<2x222xf32>
    %592 = arith.mulf %589, %591 : vector<2x222xf32>
    %593 = arith.addf %588, %592 : vector<2x222xf32>
    %594 = vector.extract_strided_slice %48 {offsets = [0, 18], sizes = [2, 222], strides = [1, 1]} : vector<2x256xf32> to vector<2x222xf32>
    %c90 = arith.constant 90 : index
    %595 = memref.load %arg1[%c90] : memref<304xf32, #tpu.memory_space<smem>>
    %596 = vector.broadcast %595 : f32 to vector<2x222xf32>
    %597 = arith.mulf %594, %596 : vector<2x222xf32>
    %598 = arith.addf %593, %597 : vector<2x222xf32>
    %599 = vector.extract_strided_slice %50 {offsets = [0, 18], sizes = [2, 222], strides = [1, 1]} : vector<2x256xf32> to vector<2x222xf32>
    %c94 = arith.constant 94 : index
    %600 = memref.load %arg1[%c94] : memref<304xf32, #tpu.memory_space<smem>>
    %601 = vector.broadcast %600 : f32 to vector<2x222xf32>
    %602 = arith.mulf %599, %601 : vector<2x222xf32>
    %603 = arith.addf %598, %602 : vector<2x222xf32>
    %604 = vector.extract_strided_slice %44 {offsets = [0, 32], sizes = [2, 222], strides = [1, 1]} : vector<2x256xf32> to vector<2x222xf32>
    %c98 = arith.constant 98 : index
    %605 = memref.load %arg1[%c98] : memref<304xf32, #tpu.memory_space<smem>>
    %606 = vector.broadcast %605 : f32 to vector<2x222xf32>
    %607 = arith.mulf %604, %606 : vector<2x222xf32>
    %608 = arith.addf %603, %607 : vector<2x222xf32>
    %609 = vector.extract_strided_slice %46 {offsets = [0, 32], sizes = [2, 222], strides = [1, 1]} : vector<2x256xf32> to vector<2x222xf32>
    %c102 = arith.constant 102 : index
    %610 = memref.load %arg1[%c102] : memref<304xf32, #tpu.memory_space<smem>>
    %611 = vector.broadcast %610 : f32 to vector<2x222xf32>
    %612 = arith.mulf %609, %611 : vector<2x222xf32>
    %613 = arith.addf %608, %612 : vector<2x222xf32>
    %614 = vector.extract_strided_slice %48 {offsets = [0, 32], sizes = [2, 222], strides = [1, 1]} : vector<2x256xf32> to vector<2x222xf32>
    %c106 = arith.constant 106 : index
    %615 = memref.load %arg1[%c106] : memref<304xf32, #tpu.memory_space<smem>>
    %616 = vector.broadcast %615 : f32 to vector<2x222xf32>
    %617 = arith.mulf %614, %616 : vector<2x222xf32>
    %618 = arith.addf %613, %617 : vector<2x222xf32>
    %619 = vector.extract_strided_slice %50 {offsets = [0, 32], sizes = [2, 222], strides = [1, 1]} : vector<2x256xf32> to vector<2x222xf32>
    %c110 = arith.constant 110 : index
    %620 = memref.load %arg1[%c110] : memref<304xf32, #tpu.memory_space<smem>>
    %621 = vector.broadcast %620 : f32 to vector<2x222xf32>
    %622 = arith.mulf %619, %621 : vector<2x222xf32>
    %623 = arith.addf %618, %622 : vector<2x222xf32>
    %624 = vector.extract_strided_slice %44 {offsets = [0, 33], sizes = [2, 222], strides = [1, 1]} : vector<2x256xf32> to vector<2x222xf32>
    %c114 = arith.constant 114 : index
    %625 = memref.load %arg1[%c114] : memref<304xf32, #tpu.memory_space<smem>>
    %626 = vector.broadcast %625 : f32 to vector<2x222xf32>
    %627 = arith.mulf %624, %626 : vector<2x222xf32>
    %628 = arith.addf %623, %627 : vector<2x222xf32>
    %629 = vector.extract_strided_slice %46 {offsets = [0, 33], sizes = [2, 222], strides = [1, 1]} : vector<2x256xf32> to vector<2x222xf32>
    %c118 = arith.constant 118 : index
    %630 = memref.load %arg1[%c118] : memref<304xf32, #tpu.memory_space<smem>>
    %631 = vector.broadcast %630 : f32 to vector<2x222xf32>
    %632 = arith.mulf %629, %631 : vector<2x222xf32>
    %633 = arith.addf %628, %632 : vector<2x222xf32>
    %634 = vector.extract_strided_slice %48 {offsets = [0, 33], sizes = [2, 222], strides = [1, 1]} : vector<2x256xf32> to vector<2x222xf32>
    %c122 = arith.constant 122 : index
    %635 = memref.load %arg1[%c122] : memref<304xf32, #tpu.memory_space<smem>>
    %636 = vector.broadcast %635 : f32 to vector<2x222xf32>
    %637 = arith.mulf %634, %636 : vector<2x222xf32>
    %638 = arith.addf %633, %637 : vector<2x222xf32>
    %639 = vector.extract_strided_slice %50 {offsets = [0, 33], sizes = [2, 222], strides = [1, 1]} : vector<2x256xf32> to vector<2x222xf32>
    %c126 = arith.constant 126 : index
    %640 = memref.load %arg1[%c126] : memref<304xf32, #tpu.memory_space<smem>>
    %641 = vector.broadcast %640 : f32 to vector<2x222xf32>
    %642 = arith.mulf %639, %641 : vector<2x222xf32>
    %643 = arith.addf %638, %642 : vector<2x222xf32>
    %644 = vector.extract_strided_slice %44 {offsets = [0, 34], sizes = [2, 222], strides = [1, 1]} : vector<2x256xf32> to vector<2x222xf32>
    %c130 = arith.constant 130 : index
    %645 = memref.load %arg1[%c130] : memref<304xf32, #tpu.memory_space<smem>>
    %646 = vector.broadcast %645 : f32 to vector<2x222xf32>
    %647 = arith.mulf %644, %646 : vector<2x222xf32>
    %648 = arith.addf %643, %647 : vector<2x222xf32>
    %649 = vector.extract_strided_slice %46 {offsets = [0, 34], sizes = [2, 222], strides = [1, 1]} : vector<2x256xf32> to vector<2x222xf32>
    %c134 = arith.constant 134 : index
    %650 = memref.load %arg1[%c134] : memref<304xf32, #tpu.memory_space<smem>>
    %651 = vector.broadcast %650 : f32 to vector<2x222xf32>
    %652 = arith.mulf %649, %651 : vector<2x222xf32>
    %653 = arith.addf %648, %652 : vector<2x222xf32>
    %654 = vector.extract_strided_slice %48 {offsets = [0, 34], sizes = [2, 222], strides = [1, 1]} : vector<2x256xf32> to vector<2x222xf32>
    %c138 = arith.constant 138 : index
    %655 = memref.load %arg1[%c138] : memref<304xf32, #tpu.memory_space<smem>>
    %656 = vector.broadcast %655 : f32 to vector<2x222xf32>
    %657 = arith.mulf %654, %656 : vector<2x222xf32>
    %658 = arith.addf %653, %657 : vector<2x222xf32>
    %659 = vector.extract_strided_slice %50 {offsets = [0, 34], sizes = [2, 222], strides = [1, 1]} : vector<2x256xf32> to vector<2x222xf32>
    %c142 = arith.constant 142 : index
    %660 = memref.load %arg1[%c142] : memref<304xf32, #tpu.memory_space<smem>>
    %661 = vector.broadcast %660 : f32 to vector<2x222xf32>
    %662 = arith.mulf %659, %661 : vector<2x222xf32>
    %663 = arith.addf %658, %662 : vector<2x222xf32>
    %c290 = arith.constant 290 : index
    %664 = memref.load %arg1[%c290] : memref<304xf32, #tpu.memory_space<smem>>
    %c294 = arith.constant 294 : index
    %665 = memref.load %arg1[%c294] : memref<304xf32, #tpu.memory_space<smem>>
    %666 = vector.broadcast %20 : vector<1x222xf32> to vector<2x222xf32>
    %667 = arith.mulf %663, %666 : vector<2x222xf32>
    %cst_30 = arith.constant dense<0.000000e+00> : vector<2xf32>
    %668 = vector.multi_reduction <add>, %667, %cst_30 [1] : vector<2x222xf32> to vector<2xf32>
    %669 = vector.shape_cast %668 : vector<2xf32> to vector<2x1xf32>
    %cst_31 = arith.constant dense<0.000000e+00> : vector<1xf32>
    %670 = vector.multi_reduction <add>, %669, %cst_31 [0] : vector<2x1xf32> to vector<1xf32>
    %671 = vector.shape_cast %670 : vector<1xf32> to vector<1x1xf32>
    %cst_32 = arith.constant 0.00255102036 : f32
    %672 = vector.broadcast %cst_32 : f32 to vector<1x1xf32>
    %673 = arith.mulf %671, %672 : vector<1x1xf32>
    %674 = vector.broadcast %673 : vector<1x1xf32> to vector<2x222xf32>
    %675 = arith.subf %663, %674 : vector<2x222xf32>
    %676 = vector.broadcast %20 : vector<1x222xf32> to vector<2x222xf32>
    %677 = arith.mulf %675, %676 : vector<2x222xf32>
    %678 = arith.mulf %677, %677 : vector<2x222xf32>
    %cst_33 = arith.constant dense<0.000000e+00> : vector<2xf32>
    %679 = vector.multi_reduction <add>, %678, %cst_33 [1] : vector<2x222xf32> to vector<2xf32>
    %680 = vector.shape_cast %679 : vector<2xf32> to vector<2x1xf32>
    %cst_34 = arith.constant dense<0.000000e+00> : vector<1xf32>
    %681 = vector.multi_reduction <add>, %680, %cst_34 [0] : vector<2x1xf32> to vector<1xf32>
    %682 = vector.shape_cast %681 : vector<1xf32> to vector<1x1xf32>
    %cst_35 = arith.constant 0.00255102036 : f32
    %683 = vector.broadcast %cst_35 : f32 to vector<1x1xf32>
    %684 = arith.mulf %682, %683 : vector<1x1xf32>
    %cst_36 = arith.constant 9.99999974E-6 : f32
    %685 = vector.broadcast %cst_36 : f32 to vector<1x1xf32>
    %686 = arith.addf %684, %685 : vector<1x1xf32>
    %687 = math.rsqrt %686 : vector<1x1xf32>
    %688 = vector.broadcast %664 : f32 to vector<1x1xf32>
    %689 = arith.mulf %688, %687 : vector<1x1xf32>
    %690 = arith.mulf %673, %689 : vector<1x1xf32>
    %691 = vector.broadcast %665 : f32 to vector<1x1xf32>
    %692 = arith.subf %691, %690 : vector<1x1xf32>
    %693 = vector.broadcast %689 : vector<1x1xf32> to vector<2x222xf32>
    %694 = arith.mulf %663, %693 : vector<2x222xf32>
    %695 = vector.broadcast %692 : vector<1x1xf32> to vector<2x222xf32>
    %696 = arith.addf %694, %695 : vector<2x222xf32>
    %cst_37 = arith.constant 0.000000e+00 : f32
    %697 = vector.broadcast %cst_37 : f32 to vector<2x222xf32>
    %698 = arith.maximumf %696, %697 : vector<2x222xf32>
    %cst_38 = arith.constant 0.000000e+00 : f32
    %699 = vector.broadcast %cst_38 : f32 to vector<2x222xf32>
    %700 = vector.extract_strided_slice %44 {offsets = [0, 0], sizes = [2, 222], strides = [1, 1]} : vector<2x256xf32> to vector<2x222xf32>
    %c3 = arith.constant 3 : index
    %701 = memref.load %arg1[%c3] : memref<304xf32, #tpu.memory_space<smem>>
    %702 = vector.broadcast %701 : f32 to vector<2x222xf32>
    %703 = arith.mulf %700, %702 : vector<2x222xf32>
    %704 = arith.addf %699, %703 : vector<2x222xf32>
    %705 = vector.extract_strided_slice %46 {offsets = [0, 0], sizes = [2, 222], strides = [1, 1]} : vector<2x256xf32> to vector<2x222xf32>
    %c7 = arith.constant 7 : index
    %706 = memref.load %arg1[%c7] : memref<304xf32, #tpu.memory_space<smem>>
    %707 = vector.broadcast %706 : f32 to vector<2x222xf32>
    %708 = arith.mulf %705, %707 : vector<2x222xf32>
    %709 = arith.addf %704, %708 : vector<2x222xf32>
    %710 = vector.extract_strided_slice %48 {offsets = [0, 0], sizes = [2, 222], strides = [1, 1]} : vector<2x256xf32> to vector<2x222xf32>
    %c11 = arith.constant 11 : index
    %711 = memref.load %arg1[%c11] : memref<304xf32, #tpu.memory_space<smem>>
    %712 = vector.broadcast %711 : f32 to vector<2x222xf32>
    %713 = arith.mulf %710, %712 : vector<2x222xf32>
    %714 = arith.addf %709, %713 : vector<2x222xf32>
    %715 = vector.extract_strided_slice %50 {offsets = [0, 0], sizes = [2, 222], strides = [1, 1]} : vector<2x256xf32> to vector<2x222xf32>
    %c15 = arith.constant 15 : index
    %716 = memref.load %arg1[%c15] : memref<304xf32, #tpu.memory_space<smem>>
    %717 = vector.broadcast %716 : f32 to vector<2x222xf32>
    %718 = arith.mulf %715, %717 : vector<2x222xf32>
    %719 = arith.addf %714, %718 : vector<2x222xf32>
    %720 = vector.extract_strided_slice %44 {offsets = [0, 1], sizes = [2, 222], strides = [1, 1]} : vector<2x256xf32> to vector<2x222xf32>
    %c19 = arith.constant 19 : index
    %721 = memref.load %arg1[%c19] : memref<304xf32, #tpu.memory_space<smem>>
    %722 = vector.broadcast %721 : f32 to vector<2x222xf32>
    %723 = arith.mulf %720, %722 : vector<2x222xf32>
    %724 = arith.addf %719, %723 : vector<2x222xf32>
    %725 = vector.extract_strided_slice %46 {offsets = [0, 1], sizes = [2, 222], strides = [1, 1]} : vector<2x256xf32> to vector<2x222xf32>
    %c23 = arith.constant 23 : index
    %726 = memref.load %arg1[%c23] : memref<304xf32, #tpu.memory_space<smem>>
    %727 = vector.broadcast %726 : f32 to vector<2x222xf32>
    %728 = arith.mulf %725, %727 : vector<2x222xf32>
    %729 = arith.addf %724, %728 : vector<2x222xf32>
    %730 = vector.extract_strided_slice %48 {offsets = [0, 1], sizes = [2, 222], strides = [1, 1]} : vector<2x256xf32> to vector<2x222xf32>
    %c27 = arith.constant 27 : index
    %731 = memref.load %arg1[%c27] : memref<304xf32, #tpu.memory_space<smem>>
    %732 = vector.broadcast %731 : f32 to vector<2x222xf32>
    %733 = arith.mulf %730, %732 : vector<2x222xf32>
    %734 = arith.addf %729, %733 : vector<2x222xf32>
    %735 = vector.extract_strided_slice %50 {offsets = [0, 1], sizes = [2, 222], strides = [1, 1]} : vector<2x256xf32> to vector<2x222xf32>
    %c31 = arith.constant 31 : index
    %736 = memref.load %arg1[%c31] : memref<304xf32, #tpu.memory_space<smem>>
    %737 = vector.broadcast %736 : f32 to vector<2x222xf32>
    %738 = arith.mulf %735, %737 : vector<2x222xf32>
    %739 = arith.addf %734, %738 : vector<2x222xf32>
    %740 = vector.extract_strided_slice %44 {offsets = [0, 2], sizes = [2, 222], strides = [1, 1]} : vector<2x256xf32> to vector<2x222xf32>
    %c35 = arith.constant 35 : index
    %741 = memref.load %arg1[%c35] : memref<304xf32, #tpu.memory_space<smem>>
    %742 = vector.broadcast %741 : f32 to vector<2x222xf32>
    %743 = arith.mulf %740, %742 : vector<2x222xf32>
    %744 = arith.addf %739, %743 : vector<2x222xf32>
    %745 = vector.extract_strided_slice %46 {offsets = [0, 2], sizes = [2, 222], strides = [1, 1]} : vector<2x256xf32> to vector<2x222xf32>
    %c39 = arith.constant 39 : index
    %746 = memref.load %arg1[%c39] : memref<304xf32, #tpu.memory_space<smem>>
    %747 = vector.broadcast %746 : f32 to vector<2x222xf32>
    %748 = arith.mulf %745, %747 : vector<2x222xf32>
    %749 = arith.addf %744, %748 : vector<2x222xf32>
    %750 = vector.extract_strided_slice %48 {offsets = [0, 2], sizes = [2, 222], strides = [1, 1]} : vector<2x256xf32> to vector<2x222xf32>
    %c43 = arith.constant 43 : index
    %751 = memref.load %arg1[%c43] : memref<304xf32, #tpu.memory_space<smem>>
    %752 = vector.broadcast %751 : f32 to vector<2x222xf32>
    %753 = arith.mulf %750, %752 : vector<2x222xf32>
    %754 = arith.addf %749, %753 : vector<2x222xf32>
    %755 = vector.extract_strided_slice %50 {offsets = [0, 2], sizes = [2, 222], strides = [1, 1]} : vector<2x256xf32> to vector<2x222xf32>
    %c47 = arith.constant 47 : index
    %756 = memref.load %arg1[%c47] : memref<304xf32, #tpu.memory_space<smem>>
    %757 = vector.broadcast %756 : f32 to vector<2x222xf32>
    %758 = arith.mulf %755, %757 : vector<2x222xf32>
    %759 = arith.addf %754, %758 : vector<2x222xf32>
    %760 = vector.extract_strided_slice %44 {offsets = [0, 16], sizes = [2, 222], strides = [1, 1]} : vector<2x256xf32> to vector<2x222xf32>
    %c51 = arith.constant 51 : index
    %761 = memref.load %arg1[%c51] : memref<304xf32, #tpu.memory_space<smem>>
    %762 = vector.broadcast %761 : f32 to vector<2x222xf32>
    %763 = arith.mulf %760, %762 : vector<2x222xf32>
    %764 = arith.addf %759, %763 : vector<2x222xf32>
    %765 = vector.extract_strided_slice %46 {offsets = [0, 16], sizes = [2, 222], strides = [1, 1]} : vector<2x256xf32> to vector<2x222xf32>
    %c55 = arith.constant 55 : index
    %766 = memref.load %arg1[%c55] : memref<304xf32, #tpu.memory_space<smem>>
    %767 = vector.broadcast %766 : f32 to vector<2x222xf32>
    %768 = arith.mulf %765, %767 : vector<2x222xf32>
    %769 = arith.addf %764, %768 : vector<2x222xf32>
    %770 = vector.extract_strided_slice %48 {offsets = [0, 16], sizes = [2, 222], strides = [1, 1]} : vector<2x256xf32> to vector<2x222xf32>
    %c59 = arith.constant 59 : index
    %771 = memref.load %arg1[%c59] : memref<304xf32, #tpu.memory_space<smem>>
    %772 = vector.broadcast %771 : f32 to vector<2x222xf32>
    %773 = arith.mulf %770, %772 : vector<2x222xf32>
    %774 = arith.addf %769, %773 : vector<2x222xf32>
    %775 = vector.extract_strided_slice %50 {offsets = [0, 16], sizes = [2, 222], strides = [1, 1]} : vector<2x256xf32> to vector<2x222xf32>
    %c63 = arith.constant 63 : index
    %776 = memref.load %arg1[%c63] : memref<304xf32, #tpu.memory_space<smem>>
    %777 = vector.broadcast %776 : f32 to vector<2x222xf32>
    %778 = arith.mulf %775, %777 : vector<2x222xf32>
    %779 = arith.addf %774, %778 : vector<2x222xf32>
    %780 = vector.extract_strided_slice %44 {offsets = [0, 17], sizes = [2, 222], strides = [1, 1]} : vector<2x256xf32> to vector<2x222xf32>
    %c67 = arith.constant 67 : index
    %781 = memref.load %arg1[%c67] : memref<304xf32, #tpu.memory_space<smem>>
    %782 = vector.broadcast %781 : f32 to vector<2x222xf32>
    %783 = arith.mulf %780, %782 : vector<2x222xf32>
    %784 = arith.addf %779, %783 : vector<2x222xf32>
    %785 = vector.extract_strided_slice %46 {offsets = [0, 17], sizes = [2, 222], strides = [1, 1]} : vector<2x256xf32> to vector<2x222xf32>
    %c71 = arith.constant 71 : index
    %786 = memref.load %arg1[%c71] : memref<304xf32, #tpu.memory_space<smem>>
    %787 = vector.broadcast %786 : f32 to vector<2x222xf32>
    %788 = arith.mulf %785, %787 : vector<2x222xf32>
    %789 = arith.addf %784, %788 : vector<2x222xf32>
    %790 = vector.extract_strided_slice %48 {offsets = [0, 17], sizes = [2, 222], strides = [1, 1]} : vector<2x256xf32> to vector<2x222xf32>
    %c75 = arith.constant 75 : index
    %791 = memref.load %arg1[%c75] : memref<304xf32, #tpu.memory_space<smem>>
    %792 = vector.broadcast %791 : f32 to vector<2x222xf32>
    %793 = arith.mulf %790, %792 : vector<2x222xf32>
    %794 = arith.addf %789, %793 : vector<2x222xf32>
    %795 = vector.extract_strided_slice %50 {offsets = [0, 17], sizes = [2, 222], strides = [1, 1]} : vector<2x256xf32> to vector<2x222xf32>
    %c79 = arith.constant 79 : index
    %796 = memref.load %arg1[%c79] : memref<304xf32, #tpu.memory_space<smem>>
    %797 = vector.broadcast %796 : f32 to vector<2x222xf32>
    %798 = arith.mulf %795, %797 : vector<2x222xf32>
    %799 = arith.addf %794, %798 : vector<2x222xf32>
    %800 = vector.extract_strided_slice %44 {offsets = [0, 18], sizes = [2, 222], strides = [1, 1]} : vector<2x256xf32> to vector<2x222xf32>
    %c83 = arith.constant 83 : index
    %801 = memref.load %arg1[%c83] : memref<304xf32, #tpu.memory_space<smem>>
    %802 = vector.broadcast %801 : f32 to vector<2x222xf32>
    %803 = arith.mulf %800, %802 : vector<2x222xf32>
    %804 = arith.addf %799, %803 : vector<2x222xf32>
    %805 = vector.extract_strided_slice %46 {offsets = [0, 18], sizes = [2, 222], strides = [1, 1]} : vector<2x256xf32> to vector<2x222xf32>
    %c87 = arith.constant 87 : index
    %806 = memref.load %arg1[%c87] : memref<304xf32, #tpu.memory_space<smem>>
    %807 = vector.broadcast %806 : f32 to vector<2x222xf32>
    %808 = arith.mulf %805, %807 : vector<2x222xf32>
    %809 = arith.addf %804, %808 : vector<2x222xf32>
    %810 = vector.extract_strided_slice %48 {offsets = [0, 18], sizes = [2, 222], strides = [1, 1]} : vector<2x256xf32> to vector<2x222xf32>
    %c91 = arith.constant 91 : index
    %811 = memref.load %arg1[%c91] : memref<304xf32, #tpu.memory_space<smem>>
    %812 = vector.broadcast %811 : f32 to vector<2x222xf32>
    %813 = arith.mulf %810, %812 : vector<2x222xf32>
    %814 = arith.addf %809, %813 : vector<2x222xf32>
    %815 = vector.extract_strided_slice %50 {offsets = [0, 18], sizes = [2, 222], strides = [1, 1]} : vector<2x256xf32> to vector<2x222xf32>
    %c95 = arith.constant 95 : index
    %816 = memref.load %arg1[%c95] : memref<304xf32, #tpu.memory_space<smem>>
    %817 = vector.broadcast %816 : f32 to vector<2x222xf32>
    %818 = arith.mulf %815, %817 : vector<2x222xf32>
    %819 = arith.addf %814, %818 : vector<2x222xf32>
    %820 = vector.extract_strided_slice %44 {offsets = [0, 32], sizes = [2, 222], strides = [1, 1]} : vector<2x256xf32> to vector<2x222xf32>
    %c99 = arith.constant 99 : index
    %821 = memref.load %arg1[%c99] : memref<304xf32, #tpu.memory_space<smem>>
    %822 = vector.broadcast %821 : f32 to vector<2x222xf32>
    %823 = arith.mulf %820, %822 : vector<2x222xf32>
    %824 = arith.addf %819, %823 : vector<2x222xf32>
    %825 = vector.extract_strided_slice %46 {offsets = [0, 32], sizes = [2, 222], strides = [1, 1]} : vector<2x256xf32> to vector<2x222xf32>
    %c103 = arith.constant 103 : index
    %826 = memref.load %arg1[%c103] : memref<304xf32, #tpu.memory_space<smem>>
    %827 = vector.broadcast %826 : f32 to vector<2x222xf32>
    %828 = arith.mulf %825, %827 : vector<2x222xf32>
    %829 = arith.addf %824, %828 : vector<2x222xf32>
    %830 = vector.extract_strided_slice %48 {offsets = [0, 32], sizes = [2, 222], strides = [1, 1]} : vector<2x256xf32> to vector<2x222xf32>
    %c107 = arith.constant 107 : index
    %831 = memref.load %arg1[%c107] : memref<304xf32, #tpu.memory_space<smem>>
    %832 = vector.broadcast %831 : f32 to vector<2x222xf32>
    %833 = arith.mulf %830, %832 : vector<2x222xf32>
    %834 = arith.addf %829, %833 : vector<2x222xf32>
    %835 = vector.extract_strided_slice %50 {offsets = [0, 32], sizes = [2, 222], strides = [1, 1]} : vector<2x256xf32> to vector<2x222xf32>
    %c111 = arith.constant 111 : index
    %836 = memref.load %arg1[%c111] : memref<304xf32, #tpu.memory_space<smem>>
    %837 = vector.broadcast %836 : f32 to vector<2x222xf32>
    %838 = arith.mulf %835, %837 : vector<2x222xf32>
    %839 = arith.addf %834, %838 : vector<2x222xf32>
    %840 = vector.extract_strided_slice %44 {offsets = [0, 33], sizes = [2, 222], strides = [1, 1]} : vector<2x256xf32> to vector<2x222xf32>
    %c115 = arith.constant 115 : index
    %841 = memref.load %arg1[%c115] : memref<304xf32, #tpu.memory_space<smem>>
    %842 = vector.broadcast %841 : f32 to vector<2x222xf32>
    %843 = arith.mulf %840, %842 : vector<2x222xf32>
    %844 = arith.addf %839, %843 : vector<2x222xf32>
    %845 = vector.extract_strided_slice %46 {offsets = [0, 33], sizes = [2, 222], strides = [1, 1]} : vector<2x256xf32> to vector<2x222xf32>
    %c119 = arith.constant 119 : index
    %846 = memref.load %arg1[%c119] : memref<304xf32, #tpu.memory_space<smem>>
    %847 = vector.broadcast %846 : f32 to vector<2x222xf32>
    %848 = arith.mulf %845, %847 : vector<2x222xf32>
    %849 = arith.addf %844, %848 : vector<2x222xf32>
    %850 = vector.extract_strided_slice %48 {offsets = [0, 33], sizes = [2, 222], strides = [1, 1]} : vector<2x256xf32> to vector<2x222xf32>
    %c123 = arith.constant 123 : index
    %851 = memref.load %arg1[%c123] : memref<304xf32, #tpu.memory_space<smem>>
    %852 = vector.broadcast %851 : f32 to vector<2x222xf32>
    %853 = arith.mulf %850, %852 : vector<2x222xf32>
    %854 = arith.addf %849, %853 : vector<2x222xf32>
    %855 = vector.extract_strided_slice %50 {offsets = [0, 33], sizes = [2, 222], strides = [1, 1]} : vector<2x256xf32> to vector<2x222xf32>
    %c127 = arith.constant 127 : index
    %856 = memref.load %arg1[%c127] : memref<304xf32, #tpu.memory_space<smem>>
    %857 = vector.broadcast %856 : f32 to vector<2x222xf32>
    %858 = arith.mulf %855, %857 : vector<2x222xf32>
    %859 = arith.addf %854, %858 : vector<2x222xf32>
    %860 = vector.extract_strided_slice %44 {offsets = [0, 34], sizes = [2, 222], strides = [1, 1]} : vector<2x256xf32> to vector<2x222xf32>
    %c131 = arith.constant 131 : index
    %861 = memref.load %arg1[%c131] : memref<304xf32, #tpu.memory_space<smem>>
    %862 = vector.broadcast %861 : f32 to vector<2x222xf32>
    %863 = arith.mulf %860, %862 : vector<2x222xf32>
    %864 = arith.addf %859, %863 : vector<2x222xf32>
    %865 = vector.extract_strided_slice %46 {offsets = [0, 34], sizes = [2, 222], strides = [1, 1]} : vector<2x256xf32> to vector<2x222xf32>
    %c135 = arith.constant 135 : index
    %866 = memref.load %arg1[%c135] : memref<304xf32, #tpu.memory_space<smem>>
    %867 = vector.broadcast %866 : f32 to vector<2x222xf32>
    %868 = arith.mulf %865, %867 : vector<2x222xf32>
    %869 = arith.addf %864, %868 : vector<2x222xf32>
    %870 = vector.extract_strided_slice %48 {offsets = [0, 34], sizes = [2, 222], strides = [1, 1]} : vector<2x256xf32> to vector<2x222xf32>
    %c139 = arith.constant 139 : index
    %871 = memref.load %arg1[%c139] : memref<304xf32, #tpu.memory_space<smem>>
    %872 = vector.broadcast %871 : f32 to vector<2x222xf32>
    %873 = arith.mulf %870, %872 : vector<2x222xf32>
    %874 = arith.addf %869, %873 : vector<2x222xf32>
    %875 = vector.extract_strided_slice %50 {offsets = [0, 34], sizes = [2, 222], strides = [1, 1]} : vector<2x256xf32> to vector<2x222xf32>
    %c143 = arith.constant 143 : index
    %876 = memref.load %arg1[%c143] : memref<304xf32, #tpu.memory_space<smem>>
    %877 = vector.broadcast %876 : f32 to vector<2x222xf32>
    %878 = arith.mulf %875, %877 : vector<2x222xf32>
    %879 = arith.addf %874, %878 : vector<2x222xf32>
    %c291 = arith.constant 291 : index
    %880 = memref.load %arg1[%c291] : memref<304xf32, #tpu.memory_space<smem>>
    %c295 = arith.constant 295 : index
    %881 = memref.load %arg1[%c295] : memref<304xf32, #tpu.memory_space<smem>>
    %882 = vector.broadcast %20 : vector<1x222xf32> to vector<2x222xf32>
    %883 = arith.mulf %879, %882 : vector<2x222xf32>
    %cst_39 = arith.constant dense<0.000000e+00> : vector<2xf32>
    %884 = vector.multi_reduction <add>, %883, %cst_39 [1] : vector<2x222xf32> to vector<2xf32>
    %885 = vector.shape_cast %884 : vector<2xf32> to vector<2x1xf32>
    %cst_40 = arith.constant dense<0.000000e+00> : vector<1xf32>
    %886 = vector.multi_reduction <add>, %885, %cst_40 [0] : vector<2x1xf32> to vector<1xf32>
    %887 = vector.shape_cast %886 : vector<1xf32> to vector<1x1xf32>
    %cst_41 = arith.constant 0.00255102036 : f32
    %888 = vector.broadcast %cst_41 : f32 to vector<1x1xf32>
    %889 = arith.mulf %887, %888 : vector<1x1xf32>
    %890 = vector.broadcast %889 : vector<1x1xf32> to vector<2x222xf32>
    %891 = arith.subf %879, %890 : vector<2x222xf32>
    %892 = vector.broadcast %20 : vector<1x222xf32> to vector<2x222xf32>
    %893 = arith.mulf %891, %892 : vector<2x222xf32>
    %894 = arith.mulf %893, %893 : vector<2x222xf32>
    %cst_42 = arith.constant dense<0.000000e+00> : vector<2xf32>
    %895 = vector.multi_reduction <add>, %894, %cst_42 [1] : vector<2x222xf32> to vector<2xf32>
    %896 = vector.shape_cast %895 : vector<2xf32> to vector<2x1xf32>
    %cst_43 = arith.constant dense<0.000000e+00> : vector<1xf32>
    %897 = vector.multi_reduction <add>, %896, %cst_43 [0] : vector<2x1xf32> to vector<1xf32>
    %898 = vector.shape_cast %897 : vector<1xf32> to vector<1x1xf32>
    %cst_44 = arith.constant 0.00255102036 : f32
    %899 = vector.broadcast %cst_44 : f32 to vector<1x1xf32>
    %900 = arith.mulf %898, %899 : vector<1x1xf32>
    %cst_45 = arith.constant 9.99999974E-6 : f32
    %901 = vector.broadcast %cst_45 : f32 to vector<1x1xf32>
    %902 = arith.addf %900, %901 : vector<1x1xf32>
    %903 = math.rsqrt %902 : vector<1x1xf32>
    %904 = vector.broadcast %880 : f32 to vector<1x1xf32>
    %905 = arith.mulf %904, %903 : vector<1x1xf32>
    %906 = arith.mulf %889, %905 : vector<1x1xf32>
    %907 = vector.broadcast %881 : f32 to vector<1x1xf32>
    %908 = arith.subf %907, %906 : vector<1x1xf32>
    %909 = vector.broadcast %905 : vector<1x1xf32> to vector<2x222xf32>
    %910 = arith.mulf %879, %909 : vector<2x222xf32>
    %911 = vector.broadcast %908 : vector<1x1xf32> to vector<2x222xf32>
    %912 = arith.addf %910, %911 : vector<2x222xf32>
    %cst_46 = arith.constant 0.000000e+00 : f32
    %913 = vector.broadcast %cst_46 : f32 to vector<2x222xf32>
    %914 = arith.maximumf %912, %913 : vector<2x222xf32>
    %cst_47 = arith.constant 0.000000e+00 : f32
    %915 = vector.broadcast %cst_47 : f32 to vector<2x188xf32>
    %916 = vector.extract_strided_slice %266 {offsets = [0, 0], sizes = [2, 188], strides = [1, 1]} : vector<2x222xf32> to vector<2x188xf32>
    %c144 = arith.constant 144 : index
    %917 = memref.load %arg1[%c144] : memref<304xf32, #tpu.memory_space<smem>>
    %918 = vector.broadcast %917 : f32 to vector<2x188xf32>
    %919 = arith.mulf %916, %918 : vector<2x188xf32>
    %920 = arith.addf %915, %919 : vector<2x188xf32>
    %921 = vector.extract_strided_slice %482 {offsets = [0, 0], sizes = [2, 188], strides = [1, 1]} : vector<2x222xf32> to vector<2x188xf32>
    %c148 = arith.constant 148 : index
    %922 = memref.load %arg1[%c148] : memref<304xf32, #tpu.memory_space<smem>>
    %923 = vector.broadcast %922 : f32 to vector<2x188xf32>
    %924 = arith.mulf %921, %923 : vector<2x188xf32>
    %925 = arith.addf %920, %924 : vector<2x188xf32>
    %926 = vector.extract_strided_slice %698 {offsets = [0, 0], sizes = [2, 188], strides = [1, 1]} : vector<2x222xf32> to vector<2x188xf32>
    %c152 = arith.constant 152 : index
    %927 = memref.load %arg1[%c152] : memref<304xf32, #tpu.memory_space<smem>>
    %928 = vector.broadcast %927 : f32 to vector<2x188xf32>
    %929 = arith.mulf %926, %928 : vector<2x188xf32>
    %930 = arith.addf %925, %929 : vector<2x188xf32>
    %931 = vector.extract_strided_slice %914 {offsets = [0, 0], sizes = [2, 188], strides = [1, 1]} : vector<2x222xf32> to vector<2x188xf32>
    %c156 = arith.constant 156 : index
    %932 = memref.load %arg1[%c156] : memref<304xf32, #tpu.memory_space<smem>>
    %933 = vector.broadcast %932 : f32 to vector<2x188xf32>
    %934 = arith.mulf %931, %933 : vector<2x188xf32>
    %935 = arith.addf %930, %934 : vector<2x188xf32>
    %936 = vector.extract_strided_slice %266 {offsets = [0, 1], sizes = [2, 188], strides = [1, 1]} : vector<2x222xf32> to vector<2x188xf32>
    %c160 = arith.constant 160 : index
    %937 = memref.load %arg1[%c160] : memref<304xf32, #tpu.memory_space<smem>>
    %938 = vector.broadcast %937 : f32 to vector<2x188xf32>
    %939 = arith.mulf %936, %938 : vector<2x188xf32>
    %940 = arith.addf %935, %939 : vector<2x188xf32>
    %941 = vector.extract_strided_slice %482 {offsets = [0, 1], sizes = [2, 188], strides = [1, 1]} : vector<2x222xf32> to vector<2x188xf32>
    %c164 = arith.constant 164 : index
    %942 = memref.load %arg1[%c164] : memref<304xf32, #tpu.memory_space<smem>>
    %943 = vector.broadcast %942 : f32 to vector<2x188xf32>
    %944 = arith.mulf %941, %943 : vector<2x188xf32>
    %945 = arith.addf %940, %944 : vector<2x188xf32>
    %946 = vector.extract_strided_slice %698 {offsets = [0, 1], sizes = [2, 188], strides = [1, 1]} : vector<2x222xf32> to vector<2x188xf32>
    %c168 = arith.constant 168 : index
    %947 = memref.load %arg1[%c168] : memref<304xf32, #tpu.memory_space<smem>>
    %948 = vector.broadcast %947 : f32 to vector<2x188xf32>
    %949 = arith.mulf %946, %948 : vector<2x188xf32>
    %950 = arith.addf %945, %949 : vector<2x188xf32>
    %951 = vector.extract_strided_slice %914 {offsets = [0, 1], sizes = [2, 188], strides = [1, 1]} : vector<2x222xf32> to vector<2x188xf32>
    %c172 = arith.constant 172 : index
    %952 = memref.load %arg1[%c172] : memref<304xf32, #tpu.memory_space<smem>>
    %953 = vector.broadcast %952 : f32 to vector<2x188xf32>
    %954 = arith.mulf %951, %953 : vector<2x188xf32>
    %955 = arith.addf %950, %954 : vector<2x188xf32>
    %956 = vector.extract_strided_slice %266 {offsets = [0, 2], sizes = [2, 188], strides = [1, 1]} : vector<2x222xf32> to vector<2x188xf32>
    %c176 = arith.constant 176 : index
    %957 = memref.load %arg1[%c176] : memref<304xf32, #tpu.memory_space<smem>>
    %958 = vector.broadcast %957 : f32 to vector<2x188xf32>
    %959 = arith.mulf %956, %958 : vector<2x188xf32>
    %960 = arith.addf %955, %959 : vector<2x188xf32>
    %961 = vector.extract_strided_slice %482 {offsets = [0, 2], sizes = [2, 188], strides = [1, 1]} : vector<2x222xf32> to vector<2x188xf32>
    %c180 = arith.constant 180 : index
    %962 = memref.load %arg1[%c180] : memref<304xf32, #tpu.memory_space<smem>>
    %963 = vector.broadcast %962 : f32 to vector<2x188xf32>
    %964 = arith.mulf %961, %963 : vector<2x188xf32>
    %965 = arith.addf %960, %964 : vector<2x188xf32>
    %966 = vector.extract_strided_slice %698 {offsets = [0, 2], sizes = [2, 188], strides = [1, 1]} : vector<2x222xf32> to vector<2x188xf32>
    %c184 = arith.constant 184 : index
    %967 = memref.load %arg1[%c184] : memref<304xf32, #tpu.memory_space<smem>>
    %968 = vector.broadcast %967 : f32 to vector<2x188xf32>
    %969 = arith.mulf %966, %968 : vector<2x188xf32>
    %970 = arith.addf %965, %969 : vector<2x188xf32>
    %971 = vector.extract_strided_slice %914 {offsets = [0, 2], sizes = [2, 188], strides = [1, 1]} : vector<2x222xf32> to vector<2x188xf32>
    %c188 = arith.constant 188 : index
    %972 = memref.load %arg1[%c188] : memref<304xf32, #tpu.memory_space<smem>>
    %973 = vector.broadcast %972 : f32 to vector<2x188xf32>
    %974 = arith.mulf %971, %973 : vector<2x188xf32>
    %975 = arith.addf %970, %974 : vector<2x188xf32>
    %976 = vector.extract_strided_slice %266 {offsets = [0, 16], sizes = [2, 188], strides = [1, 1]} : vector<2x222xf32> to vector<2x188xf32>
    %c192 = arith.constant 192 : index
    %977 = memref.load %arg1[%c192] : memref<304xf32, #tpu.memory_space<smem>>
    %978 = vector.broadcast %977 : f32 to vector<2x188xf32>
    %979 = arith.mulf %976, %978 : vector<2x188xf32>
    %980 = arith.addf %975, %979 : vector<2x188xf32>
    %981 = vector.extract_strided_slice %482 {offsets = [0, 16], sizes = [2, 188], strides = [1, 1]} : vector<2x222xf32> to vector<2x188xf32>
    %c196 = arith.constant 196 : index
    %982 = memref.load %arg1[%c196] : memref<304xf32, #tpu.memory_space<smem>>
    %983 = vector.broadcast %982 : f32 to vector<2x188xf32>
    %984 = arith.mulf %981, %983 : vector<2x188xf32>
    %985 = arith.addf %980, %984 : vector<2x188xf32>
    %986 = vector.extract_strided_slice %698 {offsets = [0, 16], sizes = [2, 188], strides = [1, 1]} : vector<2x222xf32> to vector<2x188xf32>
    %c200 = arith.constant 200 : index
    %987 = memref.load %arg1[%c200] : memref<304xf32, #tpu.memory_space<smem>>
    %988 = vector.broadcast %987 : f32 to vector<2x188xf32>
    %989 = arith.mulf %986, %988 : vector<2x188xf32>
    %990 = arith.addf %985, %989 : vector<2x188xf32>
    %991 = vector.extract_strided_slice %914 {offsets = [0, 16], sizes = [2, 188], strides = [1, 1]} : vector<2x222xf32> to vector<2x188xf32>
    %c204 = arith.constant 204 : index
    %992 = memref.load %arg1[%c204] : memref<304xf32, #tpu.memory_space<smem>>
    %993 = vector.broadcast %992 : f32 to vector<2x188xf32>
    %994 = arith.mulf %991, %993 : vector<2x188xf32>
    %995 = arith.addf %990, %994 : vector<2x188xf32>
    %996 = vector.extract_strided_slice %266 {offsets = [0, 17], sizes = [2, 188], strides = [1, 1]} : vector<2x222xf32> to vector<2x188xf32>
    %c208 = arith.constant 208 : index
    %997 = memref.load %arg1[%c208] : memref<304xf32, #tpu.memory_space<smem>>
    %998 = vector.broadcast %997 : f32 to vector<2x188xf32>
    %999 = arith.mulf %996, %998 : vector<2x188xf32>
    %1000 = arith.addf %995, %999 : vector<2x188xf32>
    %1001 = vector.extract_strided_slice %482 {offsets = [0, 17], sizes = [2, 188], strides = [1, 1]} : vector<2x222xf32> to vector<2x188xf32>
    %c212 = arith.constant 212 : index
    %1002 = memref.load %arg1[%c212] : memref<304xf32, #tpu.memory_space<smem>>
    %1003 = vector.broadcast %1002 : f32 to vector<2x188xf32>
    %1004 = arith.mulf %1001, %1003 : vector<2x188xf32>
    %1005 = arith.addf %1000, %1004 : vector<2x188xf32>
    %1006 = vector.extract_strided_slice %698 {offsets = [0, 17], sizes = [2, 188], strides = [1, 1]} : vector<2x222xf32> to vector<2x188xf32>
    %c216 = arith.constant 216 : index
    %1007 = memref.load %arg1[%c216] : memref<304xf32, #tpu.memory_space<smem>>
    %1008 = vector.broadcast %1007 : f32 to vector<2x188xf32>
    %1009 = arith.mulf %1006, %1008 : vector<2x188xf32>
    %1010 = arith.addf %1005, %1009 : vector<2x188xf32>
    %1011 = vector.extract_strided_slice %914 {offsets = [0, 17], sizes = [2, 188], strides = [1, 1]} : vector<2x222xf32> to vector<2x188xf32>
    %c220 = arith.constant 220 : index
    %1012 = memref.load %arg1[%c220] : memref<304xf32, #tpu.memory_space<smem>>
    %1013 = vector.broadcast %1012 : f32 to vector<2x188xf32>
    %1014 = arith.mulf %1011, %1013 : vector<2x188xf32>
    %1015 = arith.addf %1010, %1014 : vector<2x188xf32>
    %1016 = vector.extract_strided_slice %266 {offsets = [0, 18], sizes = [2, 188], strides = [1, 1]} : vector<2x222xf32> to vector<2x188xf32>
    %c224 = arith.constant 224 : index
    %1017 = memref.load %arg1[%c224] : memref<304xf32, #tpu.memory_space<smem>>
    %1018 = vector.broadcast %1017 : f32 to vector<2x188xf32>
    %1019 = arith.mulf %1016, %1018 : vector<2x188xf32>
    %1020 = arith.addf %1015, %1019 : vector<2x188xf32>
    %1021 = vector.extract_strided_slice %482 {offsets = [0, 18], sizes = [2, 188], strides = [1, 1]} : vector<2x222xf32> to vector<2x188xf32>
    %c228 = arith.constant 228 : index
    %1022 = memref.load %arg1[%c228] : memref<304xf32, #tpu.memory_space<smem>>
    %1023 = vector.broadcast %1022 : f32 to vector<2x188xf32>
    %1024 = arith.mulf %1021, %1023 : vector<2x188xf32>
    %1025 = arith.addf %1020, %1024 : vector<2x188xf32>
    %1026 = vector.extract_strided_slice %698 {offsets = [0, 18], sizes = [2, 188], strides = [1, 1]} : vector<2x222xf32> to vector<2x188xf32>
    %c232 = arith.constant 232 : index
    %1027 = memref.load %arg1[%c232] : memref<304xf32, #tpu.memory_space<smem>>
    %1028 = vector.broadcast %1027 : f32 to vector<2x188xf32>
    %1029 = arith.mulf %1026, %1028 : vector<2x188xf32>
    %1030 = arith.addf %1025, %1029 : vector<2x188xf32>
    %1031 = vector.extract_strided_slice %914 {offsets = [0, 18], sizes = [2, 188], strides = [1, 1]} : vector<2x222xf32> to vector<2x188xf32>
    %c236 = arith.constant 236 : index
    %1032 = memref.load %arg1[%c236] : memref<304xf32, #tpu.memory_space<smem>>
    %1033 = vector.broadcast %1032 : f32 to vector<2x188xf32>
    %1034 = arith.mulf %1031, %1033 : vector<2x188xf32>
    %1035 = arith.addf %1030, %1034 : vector<2x188xf32>
    %1036 = vector.extract_strided_slice %266 {offsets = [0, 32], sizes = [2, 188], strides = [1, 1]} : vector<2x222xf32> to vector<2x188xf32>
    %c240 = arith.constant 240 : index
    %1037 = memref.load %arg1[%c240] : memref<304xf32, #tpu.memory_space<smem>>
    %1038 = vector.broadcast %1037 : f32 to vector<2x188xf32>
    %1039 = arith.mulf %1036, %1038 : vector<2x188xf32>
    %1040 = arith.addf %1035, %1039 : vector<2x188xf32>
    %1041 = vector.extract_strided_slice %482 {offsets = [0, 32], sizes = [2, 188], strides = [1, 1]} : vector<2x222xf32> to vector<2x188xf32>
    %c244 = arith.constant 244 : index
    %1042 = memref.load %arg1[%c244] : memref<304xf32, #tpu.memory_space<smem>>
    %1043 = vector.broadcast %1042 : f32 to vector<2x188xf32>
    %1044 = arith.mulf %1041, %1043 : vector<2x188xf32>
    %1045 = arith.addf %1040, %1044 : vector<2x188xf32>
    %1046 = vector.extract_strided_slice %698 {offsets = [0, 32], sizes = [2, 188], strides = [1, 1]} : vector<2x222xf32> to vector<2x188xf32>
    %c248 = arith.constant 248 : index
    %1047 = memref.load %arg1[%c248] : memref<304xf32, #tpu.memory_space<smem>>
    %1048 = vector.broadcast %1047 : f32 to vector<2x188xf32>
    %1049 = arith.mulf %1046, %1048 : vector<2x188xf32>
    %1050 = arith.addf %1045, %1049 : vector<2x188xf32>
    %1051 = vector.extract_strided_slice %914 {offsets = [0, 32], sizes = [2, 188], strides = [1, 1]} : vector<2x222xf32> to vector<2x188xf32>
    %c252 = arith.constant 252 : index
    %1052 = memref.load %arg1[%c252] : memref<304xf32, #tpu.memory_space<smem>>
    %1053 = vector.broadcast %1052 : f32 to vector<2x188xf32>
    %1054 = arith.mulf %1051, %1053 : vector<2x188xf32>
    %1055 = arith.addf %1050, %1054 : vector<2x188xf32>
    %1056 = vector.extract_strided_slice %266 {offsets = [0, 33], sizes = [2, 188], strides = [1, 1]} : vector<2x222xf32> to vector<2x188xf32>
    %c256 = arith.constant 256 : index
    %1057 = memref.load %arg1[%c256] : memref<304xf32, #tpu.memory_space<smem>>
    %1058 = vector.broadcast %1057 : f32 to vector<2x188xf32>
    %1059 = arith.mulf %1056, %1058 : vector<2x188xf32>
    %1060 = arith.addf %1055, %1059 : vector<2x188xf32>
    %1061 = vector.extract_strided_slice %482 {offsets = [0, 33], sizes = [2, 188], strides = [1, 1]} : vector<2x222xf32> to vector<2x188xf32>
    %c260 = arith.constant 260 : index
    %1062 = memref.load %arg1[%c260] : memref<304xf32, #tpu.memory_space<smem>>
    %1063 = vector.broadcast %1062 : f32 to vector<2x188xf32>
    %1064 = arith.mulf %1061, %1063 : vector<2x188xf32>
    %1065 = arith.addf %1060, %1064 : vector<2x188xf32>
    %1066 = vector.extract_strided_slice %698 {offsets = [0, 33], sizes = [2, 188], strides = [1, 1]} : vector<2x222xf32> to vector<2x188xf32>
    %c264 = arith.constant 264 : index
    %1067 = memref.load %arg1[%c264] : memref<304xf32, #tpu.memory_space<smem>>
    %1068 = vector.broadcast %1067 : f32 to vector<2x188xf32>
    %1069 = arith.mulf %1066, %1068 : vector<2x188xf32>
    %1070 = arith.addf %1065, %1069 : vector<2x188xf32>
    %1071 = vector.extract_strided_slice %914 {offsets = [0, 33], sizes = [2, 188], strides = [1, 1]} : vector<2x222xf32> to vector<2x188xf32>
    %c268 = arith.constant 268 : index
    %1072 = memref.load %arg1[%c268] : memref<304xf32, #tpu.memory_space<smem>>
    %1073 = vector.broadcast %1072 : f32 to vector<2x188xf32>
    %1074 = arith.mulf %1071, %1073 : vector<2x188xf32>
    %1075 = arith.addf %1070, %1074 : vector<2x188xf32>
    %1076 = vector.extract_strided_slice %266 {offsets = [0, 34], sizes = [2, 188], strides = [1, 1]} : vector<2x222xf32> to vector<2x188xf32>
    %c272 = arith.constant 272 : index
    %1077 = memref.load %arg1[%c272] : memref<304xf32, #tpu.memory_space<smem>>
    %1078 = vector.broadcast %1077 : f32 to vector<2x188xf32>
    %1079 = arith.mulf %1076, %1078 : vector<2x188xf32>
    %1080 = arith.addf %1075, %1079 : vector<2x188xf32>
    %1081 = vector.extract_strided_slice %482 {offsets = [0, 34], sizes = [2, 188], strides = [1, 1]} : vector<2x222xf32> to vector<2x188xf32>
    %c276 = arith.constant 276 : index
    %1082 = memref.load %arg1[%c276] : memref<304xf32, #tpu.memory_space<smem>>
    %1083 = vector.broadcast %1082 : f32 to vector<2x188xf32>
    %1084 = arith.mulf %1081, %1083 : vector<2x188xf32>
    %1085 = arith.addf %1080, %1084 : vector<2x188xf32>
    %1086 = vector.extract_strided_slice %698 {offsets = [0, 34], sizes = [2, 188], strides = [1, 1]} : vector<2x222xf32> to vector<2x188xf32>
    %c280 = arith.constant 280 : index
    %1087 = memref.load %arg1[%c280] : memref<304xf32, #tpu.memory_space<smem>>
    %1088 = vector.broadcast %1087 : f32 to vector<2x188xf32>
    %1089 = arith.mulf %1086, %1088 : vector<2x188xf32>
    %1090 = arith.addf %1085, %1089 : vector<2x188xf32>
    %1091 = vector.extract_strided_slice %914 {offsets = [0, 34], sizes = [2, 188], strides = [1, 1]} : vector<2x222xf32> to vector<2x188xf32>
    %c284 = arith.constant 284 : index
    %1092 = memref.load %arg1[%c284] : memref<304xf32, #tpu.memory_space<smem>>
    %1093 = vector.broadcast %1092 : f32 to vector<2x188xf32>
    %1094 = arith.mulf %1091, %1093 : vector<2x188xf32>
    %1095 = arith.addf %1090, %1094 : vector<2x188xf32>
    %c296 = arith.constant 296 : index
    %1096 = memref.load %arg1[%c296] : memref<304xf32, #tpu.memory_space<smem>>
    %c300 = arith.constant 300 : index
    %1097 = memref.load %arg1[%c300] : memref<304xf32, #tpu.memory_space<smem>>
    %1098 = vector.broadcast %41 : vector<1x188xf32> to vector<2x188xf32>
    %1099 = arith.mulf %1095, %1098 : vector<2x188xf32>
    %cst_48 = arith.constant dense<0.000000e+00> : vector<2xf32>
    %1100 = vector.multi_reduction <add>, %1099, %cst_48 [1] : vector<2x188xf32> to vector<2xf32>
    %1101 = vector.shape_cast %1100 : vector<2xf32> to vector<2x1xf32>
    %cst_49 = arith.constant dense<0.000000e+00> : vector<1xf32>
    %1102 = vector.multi_reduction <add>, %1101, %cst_49 [0] : vector<2x1xf32> to vector<1xf32>
    %1103 = vector.shape_cast %1102 : vector<1xf32> to vector<1x1xf32>
    %cst_50 = arith.constant 0.00347222225 : f32
    %1104 = vector.broadcast %cst_50 : f32 to vector<1x1xf32>
    %1105 = arith.mulf %1103, %1104 : vector<1x1xf32>
    %1106 = vector.broadcast %1105 : vector<1x1xf32> to vector<2x188xf32>
    %1107 = arith.subf %1095, %1106 : vector<2x188xf32>
    %1108 = vector.broadcast %41 : vector<1x188xf32> to vector<2x188xf32>
    %1109 = arith.mulf %1107, %1108 : vector<2x188xf32>
    %1110 = arith.mulf %1109, %1109 : vector<2x188xf32>
    %cst_51 = arith.constant dense<0.000000e+00> : vector<2xf32>
    %1111 = vector.multi_reduction <add>, %1110, %cst_51 [1] : vector<2x188xf32> to vector<2xf32>
    %1112 = vector.shape_cast %1111 : vector<2xf32> to vector<2x1xf32>
    %cst_52 = arith.constant dense<0.000000e+00> : vector<1xf32>
    %1113 = vector.multi_reduction <add>, %1112, %cst_52 [0] : vector<2x1xf32> to vector<1xf32>
    %1114 = vector.shape_cast %1113 : vector<1xf32> to vector<1x1xf32>
    %cst_53 = arith.constant 0.00347222225 : f32
    %1115 = vector.broadcast %cst_53 : f32 to vector<1x1xf32>
    %1116 = arith.mulf %1114, %1115 : vector<1x1xf32>
    %cst_54 = arith.constant 9.99999974E-6 : f32
    %1117 = vector.broadcast %cst_54 : f32 to vector<1x1xf32>
    %1118 = arith.addf %1116, %1117 : vector<1x1xf32>
    %1119 = math.rsqrt %1118 : vector<1x1xf32>
    %1120 = vector.broadcast %1096 : f32 to vector<1x1xf32>
    %1121 = arith.mulf %1120, %1119 : vector<1x1xf32>
    %1122 = arith.mulf %1105, %1121 : vector<1x1xf32>
    %1123 = vector.broadcast %1097 : f32 to vector<1x1xf32>
    %1124 = arith.subf %1123, %1122 : vector<1x1xf32>
    %1125 = vector.broadcast %1121 : vector<1x1xf32> to vector<2x188xf32>
    %1126 = arith.mulf %1095, %1125 : vector<2x188xf32>
    %1127 = vector.broadcast %1124 : vector<1x1xf32> to vector<2x188xf32>
    %1128 = arith.addf %1126, %1127 : vector<2x188xf32>
    %1129 = vector.extract_strided_slice %44 {offsets = [0, 34], sizes = [2, 188], strides = [1, 1]} : vector<2x256xf32> to vector<2x188xf32>
    %1130 = arith.addf %1128, %1129 : vector<2x188xf32>
    %c0_55 = arith.constant 0 : index
    %c0_56 = arith.constant 0 : index
    %c0_57 = arith.constant 0 : index
    %1131 = vector.load %arg2[%c0_55, %c0_56, %c0_57] : memref<4x2x188xf32, #tpu.memory_space<vmem>>, vector<1x2x188xf32>
    %1132 = vector.shape_cast %1131 : vector<1x2x188xf32> to vector<2x188xf32>
    %1133 = vector.shape_cast %1130 : vector<2x188xf32> to vector<1x2x188xf32>
    tpu.vector_store %arg2[%c0_55, %c0_56, %c0_57], %1133 {strides = array<i32>} : memref<4x2x188xf32, #tpu.memory_space<vmem>>, vector<1x2x188xf32>,
    %cst_58 = arith.constant 0.000000e+00 : f32
    %1134 = vector.broadcast %cst_58 : f32 to vector<2x188xf32>
    %1135 = vector.extract_strided_slice %266 {offsets = [0, 0], sizes = [2, 188], strides = [1, 1]} : vector<2x222xf32> to vector<2x188xf32>
    %c145 = arith.constant 145 : index
    %1136 = memref.load %arg1[%c145] : memref<304xf32, #tpu.memory_space<smem>>
    %1137 = vector.broadcast %1136 : f32 to vector<2x188xf32>
    %1138 = arith.mulf %1135, %1137 : vector<2x188xf32>
    %1139 = arith.addf %1134, %1138 : vector<2x188xf32>
    %1140 = vector.extract_strided_slice %482 {offsets = [0, 0], sizes = [2, 188], strides = [1, 1]} : vector<2x222xf32> to vector<2x188xf32>
    %c149 = arith.constant 149 : index
    %1141 = memref.load %arg1[%c149] : memref<304xf32, #tpu.memory_space<smem>>
    %1142 = vector.broadcast %1141 : f32 to vector<2x188xf32>
    %1143 = arith.mulf %1140, %1142 : vector<2x188xf32>
    %1144 = arith.addf %1139, %1143 : vector<2x188xf32>
    %1145 = vector.extract_strided_slice %698 {offsets = [0, 0], sizes = [2, 188], strides = [1, 1]} : vector<2x222xf32> to vector<2x188xf32>
    %c153 = arith.constant 153 : index
    %1146 = memref.load %arg1[%c153] : memref<304xf32, #tpu.memory_space<smem>>
    %1147 = vector.broadcast %1146 : f32 to vector<2x188xf32>
    %1148 = arith.mulf %1145, %1147 : vector<2x188xf32>
    %1149 = arith.addf %1144, %1148 : vector<2x188xf32>
    %1150 = vector.extract_strided_slice %914 {offsets = [0, 0], sizes = [2, 188], strides = [1, 1]} : vector<2x222xf32> to vector<2x188xf32>
    %c157 = arith.constant 157 : index
    %1151 = memref.load %arg1[%c157] : memref<304xf32, #tpu.memory_space<smem>>
    %1152 = vector.broadcast %1151 : f32 to vector<2x188xf32>
    %1153 = arith.mulf %1150, %1152 : vector<2x188xf32>
    %1154 = arith.addf %1149, %1153 : vector<2x188xf32>
    %1155 = vector.extract_strided_slice %266 {offsets = [0, 1], sizes = [2, 188], strides = [1, 1]} : vector<2x222xf32> to vector<2x188xf32>
    %c161 = arith.constant 161 : index
    %1156 = memref.load %arg1[%c161] : memref<304xf32, #tpu.memory_space<smem>>
    %1157 = vector.broadcast %1156 : f32 to vector<2x188xf32>
    %1158 = arith.mulf %1155, %1157 : vector<2x188xf32>
    %1159 = arith.addf %1154, %1158 : vector<2x188xf32>
    %1160 = vector.extract_strided_slice %482 {offsets = [0, 1], sizes = [2, 188], strides = [1, 1]} : vector<2x222xf32> to vector<2x188xf32>
    %c165 = arith.constant 165 : index
    %1161 = memref.load %arg1[%c165] : memref<304xf32, #tpu.memory_space<smem>>
    %1162 = vector.broadcast %1161 : f32 to vector<2x188xf32>
    %1163 = arith.mulf %1160, %1162 : vector<2x188xf32>
    %1164 = arith.addf %1159, %1163 : vector<2x188xf32>
    %1165 = vector.extract_strided_slice %698 {offsets = [0, 1], sizes = [2, 188], strides = [1, 1]} : vector<2x222xf32> to vector<2x188xf32>
    %c169 = arith.constant 169 : index
    %1166 = memref.load %arg1[%c169] : memref<304xf32, #tpu.memory_space<smem>>
    %1167 = vector.broadcast %1166 : f32 to vector<2x188xf32>
    %1168 = arith.mulf %1165, %1167 : vector<2x188xf32>
    %1169 = arith.addf %1164, %1168 : vector<2x188xf32>
    %1170 = vector.extract_strided_slice %914 {offsets = [0, 1], sizes = [2, 188], strides = [1, 1]} : vector<2x222xf32> to vector<2x188xf32>
    %c173 = arith.constant 173 : index
    %1171 = memref.load %arg1[%c173] : memref<304xf32, #tpu.memory_space<smem>>
    %1172 = vector.broadcast %1171 : f32 to vector<2x188xf32>
    %1173 = arith.mulf %1170, %1172 : vector<2x188xf32>
    %1174 = arith.addf %1169, %1173 : vector<2x188xf32>
    %1175 = vector.extract_strided_slice %266 {offsets = [0, 2], sizes = [2, 188], strides = [1, 1]} : vector<2x222xf32> to vector<2x188xf32>
    %c177 = arith.constant 177 : index
    %1176 = memref.load %arg1[%c177] : memref<304xf32, #tpu.memory_space<smem>>
    %1177 = vector.broadcast %1176 : f32 to vector<2x188xf32>
    %1178 = arith.mulf %1175, %1177 : vector<2x188xf32>
    %1179 = arith.addf %1174, %1178 : vector<2x188xf32>
    %1180 = vector.extract_strided_slice %482 {offsets = [0, 2], sizes = [2, 188], strides = [1, 1]} : vector<2x222xf32> to vector<2x188xf32>
    %c181 = arith.constant 181 : index
    %1181 = memref.load %arg1[%c181] : memref<304xf32, #tpu.memory_space<smem>>
    %1182 = vector.broadcast %1181 : f32 to vector<2x188xf32>
    %1183 = arith.mulf %1180, %1182 : vector<2x188xf32>
    %1184 = arith.addf %1179, %1183 : vector<2x188xf32>
    %1185 = vector.extract_strided_slice %698 {offsets = [0, 2], sizes = [2, 188], strides = [1, 1]} : vector<2x222xf32> to vector<2x188xf32>
    %c185 = arith.constant 185 : index
    %1186 = memref.load %arg1[%c185] : memref<304xf32, #tpu.memory_space<smem>>
    %1187 = vector.broadcast %1186 : f32 to vector<2x188xf32>
    %1188 = arith.mulf %1185, %1187 : vector<2x188xf32>
    %1189 = arith.addf %1184, %1188 : vector<2x188xf32>
    %1190 = vector.extract_strided_slice %914 {offsets = [0, 2], sizes = [2, 188], strides = [1, 1]} : vector<2x222xf32> to vector<2x188xf32>
    %c189 = arith.constant 189 : index
    %1191 = memref.load %arg1[%c189] : memref<304xf32, #tpu.memory_space<smem>>
    %1192 = vector.broadcast %1191 : f32 to vector<2x188xf32>
    %1193 = arith.mulf %1190, %1192 : vector<2x188xf32>
    %1194 = arith.addf %1189, %1193 : vector<2x188xf32>
    %1195 = vector.extract_strided_slice %266 {offsets = [0, 16], sizes = [2, 188], strides = [1, 1]} : vector<2x222xf32> to vector<2x188xf32>
    %c193 = arith.constant 193 : index
    %1196 = memref.load %arg1[%c193] : memref<304xf32, #tpu.memory_space<smem>>
    %1197 = vector.broadcast %1196 : f32 to vector<2x188xf32>
    %1198 = arith.mulf %1195, %1197 : vector<2x188xf32>
    %1199 = arith.addf %1194, %1198 : vector<2x188xf32>
    %1200 = vector.extract_strided_slice %482 {offsets = [0, 16], sizes = [2, 188], strides = [1, 1]} : vector<2x222xf32> to vector<2x188xf32>
    %c197 = arith.constant 197 : index
    %1201 = memref.load %arg1[%c197] : memref<304xf32, #tpu.memory_space<smem>>
    %1202 = vector.broadcast %1201 : f32 to vector<2x188xf32>
    %1203 = arith.mulf %1200, %1202 : vector<2x188xf32>
    %1204 = arith.addf %1199, %1203 : vector<2x188xf32>
    %1205 = vector.extract_strided_slice %698 {offsets = [0, 16], sizes = [2, 188], strides = [1, 1]} : vector<2x222xf32> to vector<2x188xf32>
    %c201 = arith.constant 201 : index
    %1206 = memref.load %arg1[%c201] : memref<304xf32, #tpu.memory_space<smem>>
    %1207 = vector.broadcast %1206 : f32 to vector<2x188xf32>
    %1208 = arith.mulf %1205, %1207 : vector<2x188xf32>
    %1209 = arith.addf %1204, %1208 : vector<2x188xf32>
    %1210 = vector.extract_strided_slice %914 {offsets = [0, 16], sizes = [2, 188], strides = [1, 1]} : vector<2x222xf32> to vector<2x188xf32>
    %c205 = arith.constant 205 : index
    %1211 = memref.load %arg1[%c205] : memref<304xf32, #tpu.memory_space<smem>>
    %1212 = vector.broadcast %1211 : f32 to vector<2x188xf32>
    %1213 = arith.mulf %1210, %1212 : vector<2x188xf32>
    %1214 = arith.addf %1209, %1213 : vector<2x188xf32>
    %1215 = vector.extract_strided_slice %266 {offsets = [0, 17], sizes = [2, 188], strides = [1, 1]} : vector<2x222xf32> to vector<2x188xf32>
    %c209 = arith.constant 209 : index
    %1216 = memref.load %arg1[%c209] : memref<304xf32, #tpu.memory_space<smem>>
    %1217 = vector.broadcast %1216 : f32 to vector<2x188xf32>
    %1218 = arith.mulf %1215, %1217 : vector<2x188xf32>
    %1219 = arith.addf %1214, %1218 : vector<2x188xf32>
    %1220 = vector.extract_strided_slice %482 {offsets = [0, 17], sizes = [2, 188], strides = [1, 1]} : vector<2x222xf32> to vector<2x188xf32>
    %c213 = arith.constant 213 : index
    %1221 = memref.load %arg1[%c213] : memref<304xf32, #tpu.memory_space<smem>>
    %1222 = vector.broadcast %1221 : f32 to vector<2x188xf32>
    %1223 = arith.mulf %1220, %1222 : vector<2x188xf32>
    %1224 = arith.addf %1219, %1223 : vector<2x188xf32>
    %1225 = vector.extract_strided_slice %698 {offsets = [0, 17], sizes = [2, 188], strides = [1, 1]} : vector<2x222xf32> to vector<2x188xf32>
    %c217 = arith.constant 217 : index
    %1226 = memref.load %arg1[%c217] : memref<304xf32, #tpu.memory_space<smem>>
    %1227 = vector.broadcast %1226 : f32 to vector<2x188xf32>
    %1228 = arith.mulf %1225, %1227 : vector<2x188xf32>
    %1229 = arith.addf %1224, %1228 : vector<2x188xf32>
    %1230 = vector.extract_strided_slice %914 {offsets = [0, 17], sizes = [2, 188], strides = [1, 1]} : vector<2x222xf32> to vector<2x188xf32>
    %c221 = arith.constant 221 : index
    %1231 = memref.load %arg1[%c221] : memref<304xf32, #tpu.memory_space<smem>>
    %1232 = vector.broadcast %1231 : f32 to vector<2x188xf32>
    %1233 = arith.mulf %1230, %1232 : vector<2x188xf32>
    %1234 = arith.addf %1229, %1233 : vector<2x188xf32>
    %1235 = vector.extract_strided_slice %266 {offsets = [0, 18], sizes = [2, 188], strides = [1, 1]} : vector<2x222xf32> to vector<2x188xf32>
    %c225 = arith.constant 225 : index
    %1236 = memref.load %arg1[%c225] : memref<304xf32, #tpu.memory_space<smem>>
    %1237 = vector.broadcast %1236 : f32 to vector<2x188xf32>
    %1238 = arith.mulf %1235, %1237 : vector<2x188xf32>
    %1239 = arith.addf %1234, %1238 : vector<2x188xf32>
    %1240 = vector.extract_strided_slice %482 {offsets = [0, 18], sizes = [2, 188], strides = [1, 1]} : vector<2x222xf32> to vector<2x188xf32>
    %c229 = arith.constant 229 : index
    %1241 = memref.load %arg1[%c229] : memref<304xf32, #tpu.memory_space<smem>>
    %1242 = vector.broadcast %1241 : f32 to vector<2x188xf32>
    %1243 = arith.mulf %1240, %1242 : vector<2x188xf32>
    %1244 = arith.addf %1239, %1243 : vector<2x188xf32>
    %1245 = vector.extract_strided_slice %698 {offsets = [0, 18], sizes = [2, 188], strides = [1, 1]} : vector<2x222xf32> to vector<2x188xf32>
    %c233 = arith.constant 233 : index
    %1246 = memref.load %arg1[%c233] : memref<304xf32, #tpu.memory_space<smem>>
    %1247 = vector.broadcast %1246 : f32 to vector<2x188xf32>
    %1248 = arith.mulf %1245, %1247 : vector<2x188xf32>
    %1249 = arith.addf %1244, %1248 : vector<2x188xf32>
    %1250 = vector.extract_strided_slice %914 {offsets = [0, 18], sizes = [2, 188], strides = [1, 1]} : vector<2x222xf32> to vector<2x188xf32>
    %c237 = arith.constant 237 : index
    %1251 = memref.load %arg1[%c237] : memref<304xf32, #tpu.memory_space<smem>>
    %1252 = vector.broadcast %1251 : f32 to vector<2x188xf32>
    %1253 = arith.mulf %1250, %1252 : vector<2x188xf32>
    %1254 = arith.addf %1249, %1253 : vector<2x188xf32>
    %1255 = vector.extract_strided_slice %266 {offsets = [0, 32], sizes = [2, 188], strides = [1, 1]} : vector<2x222xf32> to vector<2x188xf32>
    %c241 = arith.constant 241 : index
    %1256 = memref.load %arg1[%c241] : memref<304xf32, #tpu.memory_space<smem>>
    %1257 = vector.broadcast %1256 : f32 to vector<2x188xf32>
    %1258 = arith.mulf %1255, %1257 : vector<2x188xf32>
    %1259 = arith.addf %1254, %1258 : vector<2x188xf32>
    %1260 = vector.extract_strided_slice %482 {offsets = [0, 32], sizes = [2, 188], strides = [1, 1]} : vector<2x222xf32> to vector<2x188xf32>
    %c245 = arith.constant 245 : index
    %1261 = memref.load %arg1[%c245] : memref<304xf32, #tpu.memory_space<smem>>
    %1262 = vector.broadcast %1261 : f32 to vector<2x188xf32>
    %1263 = arith.mulf %1260, %1262 : vector<2x188xf32>
    %1264 = arith.addf %1259, %1263 : vector<2x188xf32>
    %1265 = vector.extract_strided_slice %698 {offsets = [0, 32], sizes = [2, 188], strides = [1, 1]} : vector<2x222xf32> to vector<2x188xf32>
    %c249 = arith.constant 249 : index
    %1266 = memref.load %arg1[%c249] : memref<304xf32, #tpu.memory_space<smem>>
    %1267 = vector.broadcast %1266 : f32 to vector<2x188xf32>
    %1268 = arith.mulf %1265, %1267 : vector<2x188xf32>
    %1269 = arith.addf %1264, %1268 : vector<2x188xf32>
    %1270 = vector.extract_strided_slice %914 {offsets = [0, 32], sizes = [2, 188], strides = [1, 1]} : vector<2x222xf32> to vector<2x188xf32>
    %c253 = arith.constant 253 : index
    %1271 = memref.load %arg1[%c253] : memref<304xf32, #tpu.memory_space<smem>>
    %1272 = vector.broadcast %1271 : f32 to vector<2x188xf32>
    %1273 = arith.mulf %1270, %1272 : vector<2x188xf32>
    %1274 = arith.addf %1269, %1273 : vector<2x188xf32>
    %1275 = vector.extract_strided_slice %266 {offsets = [0, 33], sizes = [2, 188], strides = [1, 1]} : vector<2x222xf32> to vector<2x188xf32>
    %c257 = arith.constant 257 : index
    %1276 = memref.load %arg1[%c257] : memref<304xf32, #tpu.memory_space<smem>>
    %1277 = vector.broadcast %1276 : f32 to vector<2x188xf32>
    %1278 = arith.mulf %1275, %1277 : vector<2x188xf32>
    %1279 = arith.addf %1274, %1278 : vector<2x188xf32>
    %1280 = vector.extract_strided_slice %482 {offsets = [0, 33], sizes = [2, 188], strides = [1, 1]} : vector<2x222xf32> to vector<2x188xf32>
    %c261 = arith.constant 261 : index
    %1281 = memref.load %arg1[%c261] : memref<304xf32, #tpu.memory_space<smem>>
    %1282 = vector.broadcast %1281 : f32 to vector<2x188xf32>
    %1283 = arith.mulf %1280, %1282 : vector<2x188xf32>
    %1284 = arith.addf %1279, %1283 : vector<2x188xf32>
    %1285 = vector.extract_strided_slice %698 {offsets = [0, 33], sizes = [2, 188], strides = [1, 1]} : vector<2x222xf32> to vector<2x188xf32>
    %c265 = arith.constant 265 : index
    %1286 = memref.load %arg1[%c265] : memref<304xf32, #tpu.memory_space<smem>>
    %1287 = vector.broadcast %1286 : f32 to vector<2x188xf32>
    %1288 = arith.mulf %1285, %1287 : vector<2x188xf32>
    %1289 = arith.addf %1284, %1288 : vector<2x188xf32>
    %1290 = vector.extract_strided_slice %914 {offsets = [0, 33], sizes = [2, 188], strides = [1, 1]} : vector<2x222xf32> to vector<2x188xf32>
    %c269 = arith.constant 269 : index
    %1291 = memref.load %arg1[%c269] : memref<304xf32, #tpu.memory_space<smem>>
    %1292 = vector.broadcast %1291 : f32 to vector<2x188xf32>
    %1293 = arith.mulf %1290, %1292 : vector<2x188xf32>
    %1294 = arith.addf %1289, %1293 : vector<2x188xf32>
    %1295 = vector.extract_strided_slice %266 {offsets = [0, 34], sizes = [2, 188], strides = [1, 1]} : vector<2x222xf32> to vector<2x188xf32>
    %c273 = arith.constant 273 : index
    %1296 = memref.load %arg1[%c273] : memref<304xf32, #tpu.memory_space<smem>>
    %1297 = vector.broadcast %1296 : f32 to vector<2x188xf32>
    %1298 = arith.mulf %1295, %1297 : vector<2x188xf32>
    %1299 = arith.addf %1294, %1298 : vector<2x188xf32>
    %1300 = vector.extract_strided_slice %482 {offsets = [0, 34], sizes = [2, 188], strides = [1, 1]} : vector<2x222xf32> to vector<2x188xf32>
    %c277 = arith.constant 277 : index
    %1301 = memref.load %arg1[%c277] : memref<304xf32, #tpu.memory_space<smem>>
    %1302 = vector.broadcast %1301 : f32 to vector<2x188xf32>
    %1303 = arith.mulf %1300, %1302 : vector<2x188xf32>
    %1304 = arith.addf %1299, %1303 : vector<2x188xf32>
    %1305 = vector.extract_strided_slice %698 {offsets = [0, 34], sizes = [2, 188], strides = [1, 1]} : vector<2x222xf32> to vector<2x188xf32>
    %c281 = arith.constant 281 : index
    %1306 = memref.load %arg1[%c281] : memref<304xf32, #tpu.memory_space<smem>>
    %1307 = vector.broadcast %1306 : f32 to vector<2x188xf32>
    %1308 = arith.mulf %1305, %1307 : vector<2x188xf32>
    %1309 = arith.addf %1304, %1308 : vector<2x188xf32>
    %1310 = vector.extract_strided_slice %914 {offsets = [0, 34], sizes = [2, 188], strides = [1, 1]} : vector<2x222xf32> to vector<2x188xf32>
    %c285 = arith.constant 285 : index
    %1311 = memref.load %arg1[%c285] : memref<304xf32, #tpu.memory_space<smem>>
    %1312 = vector.broadcast %1311 : f32 to vector<2x188xf32>
    %1313 = arith.mulf %1310, %1312 : vector<2x188xf32>
    %1314 = arith.addf %1309, %1313 : vector<2x188xf32>
    %c297 = arith.constant 297 : index
    %1315 = memref.load %arg1[%c297] : memref<304xf32, #tpu.memory_space<smem>>
    %c301 = arith.constant 301 : index
    %1316 = memref.load %arg1[%c301] : memref<304xf32, #tpu.memory_space<smem>>
    %1317 = vector.broadcast %41 : vector<1x188xf32> to vector<2x188xf32>
    %1318 = arith.mulf %1314, %1317 : vector<2x188xf32>
    %cst_59 = arith.constant dense<0.000000e+00> : vector<2xf32>
    %1319 = vector.multi_reduction <add>, %1318, %cst_59 [1] : vector<2x188xf32> to vector<2xf32>
    %1320 = vector.shape_cast %1319 : vector<2xf32> to vector<2x1xf32>
    %cst_60 = arith.constant dense<0.000000e+00> : vector<1xf32>
    %1321 = vector.multi_reduction <add>, %1320, %cst_60 [0] : vector<2x1xf32> to vector<1xf32>
    %1322 = vector.shape_cast %1321 : vector<1xf32> to vector<1x1xf32>
    %cst_61 = arith.constant 0.00347222225 : f32
    %1323 = vector.broadcast %cst_61 : f32 to vector<1x1xf32>
    %1324 = arith.mulf %1322, %1323 : vector<1x1xf32>
    %1325 = vector.broadcast %1324 : vector<1x1xf32> to vector<2x188xf32>
    %1326 = arith.subf %1314, %1325 : vector<2x188xf32>
    %1327 = vector.broadcast %41 : vector<1x188xf32> to vector<2x188xf32>
    %1328 = arith.mulf %1326, %1327 : vector<2x188xf32>
    %1329 = arith.mulf %1328, %1328 : vector<2x188xf32>
    %cst_62 = arith.constant dense<0.000000e+00> : vector<2xf32>
    %1330 = vector.multi_reduction <add>, %1329, %cst_62 [1] : vector<2x188xf32> to vector<2xf32>
    %1331 = vector.shape_cast %1330 : vector<2xf32> to vector<2x1xf32>
    %cst_63 = arith.constant dense<0.000000e+00> : vector<1xf32>
    %1332 = vector.multi_reduction <add>, %1331, %cst_63 [0] : vector<2x1xf32> to vector<1xf32>
    %1333 = vector.shape_cast %1332 : vector<1xf32> to vector<1x1xf32>
    %cst_64 = arith.constant 0.00347222225 : f32
    %1334 = vector.broadcast %cst_64 : f32 to vector<1x1xf32>
    %1335 = arith.mulf %1333, %1334 : vector<1x1xf32>
    %cst_65 = arith.constant 9.99999974E-6 : f32
    %1336 = vector.broadcast %cst_65 : f32 to vector<1x1xf32>
    %1337 = arith.addf %1335, %1336 : vector<1x1xf32>
    %1338 = math.rsqrt %1337 : vector<1x1xf32>
    %1339 = vector.broadcast %1315 : f32 to vector<1x1xf32>
    %1340 = arith.mulf %1339, %1338 : vector<1x1xf32>
    %1341 = arith.mulf %1324, %1340 : vector<1x1xf32>
    %1342 = vector.broadcast %1316 : f32 to vector<1x1xf32>
    %1343 = arith.subf %1342, %1341 : vector<1x1xf32>
    %1344 = vector.broadcast %1340 : vector<1x1xf32> to vector<2x188xf32>
    %1345 = arith.mulf %1314, %1344 : vector<2x188xf32>
    %1346 = vector.broadcast %1343 : vector<1x1xf32> to vector<2x188xf32>
    %1347 = arith.addf %1345, %1346 : vector<2x188xf32>
    %1348 = vector.extract_strided_slice %46 {offsets = [0, 34], sizes = [2, 188], strides = [1, 1]} : vector<2x256xf32> to vector<2x188xf32>
    %1349 = arith.addf %1347, %1348 : vector<2x188xf32>
    %c1_66 = arith.constant 1 : index
    %c0_67 = arith.constant 0 : index
    %c0_68 = arith.constant 0 : index
    %1350 = vector.load %arg2[%c1_66, %c0_67, %c0_68] : memref<4x2x188xf32, #tpu.memory_space<vmem>>, vector<1x2x188xf32>
    %1351 = vector.shape_cast %1350 : vector<1x2x188xf32> to vector<2x188xf32>
    %1352 = vector.shape_cast %1349 : vector<2x188xf32> to vector<1x2x188xf32>
    tpu.vector_store %arg2[%c1_66, %c0_67, %c0_68], %1352 {strides = array<i32>} : memref<4x2x188xf32, #tpu.memory_space<vmem>>, vector<1x2x188xf32>,
    %cst_69 = arith.constant 0.000000e+00 : f32
    %1353 = vector.broadcast %cst_69 : f32 to vector<2x188xf32>
    %1354 = vector.extract_strided_slice %266 {offsets = [0, 0], sizes = [2, 188], strides = [1, 1]} : vector<2x222xf32> to vector<2x188xf32>
    %c146 = arith.constant 146 : index
    %1355 = memref.load %arg1[%c146] : memref<304xf32, #tpu.memory_space<smem>>
    %1356 = vector.broadcast %1355 : f32 to vector<2x188xf32>
    %1357 = arith.mulf %1354, %1356 : vector<2x188xf32>
    %1358 = arith.addf %1353, %1357 : vector<2x188xf32>
    %1359 = vector.extract_strided_slice %482 {offsets = [0, 0], sizes = [2, 188], strides = [1, 1]} : vector<2x222xf32> to vector<2x188xf32>
    %c150 = arith.constant 150 : index
    %1360 = memref.load %arg1[%c150] : memref<304xf32, #tpu.memory_space<smem>>
    %1361 = vector.broadcast %1360 : f32 to vector<2x188xf32>
    %1362 = arith.mulf %1359, %1361 : vector<2x188xf32>
    %1363 = arith.addf %1358, %1362 : vector<2x188xf32>
    %1364 = vector.extract_strided_slice %698 {offsets = [0, 0], sizes = [2, 188], strides = [1, 1]} : vector<2x222xf32> to vector<2x188xf32>
    %c154 = arith.constant 154 : index
    %1365 = memref.load %arg1[%c154] : memref<304xf32, #tpu.memory_space<smem>>
    %1366 = vector.broadcast %1365 : f32 to vector<2x188xf32>
    %1367 = arith.mulf %1364, %1366 : vector<2x188xf32>
    %1368 = arith.addf %1363, %1367 : vector<2x188xf32>
    %1369 = vector.extract_strided_slice %914 {offsets = [0, 0], sizes = [2, 188], strides = [1, 1]} : vector<2x222xf32> to vector<2x188xf32>
    %c158 = arith.constant 158 : index
    %1370 = memref.load %arg1[%c158] : memref<304xf32, #tpu.memory_space<smem>>
    %1371 = vector.broadcast %1370 : f32 to vector<2x188xf32>
    %1372 = arith.mulf %1369, %1371 : vector<2x188xf32>
    %1373 = arith.addf %1368, %1372 : vector<2x188xf32>
    %1374 = vector.extract_strided_slice %266 {offsets = [0, 1], sizes = [2, 188], strides = [1, 1]} : vector<2x222xf32> to vector<2x188xf32>
    %c162 = arith.constant 162 : index
    %1375 = memref.load %arg1[%c162] : memref<304xf32, #tpu.memory_space<smem>>
    %1376 = vector.broadcast %1375 : f32 to vector<2x188xf32>
    %1377 = arith.mulf %1374, %1376 : vector<2x188xf32>
    %1378 = arith.addf %1373, %1377 : vector<2x188xf32>
    %1379 = vector.extract_strided_slice %482 {offsets = [0, 1], sizes = [2, 188], strides = [1, 1]} : vector<2x222xf32> to vector<2x188xf32>
    %c166 = arith.constant 166 : index
    %1380 = memref.load %arg1[%c166] : memref<304xf32, #tpu.memory_space<smem>>
    %1381 = vector.broadcast %1380 : f32 to vector<2x188xf32>
    %1382 = arith.mulf %1379, %1381 : vector<2x188xf32>
    %1383 = arith.addf %1378, %1382 : vector<2x188xf32>
    %1384 = vector.extract_strided_slice %698 {offsets = [0, 1], sizes = [2, 188], strides = [1, 1]} : vector<2x222xf32> to vector<2x188xf32>
    %c170 = arith.constant 170 : index
    %1385 = memref.load %arg1[%c170] : memref<304xf32, #tpu.memory_space<smem>>
    %1386 = vector.broadcast %1385 : f32 to vector<2x188xf32>
    %1387 = arith.mulf %1384, %1386 : vector<2x188xf32>
    %1388 = arith.addf %1383, %1387 : vector<2x188xf32>
    %1389 = vector.extract_strided_slice %914 {offsets = [0, 1], sizes = [2, 188], strides = [1, 1]} : vector<2x222xf32> to vector<2x188xf32>
    %c174 = arith.constant 174 : index
    %1390 = memref.load %arg1[%c174] : memref<304xf32, #tpu.memory_space<smem>>
    %1391 = vector.broadcast %1390 : f32 to vector<2x188xf32>
    %1392 = arith.mulf %1389, %1391 : vector<2x188xf32>
    %1393 = arith.addf %1388, %1392 : vector<2x188xf32>
    %1394 = vector.extract_strided_slice %266 {offsets = [0, 2], sizes = [2, 188], strides = [1, 1]} : vector<2x222xf32> to vector<2x188xf32>
    %c178 = arith.constant 178 : index
    %1395 = memref.load %arg1[%c178] : memref<304xf32, #tpu.memory_space<smem>>
    %1396 = vector.broadcast %1395 : f32 to vector<2x188xf32>
    %1397 = arith.mulf %1394, %1396 : vector<2x188xf32>
    %1398 = arith.addf %1393, %1397 : vector<2x188xf32>
    %1399 = vector.extract_strided_slice %482 {offsets = [0, 2], sizes = [2, 188], strides = [1, 1]} : vector<2x222xf32> to vector<2x188xf32>
    %c182 = arith.constant 182 : index
    %1400 = memref.load %arg1[%c182] : memref<304xf32, #tpu.memory_space<smem>>
    %1401 = vector.broadcast %1400 : f32 to vector<2x188xf32>
    %1402 = arith.mulf %1399, %1401 : vector<2x188xf32>
    %1403 = arith.addf %1398, %1402 : vector<2x188xf32>
    %1404 = vector.extract_strided_slice %698 {offsets = [0, 2], sizes = [2, 188], strides = [1, 1]} : vector<2x222xf32> to vector<2x188xf32>
    %c186 = arith.constant 186 : index
    %1405 = memref.load %arg1[%c186] : memref<304xf32, #tpu.memory_space<smem>>
    %1406 = vector.broadcast %1405 : f32 to vector<2x188xf32>
    %1407 = arith.mulf %1404, %1406 : vector<2x188xf32>
    %1408 = arith.addf %1403, %1407 : vector<2x188xf32>
    %1409 = vector.extract_strided_slice %914 {offsets = [0, 2], sizes = [2, 188], strides = [1, 1]} : vector<2x222xf32> to vector<2x188xf32>
    %c190 = arith.constant 190 : index
    %1410 = memref.load %arg1[%c190] : memref<304xf32, #tpu.memory_space<smem>>
    %1411 = vector.broadcast %1410 : f32 to vector<2x188xf32>
    %1412 = arith.mulf %1409, %1411 : vector<2x188xf32>
    %1413 = arith.addf %1408, %1412 : vector<2x188xf32>
    %1414 = vector.extract_strided_slice %266 {offsets = [0, 16], sizes = [2, 188], strides = [1, 1]} : vector<2x222xf32> to vector<2x188xf32>
    %c194 = arith.constant 194 : index
    %1415 = memref.load %arg1[%c194] : memref<304xf32, #tpu.memory_space<smem>>
    %1416 = vector.broadcast %1415 : f32 to vector<2x188xf32>
    %1417 = arith.mulf %1414, %1416 : vector<2x188xf32>
    %1418 = arith.addf %1413, %1417 : vector<2x188xf32>
    %1419 = vector.extract_strided_slice %482 {offsets = [0, 16], sizes = [2, 188], strides = [1, 1]} : vector<2x222xf32> to vector<2x188xf32>
    %c198 = arith.constant 198 : index
    %1420 = memref.load %arg1[%c198] : memref<304xf32, #tpu.memory_space<smem>>
    %1421 = vector.broadcast %1420 : f32 to vector<2x188xf32>
    %1422 = arith.mulf %1419, %1421 : vector<2x188xf32>
    %1423 = arith.addf %1418, %1422 : vector<2x188xf32>
    %1424 = vector.extract_strided_slice %698 {offsets = [0, 16], sizes = [2, 188], strides = [1, 1]} : vector<2x222xf32> to vector<2x188xf32>
    %c202 = arith.constant 202 : index
    %1425 = memref.load %arg1[%c202] : memref<304xf32, #tpu.memory_space<smem>>
    %1426 = vector.broadcast %1425 : f32 to vector<2x188xf32>
    %1427 = arith.mulf %1424, %1426 : vector<2x188xf32>
    %1428 = arith.addf %1423, %1427 : vector<2x188xf32>
    %1429 = vector.extract_strided_slice %914 {offsets = [0, 16], sizes = [2, 188], strides = [1, 1]} : vector<2x222xf32> to vector<2x188xf32>
    %c206 = arith.constant 206 : index
    %1430 = memref.load %arg1[%c206] : memref<304xf32, #tpu.memory_space<smem>>
    %1431 = vector.broadcast %1430 : f32 to vector<2x188xf32>
    %1432 = arith.mulf %1429, %1431 : vector<2x188xf32>
    %1433 = arith.addf %1428, %1432 : vector<2x188xf32>
    %1434 = vector.extract_strided_slice %266 {offsets = [0, 17], sizes = [2, 188], strides = [1, 1]} : vector<2x222xf32> to vector<2x188xf32>
    %c210 = arith.constant 210 : index
    %1435 = memref.load %arg1[%c210] : memref<304xf32, #tpu.memory_space<smem>>
    %1436 = vector.broadcast %1435 : f32 to vector<2x188xf32>
    %1437 = arith.mulf %1434, %1436 : vector<2x188xf32>
    %1438 = arith.addf %1433, %1437 : vector<2x188xf32>
    %1439 = vector.extract_strided_slice %482 {offsets = [0, 17], sizes = [2, 188], strides = [1, 1]} : vector<2x222xf32> to vector<2x188xf32>
    %c214 = arith.constant 214 : index
    %1440 = memref.load %arg1[%c214] : memref<304xf32, #tpu.memory_space<smem>>
    %1441 = vector.broadcast %1440 : f32 to vector<2x188xf32>
    %1442 = arith.mulf %1439, %1441 : vector<2x188xf32>
    %1443 = arith.addf %1438, %1442 : vector<2x188xf32>
    %1444 = vector.extract_strided_slice %698 {offsets = [0, 17], sizes = [2, 188], strides = [1, 1]} : vector<2x222xf32> to vector<2x188xf32>
    %c218 = arith.constant 218 : index
    %1445 = memref.load %arg1[%c218] : memref<304xf32, #tpu.memory_space<smem>>
    %1446 = vector.broadcast %1445 : f32 to vector<2x188xf32>
    %1447 = arith.mulf %1444, %1446 : vector<2x188xf32>
    %1448 = arith.addf %1443, %1447 : vector<2x188xf32>
    %1449 = vector.extract_strided_slice %914 {offsets = [0, 17], sizes = [2, 188], strides = [1, 1]} : vector<2x222xf32> to vector<2x188xf32>
    %c222 = arith.constant 222 : index
    %1450 = memref.load %arg1[%c222] : memref<304xf32, #tpu.memory_space<smem>>
    %1451 = vector.broadcast %1450 : f32 to vector<2x188xf32>
    %1452 = arith.mulf %1449, %1451 : vector<2x188xf32>
    %1453 = arith.addf %1448, %1452 : vector<2x188xf32>
    %1454 = vector.extract_strided_slice %266 {offsets = [0, 18], sizes = [2, 188], strides = [1, 1]} : vector<2x222xf32> to vector<2x188xf32>
    %c226 = arith.constant 226 : index
    %1455 = memref.load %arg1[%c226] : memref<304xf32, #tpu.memory_space<smem>>
    %1456 = vector.broadcast %1455 : f32 to vector<2x188xf32>
    %1457 = arith.mulf %1454, %1456 : vector<2x188xf32>
    %1458 = arith.addf %1453, %1457 : vector<2x188xf32>
    %1459 = vector.extract_strided_slice %482 {offsets = [0, 18], sizes = [2, 188], strides = [1, 1]} : vector<2x222xf32> to vector<2x188xf32>
    %c230 = arith.constant 230 : index
    %1460 = memref.load %arg1[%c230] : memref<304xf32, #tpu.memory_space<smem>>
    %1461 = vector.broadcast %1460 : f32 to vector<2x188xf32>
    %1462 = arith.mulf %1459, %1461 : vector<2x188xf32>
    %1463 = arith.addf %1458, %1462 : vector<2x188xf32>
    %1464 = vector.extract_strided_slice %698 {offsets = [0, 18], sizes = [2, 188], strides = [1, 1]} : vector<2x222xf32> to vector<2x188xf32>
    %c234 = arith.constant 234 : index
    %1465 = memref.load %arg1[%c234] : memref<304xf32, #tpu.memory_space<smem>>
    %1466 = vector.broadcast %1465 : f32 to vector<2x188xf32>
    %1467 = arith.mulf %1464, %1466 : vector<2x188xf32>
    %1468 = arith.addf %1463, %1467 : vector<2x188xf32>
    %1469 = vector.extract_strided_slice %914 {offsets = [0, 18], sizes = [2, 188], strides = [1, 1]} : vector<2x222xf32> to vector<2x188xf32>
    %c238 = arith.constant 238 : index
    %1470 = memref.load %arg1[%c238] : memref<304xf32, #tpu.memory_space<smem>>
    %1471 = vector.broadcast %1470 : f32 to vector<2x188xf32>
    %1472 = arith.mulf %1469, %1471 : vector<2x188xf32>
    %1473 = arith.addf %1468, %1472 : vector<2x188xf32>
    %1474 = vector.extract_strided_slice %266 {offsets = [0, 32], sizes = [2, 188], strides = [1, 1]} : vector<2x222xf32> to vector<2x188xf32>
    %c242 = arith.constant 242 : index
    %1475 = memref.load %arg1[%c242] : memref<304xf32, #tpu.memory_space<smem>>
    %1476 = vector.broadcast %1475 : f32 to vector<2x188xf32>
    %1477 = arith.mulf %1474, %1476 : vector<2x188xf32>
    %1478 = arith.addf %1473, %1477 : vector<2x188xf32>
    %1479 = vector.extract_strided_slice %482 {offsets = [0, 32], sizes = [2, 188], strides = [1, 1]} : vector<2x222xf32> to vector<2x188xf32>
    %c246 = arith.constant 246 : index
    %1480 = memref.load %arg1[%c246] : memref<304xf32, #tpu.memory_space<smem>>
    %1481 = vector.broadcast %1480 : f32 to vector<2x188xf32>
    %1482 = arith.mulf %1479, %1481 : vector<2x188xf32>
    %1483 = arith.addf %1478, %1482 : vector<2x188xf32>
    %1484 = vector.extract_strided_slice %698 {offsets = [0, 32], sizes = [2, 188], strides = [1, 1]} : vector<2x222xf32> to vector<2x188xf32>
    %c250 = arith.constant 250 : index
    %1485 = memref.load %arg1[%c250] : memref<304xf32, #tpu.memory_space<smem>>
    %1486 = vector.broadcast %1485 : f32 to vector<2x188xf32>
    %1487 = arith.mulf %1484, %1486 : vector<2x188xf32>
    %1488 = arith.addf %1483, %1487 : vector<2x188xf32>
    %1489 = vector.extract_strided_slice %914 {offsets = [0, 32], sizes = [2, 188], strides = [1, 1]} : vector<2x222xf32> to vector<2x188xf32>
    %c254 = arith.constant 254 : index
    %1490 = memref.load %arg1[%c254] : memref<304xf32, #tpu.memory_space<smem>>
    %1491 = vector.broadcast %1490 : f32 to vector<2x188xf32>
    %1492 = arith.mulf %1489, %1491 : vector<2x188xf32>
    %1493 = arith.addf %1488, %1492 : vector<2x188xf32>
    %1494 = vector.extract_strided_slice %266 {offsets = [0, 33], sizes = [2, 188], strides = [1, 1]} : vector<2x222xf32> to vector<2x188xf32>
    %c258 = arith.constant 258 : index
    %1495 = memref.load %arg1[%c258] : memref<304xf32, #tpu.memory_space<smem>>
    %1496 = vector.broadcast %1495 : f32 to vector<2x188xf32>
    %1497 = arith.mulf %1494, %1496 : vector<2x188xf32>
    %1498 = arith.addf %1493, %1497 : vector<2x188xf32>
    %1499 = vector.extract_strided_slice %482 {offsets = [0, 33], sizes = [2, 188], strides = [1, 1]} : vector<2x222xf32> to vector<2x188xf32>
    %c262 = arith.constant 262 : index
    %1500 = memref.load %arg1[%c262] : memref<304xf32, #tpu.memory_space<smem>>
    %1501 = vector.broadcast %1500 : f32 to vector<2x188xf32>
    %1502 = arith.mulf %1499, %1501 : vector<2x188xf32>
    %1503 = arith.addf %1498, %1502 : vector<2x188xf32>
    %1504 = vector.extract_strided_slice %698 {offsets = [0, 33], sizes = [2, 188], strides = [1, 1]} : vector<2x222xf32> to vector<2x188xf32>
    %c266 = arith.constant 266 : index
    %1505 = memref.load %arg1[%c266] : memref<304xf32, #tpu.memory_space<smem>>
    %1506 = vector.broadcast %1505 : f32 to vector<2x188xf32>
    %1507 = arith.mulf %1504, %1506 : vector<2x188xf32>
    %1508 = arith.addf %1503, %1507 : vector<2x188xf32>
    %1509 = vector.extract_strided_slice %914 {offsets = [0, 33], sizes = [2, 188], strides = [1, 1]} : vector<2x222xf32> to vector<2x188xf32>
    %c270 = arith.constant 270 : index
    %1510 = memref.load %arg1[%c270] : memref<304xf32, #tpu.memory_space<smem>>
    %1511 = vector.broadcast %1510 : f32 to vector<2x188xf32>
    %1512 = arith.mulf %1509, %1511 : vector<2x188xf32>
    %1513 = arith.addf %1508, %1512 : vector<2x188xf32>
    %1514 = vector.extract_strided_slice %266 {offsets = [0, 34], sizes = [2, 188], strides = [1, 1]} : vector<2x222xf32> to vector<2x188xf32>
    %c274 = arith.constant 274 : index
    %1515 = memref.load %arg1[%c274] : memref<304xf32, #tpu.memory_space<smem>>
    %1516 = vector.broadcast %1515 : f32 to vector<2x188xf32>
    %1517 = arith.mulf %1514, %1516 : vector<2x188xf32>
    %1518 = arith.addf %1513, %1517 : vector<2x188xf32>
    %1519 = vector.extract_strided_slice %482 {offsets = [0, 34], sizes = [2, 188], strides = [1, 1]} : vector<2x222xf32> to vector<2x188xf32>
    %c278 = arith.constant 278 : index
    %1520 = memref.load %arg1[%c278] : memref<304xf32, #tpu.memory_space<smem>>
    %1521 = vector.broadcast %1520 : f32 to vector<2x188xf32>
    %1522 = arith.mulf %1519, %1521 : vector<2x188xf32>
    %1523 = arith.addf %1518, %1522 : vector<2x188xf32>
    %1524 = vector.extract_strided_slice %698 {offsets = [0, 34], sizes = [2, 188], strides = [1, 1]} : vector<2x222xf32> to vector<2x188xf32>
    %c282 = arith.constant 282 : index
    %1525 = memref.load %arg1[%c282] : memref<304xf32, #tpu.memory_space<smem>>
    %1526 = vector.broadcast %1525 : f32 to vector<2x188xf32>
    %1527 = arith.mulf %1524, %1526 : vector<2x188xf32>
    %1528 = arith.addf %1523, %1527 : vector<2x188xf32>
    %1529 = vector.extract_strided_slice %914 {offsets = [0, 34], sizes = [2, 188], strides = [1, 1]} : vector<2x222xf32> to vector<2x188xf32>
    %c286 = arith.constant 286 : index
    %1530 = memref.load %arg1[%c286] : memref<304xf32, #tpu.memory_space<smem>>
    %1531 = vector.broadcast %1530 : f32 to vector<2x188xf32>
    %1532 = arith.mulf %1529, %1531 : vector<2x188xf32>
    %1533 = arith.addf %1528, %1532 : vector<2x188xf32>
    %c298 = arith.constant 298 : index
    %1534 = memref.load %arg1[%c298] : memref<304xf32, #tpu.memory_space<smem>>
    %c302 = arith.constant 302 : index
    %1535 = memref.load %arg1[%c302] : memref<304xf32, #tpu.memory_space<smem>>
    %1536 = vector.broadcast %41 : vector<1x188xf32> to vector<2x188xf32>
    %1537 = arith.mulf %1533, %1536 : vector<2x188xf32>
    %cst_70 = arith.constant dense<0.000000e+00> : vector<2xf32>
    %1538 = vector.multi_reduction <add>, %1537, %cst_70 [1] : vector<2x188xf32> to vector<2xf32>
    %1539 = vector.shape_cast %1538 : vector<2xf32> to vector<2x1xf32>
    %cst_71 = arith.constant dense<0.000000e+00> : vector<1xf32>
    %1540 = vector.multi_reduction <add>, %1539, %cst_71 [0] : vector<2x1xf32> to vector<1xf32>
    %1541 = vector.shape_cast %1540 : vector<1xf32> to vector<1x1xf32>
    %cst_72 = arith.constant 0.00347222225 : f32
    %1542 = vector.broadcast %cst_72 : f32 to vector<1x1xf32>
    %1543 = arith.mulf %1541, %1542 : vector<1x1xf32>
    %1544 = vector.broadcast %1543 : vector<1x1xf32> to vector<2x188xf32>
    %1545 = arith.subf %1533, %1544 : vector<2x188xf32>
    %1546 = vector.broadcast %41 : vector<1x188xf32> to vector<2x188xf32>
    %1547 = arith.mulf %1545, %1546 : vector<2x188xf32>
    %1548 = arith.mulf %1547, %1547 : vector<2x188xf32>
    %cst_73 = arith.constant dense<0.000000e+00> : vector<2xf32>
    %1549 = vector.multi_reduction <add>, %1548, %cst_73 [1] : vector<2x188xf32> to vector<2xf32>
    %1550 = vector.shape_cast %1549 : vector<2xf32> to vector<2x1xf32>
    %cst_74 = arith.constant dense<0.000000e+00> : vector<1xf32>
    %1551 = vector.multi_reduction <add>, %1550, %cst_74 [0] : vector<2x1xf32> to vector<1xf32>
    %1552 = vector.shape_cast %1551 : vector<1xf32> to vector<1x1xf32>
    %cst_75 = arith.constant 0.00347222225 : f32
    %1553 = vector.broadcast %cst_75 : f32 to vector<1x1xf32>
    %1554 = arith.mulf %1552, %1553 : vector<1x1xf32>
    %cst_76 = arith.constant 9.99999974E-6 : f32
    %1555 = vector.broadcast %cst_76 : f32 to vector<1x1xf32>
    %1556 = arith.addf %1554, %1555 : vector<1x1xf32>
    %1557 = math.rsqrt %1556 : vector<1x1xf32>
    %1558 = vector.broadcast %1534 : f32 to vector<1x1xf32>
    %1559 = arith.mulf %1558, %1557 : vector<1x1xf32>
    %1560 = arith.mulf %1543, %1559 : vector<1x1xf32>
    %1561 = vector.broadcast %1535 : f32 to vector<1x1xf32>
    %1562 = arith.subf %1561, %1560 : vector<1x1xf32>
    %1563 = vector.broadcast %1559 : vector<1x1xf32> to vector<2x188xf32>
    %1564 = arith.mulf %1533, %1563 : vector<2x188xf32>
    %1565 = vector.broadcast %1562 : vector<1x1xf32> to vector<2x188xf32>
    %1566 = arith.addf %1564, %1565 : vector<2x188xf32>
    %1567 = vector.extract_strided_slice %48 {offsets = [0, 34], sizes = [2, 188], strides = [1, 1]} : vector<2x256xf32> to vector<2x188xf32>
    %1568 = arith.addf %1566, %1567 : vector<2x188xf32>
    %c2_77 = arith.constant 2 : index
    %c0_78 = arith.constant 0 : index
    %c0_79 = arith.constant 0 : index
    %1569 = vector.load %arg2[%c2_77, %c0_78, %c0_79] : memref<4x2x188xf32, #tpu.memory_space<vmem>>, vector<1x2x188xf32>
    %1570 = vector.shape_cast %1569 : vector<1x2x188xf32> to vector<2x188xf32>
    %1571 = vector.shape_cast %1568 : vector<2x188xf32> to vector<1x2x188xf32>
    tpu.vector_store %arg2[%c2_77, %c0_78, %c0_79], %1571 {strides = array<i32>} : memref<4x2x188xf32, #tpu.memory_space<vmem>>, vector<1x2x188xf32>,
    %cst_80 = arith.constant 0.000000e+00 : f32
    %1572 = vector.broadcast %cst_80 : f32 to vector<2x188xf32>
    %1573 = vector.extract_strided_slice %266 {offsets = [0, 0], sizes = [2, 188], strides = [1, 1]} : vector<2x222xf32> to vector<2x188xf32>
    %c147 = arith.constant 147 : index
    %1574 = memref.load %arg1[%c147] : memref<304xf32, #tpu.memory_space<smem>>
    %1575 = vector.broadcast %1574 : f32 to vector<2x188xf32>
    %1576 = arith.mulf %1573, %1575 : vector<2x188xf32>
    %1577 = arith.addf %1572, %1576 : vector<2x188xf32>
    %1578 = vector.extract_strided_slice %482 {offsets = [0, 0], sizes = [2, 188], strides = [1, 1]} : vector<2x222xf32> to vector<2x188xf32>
    %c151 = arith.constant 151 : index
    %1579 = memref.load %arg1[%c151] : memref<304xf32, #tpu.memory_space<smem>>
    %1580 = vector.broadcast %1579 : f32 to vector<2x188xf32>
    %1581 = arith.mulf %1578, %1580 : vector<2x188xf32>
    %1582 = arith.addf %1577, %1581 : vector<2x188xf32>
    %1583 = vector.extract_strided_slice %698 {offsets = [0, 0], sizes = [2, 188], strides = [1, 1]} : vector<2x222xf32> to vector<2x188xf32>
    %c155 = arith.constant 155 : index
    %1584 = memref.load %arg1[%c155] : memref<304xf32, #tpu.memory_space<smem>>
    %1585 = vector.broadcast %1584 : f32 to vector<2x188xf32>
    %1586 = arith.mulf %1583, %1585 : vector<2x188xf32>
    %1587 = arith.addf %1582, %1586 : vector<2x188xf32>
    %1588 = vector.extract_strided_slice %914 {offsets = [0, 0], sizes = [2, 188], strides = [1, 1]} : vector<2x222xf32> to vector<2x188xf32>
    %c159 = arith.constant 159 : index
    %1589 = memref.load %arg1[%c159] : memref<304xf32, #tpu.memory_space<smem>>
    %1590 = vector.broadcast %1589 : f32 to vector<2x188xf32>
    %1591 = arith.mulf %1588, %1590 : vector<2x188xf32>
    %1592 = arith.addf %1587, %1591 : vector<2x188xf32>
    %1593 = vector.extract_strided_slice %266 {offsets = [0, 1], sizes = [2, 188], strides = [1, 1]} : vector<2x222xf32> to vector<2x188xf32>
    %c163 = arith.constant 163 : index
    %1594 = memref.load %arg1[%c163] : memref<304xf32, #tpu.memory_space<smem>>
    %1595 = vector.broadcast %1594 : f32 to vector<2x188xf32>
    %1596 = arith.mulf %1593, %1595 : vector<2x188xf32>
    %1597 = arith.addf %1592, %1596 : vector<2x188xf32>
    %1598 = vector.extract_strided_slice %482 {offsets = [0, 1], sizes = [2, 188], strides = [1, 1]} : vector<2x222xf32> to vector<2x188xf32>
    %c167 = arith.constant 167 : index
    %1599 = memref.load %arg1[%c167] : memref<304xf32, #tpu.memory_space<smem>>
    %1600 = vector.broadcast %1599 : f32 to vector<2x188xf32>
    %1601 = arith.mulf %1598, %1600 : vector<2x188xf32>
    %1602 = arith.addf %1597, %1601 : vector<2x188xf32>
    %1603 = vector.extract_strided_slice %698 {offsets = [0, 1], sizes = [2, 188], strides = [1, 1]} : vector<2x222xf32> to vector<2x188xf32>
    %c171 = arith.constant 171 : index
    %1604 = memref.load %arg1[%c171] : memref<304xf32, #tpu.memory_space<smem>>
    %1605 = vector.broadcast %1604 : f32 to vector<2x188xf32>
    %1606 = arith.mulf %1603, %1605 : vector<2x188xf32>
    %1607 = arith.addf %1602, %1606 : vector<2x188xf32>
    %1608 = vector.extract_strided_slice %914 {offsets = [0, 1], sizes = [2, 188], strides = [1, 1]} : vector<2x222xf32> to vector<2x188xf32>
    %c175 = arith.constant 175 : index
    %1609 = memref.load %arg1[%c175] : memref<304xf32, #tpu.memory_space<smem>>
    %1610 = vector.broadcast %1609 : f32 to vector<2x188xf32>
    %1611 = arith.mulf %1608, %1610 : vector<2x188xf32>
    %1612 = arith.addf %1607, %1611 : vector<2x188xf32>
    %1613 = vector.extract_strided_slice %266 {offsets = [0, 2], sizes = [2, 188], strides = [1, 1]} : vector<2x222xf32> to vector<2x188xf32>
    %c179 = arith.constant 179 : index
    %1614 = memref.load %arg1[%c179] : memref<304xf32, #tpu.memory_space<smem>>
    %1615 = vector.broadcast %1614 : f32 to vector<2x188xf32>
    %1616 = arith.mulf %1613, %1615 : vector<2x188xf32>
    %1617 = arith.addf %1612, %1616 : vector<2x188xf32>
    %1618 = vector.extract_strided_slice %482 {offsets = [0, 2], sizes = [2, 188], strides = [1, 1]} : vector<2x222xf32> to vector<2x188xf32>
    %c183 = arith.constant 183 : index
    %1619 = memref.load %arg1[%c183] : memref<304xf32, #tpu.memory_space<smem>>
    %1620 = vector.broadcast %1619 : f32 to vector<2x188xf32>
    %1621 = arith.mulf %1618, %1620 : vector<2x188xf32>
    %1622 = arith.addf %1617, %1621 : vector<2x188xf32>
    %1623 = vector.extract_strided_slice %698 {offsets = [0, 2], sizes = [2, 188], strides = [1, 1]} : vector<2x222xf32> to vector<2x188xf32>
    %c187 = arith.constant 187 : index
    %1624 = memref.load %arg1[%c187] : memref<304xf32, #tpu.memory_space<smem>>
    %1625 = vector.broadcast %1624 : f32 to vector<2x188xf32>
    %1626 = arith.mulf %1623, %1625 : vector<2x188xf32>
    %1627 = arith.addf %1622, %1626 : vector<2x188xf32>
    %1628 = vector.extract_strided_slice %914 {offsets = [0, 2], sizes = [2, 188], strides = [1, 1]} : vector<2x222xf32> to vector<2x188xf32>
    %c191 = arith.constant 191 : index
    %1629 = memref.load %arg1[%c191] : memref<304xf32, #tpu.memory_space<smem>>
    %1630 = vector.broadcast %1629 : f32 to vector<2x188xf32>
    %1631 = arith.mulf %1628, %1630 : vector<2x188xf32>
    %1632 = arith.addf %1627, %1631 : vector<2x188xf32>
    %1633 = vector.extract_strided_slice %266 {offsets = [0, 16], sizes = [2, 188], strides = [1, 1]} : vector<2x222xf32> to vector<2x188xf32>
    %c195 = arith.constant 195 : index
    %1634 = memref.load %arg1[%c195] : memref<304xf32, #tpu.memory_space<smem>>
    %1635 = vector.broadcast %1634 : f32 to vector<2x188xf32>
    %1636 = arith.mulf %1633, %1635 : vector<2x188xf32>
    %1637 = arith.addf %1632, %1636 : vector<2x188xf32>
    %1638 = vector.extract_strided_slice %482 {offsets = [0, 16], sizes = [2, 188], strides = [1, 1]} : vector<2x222xf32> to vector<2x188xf32>
    %c199 = arith.constant 199 : index
    %1639 = memref.load %arg1[%c199] : memref<304xf32, #tpu.memory_space<smem>>
    %1640 = vector.broadcast %1639 : f32 to vector<2x188xf32>
    %1641 = arith.mulf %1638, %1640 : vector<2x188xf32>
    %1642 = arith.addf %1637, %1641 : vector<2x188xf32>
    %1643 = vector.extract_strided_slice %698 {offsets = [0, 16], sizes = [2, 188], strides = [1, 1]} : vector<2x222xf32> to vector<2x188xf32>
    %c203 = arith.constant 203 : index
    %1644 = memref.load %arg1[%c203] : memref<304xf32, #tpu.memory_space<smem>>
    %1645 = vector.broadcast %1644 : f32 to vector<2x188xf32>
    %1646 = arith.mulf %1643, %1645 : vector<2x188xf32>
    %1647 = arith.addf %1642, %1646 : vector<2x188xf32>
    %1648 = vector.extract_strided_slice %914 {offsets = [0, 16], sizes = [2, 188], strides = [1, 1]} : vector<2x222xf32> to vector<2x188xf32>
    %c207 = arith.constant 207 : index
    %1649 = memref.load %arg1[%c207] : memref<304xf32, #tpu.memory_space<smem>>
    %1650 = vector.broadcast %1649 : f32 to vector<2x188xf32>
    %1651 = arith.mulf %1648, %1650 : vector<2x188xf32>
    %1652 = arith.addf %1647, %1651 : vector<2x188xf32>
    %1653 = vector.extract_strided_slice %266 {offsets = [0, 17], sizes = [2, 188], strides = [1, 1]} : vector<2x222xf32> to vector<2x188xf32>
    %c211 = arith.constant 211 : index
    %1654 = memref.load %arg1[%c211] : memref<304xf32, #tpu.memory_space<smem>>
    %1655 = vector.broadcast %1654 : f32 to vector<2x188xf32>
    %1656 = arith.mulf %1653, %1655 : vector<2x188xf32>
    %1657 = arith.addf %1652, %1656 : vector<2x188xf32>
    %1658 = vector.extract_strided_slice %482 {offsets = [0, 17], sizes = [2, 188], strides = [1, 1]} : vector<2x222xf32> to vector<2x188xf32>
    %c215 = arith.constant 215 : index
    %1659 = memref.load %arg1[%c215] : memref<304xf32, #tpu.memory_space<smem>>
    %1660 = vector.broadcast %1659 : f32 to vector<2x188xf32>
    %1661 = arith.mulf %1658, %1660 : vector<2x188xf32>
    %1662 = arith.addf %1657, %1661 : vector<2x188xf32>
    %1663 = vector.extract_strided_slice %698 {offsets = [0, 17], sizes = [2, 188], strides = [1, 1]} : vector<2x222xf32> to vector<2x188xf32>
    %c219 = arith.constant 219 : index
    %1664 = memref.load %arg1[%c219] : memref<304xf32, #tpu.memory_space<smem>>
    %1665 = vector.broadcast %1664 : f32 to vector<2x188xf32>
    %1666 = arith.mulf %1663, %1665 : vector<2x188xf32>
    %1667 = arith.addf %1662, %1666 : vector<2x188xf32>
    %1668 = vector.extract_strided_slice %914 {offsets = [0, 17], sizes = [2, 188], strides = [1, 1]} : vector<2x222xf32> to vector<2x188xf32>
    %c223 = arith.constant 223 : index
    %1669 = memref.load %arg1[%c223] : memref<304xf32, #tpu.memory_space<smem>>
    %1670 = vector.broadcast %1669 : f32 to vector<2x188xf32>
    %1671 = arith.mulf %1668, %1670 : vector<2x188xf32>
    %1672 = arith.addf %1667, %1671 : vector<2x188xf32>
    %1673 = vector.extract_strided_slice %266 {offsets = [0, 18], sizes = [2, 188], strides = [1, 1]} : vector<2x222xf32> to vector<2x188xf32>
    %c227 = arith.constant 227 : index
    %1674 = memref.load %arg1[%c227] : memref<304xf32, #tpu.memory_space<smem>>
    %1675 = vector.broadcast %1674 : f32 to vector<2x188xf32>
    %1676 = arith.mulf %1673, %1675 : vector<2x188xf32>
    %1677 = arith.addf %1672, %1676 : vector<2x188xf32>
    %1678 = vector.extract_strided_slice %482 {offsets = [0, 18], sizes = [2, 188], strides = [1, 1]} : vector<2x222xf32> to vector<2x188xf32>
    %c231 = arith.constant 231 : index
    %1679 = memref.load %arg1[%c231] : memref<304xf32, #tpu.memory_space<smem>>
    %1680 = vector.broadcast %1679 : f32 to vector<2x188xf32>
    %1681 = arith.mulf %1678, %1680 : vector<2x188xf32>
    %1682 = arith.addf %1677, %1681 : vector<2x188xf32>
    %1683 = vector.extract_strided_slice %698 {offsets = [0, 18], sizes = [2, 188], strides = [1, 1]} : vector<2x222xf32> to vector<2x188xf32>
    %c235 = arith.constant 235 : index
    %1684 = memref.load %arg1[%c235] : memref<304xf32, #tpu.memory_space<smem>>
    %1685 = vector.broadcast %1684 : f32 to vector<2x188xf32>
    %1686 = arith.mulf %1683, %1685 : vector<2x188xf32>
    %1687 = arith.addf %1682, %1686 : vector<2x188xf32>
    %1688 = vector.extract_strided_slice %914 {offsets = [0, 18], sizes = [2, 188], strides = [1, 1]} : vector<2x222xf32> to vector<2x188xf32>
    %c239 = arith.constant 239 : index
    %1689 = memref.load %arg1[%c239] : memref<304xf32, #tpu.memory_space<smem>>
    %1690 = vector.broadcast %1689 : f32 to vector<2x188xf32>
    %1691 = arith.mulf %1688, %1690 : vector<2x188xf32>
    %1692 = arith.addf %1687, %1691 : vector<2x188xf32>
    %1693 = vector.extract_strided_slice %266 {offsets = [0, 32], sizes = [2, 188], strides = [1, 1]} : vector<2x222xf32> to vector<2x188xf32>
    %c243 = arith.constant 243 : index
    %1694 = memref.load %arg1[%c243] : memref<304xf32, #tpu.memory_space<smem>>
    %1695 = vector.broadcast %1694 : f32 to vector<2x188xf32>
    %1696 = arith.mulf %1693, %1695 : vector<2x188xf32>
    %1697 = arith.addf %1692, %1696 : vector<2x188xf32>
    %1698 = vector.extract_strided_slice %482 {offsets = [0, 32], sizes = [2, 188], strides = [1, 1]} : vector<2x222xf32> to vector<2x188xf32>
    %c247 = arith.constant 247 : index
    %1699 = memref.load %arg1[%c247] : memref<304xf32, #tpu.memory_space<smem>>
    %1700 = vector.broadcast %1699 : f32 to vector<2x188xf32>
    %1701 = arith.mulf %1698, %1700 : vector<2x188xf32>
    %1702 = arith.addf %1697, %1701 : vector<2x188xf32>
    %1703 = vector.extract_strided_slice %698 {offsets = [0, 32], sizes = [2, 188], strides = [1, 1]} : vector<2x222xf32> to vector<2x188xf32>
    %c251 = arith.constant 251 : index
    %1704 = memref.load %arg1[%c251] : memref<304xf32, #tpu.memory_space<smem>>
    %1705 = vector.broadcast %1704 : f32 to vector<2x188xf32>
    %1706 = arith.mulf %1703, %1705 : vector<2x188xf32>
    %1707 = arith.addf %1702, %1706 : vector<2x188xf32>
    %1708 = vector.extract_strided_slice %914 {offsets = [0, 32], sizes = [2, 188], strides = [1, 1]} : vector<2x222xf32> to vector<2x188xf32>
    %c255 = arith.constant 255 : index
    %1709 = memref.load %arg1[%c255] : memref<304xf32, #tpu.memory_space<smem>>
    %1710 = vector.broadcast %1709 : f32 to vector<2x188xf32>
    %1711 = arith.mulf %1708, %1710 : vector<2x188xf32>
    %1712 = arith.addf %1707, %1711 : vector<2x188xf32>
    %1713 = vector.extract_strided_slice %266 {offsets = [0, 33], sizes = [2, 188], strides = [1, 1]} : vector<2x222xf32> to vector<2x188xf32>
    %c259 = arith.constant 259 : index
    %1714 = memref.load %arg1[%c259] : memref<304xf32, #tpu.memory_space<smem>>
    %1715 = vector.broadcast %1714 : f32 to vector<2x188xf32>
    %1716 = arith.mulf %1713, %1715 : vector<2x188xf32>
    %1717 = arith.addf %1712, %1716 : vector<2x188xf32>
    %1718 = vector.extract_strided_slice %482 {offsets = [0, 33], sizes = [2, 188], strides = [1, 1]} : vector<2x222xf32> to vector<2x188xf32>
    %c263 = arith.constant 263 : index
    %1719 = memref.load %arg1[%c263] : memref<304xf32, #tpu.memory_space<smem>>
    %1720 = vector.broadcast %1719 : f32 to vector<2x188xf32>
    %1721 = arith.mulf %1718, %1720 : vector<2x188xf32>
    %1722 = arith.addf %1717, %1721 : vector<2x188xf32>
    %1723 = vector.extract_strided_slice %698 {offsets = [0, 33], sizes = [2, 188], strides = [1, 1]} : vector<2x222xf32> to vector<2x188xf32>
    %c267 = arith.constant 267 : index
    %1724 = memref.load %arg1[%c267] : memref<304xf32, #tpu.memory_space<smem>>
    %1725 = vector.broadcast %1724 : f32 to vector<2x188xf32>
    %1726 = arith.mulf %1723, %1725 : vector<2x188xf32>
    %1727 = arith.addf %1722, %1726 : vector<2x188xf32>
    %1728 = vector.extract_strided_slice %914 {offsets = [0, 33], sizes = [2, 188], strides = [1, 1]} : vector<2x222xf32> to vector<2x188xf32>
    %c271 = arith.constant 271 : index
    %1729 = memref.load %arg1[%c271] : memref<304xf32, #tpu.memory_space<smem>>
    %1730 = vector.broadcast %1729 : f32 to vector<2x188xf32>
    %1731 = arith.mulf %1728, %1730 : vector<2x188xf32>
    %1732 = arith.addf %1727, %1731 : vector<2x188xf32>
    %1733 = vector.extract_strided_slice %266 {offsets = [0, 34], sizes = [2, 188], strides = [1, 1]} : vector<2x222xf32> to vector<2x188xf32>
    %c275 = arith.constant 275 : index
    %1734 = memref.load %arg1[%c275] : memref<304xf32, #tpu.memory_space<smem>>
    %1735 = vector.broadcast %1734 : f32 to vector<2x188xf32>
    %1736 = arith.mulf %1733, %1735 : vector<2x188xf32>
    %1737 = arith.addf %1732, %1736 : vector<2x188xf32>
    %1738 = vector.extract_strided_slice %482 {offsets = [0, 34], sizes = [2, 188], strides = [1, 1]} : vector<2x222xf32> to vector<2x188xf32>
    %c279 = arith.constant 279 : index
    %1739 = memref.load %arg1[%c279] : memref<304xf32, #tpu.memory_space<smem>>
    %1740 = vector.broadcast %1739 : f32 to vector<2x188xf32>
    %1741 = arith.mulf %1738, %1740 : vector<2x188xf32>
    %1742 = arith.addf %1737, %1741 : vector<2x188xf32>
    %1743 = vector.extract_strided_slice %698 {offsets = [0, 34], sizes = [2, 188], strides = [1, 1]} : vector<2x222xf32> to vector<2x188xf32>
    %c283 = arith.constant 283 : index
    %1744 = memref.load %arg1[%c283] : memref<304xf32, #tpu.memory_space<smem>>
    %1745 = vector.broadcast %1744 : f32 to vector<2x188xf32>
    %1746 = arith.mulf %1743, %1745 : vector<2x188xf32>
    %1747 = arith.addf %1742, %1746 : vector<2x188xf32>
    %1748 = vector.extract_strided_slice %914 {offsets = [0, 34], sizes = [2, 188], strides = [1, 1]} : vector<2x222xf32> to vector<2x188xf32>
    %c287 = arith.constant 287 : index
    %1749 = memref.load %arg1[%c287] : memref<304xf32, #tpu.memory_space<smem>>
    %1750 = vector.broadcast %1749 : f32 to vector<2x188xf32>
    %1751 = arith.mulf %1748, %1750 : vector<2x188xf32>
    %1752 = arith.addf %1747, %1751 : vector<2x188xf32>
    %c299 = arith.constant 299 : index
    %1753 = memref.load %arg1[%c299] : memref<304xf32, #tpu.memory_space<smem>>
    %c303 = arith.constant 303 : index
    %1754 = memref.load %arg1[%c303] : memref<304xf32, #tpu.memory_space<smem>>
    %1755 = vector.broadcast %41 : vector<1x188xf32> to vector<2x188xf32>
    %1756 = arith.mulf %1752, %1755 : vector<2x188xf32>
    %cst_81 = arith.constant dense<0.000000e+00> : vector<2xf32>
    %1757 = vector.multi_reduction <add>, %1756, %cst_81 [1] : vector<2x188xf32> to vector<2xf32>
    %1758 = vector.shape_cast %1757 : vector<2xf32> to vector<2x1xf32>
    %cst_82 = arith.constant dense<0.000000e+00> : vector<1xf32>
    %1759 = vector.multi_reduction <add>, %1758, %cst_82 [0] : vector<2x1xf32> to vector<1xf32>
    %1760 = vector.shape_cast %1759 : vector<1xf32> to vector<1x1xf32>
    %cst_83 = arith.constant 0.00347222225 : f32
    %1761 = vector.broadcast %cst_83 : f32 to vector<1x1xf32>
    %1762 = arith.mulf %1760, %1761 : vector<1x1xf32>
    %1763 = vector.broadcast %1762 : vector<1x1xf32> to vector<2x188xf32>
    %1764 = arith.subf %1752, %1763 : vector<2x188xf32>
    %1765 = vector.broadcast %41 : vector<1x188xf32> to vector<2x188xf32>
    %1766 = arith.mulf %1764, %1765 : vector<2x188xf32>
    %1767 = arith.mulf %1766, %1766 : vector<2x188xf32>
    %cst_84 = arith.constant dense<0.000000e+00> : vector<2xf32>
    %1768 = vector.multi_reduction <add>, %1767, %cst_84 [1] : vector<2x188xf32> to vector<2xf32>
    %1769 = vector.shape_cast %1768 : vector<2xf32> to vector<2x1xf32>
    %cst_85 = arith.constant dense<0.000000e+00> : vector<1xf32>
    %1770 = vector.multi_reduction <add>, %1769, %cst_85 [0] : vector<2x1xf32> to vector<1xf32>
    %1771 = vector.shape_cast %1770 : vector<1xf32> to vector<1x1xf32>
    %cst_86 = arith.constant 0.00347222225 : f32
    %1772 = vector.broadcast %cst_86 : f32 to vector<1x1xf32>
    %1773 = arith.mulf %1771, %1772 : vector<1x1xf32>
    %cst_87 = arith.constant 9.99999974E-6 : f32
    %1774 = vector.broadcast %cst_87 : f32 to vector<1x1xf32>
    %1775 = arith.addf %1773, %1774 : vector<1x1xf32>
    %1776 = math.rsqrt %1775 : vector<1x1xf32>
    %1777 = vector.broadcast %1753 : f32 to vector<1x1xf32>
    %1778 = arith.mulf %1777, %1776 : vector<1x1xf32>
    %1779 = arith.mulf %1762, %1778 : vector<1x1xf32>
    %1780 = vector.broadcast %1754 : f32 to vector<1x1xf32>
    %1781 = arith.subf %1780, %1779 : vector<1x1xf32>
    %1782 = vector.broadcast %1778 : vector<1x1xf32> to vector<2x188xf32>
    %1783 = arith.mulf %1752, %1782 : vector<2x188xf32>
    %1784 = vector.broadcast %1781 : vector<1x1xf32> to vector<2x188xf32>
    %1785 = arith.addf %1783, %1784 : vector<2x188xf32>
    %1786 = vector.extract_strided_slice %50 {offsets = [0, 34], sizes = [2, 188], strides = [1, 1]} : vector<2x256xf32> to vector<2x188xf32>
    %1787 = arith.addf %1785, %1786 : vector<2x188xf32>
    %c3_88 = arith.constant 3 : index
    %c0_89 = arith.constant 0 : index
    %c0_90 = arith.constant 0 : index
    %1788 = vector.load %arg2[%c3_88, %c0_89, %c0_90] : memref<4x2x188xf32, #tpu.memory_space<vmem>>, vector<1x2x188xf32>
    %1789 = vector.shape_cast %1788 : vector<1x2x188xf32> to vector<2x188xf32>
    %1790 = vector.shape_cast %1787 : vector<2x188xf32> to vector<1x2x188xf32>
    tpu.vector_store %arg2[%c3_88, %c0_89, %c0_90], %1790 {strides = array<i32>} : memref<4x2x188xf32, #tpu.memory_space<vmem>>, vector<1x2x188xf32>,
    return
  }
}

</mosaic_0001>

<llo_original>
// kernel: residual_block.1
$region0: #{residual_block.1}
  #allocation0 [shape = 'u32[]', space=smem, size = 0x4, offset = 0x4, fixed_abs, tag = 'smem constant byte address 0x4 - core index']
  #allocation1 [shape = 'u32[144,128]{1,0:T(1,128)}', space=vmem, size = 0x12000, scoped, tag = 'internal scratch']
  %s0 = inlined_call_operand.vmem [shape: f32[2,4,256], index: 0, kind: input, shape index: {}]
  %s1 = inlined_call_operand.vmem [shape: f32[304], index: 1, kind: input, shape index: {}]
  %s2 = inlined_call_operand.vmem [shape: f32[4,2,188], index: 2, kind: output, shape index: {}]
  %s3 = sld [smem:[#allocation0]]
  $region22: #{residual_block.1} parent=0
    _
  %s5 = ssub.s32 1, %s3
  %s6 = scalar_select 0, %s5, %s3
  $region1: #{residual_block.1} parent=0
    #allocation2 [shape = 'u8[1536]{0}', space=smem, size = 0x600, scoped, tag = 'input window, operand 1, single buffered']
    #allocation3 [shape = 's32[1]{0}', space=sflag, size = 0x4, scoped, tag = 'scoped memory for residual_block.1']
    %7 = vsyncpa [#allocation3], 0
    // Predicated region
    $region2: #{residual_block.1} parent=1 // pred_check
      _
    $region3: #{residual_block.1} parent=1 // pred_check_branch
      %9 = sbr.rel (0) target = $region5
    $region4: #{residual_block.1} parent=1 // pred_region
      _
    $region5: #{residual_block.1} parent=1 // pred_fallthru
      _
    // Predicated region
    $region6: #{residual_block.1} parent=1 // pred_check
      _
    $region7: #{residual_block.1} parent=1 // pred_check_branch
      %11 = sbr.rel (0) target = $region9
    $region8: #{residual_block.1} parent=1 // pred_region
      %s13 = ssub.s32 48, 48
      %14 = vsyncadd [#allocation3], %s13
      %s16 = sshll.u32 %s1, 4
      %s17 = int_to_ptr.vmem [resolvable:$true] %s16
      %19 = dma.vmem_to_smem %s17, 48, [#allocation2], [#allocation3]
    $region9: #{residual_block.1} parent=1 // pred_fallthru
      _
    // Predicated region
    $region10: #{residual_block.1} parent=1 // pred_check
      _
    $region11: #{residual_block.1} parent=1 // pred_check_branch
      %21 = sbr.rel (0) target = $region13
    $region12: #{residual_block.1} parent=1 // pred_region
      %22 = dma.done [#allocation3], 48
    $region13: #{residual_block.1} parent=1 // pred_fallthru
      _
    %23 = sfence
    %v24 = vlaneseq
    %v25 = vand.u32 %v24, 127
    %v26 = vadd.s32 %v25, 128
    %vm27 = vcmp.lt.s32.totalorder %v25, 0
    %v28 = vsub.s32 0, %v25
    %v29 = vsel %vm27, %v28, %v25
    %v30 = vshrl.u32 %v29, 4
    %v31 = vand.u32 %v29, 15
    %v32 = vsub.s32 0, %v31
    %v33 = vsel %vm27, %v32, %v31
    %vm34 = vcmp.lt.s32.totalorder %v26, 0
    %v35 = vsub.s32 0, %v26
    %v36 = vsel %vm34, %v35, %v26
    %v37 = vshrl.u32 %v36, 4
    %v38 = vand.u32 %v36, 15
    %v39 = vsub.s32 0, %v38
    %v40 = vsel %vm34, %v39, %v38
    %vm41 = vcmp.ne.s32.totalorder %v33, 0
    %vm42 = vcmp.ne.s32.totalorder %v40, 0
    %vm43 = vcmp.lt.s32.totalorder %v33, 0
    %vm44 = vcmp.lt.s32.totalorder %v40, 0
    %vm45 = vmand %vm43, %vm41
    %vm46 = vmand %vm44, %vm42
    %v47 = vadd.s32 %v33, 16
    %v48 = vadd.s32 %v40, 16
    %v49 = vsel %vm45, %v47, %v33
    %v50 = vsel %vm46, %v48, %v40
    %vm51 = vcmp.lt.s32.totalorder %v49, 14
    %vm52 = vcmp.lt.s32.totalorder %v50, 14
    %v53 = vsel %vm51, 1, 0
    %v54 = vsel %vm52, 1, 0
    %v55 = vcvt.s32.f32 %v53
    %v56 = vcvt.s32.f32 %v54
    %vm57 = vcmp.lt.s32.totalorder %v49, 12
    %vm58 = vcmp.lt.s32.totalorder %v50, 12
    %v59 = vsel %vm57, 1, 0
    %v60 = vsel %vm58, 1, 0
    %v61 = vcvt.s32.f32 %v59
    %v62 = vcvt.s32.f32 %v60
    %v63 = vld [vmem:[%s0] sm:$0xff]
    %v64 = vld [vmem:[%s0 + $0x8] sm:$0xff]
    %s65 = sld [smem:[#allocation2]]
    %v66 = vstv %s65
    %v67 = vmul.f32 %v63, %v66
    %v68 = vmul.f32 %v64, %v66
    %v69 = vadd.f32 %v67, 0.0
    %v70 = vadd.f32 %v68, 0.0
    %s71 = sld [smem:[#allocation2 + $0x4]]
    %v72 = vstv %s71
    %v73 = vmul.f32 %v63, %v72
    %v74 = vmul.f32 %v64, %v72
    %v77 = vrot.slane %v73, 5
    %v78 = vrot.slane %v77, 4
    %v79 = vrot.slane %v74, 5
    %v80 = vrot.slane %v79, 4
    %v83 = vadd.f32 %v69, %v78
    %v84 = vadd.f32 %v70, %v80
    %s85 = sld [smem:[#allocation2 + $0x8]]
    %v86 = vstv %s85
    %v87 = vmul.f32 %v63, %v86
    %v88 = vmul.f32 %v64, %v86
    %v91 = vrot.slane %v87, 6
    %v92 = vrot.slane %v91, 4
    %v93 = vrot.slane %v88, 6
    %v94 = vrot.slane %v93, 4
    %v97 = vadd.f32 %v83, %v92
    %v98 = vadd.f32 %v84, %v94
    %s99 = sld [smem:[#allocation2 + $0xc]]
    %v100 = vstv %s99
    %v101 = vmul.f32 %v63, %v100
    %v102 = vmul.f32 %v64, %v100
    %v105 = vrot.slane %v101, 7
    %v106 = vrot.slane %v105, 4
    %v107 = vrot.slane %v102, 7
    %v108 = vrot.slane %v107, 4
    %v111 = vadd.f32 %v97, %v106
    %v112 = vadd.f32 %v98, %v108
    %s113 = sld [smem:[#allocation2 + $0x10]]
    %v114 = vstv %s113
    %v115 = vmul.f32 %v63, %v114
    %v116 = vmul.f32 %v64, %v114
    %119 = vrot.lane.b32.xlu0 %v115, 127
    %v120 = vpop.permute.xlu0 %119
    %121 = vrot.lane.b32.xlu0 %v116, 127
    %v122 = vpop.permute.xlu0 %121
    %v123 = vrot.slane %v120, 4
    %v124 = vrot.slane %v122, 4
    %vm125 = vcmask 1039360
    %v126 = vsel %vm125, %v120, %v123
    %v127 = vsel %vm125, %v122, %v124
    %v130 = vadd.f32 %v111, %v126
    %v131 = vadd.f32 %v112, %v127
    %s132 = sld [smem:[#allocation2 + $0x14]]
    %v133 = vstv %s132
    %v134 = vmul.f32 %v63, %v133
    %v135 = vmul.f32 %v64, %v133
    %v138 = vrot.slane %v134, 5
    %v139 = vrot.slane %v138, 4
    %v140 = vrot.slane %v135, 5
    %v141 = vrot.slane %v140, 4
    %142 = vrot.lane.b32.xlu0 %v139, 127
    %v143 = vpop.permute.xlu0 %142
    %144 = vrot.lane.b32.xlu0 %v141, 127
    %v145 = vpop.permute.xlu0 %144
    %v146 = vrot.slane %v143, 4
    %v147 = vrot.slane %v145, 4
    %v148 = vsel %vm125, %v143, %v146
    %v149 = vsel %vm125, %v145, %v147
    %v152 = vadd.f32 %v130, %v148
    %v153 = vadd.f32 %v131, %v149
    %s154 = sld [smem:[#allocation2 + $0x18]]
    %v155 = vstv %s154
    %v156 = vmul.f32 %v63, %v155
    %v157 = vmul.f32 %v64, %v155
    %v160 = vrot.slane %v156, 6
    %v161 = vrot.slane %v160, 4
    %v162 = vrot.slane %v157, 6
    %v163 = vrot.slane %v162, 4
    %164 = vrot.lane.b32.xlu0 %v161, 127
    %v165 = vpop.permute.xlu0 %164
    %166 = vrot.lane.b32.xlu0 %v163, 127
    %v167 = vpop.permute.xlu0 %166
    %v168 = vrot.slane %v165, 4
    %v169 = vrot.slane %v167, 4
    %v170 = vsel %vm125, %v165, %v168
    %v171 = vsel %vm125, %v167, %v169
    %v174 = vadd.f32 %v152, %v170
    %v175 = vadd.f32 %v153, %v171
    %s176 = sld [smem:[#allocation2 + $0x1c]]
    %v177 = vstv %s176
    %v178 = vmul.f32 %v63, %v177
    %v179 = vmul.f32 %v64, %v177
    %v182 = vrot.slane %v178, 7
    %v183 = vrot.slane %v182, 4
    %v184 = vrot.slane %v179, 7
    %v185 = vrot.slane %v184, 4
    %186 = vrot.lane.b32.xlu0 %v183, 127
    %v187 = vpop.permute.xlu0 %186
    %188 = vrot.lane.b32.xlu0 %v185, 127
    %v189 = vpop.permute.xlu0 %188
    %v190 = vrot.slane %v187, 4
    %v191 = vrot.slane %v189, 4
    %v192 = vsel %vm125, %v187, %v190
    %v193 = vsel %vm125, %v189, %v191
    %v196 = vadd.f32 %v174, %v192
    %v197 = vadd.f32 %v175, %v193
    %s198 = sld [smem:[#allocation2 + $0x20]]
    %v199 = vstv %s198
    %v200 = vmul.f32 %v63, %v199
    %v201 = vmul.f32 %v64, %v199
    %204 = vrot.lane.b32.xlu0 %v200, 126
    %v205 = vpop.permute.xlu0 %204
    %206 = vrot.lane.b32.xlu0 %v201, 126
    %v207 = vpop.permute.xlu0 %206
    %v208 = vrot.slane %v205, 4
    %v209 = vrot.slane %v207, 4
    %vm210 = vcmask 1031168
    %v211 = vsel %vm210, %v205, %v208
    %v212 = vsel %vm210, %v207, %v209
    %v215 = vadd.f32 %v196, %v211
    %v216 = vadd.f32 %v197, %v212
    %s217 = sld [smem:[#allocation2 + $0x24]]
    %v218 = vstv %s217
    %v219 = vmul.f32 %v63, %v218
    %v220 = vmul.f32 %v64, %v218
    %v223 = vrot.slane %v219, 5
    %v224 = vrot.slane %v223, 4
    %v225 = vrot.slane %v220, 5
    %v226 = vrot.slane %v225, 4
    %227 = vrot.lane.b32.xlu0 %v224, 126
    %v228 = vpop.permute.xlu0 %227
    %229 = vrot.lane.b32.xlu0 %v226, 126
    %v230 = vpop.permute.xlu0 %229
    %v231 = vrot.slane %v228, 4
    %v232 = vrot.slane %v230, 4
    %v233 = vsel %vm210, %v228, %v231
    %v234 = vsel %vm210, %v230, %v232
    %v237 = vadd.f32 %v215, %v233
    %v238 = vadd.f32 %v216, %v234
    %s239 = sld [smem:[#allocation2 + $0x28]]
    %v240 = vstv %s239
    %v241 = vmul.f32 %v63, %v240
    %v242 = vmul.f32 %v64, %v240
    %v245 = vrot.slane %v241, 6
    %v246 = vrot.slane %v245, 4
    %v247 = vrot.slane %v242, 6
    %v248 = vrot.slane %v247, 4
    %249 = vrot.lane.b32.xlu0 %v246, 126
    %v250 = vpop.permute.xlu0 %249
    %251 = vrot.lane.b32.xlu0 %v248, 126
    %v252 = vpop.permute.xlu0 %251
    %v253 = vrot.slane %v250, 4
    %v254 = vrot.slane %v252, 4
    %v255 = vsel %vm210, %v250, %v253
    %v256 = vsel %vm210, %v252, %v254
    %v259 = vadd.f32 %v237, %v255
    %v260 = vadd.f32 %v238, %v256
    %s261 = sld [smem:[#allocation2 + $0x2c]]
    %v262 = vstv %s261
    %v263 = vmul.f32 %v63, %v262
    %v264 = vmul.f32 %v64, %v262
    %v267 = vrot.slane %v263, 7
    %v268 = vrot.slane %v267, 4
    %v269 = vrot.slane %v264, 7
    %v270 = vrot.slane %v269, 4
    %271 = vrot.lane.b32.xlu0 %v268, 126
    %v272 = vpop.permute.xlu0 %271
    %273 = vrot.lane.b32.xlu0 %v270, 126
    %v274 = vpop.permute.xlu0 %273
    %v275 = vrot.slane %v272, 4
    %v276 = vrot.slane %v274, 4
    %v277 = vsel %vm210, %v272, %v275
    %v278 = vsel %vm210, %v274, %v276
    %v281 = vadd.f32 %v259, %v277
    %v282 = vadd.f32 %v260, %v278
    %s283 = sld [smem:[#allocation2 + $0x30]]
    %v284 = vstv %s283
    %v285 = vmul.f32 %v63, %v284
    %v286 = vmul.f32 %v64, %v284
    %289 = vrot.lane.b32.xlu0 %v285, 112
    %v290 = vpop.permute.xlu0 %289
    %291 = vrot.lane.b32.xlu0 %v286, 112
    %v292 = vpop.permute.xlu0 %291
    %v293 = vrot.slane %v290, 4
    %v294 = vrot.slane %v292, 4
    %vm295 = vcmask 916480
    %v296 = vsel %vm295, %v290, %v293
    %v297 = vsel %vm295, %v292, %v294
    %v300 = vadd.f32 %v281, %v296
    %v301 = vadd.f32 %v282, %v297
    %s302 = sld [smem:[#allocation2 + $0x34]]
    %v303 = vstv %s302
    %v304 = vmul.f32 %v63, %v303
    %v305 = vmul.f32 %v64, %v303
    %v308 = vrot.slane %v304, 5
    %v309 = vrot.slane %v308, 4
    %v310 = vrot.slane %v305, 5
    %v311 = vrot.slane %v310, 4
    %312 = vrot.lane.b32.xlu0 %v309, 112
    %v313 = vpop.permute.xlu0 %312
    %314 = vrot.lane.b32.xlu0 %v311, 112
    %v315 = vpop.permute.xlu0 %314
    %v316 = vrot.slane %v313, 4
    %v317 = vrot.slane %v315, 4
    %v318 = vsel %vm295, %v313, %v316
    %v319 = vsel %vm295, %v315, %v317
    %v322 = vadd.f32 %v300, %v318
    %v323 = vadd.f32 %v301, %v319
    %s324 = sld [smem:[#allocation2 + $0x38]]
    %v325 = vstv %s324
    %v326 = vmul.f32 %v63, %v325
    %v327 = vmul.f32 %v64, %v325
    %v330 = vrot.slane %v326, 6
    %v331 = vrot.slane %v330, 4
    %v332 = vrot.slane %v327, 6
    %v333 = vrot.slane %v332, 4
    %334 = vrot.lane.b32.xlu0 %v331, 112
    %v335 = vpop.permute.xlu0 %334
    %336 = vrot.lane.b32.xlu0 %v333, 112
    %v337 = vpop.permute.xlu0 %336
    %v338 = vrot.slane %v335, 4
    %v339 = vrot.slane %v337, 4
    %v340 = vsel %vm295, %v335, %v338
    %v341 = vsel %vm295, %v337, %v339
    %v344 = vadd.f32 %v322, %v340
    %v345 = vadd.f32 %v323, %v341
    %s346 = sld [smem:[#allocation2 + $0x3c]]
    %v347 = vstv %s346
    %v348 = vmul.f32 %v63, %v347
    %v349 = vmul.f32 %v64, %v347
    %v352 = vrot.slane %v348, 7
    %v353 = vrot.slane %v352, 4
    %v354 = vrot.slane %v349, 7
    %v355 = vrot.slane %v354, 4
    %356 = vrot.lane.b32.xlu0 %v353, 112
    %v357 = vpop.permute.xlu0 %356
    %358 = vrot.lane.b32.xlu0 %v355, 112
    %v359 = vpop.permute.xlu0 %358
    %v360 = vrot.slane %v357, 4
    %v361 = vrot.slane %v359, 4
    %v362 = vsel %vm295, %v357, %v360
    %v363 = vsel %vm295, %v359, %v361
    %v366 = vadd.f32 %v344, %v362
    %v367 = vadd.f32 %v345, %v363
    %s368 = sld [smem:[#allocation2 + $0x40]]
    %v369 = vstv %s368
    %v370 = vmul.f32 %v63, %v369
    %v371 = vmul.f32 %v64, %v369
    %374 = vrot.lane.b32.xlu0 %v370, 111
    %v375 = vpop.permute.xlu0 %374
    %376 = vrot.lane.b32.xlu0 %v371, 111
    %v377 = vpop.permute.xlu0 %376
    %v378 = vrot.slane %v375, 4
    %v379 = vrot.slane %v377, 4
    %vm380 = vcmask 908288
    %v381 = vsel %vm380, %v375, %v378
    %v382 = vsel %vm380, %v377, %v379
    %v385 = vadd.f32 %v366, %v381
    %v386 = vadd.f32 %v367, %v382
    %s387 = sld [smem:[#allocation2 + $0x44]]
    %v388 = vstv %s387
    %v389 = vmul.f32 %v63, %v388
    %v390 = vmul.f32 %v64, %v388
    %v393 = vrot.slane %v389, 5
    %v394 = vrot.slane %v393, 4
    %v395 = vrot.slane %v390, 5
    %v396 = vrot.slane %v395, 4
    %397 = vrot.lane.b32.xlu0 %v394, 111
    %v398 = vpop.permute.xlu0 %397
    %399 = vrot.lane.b32.xlu0 %v396, 111
    %v400 = vpop.permute.xlu0 %399
    %v401 = vrot.slane %v398, 4
    %v402 = vrot.slane %v400, 4
    %v403 = vsel %vm380, %v398, %v401
    %v404 = vsel %vm380, %v400, %v402
    %v407 = vadd.f32 %v385, %v403
    %v408 = vadd.f32 %v386, %v404
    %s409 = sld [smem:[#allocation2 + $0x48]]
    %v410 = vstv %s409
    %v411 = vmul.f32 %v63, %v410
    %v412 = vmul.f32 %v64, %v410
    %v415 = vrot.slane %v411, 6
    %v416 = vrot.slane %v415, 4
    %v417 = vrot.slane %v412, 6
    %v418 = vrot.slane %v417, 4
    %419 = vrot.lane.b32.xlu0 %v416, 111
    %v420 = vpop.permute.xlu0 %419
    %421 = vrot.lane.b32.xlu0 %v418, 111
    %v422 = vpop.permute.xlu0 %421
    %v423 = vrot.slane %v420, 4
    %v424 = vrot.slane %v422, 4
    %v425 = vsel %vm380, %v420, %v423
    %v426 = vsel %vm380, %v422, %v424
    %v429 = vadd.f32 %v407, %v425
    %v430 = vadd.f32 %v408, %v426
    %s431 = sld [smem:[#allocation2 + $0x4c]]
    %v432 = vstv %s431
    %v433 = vmul.f32 %v63, %v432
    %v434 = vmul.f32 %v64, %v432
    %v437 = vrot.slane %v433, 7
    %v438 = vrot.slane %v437, 4
    %v439 = vrot.slane %v434, 7
    %v440 = vrot.slane %v439, 4
    %441 = vrot.lane.b32.xlu0 %v438, 111
    %v442 = vpop.permute.xlu0 %441
    %443 = vrot.lane.b32.xlu0 %v440, 111
    %v444 = vpop.permute.xlu0 %443
    %v445 = vrot.slane %v442, 4
    %v446 = vrot.slane %v444, 4
    %v447 = vsel %vm380, %v442, %v445
    %v448 = vsel %vm380, %v444, %v446
    %v451 = vadd.f32 %v429, %v447
    %v452 = vadd.f32 %v430, %v448
    %s453 = sld [smem:[#allocation2 + $0x50]]
    %v454 = vstv %s453
    %v455 = vmul.f32 %v63, %v454
    %v456 = vmul.f32 %v64, %v454
    %459 = vrot.lane.b32.xlu0 %v455, 110
    %v460 = vpop.permute.xlu0 %459
    %461 = vrot.lane.b32.xlu0 %v456, 110
    %v462 = vpop.permute.xlu0 %461
    %v463 = vrot.slane %v460, 4
    %v464 = vrot.slane %v462, 4
    %vm465 = vcmask 900096
    %v466 = vsel %vm465, %v460, %v463
    %v467 = vsel %vm465, %v462, %v464
    %v470 = vadd.f32 %v451, %v466
    %v471 = vadd.f32 %v452, %v467
    %s472 = sld [smem:[#allocation2 + $0x54]]
    %v473 = vstv %s472
    %v474 = vmul.f32 %v63, %v473
    %v475 = vmul.f32 %v64, %v473
    %v478 = vrot.slane %v474, 5
    %v479 = vrot.slane %v478, 4
    %v480 = vrot.slane %v475, 5
    %v481 = vrot.slane %v480, 4
    %482 = vrot.lane.b32.xlu0 %v479, 110
    %v483 = vpop.permute.xlu0 %482
    %484 = vrot.lane.b32.xlu0 %v481, 110
    %v485 = vpop.permute.xlu0 %484
    %v486 = vrot.slane %v483, 4
    %v487 = vrot.slane %v485, 4
    %v488 = vsel %vm465, %v483, %v486
    %v489 = vsel %vm465, %v485, %v487
    %v492 = vadd.f32 %v470, %v488
    %v493 = vadd.f32 %v471, %v489
    %s494 = sld [smem:[#allocation2 + $0x58]]
    %v495 = vstv %s494
    %v496 = vmul.f32 %v63, %v495
    %v497 = vmul.f32 %v64, %v495
    %v500 = vrot.slane %v496, 6
    %v501 = vrot.slane %v500, 4
    %v502 = vrot.slane %v497, 6
    %v503 = vrot.slane %v502, 4
    %504 = vrot.lane.b32.xlu0 %v501, 110
    %v505 = vpop.permute.xlu0 %504
    %506 = vrot.lane.b32.xlu0 %v503, 110
    %v507 = vpop.permute.xlu0 %506
    %v508 = vrot.slane %v505, 4
    %v509 = vrot.slane %v507, 4
    %v510 = vsel %vm465, %v505, %v508
    %v511 = vsel %vm465, %v507, %v509
    %v514 = vadd.f32 %v492, %v510
    %v515 = vadd.f32 %v493, %v511
    %s516 = sld [smem:[#allocation2 + $0x5c]]
    %v517 = vstv %s516
    %v518 = vmul.f32 %v63, %v517
    %v519 = vmul.f32 %v64, %v517
    %v522 = vrot.slane %v518, 7
    %v523 = vrot.slane %v522, 4
    %v524 = vrot.slane %v519, 7
    %v525 = vrot.slane %v524, 4
    %526 = vrot.lane.b32.xlu0 %v523, 110
    %v527 = vpop.permute.xlu0 %526
    %528 = vrot.lane.b32.xlu0 %v525, 110
    %v529 = vpop.permute.xlu0 %528
    %v530 = vrot.slane %v527, 4
    %v531 = vrot.slane %v529, 4
    %v532 = vsel %vm465, %v527, %v530
    %v533 = vsel %vm465, %v529, %v531
    %v536 = vadd.f32 %v514, %v532
    %v537 = vadd.f32 %v515, %v533
    %s538 = sld [smem:[#allocation2 + $0x60]]
    %v539 = vstv %s538
    %v540 = vmul.f32 %v63, %v539
    %v541 = vmul.f32 %v64, %v539
    %544 = vrot.lane.b32.xlu0 %v540, 96
    %v545 = vpop.permute.xlu0 %544
    %546 = vrot.lane.b32.xlu0 %v541, 96
    %v547 = vpop.permute.xlu0 %546
    %v548 = vrot.slane %v545, 4
    %v549 = vrot.slane %v547, 4
    %vm550 = vcmask 785408
    %v551 = vsel %vm550, %v545, %v548
    %v552 = vsel %vm550, %v547, %v549
    %v555 = vadd.f32 %v536, %v551
    %v556 = vadd.f32 %v537, %v552
    %s557 = sld [smem:[#allocation2 + $0x64]]
    %v558 = vstv %s557
    %v559 = vmul.f32 %v63, %v558
    %v560 = vmul.f32 %v64, %v558
    %v563 = vrot.slane %v559, 5
    %v564 = vrot.slane %v563, 4
    %v565 = vrot.slane %v560, 5
    %v566 = vrot.slane %v565, 4
    %567 = vrot.lane.b32.xlu0 %v564, 96
    %v568 = vpop.permute.xlu0 %567
    %569 = vrot.lane.b32.xlu0 %v566, 96
    %v570 = vpop.permute.xlu0 %569
    %v571 = vrot.slane %v568, 4
    %v572 = vrot.slane %v570, 4
    %v573 = vsel %vm550, %v568, %v571
    %v574 = vsel %vm550, %v570, %v572
    %v577 = vadd.f32 %v555, %v573
    %v578 = vadd.f32 %v556, %v574
    %s579 = sld [smem:[#allocation2 + $0x68]]
    %v580 = vstv %s579
    %v581 = vmul.f32 %v63, %v580
    %v582 = vmul.f32 %v64, %v580
    %v585 = vrot.slane %v581, 6
    %v586 = vrot.slane %v585, 4
    %v587 = vrot.slane %v582, 6
    %v588 = vrot.slane %v587, 4
    %589 = vrot.lane.b32.xlu0 %v586, 96
    %v590 = vpop.permute.xlu0 %589
    %591 = vrot.lane.b32.xlu0 %v588, 96
    %v592 = vpop.permute.xlu0 %591
    %v593 = vrot.slane %v590, 4
    %v594 = vrot.slane %v592, 4
    %v595 = vsel %vm550, %v590, %v593
    %v596 = vsel %vm550, %v592, %v594
    %v599 = vadd.f32 %v577, %v595
    %v600 = vadd.f32 %v578, %v596
    %s601 = sld [smem:[#allocation2 + $0x6c]]
    %v602 = vstv %s601
    %v603 = vmul.f32 %v63, %v602
    %v604 = vmul.f32 %v64, %v602
    %v607 = vrot.slane %v603, 7
    %v608 = vrot.slane %v607, 4
    %v609 = vrot.slane %v604, 7
    %v610 = vrot.slane %v609, 4
    %611 = vrot.lane.b32.xlu0 %v608, 96
    %v612 = vpop.permute.xlu0 %611
    %613 = vrot.lane.b32.xlu0 %v610, 96
    %v614 = vpop.permute.xlu0 %613
    %v615 = vrot.slane %v612, 4
    %v616 = vrot.slane %v614, 4
    %v617 = vsel %vm550, %v612, %v615
    %v618 = vsel %vm550, %v614, %v616
    %v621 = vadd.f32 %v599, %v617
    %v622 = vadd.f32 %v600, %v618
    %s623 = sld [smem:[#allocation2 + $0x70]]
    %v624 = vstv %s623
    %v625 = vmul.f32 %v63, %v624
    %v626 = vmul.f32 %v64, %v624
    %629 = vrot.lane.b32.xlu0 %v625, 95
    %v630 = vpop.permute.xlu0 %629
    %631 = vrot.lane.b32.xlu0 %v626, 95
    %v632 = vpop.permute.xlu0 %631
    %v633 = vrot.slane %v630, 4
    %v634 = vrot.slane %v632, 4
    %vm635 = vcmask 777216
    %v636 = vsel %vm635, %v630, %v633
    %v637 = vsel %vm635, %v632, %v634
    %v640 = vadd.f32 %v621, %v636
    %v641 = vadd.f32 %v622, %v637
    %s642 = sld [smem:[#allocation2 + $0x74]]
    %v643 = vstv %s642
    %v644 = vmul.f32 %v63, %v643
    %v645 = vmul.f32 %v64, %v643
    %v648 = vrot.slane %v644, 5
    %v649 = vrot.slane %v648, 4
    %v650 = vrot.slane %v645, 5
    %v651 = vrot.slane %v650, 4
    %652 = vrot.lane.b32.xlu0 %v649, 95
    %v653 = vpop.permute.xlu0 %652
    %654 = vrot.lane.b32.xlu0 %v651, 95
    %v655 = vpop.permute.xlu0 %654
    %v656 = vrot.slane %v653, 4
    %v657 = vrot.slane %v655, 4
    %v658 = vsel %vm635, %v653, %v656
    %v659 = vsel %vm635, %v655, %v657
    %v662 = vadd.f32 %v640, %v658
    %v663 = vadd.f32 %v641, %v659
    %s664 = sld [smem:[#allocation2 + $0x78]]
    %v665 = vstv %s664
    %v666 = vmul.f32 %v63, %v665
    %v667 = vmul.f32 %v64, %v665
    %v670 = vrot.slane %v666, 6
    %v671 = vrot.slane %v670, 4
    %v672 = vrot.slane %v667, 6
    %v673 = vrot.slane %v672, 4
    %674 = vrot.lane.b32.xlu0 %v671, 95
    %v675 = vpop.permute.xlu0 %674
    %676 = vrot.lane.b32.xlu0 %v673, 95
    %v677 = vpop.permute.xlu0 %676
    %v678 = vrot.slane %v675, 4
    %v679 = vrot.slane %v677, 4
    %v680 = vsel %vm635, %v675, %v678
    %v681 = vsel %vm635, %v677, %v679
    %v684 = vadd.f32 %v662, %v680
    %v685 = vadd.f32 %v663, %v681
    %s686 = sld [smem:[#allocation2 + $0x7c]]
    %v687 = vstv %s686
    %v688 = vmul.f32 %v63, %v687
    %v689 = vmul.f32 %v64, %v687
    %v692 = vrot.slane %v688, 7
    %v693 = vrot.slane %v692, 4
    %v694 = vrot.slane %v689, 7
    %v695 = vrot.slane %v694, 4
    %696 = vrot.lane.b32.xlu0 %v693, 95
    %v697 = vpop.permute.xlu0 %696
    %698 = vrot.lane.b32.xlu0 %v695, 95
    %v699 = vpop.permute.xlu0 %698
    %v700 = vrot.slane %v697, 4
    %v701 = vrot.slane %v699, 4
    %v702 = vsel %vm635, %v697, %v700
    %v703 = vsel %vm635, %v699, %v701
    %v706 = vadd.f32 %v684, %v702
    %v707 = vadd.f32 %v685, %v703
    %s708 = sld [smem:[#allocation2 + $0x80]]
    %v709 = vstv %s708
    %v710 = vmul.f32 %v63, %v709
    %v711 = vmul.f32 %v64, %v709
    %714 = vrot.lane.b32.xlu0 %v710, 94
    %v715 = vpop.permute.xlu0 %714
    %716 = vrot.lane.b32.xlu0 %v711, 94
    %v717 = vpop.permute.xlu0 %716
    %v718 = vrot.slane %v715, 4
    %v719 = vrot.slane %v717, 4
    %vm720 = vcmask 769024
    %v721 = vsel %vm720, %v715, %v718
    %v722 = vsel %vm720, %v717, %v719
    %v725 = vadd.f32 %v706, %v721
    %v726 = vadd.f32 %v707, %v722
    %s727 = sld [smem:[#allocation2 + $0x84]]
    %v728 = vstv %s727
    %v729 = vmul.f32 %v63, %v728
    %v730 = vmul.f32 %v64, %v728
    %v733 = vrot.slane %v729, 5
    %v734 = vrot.slane %v733, 4
    %v735 = vrot.slane %v730, 5
    %v736 = vrot.slane %v735, 4
    %737 = vrot.lane.b32.xlu0 %v734, 94
    %v738 = vpop.permute.xlu0 %737
    %739 = vrot.lane.b32.xlu0 %v736, 94
    %v740 = vpop.permute.xlu0 %739
    %v741 = vrot.slane %v738, 4
    %v742 = vrot.slane %v740, 4
    %v743 = vsel %vm720, %v738, %v741
    %v744 = vsel %vm720, %v740, %v742
    %v747 = vadd.f32 %v725, %v743
    %v748 = vadd.f32 %v726, %v744
    %s749 = sld [smem:[#allocation2 + $0x88]]
    %v750 = vstv %s749
    %v751 = vmul.f32 %v63, %v750
    %v752 = vmul.f32 %v64, %v750
    %v755 = vrot.slane %v751, 6
    %v756 = vrot.slane %v755, 4
    %v757 = vrot.slane %v752, 6
    %v758 = vrot.slane %v757, 4
    %759 = vrot.lane.b32.xlu0 %v756, 94
    %v760 = vpop.permute.xlu0 %759
    %761 = vrot.lane.b32.xlu0 %v758, 94
    %v762 = vpop.permute.xlu0 %761
    %v763 = vrot.slane %v760, 4
    %v764 = vrot.slane %v762, 4
    %v765 = vsel %vm720, %v760, %v763
    %v766 = vsel %vm720, %v762, %v764
    %v769 = vadd.f32 %v747, %v765
    %v770 = vadd.f32 %v748, %v766
    %s771 = sld [smem:[#allocation2 + $0x8c]]
    %v772 = vstv %s771
    %v773 = vmul.f32 %v63, %v772
    %v774 = vmul.f32 %v64, %v772
    %v777 = vrot.slane %v773, 7
    %v778 = vrot.slane %v777, 4
    %v779 = vrot.slane %v774, 7
    %v780 = vrot.slane %v779, 4
    %781 = vrot.lane.b32.xlu0 %v778, 94
    %v782 = vpop.permute.xlu0 %781
    %783 = vrot.lane.b32.xlu0 %v780, 94
    %v784 = vpop.permute.xlu0 %783
    %v785 = vrot.slane %v782, 4
    %v786 = vrot.slane %v784, 4
    %v787 = vsel %vm720, %v782, %v785
    %v788 = vsel %vm720, %v784, %v786
    %v791 = vadd.f32 %v769, %v787
    %v792 = vadd.f32 %v770, %v788
    %s793 = sld [smem:[#allocation2 + $0x120]]
    %s794 = sld [smem:[#allocation2 + $0x124]]
    %v797 = vcombine.low %v55, %v56
    %v798 = vrot.slane %v797, 1
    %v801 = vmul.f32 %v791, %v797
    %v802 = vmul.f32 %v792, %v798
    %v805 = vlaneseq
    %v806 = vshrl.u32 %v805, 7
    %v807 = vsub.s32 0, %v806
    %v808 = vrot.slane %v801, %v807
    %v809 = vlaneseq
    %v810 = vshrl.u32 %v809, 7
    %v811 = vsub.s32 4, %v810
    %v812 = vrot.slane %v801, %v811
    %v813 = vlaneseq
    %v814 = vshrl.u32 %v813, 7
    %v815 = vsub.s32 0, %v814
    %v816 = vrot.slane %v802, %v815
    %v817 = vlaneseq
    %v818 = vshrl.u32 %v817, 7
    %v819 = vsub.s32 4, %v818
    %v820 = vrot.slane %v802, %v819
    %vm821 = vcmask 1041409
    %v822 = vsel %vm821, %v816, %v808
    %v823 = vsel %vm821, %v820, %v812
    %vm826 = vcmask 1041408
    %v827 = vsel %vm826, %v822, 0.0
    %vm828 = vcmask 762880
    %v829 = vsel %vm828, %v823, 0.0
    %v830 = vadd.f32 %v827, %v829
    %831 = vadd.xlane.f32.xlu0 %v830
    %v832 = vpop.xlane.xlu0 %831
    %v833 = vsel %vm826, %v832, 0.0
    %v834 = vrot.slane %v833, 4
    %v835 = vadd.f32 %v833, %v834
    %v836 = vrot.slane %v835, 2
    %v837 = vadd.f32 %v835, %v836
    %v838 = vrot.slane %v837, 1
    %v839 = vadd.f32 %v837, %v838
    %v840 = vmul.f32 %v839, 0.0025510204
    %v841 = vsub.f32 %v791, %v840
    %v842 = vsub.f32 %v792, %v840
    %v843 = vmul.f32 %v841, %v797
    %v844 = vmul.f32 %v842, %v798
    %v845 = vmul.f32 %v843, %v843
    %v846 = vmul.f32 %v844, %v844
    %v849 = vlaneseq
    %v850 = vshrl.u32 %v849, 7
    %v851 = vsub.s32 0, %v850
    %v852 = vrot.slane %v845, %v851
    %v853 = vlaneseq
    %v854 = vshrl.u32 %v853, 7
    %v855 = vsub.s32 4, %v854
    %v856 = vrot.slane %v845, %v855
    %v857 = vlaneseq
    %v858 = vshrl.u32 %v857, 7
    %v859 = vsub.s32 0, %v858
    %v860 = vrot.slane %v846, %v859
    %v861 = vlaneseq
    %v862 = vshrl.u32 %v861, 7
    %v863 = vsub.s32 4, %v862
    %v864 = vrot.slane %v846, %v863
    %v865 = vsel %vm821, %v860, %v852
    %v866 = vsel %vm821, %v864, %v856
    %v869 = vsel %vm826, %v865, 0.0
    %v870 = vsel %vm828, %v866, 0.0
    %v871 = vadd.f32 %v869, %v870
    %872 = vadd.xlane.f32.xlu0 %v871
    %v873 = vpop.xlane.xlu0 %872
    %v874 = vsel %vm826, %v873, 0.0
    %v875 = vrot.slane %v874, 4
    %v876 = vadd.f32 %v874, %v875
    %v877 = vrot.slane %v876, 2
    %v878 = vadd.f32 %v876, %v877
    %v879 = vrot.slane %v878, 1
    %v880 = vadd.f32 %v878, %v879
    %v881 = vmul.f32 %v880, 0.0025510204
    %v882 = vadd.f32 %v881, 1e-05
    %v883 = vrsqrt.pop %v882
    %v884 = vstv %s793
    %v885 = vmul.f32 %v884, %v883
    %v886 = vmul.f32 %v840, %v885
    %v887 = vstv %s794
    %v888 = vsub.f32 %v887, %v886
    %v889 = vmul.f32 %v791, %v885
    %v890 = vmul.f32 %v792, %v885
    %v891 = vadd.f32 %v889, %v888
    %v892 = vadd.f32 %v890, %v888
    %v893 = vmax.f32 %v891, 0.0
    %v894 = vmax.f32 %v892, 0.0
    %s895 = sld [smem:[#allocation2 + $0x1]]
    %v896 = vstv %s895
    %v897 = vmul.f32 %v63, %v896
    %v898 = vmul.f32 %v64, %v896
    %v899 = vadd.f32 %v897, 0.0
    %v900 = vadd.f32 %v898, 0.0
    %s901 = sld [smem:[#allocation2 + $0x5]]
    %v902 = vstv %s901
    %v903 = vmul.f32 %v63, %v902
    %v904 = vmul.f32 %v64, %v902
    %v907 = vrot.slane %v903, 5
    %v908 = vrot.slane %v907, 4
    %v909 = vrot.slane %v904, 5
    %v910 = vrot.slane %v909, 4
    %v913 = vadd.f32 %v899, %v908
    %v914 = vadd.f32 %v900, %v910
    %s915 = sld [smem:[#allocation2 + $0x9]]
    %v916 = vstv %s915
    %v917 = vmul.f32 %v63, %v916
    %v918 = vmul.f32 %v64, %v916
    %v921 = vrot.slane %v917, 6
    %v922 = vrot.slane %v921, 4
    %v923 = vrot.slane %v918, 6
    %v924 = vrot.slane %v923, 4
    %v927 = vadd.f32 %v913, %v922
    %v928 = vadd.f32 %v914, %v924
    %s929 = sld [smem:[#allocation2 + $0xd]]
    %v930 = vstv %s929
    %v931 = vmul.f32 %v63, %v930
    %v932 = vmul.f32 %v64, %v930
    %v935 = vrot.slane %v931, 7
    %v936 = vrot.slane %v935, 4
    %v937 = vrot.slane %v932, 7
    %v938 = vrot.slane %v937, 4
    %v941 = vadd.f32 %v927, %v936
    %v942 = vadd.f32 %v928, %v938
    %s943 = sld [smem:[#allocation2 + $0x11]]
    %v944 = vstv %s943
    %v945 = vmul.f32 %v63, %v944
    %v946 = vmul.f32 %v64, %v944
    %949 = vrot.lane.b32.xlu0 %v945, 127
    %v950 = vpop.permute.xlu0 %949
    %951 = vrot.lane.b32.xlu0 %v946, 127
    %v952 = vpop.permute.xlu0 %951
    %v953 = vrot.slane %v950, 4
    %v954 = vrot.slane %v952, 4
    %v955 = vsel %vm125, %v950, %v953
    %v956 = vsel %vm125, %v952, %v954
    %v959 = vadd.f32 %v941, %v955
    %v960 = vadd.f32 %v942, %v956
    %s961 = sld [smem:[#allocation2 + $0x15]]
    %v962 = vstv %s961
    %v963 = vmul.f32 %v63, %v962
    %v964 = vmul.f32 %v64, %v962
    %v967 = vrot.slane %v963, 5
    %v968 = vrot.slane %v967, 4
    %v969 = vrot.slane %v964, 5
    %v970 = vrot.slane %v969, 4
    %971 = vrot.lane.b32.xlu0 %v968, 127
    %v972 = vpop.permute.xlu0 %971
    %973 = vrot.lane.b32.xlu0 %v970, 127
    %v974 = vpop.permute.xlu0 %973
    %v975 = vrot.slane %v972, 4
    %v976 = vrot.slane %v974, 4
    %v977 = vsel %vm125, %v972, %v975
    %v978 = vsel %vm125, %v974, %v976
    %v981 = vadd.f32 %v959, %v977
    %v982 = vadd.f32 %v960, %v978
    %s983 = sld [smem:[#allocation2 + $0x19]]
    %v984 = vstv %s983
    %v985 = vmul.f32 %v63, %v984
    %v986 = vmul.f32 %v64, %v984
    %v989 = vrot.slane %v985, 6
    %v990 = vrot.slane %v989, 4
    %v991 = vrot.slane %v986, 6
    %v992 = vrot.slane %v991, 4
    %993 = vrot.lane.b32.xlu0 %v990, 127
    %v994 = vpop.permute.xlu0 %993
    %995 = vrot.lane.b32.xlu0 %v992, 127
    %v996 = vpop.permute.xlu0 %995
    %v997 = vrot.slane %v994, 4
    %v998 = vrot.slane %v996, 4
    %v999 = vsel %vm125, %v994, %v997
    %v1000 = vsel %vm125, %v996, %v998
    %v1003 = vadd.f32 %v981, %v999
    %v1004 = vadd.f32 %v982, %v1000
    %s1005 = sld [smem:[#allocation2 + $0x1d]]
    %v1006 = vstv %s1005
    %v1007 = vmul.f32 %v63, %v1006
    %v1008 = vmul.f32 %v64, %v1006
    %v1011 = vrot.slane %v1007, 7
    %v1012 = vrot.slane %v1011, 4
    %v1013 = vrot.slane %v1008, 7
    %v1014 = vrot.slane %v1013, 4
    %1015 = vrot.lane.b32.xlu0 %v1012, 127
    %v1016 = vpop.permute.xlu0 %1015
    %1017 = vrot.lane.b32.xlu0 %v1014, 127
    %v1018 = vpop.permute.xlu0 %1017
    %v1019 = vrot.slane %v1016, 4
    %v1020 = vrot.slane %v1018, 4
    %v1021 = vsel %vm125, %v1016, %v1019
    %v1022 = vsel %vm125, %v1018, %v1020
    %v1025 = vadd.f32 %v1003, %v1021
    %v1026 = vadd.f32 %v1004, %v1022
    %s1027 = sld [smem:[#allocation2 + $0x21]]
    %v1028 = vstv %s1027
    %v1029 = vmul.f32 %v63, %v1028
    %v1030 = vmul.f32 %v64, %v1028
    %1033 = vrot.lane.b32.xlu0 %v1029, 126
    %v1034 = vpop.permute.xlu0 %1033
    %1035 = vrot.lane.b32.xlu0 %v1030, 126
    %v1036 = vpop.permute.xlu0 %1035
    %v1037 = vrot.slane %v1034, 4
    %v1038 = vrot.slane %v1036, 4
    %v1039 = vsel %vm210, %v1034, %v1037
    %v1040 = vsel %vm210, %v1036, %v1038
    %v1043 = vadd.f32 %v1025, %v1039
    %v1044 = vadd.f32 %v1026, %v1040
    %s1045 = sld [smem:[#allocation2 + $0x25]]
    %v1046 = vstv %s1045
    %v1047 = vmul.f32 %v63, %v1046
    %v1048 = vmul.f32 %v64, %v1046
    %v1051 = vrot.slane %v1047, 5
    %v1052 = vrot.slane %v1051, 4
    %v1053 = vrot.slane %v1048, 5
    %v1054 = vrot.slane %v1053, 4
    %1055 = vrot.lane.b32.xlu0 %v1052, 126
    %v1056 = vpop.permute.xlu0 %1055
    %1057 = vrot.lane.b32.xlu0 %v1054, 126
    %v1058 = vpop.permute.xlu0 %1057
    %v1059 = vrot.slane %v1056, 4
    %v1060 = vrot.slane %v1058, 4
    %v1061 = vsel %vm210, %v1056, %v1059
    %v1062 = vsel %vm210, %v1058, %v1060
    %v1065 = vadd.f32 %v1043, %v1061
    %v1066 = vadd.f32 %v1044, %v1062
    %s1067 = sld [smem:[#allocation2 + $0x29]]
    %v1068 = vstv %s1067
    %v1069 = vmul.f32 %v63, %v1068
    %v1070 = vmul.f32 %v64, %v1068
    %v1073 = vrot.slane %v1069, 6
    %v1074 = vrot.slane %v1073, 4
    %v1075 = vrot.slane %v1070, 6
    %v1076 = vrot.slane %v1075, 4
    %1077 = vrot.lane.b32.xlu0 %v1074, 126
    %v1078 = vpop.permute.xlu0 %1077
    %1079 = vrot.lane.b32.xlu0 %v1076, 126
    %v1080 = vpop.permute.xlu0 %1079
    %v1081 = vrot.slane %v1078, 4
    %v1082 = vrot.slane %v1080, 4
    %v1083 = vsel %vm210, %v1078, %v1081
    %v1084 = vsel %vm210, %v1080, %v1082
    %v1087 = vadd.f32 %v1065, %v1083
    %v1088 = vadd.f32 %v1066, %v1084
    %s1089 = sld [smem:[#allocation2 + $0x2d]]
    %v1090 = vstv %s1089
    %v1091 = vmul.f32 %v63, %v1090
    %v1092 = vmul.f32 %v64, %v1090
    %v1095 = vrot.slane %v1091, 7
    %v1096 = vrot.slane %v1095, 4
    %v1097 = vrot.slane %v1092, 7
    %v1098 = vrot.slane %v1097, 4
    %1099 = vrot.lane.b32.xlu0 %v1096, 126
    %v1100 = vpop.permute.xlu0 %1099
    %1101 = vrot.lane.b32.xlu0 %v1098, 126
    %v1102 = vpop.permute.xlu0 %1101
    %v1103 = vrot.slane %v1100, 4
    %v1104 = vrot.slane %v1102, 4
    %v1105 = vsel %vm210, %v1100, %v1103
    %v1106 = vsel %vm210, %v1102, %v1104
    %v1109 = vadd.f32 %v1087, %v1105
    %v1110 = vadd.f32 %v1088, %v1106
    %s1111 = sld [smem:[#allocation2 + $0x31]]
    %v1112 = vstv %s1111
    %v1113 = vmul.f32 %v63, %v1112
    %v1114 = vmul.f32 %v64, %v1112
    %1117 = vrot.lane.b32.xlu0 %v1113, 112
    %v1118 = vpop.permute.xlu0 %1117
    %1119 = vrot.lane.b32.xlu0 %v1114, 112
    %v1120 = vpop.permute.xlu0 %1119
    %v1121 = vrot.slane %v1118, 4
    %v1122 = vrot.slane %v1120, 4
    %v1123 = vsel %vm295, %v1118, %v1121
    %v1124 = vsel %vm295, %v1120, %v1122
    %v1127 = vadd.f32 %v1109, %v1123
    %v1128 = vadd.f32 %v1110, %v1124
    %s1129 = sld [smem:[#allocation2 + $0x35]]
    %v1130 = vstv %s1129
    %v1131 = vmul.f32 %v63, %v1130
    %v1132 = vmul.f32 %v64, %v1130
    %v1135 = vrot.slane %v1131, 5
    %v1136 = vrot.slane %v1135, 4
    %v1137 = vrot.slane %v1132, 5
    %v1138 = vrot.slane %v1137, 4
    %1139 = vrot.lane.b32.xlu0 %v1136, 112
    %v1140 = vpop.permute.xlu0 %1139
    %1141 = vrot.lane.b32.xlu0 %v1138, 112
    %v1142 = vpop.permute.xlu0 %1141
    %v1143 = vrot.slane %v1140, 4
    %v1144 = vrot.slane %v1142, 4
    %v1145 = vsel %vm295, %v1140, %v1143
    %v1146 = vsel %vm295, %v1142, %v1144
    %v1149 = vadd.f32 %v1127, %v1145
    %v1150 = vadd.f32 %v1128, %v1146
    %s1151 = sld [smem:[#allocation2 + $0x39]]
    %v1152 = vstv %s1151
    %v1153 = vmul.f32 %v63, %v1152
    %v1154 = vmul.f32 %v64, %v1152
    %v1157 = vrot.slane %v1153, 6
    %v1158 = vrot.slane %v1157, 4
    %v1159 = vrot.slane %v1154, 6
    %v1160 = vrot.slane %v1159, 4
    %1161 = vrot.lane.b32.xlu0 %v1158, 112
    %v1162 = vpop.permute.xlu0 %1161
    %1163 = vrot.lane.b32.xlu0 %v1160, 112
    %v1164 = vpop.permute.xlu0 %1163
    %v1165 = vrot.slane %v1162, 4
    %v1166 = vrot.slane %v1164, 4
    %v1167 = vsel %vm295, %v1162, %v1165
    %v1168 = vsel %vm295, %v1164, %v1166
    %v1171 = vadd.f32 %v1149, %v1167
    %v1172 = vadd.f32 %v1150, %v1168
    %s1173 = sld [smem:[#allocation2 + $0x3d]]
    %v1174 = vstv %s1173
    %v1175 = vmul.f32 %v63, %v1174
    %v1176 = vmul.f32 %v64, %v1174
    %v1179 = vrot.slane %v1175, 7
    %v1180 = vrot.slane %v1179, 4
    %v1181 = vrot.slane %v1176, 7
    %v1182 = vrot.slane %v1181, 4
    %1183 = vrot.lane.b32.xlu0 %v1180, 112
    %v1184 = vpop.permute.xlu0 %1183
    %1185 = vrot.lane.b32.xlu0 %v1182, 112
    %v1186 = vpop.permute.xlu0 %1185
    %v1187 = vrot.slane %v1184, 4
    %v1188 = vrot.slane %v1186, 4
    %v1189 = vsel %vm295, %v1184, %v1187
    %v1190 = vsel %vm295, %v1186, %v1188
    %v1193 = vadd.f32 %v1171, %v1189
    %v1194 = vadd.f32 %v1172, %v1190
    %s1195 = sld [smem:[#allocation2 + $0x41]]
    %v1196 = vstv %s1195
    %v1197 = vmul.f32 %v63, %v1196
    %v1198 = vmul.f32 %v64, %v1196
    %1201 = vrot.lane.b32.xlu0 %v1197, 111
    %v1202 = vpop.permute.xlu0 %1201
    %1203 = vrot.lane.b32.xlu0 %v1198, 111
    %v1204 = vpop.permute.xlu0 %1203
    %v1205 = vrot.slane %v1202, 4
    %v1206 = vrot.slane %v1204, 4
    %v1207 = vsel %vm380, %v1202, %v1205
    %v1208 = vsel %vm380, %v1204, %v1206
    %v1211 = vadd.f32 %v1193, %v1207
    %v1212 = vadd.f32 %v1194, %v1208
    %s1213 = sld [smem:[#allocation2 + $0x45]]
    %v1214 = vstv %s1213
    %v1215 = vmul.f32 %v63, %v1214
    %v1216 = vmul.f32 %v64, %v1214
    %v1219 = vrot.slane %v1215, 5
    %v1220 = vrot.slane %v1219, 4
    %v1221 = vrot.slane %v1216, 5
    %v1222 = vrot.slane %v1221, 4
    %1223 = vrot.lane.b32.xlu0 %v1220, 111
    %v1224 = vpop.permute.xlu0 %1223
    %1225 = vrot.lane.b32.xlu0 %v1222, 111
    %v1226 = vpop.permute.xlu0 %1225
    %v1227 = vrot.slane %v1224, 4
    %v1228 = vrot.slane %v1226, 4
    %v1229 = vsel %vm380, %v1224, %v1227
    %v1230 = vsel %vm380, %v1226, %v1228
    %v1233 = vadd.f32 %v1211, %v1229
    %v1234 = vadd.f32 %v1212, %v1230
    %s1235 = sld [smem:[#allocation2 + $0x49]]
    %v1236 = vstv %s1235
    %v1237 = vmul.f32 %v63, %v1236
    %v1238 = vmul.f32 %v64, %v1236
    %v1241 = vrot.slane %v1237, 6
    %v1242 = vrot.slane %v1241, 4
    %v1243 = vrot.slane %v1238, 6
    %v1244 = vrot.slane %v1243, 4
    %1245 = vrot.lane.b32.xlu0 %v1242, 111
    %v1246 = vpop.permute.xlu0 %1245
    %1247 = vrot.lane.b32.xlu0 %v1244, 111
    %v1248 = vpop.permute.xlu0 %1247
    %v1249 = vrot.slane %v1246, 4
    %v1250 = vrot.slane %v1248, 4
    %v1251 = vsel %vm380, %v1246, %v1249
    %v1252 = vsel %vm380, %v1248, %v1250
    %v1255 = vadd.f32 %v1233, %v1251
    %v1256 = vadd.f32 %v1234, %v1252
    %s1257 = sld [smem:[#allocation2 + $0x4d]]
    %v1258 = vstv %s1257
    %v1259 = vmul.f32 %v63, %v1258
    %v1260 = vmul.f32 %v64, %v1258
    %v1263 = vrot.slane %v1259, 7
    %v1264 = vrot.slane %v1263, 4
    %v1265 = vrot.slane %v1260, 7
    %v1266 = vrot.slane %v1265, 4
    %1267 = vrot.lane.b32.xlu0 %v1264, 111
    %v1268 = vpop.permute.xlu0 %1267
    %1269 = vrot.lane.b32.xlu0 %v1266, 111
    %v1270 = vpop.permute.xlu0 %1269
    %v1271 = vrot.slane %v1268, 4
    %v1272 = vrot.slane %v1270, 4
    %v1273 = vsel %vm380, %v1268, %v1271
    %v1274 = vsel %vm380, %v1270, %v1272
    %v1277 = vadd.f32 %v1255, %v1273
    %v1278 = vadd.f32 %v1256, %v1274
    %s1279 = sld [smem:[#allocation2 + $0x51]]
    %v1280 = vstv %s1279
    %v1281 = vmul.f32 %v63, %v1280
    %v1282 = vmul.f32 %v64, %v1280
    %1285 = vrot.lane.b32.xlu0 %v1281, 110
    %v1286 = vpop.permute.xlu0 %1285
    %1287 = vrot.lane.b32.xlu0 %v1282, 110
    %v1288 = vpop.permute.xlu0 %1287
    %v1289 = vrot.slane %v1286, 4
    %v1290 = vrot.slane %v1288, 4
    %v1291 = vsel %vm465, %v1286, %v1289
    %v1292 = vsel %vm465, %v1288, %v1290
    %v1295 = vadd.f32 %v1277, %v1291
    %v1296 = vadd.f32 %v1278, %v1292
    %s1297 = sld [smem:[#allocation2 + $0x55]]
    %v1298 = vstv %s1297
    %v1299 = vmul.f32 %v63, %v1298
    %v1300 = vmul.f32 %v64, %v1298
    %v1303 = vrot.slane %v1299, 5
    %v1304 = vrot.slane %v1303, 4
    %v1305 = vrot.slane %v1300, 5
    %v1306 = vrot.slane %v1305, 4
    %1307 = vrot.lane.b32.xlu0 %v1304, 110
    %v1308 = vpop.permute.xlu0 %1307
    %1309 = vrot.lane.b32.xlu0 %v1306, 110
    %v1310 = vpop.permute.xlu0 %1309
    %v1311 = vrot.slane %v1308, 4
    %v1312 = vrot.slane %v1310, 4
    %v1313 = vsel %vm465, %v1308, %v1311
    %v1314 = vsel %vm465, %v1310, %v1312
    %v1317 = vadd.f32 %v1295, %v1313
    %v1318 = vadd.f32 %v1296, %v1314
    %s1319 = sld [smem:[#allocation2 + $0x59]]
    %v1320 = vstv %s1319
    %v1321 = vmul.f32 %v63, %v1320
    %v1322 = vmul.f32 %v64, %v1320
    %v1325 = vrot.slane %v1321, 6
    %v1326 = vrot.slane %v1325, 4
    %v1327 = vrot.slane %v1322, 6
    %v1328 = vrot.slane %v1327, 4
    %1329 = vrot.lane.b32.xlu0 %v1326, 110
    %v1330 = vpop.permute.xlu0 %1329
    %1331 = vrot.lane.b32.xlu0 %v1328, 110
    %v1332 = vpop.permute.xlu0 %1331
    %v1333 = vrot.slane %v1330, 4
    %v1334 = vrot.slane %v1332, 4
    %v1335 = vsel %vm465, %v1330, %v1333
    %v1336 = vsel %vm465, %v1332, %v1334
    %v1339 = vadd.f32 %v1317, %v1335
    %v1340 = vadd.f32 %v1318, %v1336
    %s1341 = sld [smem:[#allocation2 + $0x5d]]
    %v1342 = vstv %s1341
    %v1343 = vmul.f32 %v63, %v1342
    %v1344 = vmul.f32 %v64, %v1342
    %v1347 = vrot.slane %v1343, 7
    %v1348 = vrot.slane %v1347, 4
    %v1349 = vrot.slane %v1344, 7
    %v1350 = vrot.slane %v1349, 4
    %1351 = vrot.lane.b32.xlu0 %v1348, 110
    %v1352 = vpop.permute.xlu0 %1351
    %1353 = vrot.lane.b32.xlu0 %v1350, 110
    %v1354 = vpop.permute.xlu0 %1353
    %v1355 = vrot.slane %v1352, 4
    %v1356 = vrot.slane %v1354, 4
    %v1357 = vsel %vm465, %v1352, %v1355
    %v1358 = vsel %vm465, %v1354, %v1356
    %v1361 = vadd.f32 %v1339, %v1357
    %v1362 = vadd.f32 %v1340, %v1358
    %s1363 = sld [smem:[#allocation2 + $0x61]]
    %v1364 = vstv %s1363
    %v1365 = vmul.f32 %v63, %v1364
    %v1366 = vmul.f32 %v64, %v1364
    %1369 = vrot.lane.b32.xlu0 %v1365, 96
    %v1370 = vpop.permute.xlu0 %1369
    %1371 = vrot.lane.b32.xlu0 %v1366, 96
    %v1372 = vpop.permute.xlu0 %1371
    %v1373 = vrot.slane %v1370, 4
    %v1374 = vrot.slane %v1372, 4
    %v1375 = vsel %vm550, %v1370, %v1373
    %v1376 = vsel %vm550, %v1372, %v1374
    %v1379 = vadd.f32 %v1361, %v1375
    %v1380 = vadd.f32 %v1362, %v1376
    %s1381 = sld [smem:[#allocation2 + $0x65]]
    %v1382 = vstv %s1381
    %v1383 = vmul.f32 %v63, %v1382
    %v1384 = vmul.f32 %v64, %v1382
    %v1387 = vrot.slane %v1383, 5
    %v1388 = vrot.slane %v1387, 4
    %v1389 = vrot.slane %v1384, 5
    %v1390 = vrot.slane %v1389, 4
    %1391 = vrot.lane.b32.xlu0 %v1388, 96
    %v1392 = vpop.permute.xlu0 %1391
    %1393 = vrot.lane.b32.xlu0 %v1390, 96
    %v1394 = vpop.permute.xlu0 %1393
    %v1395 = vrot.slane %v1392, 4
    %v1396 = vrot.slane %v1394, 4
    %v1397 = vsel %vm550, %v1392, %v1395
    %v1398 = vsel %vm550, %v1394, %v1396
    %v1401 = vadd.f32 %v1379, %v1397
    %v1402 = vadd.f32 %v1380, %v1398
    %s1403 = sld [smem:[#allocation2 + $0x69]]
    %v1404 = vstv %s1403
    %v1405 = vmul.f32 %v63, %v1404
    %v1406 = vmul.f32 %v64, %v1404
    %v1409 = vrot.slane %v1405, 6
    %v1410 = vrot.slane %v1409, 4
    %v1411 = vrot.slane %v1406, 6
    %v1412 = vrot.slane %v1411, 4
    %1413 = vrot.lane.b32.xlu0 %v1410, 96
    %v1414 = vpop.permute.xlu0 %1413
    %1415 = vrot.lane.b32.xlu0 %v1412, 96
    %v1416 = vpop.permute.xlu0 %1415
    %v1417 = vrot.slane %v1414, 4
    %v1418 = vrot.slane %v1416, 4
    %v1419 = vsel %vm550, %v1414, %v1417
    %v1420 = vsel %vm550, %v1416, %v1418
    %v1423 = vadd.f32 %v1401, %v1419
    %v1424 = vadd.f32 %v1402, %v1420
    %s1425 = sld [smem:[#allocation2 + $0x6d]]
    %v1426 = vstv %s1425
    %v1427 = vmul.f32 %v63, %v1426
    %v1428 = vmul.f32 %v64, %v1426
    %v1431 = vrot.slane %v1427, 7
    %v1432 = vrot.slane %v1431, 4
    %v1433 = vrot.slane %v1428, 7
    %v1434 = vrot.slane %v1433, 4
    %1435 = vrot.lane.b32.xlu0 %v1432, 96
    %v1436 = vpop.permute.xlu0 %1435
    %1437 = vrot.lane.b32.xlu0 %v1434, 96
    %v1438 = vpop.permute.xlu0 %1437
    %v1439 = vrot.slane %v1436, 4
    %v1440 = vrot.slane %v1438, 4
    %v1441 = vsel %vm550, %v1436, %v1439
    %v1442 = vsel %vm550, %v1438, %v1440
    %v1445 = vadd.f32 %v1423, %v1441
    %v1446 = vadd.f32 %v1424, %v1442
    %s1447 = sld [smem:[#allocation2 + $0x71]]
    %v1448 = vstv %s1447
    %v1449 = vmul.f32 %v63, %v1448
    %v1450 = vmul.f32 %v64, %v1448
    %1453 = vrot.lane.b32.xlu0 %v1449, 95
    %v1454 = vpop.permute.xlu0 %1453
    %1455 = vrot.lane.b32.xlu0 %v1450, 95
    %v1456 = vpop.permute.xlu0 %1455
    %v1457 = vrot.slane %v1454, 4
    %v1458 = vrot.slane %v1456, 4
    %v1459 = vsel %vm635, %v1454, %v1457
    %v1460 = vsel %vm635, %v1456, %v1458
    %v1463 = vadd.f32 %v1445, %v1459
    %v1464 = vadd.f32 %v1446, %v1460
    %s1465 = sld [smem:[#allocation2 + $0x75]]
    %v1466 = vstv %s1465
    %v1467 = vmul.f32 %v63, %v1466
    %v1468 = vmul.f32 %v64, %v1466
    %v1471 = vrot.slane %v1467, 5
    %v1472 = vrot.slane %v1471, 4
    %v1473 = vrot.slane %v1468, 5
    %v1474 = vrot.slane %v1473, 4
    %1475 = vrot.lane.b32.xlu0 %v1472, 95
    %v1476 = vpop.permute.xlu0 %1475
    %1477 = vrot.lane.b32.xlu0 %v1474, 95
    %v1478 = vpop.permute.xlu0 %1477
    %v1479 = vrot.slane %v1476, 4
    %v1480 = vrot.slane %v1478, 4
    %v1481 = vsel %vm635, %v1476, %v1479
    %v1482 = vsel %vm635, %v1478, %v1480
    %v1485 = vadd.f32 %v1463, %v1481
    %v1486 = vadd.f32 %v1464, %v1482
    %s1487 = sld [smem:[#allocation2 + $0x79]]
    %v1488 = vstv %s1487
    %v1489 = vmul.f32 %v63, %v1488
    %v1490 = vmul.f32 %v64, %v1488
    %v1493 = vrot.slane %v1489, 6
    %v1494 = vrot.slane %v1493, 4
    %v1495 = vrot.slane %v1490, 6
    %v1496 = vrot.slane %v1495, 4
    %1497 = vrot.lane.b32.xlu0 %v1494, 95
    %v1498 = vpop.permute.xlu0 %1497
    %1499 = vrot.lane.b32.xlu0 %v1496, 95
    %v1500 = vpop.permute.xlu0 %1499
    %v1501 = vrot.slane %v1498, 4
    %v1502 = vrot.slane %v1500, 4
    %v1503 = vsel %vm635, %v1498, %v1501
    %v1504 = vsel %vm635, %v1500, %v1502
    %v1507 = vadd.f32 %v1485, %v1503
    %v1508 = vadd.f32 %v1486, %v1504
    %s1509 = sld [smem:[#allocation2 + $0x7d]]
    %v1510 = vstv %s1509
    %v1511 = vmul.f32 %v63, %v1510
    %v1512 = vmul.f32 %v64, %v1510
    %v1515 = vrot.slane %v1511, 7
    %v1516 = vrot.slane %v1515, 4
    %v1517 = vrot.slane %v1512, 7
    %v1518 = vrot.slane %v1517, 4
    %1519 = vrot.lane.b32.xlu0 %v1516, 95
    %v1520 = vpop.permute.xlu0 %1519
    %1521 = vrot.lane.b32.xlu0 %v1518, 95
    %v1522 = vpop.permute.xlu0 %1521
    %v1523 = vrot.slane %v1520, 4
    %v1524 = vrot.slane %v1522, 4
    %v1525 = vsel %vm635, %v1520, %v1523
    %v1526 = vsel %vm635, %v1522, %v1524
    %v1529 = vadd.f32 %v1507, %v1525
    %v1530 = vadd.f32 %v1508, %v1526
    %s1531 = sld [smem:[#allocation2 + $0x81]]
    %v1532 = vstv %s1531
    %v1533 = vmul.f32 %v63, %v1532
    %v1534 = vmul.f32 %v64, %v1532
    %1537 = vrot.lane.b32.xlu0 %v1533, 94
    %v1538 = vpop.permute.xlu0 %1537
    %1539 = vrot.lane.b32.xlu0 %v1534, 94
    %v1540 = vpop.permute.xlu0 %1539
    %v1541 = vrot.slane %v1538, 4
    %v1542 = vrot.slane %v1540, 4
    %v1543 = vsel %vm720, %v1538, %v1541
    %v1544 = vsel %vm720, %v1540, %v1542
    %v1547 = vadd.f32 %v1529, %v1543
    %v1548 = vadd.f32 %v1530, %v1544
    %s1549 = sld [smem:[#allocation2 + $0x85]]
    %v1550 = vstv %s1549
    %v1551 = vmul.f32 %v63, %v1550
    %v1552 = vmul.f32 %v64, %v1550
    %v1555 = vrot.slane %v1551, 5
    %v1556 = vrot.slane %v1555, 4
    %v1557 = vrot.slane %v1552, 5
    %v1558 = vrot.slane %v1557, 4
    %1559 = vrot.lane.b32.xlu0 %v1556, 94
    %v1560 = vpop.permute.xlu0 %1559
    %1561 = vrot.lane.b32.xlu0 %v1558, 94
    %v1562 = vpop.permute.xlu0 %1561
    %v1563 = vrot.slane %v1560, 4
    %v1564 = vrot.slane %v1562, 4
    %v1565 = vsel %vm720, %v1560, %v1563
    %v1566 = vsel %vm720, %v1562, %v1564
    %v1569 = vadd.f32 %v1547, %v1565
    %v1570 = vadd.f32 %v1548, %v1566
    %s1571 = sld [smem:[#allocation2 + $0x89]]
    %v1572 = vstv %s1571
    %v1573 = vmul.f32 %v63, %v1572
    %v1574 = vmul.f32 %v64, %v1572
    %v1577 = vrot.slane %v1573, 6
    %v1578 = vrot.slane %v1577, 4
    %v1579 = vrot.slane %v1574, 6
    %v1580 = vrot.slane %v1579, 4
    %1581 = vrot.lane.b32.xlu0 %v1578, 94
    %v1582 = vpop.permute.xlu0 %1581
    %1583 = vrot.lane.b32.xlu0 %v1580, 94
    %v1584 = vpop.permute.xlu0 %1583
    %v1585 = vrot.slane %v1582, 4
    %v1586 = vrot.slane %v1584, 4
    %v1587 = vsel %vm720, %v1582, %v1585
    %v1588 = vsel %vm720, %v1584, %v1586
    %v1591 = vadd.f32 %v1569, %v1587
    %v1592 = vadd.f32 %v1570, %v1588
    %s1593 = sld [smem:[#allocation2 + $0x8d]]
    %v1594 = vstv %s1593
    %v1595 = vmul.f32 %v63, %v1594
    %v1596 = vmul.f32 %v64, %v1594
    %v1599 = vrot.slane %v1595, 7
    %v1600 = vrot.slane %v1599, 4
    %v1601 = vrot.slane %v1596, 7
    %v1602 = vrot.slane %v1601, 4
    %1603 = vrot.lane.b32.xlu0 %v1600, 94
    %v1604 = vpop.permute.xlu0 %1603
    %1605 = vrot.lane.b32.xlu0 %v1602, 94
    %v1606 = vpop.permute.xlu0 %1605
    %v1607 = vrot.slane %v1604, 4
    %v1608 = vrot.slane %v1606, 4
    %v1609 = vsel %vm720, %v1604, %v1607
    %v1610 = vsel %vm720, %v1606, %v1608
    %v1613 = vadd.f32 %v1591, %v1609
    %v1614 = vadd.f32 %v1592, %v1610
    %s1615 = sld [smem:[#allocation2 + $0x121]]
    %s1616 = sld [smem:[#allocation2 + $0x125]]
    %v1617 = vmul.f32 %v1613, %v797
    %v1618 = vmul.f32 %v1614, %v798
    %v1621 = vlaneseq
    %v1622 = vshrl.u32 %v1621, 7
    %v1623 = vsub.s32 0, %v1622
    %v1624 = vrot.slane %v1617, %v1623
    %v1625 = vlaneseq
    %v1626 = vshrl.u32 %v1625, 7
    %v1627 = vsub.s32 4, %v1626
    %v1628 = vrot.slane %v1617, %v1627
    %v1629 = vlaneseq
    %v1630 = vshrl.u32 %v1629, 7
    %v1631 = vsub.s32 0, %v1630
    %v1632 = vrot.slane %v1618, %v1631
    %v1633 = vlaneseq
    %v1634 = vshrl.u32 %v1633, 7
    %v1635 = vsub.s32 4, %v1634
    %v1636 = vrot.slane %v1618, %v1635
    %v1637 = vsel %vm821, %v1632, %v1624
    %v1638 = vsel %vm821, %v1636, %v1628
    %v1641 = vsel %vm826, %v1637, 0.0
    %v1642 = vsel %vm828, %v1638, 0.0
    %v1643 = vadd.f32 %v1641, %v1642
    %1644 = vadd.xlane.f32.xlu0 %v1643
    %v1645 = vpop.xlane.xlu0 %1644
    %v1646 = vsel %vm826, %v1645, 0.0
    %v1647 = vrot.slane %v1646, 4
    %v1648 = vadd.f32 %v1646, %v1647
    %v1649 = vrot.slane %v1648, 2
    %v1650 = vadd.f32 %v1648, %v1649
    %v1651 = vrot.slane %v1650, 1
    %v1652 = vadd.f32 %v1650, %v1651
    %v1653 = vmul.f32 %v1652, 0.0025510204
    %v1654 = vsub.f32 %v1613, %v1653
    %v1655 = vsub.f32 %v1614, %v1653
    %v1656 = vmul.f32 %v1654, %v797
    %v1657 = vmul.f32 %v1655, %v798
    %v1658 = vmul.f32 %v1656, %v1656
    %v1659 = vmul.f32 %v1657, %v1657
    %v1662 = vlaneseq
    %v1663 = vshrl.u32 %v1662, 7
    %v1664 = vsub.s32 0, %v1663
    %v1665 = vrot.slane %v1658, %v1664
    %v1666 = vlaneseq
    %v1667 = vshrl.u32 %v1666, 7
    %v1668 = vsub.s32 4, %v1667
    %v1669 = vrot.slane %v1658, %v1668
    %v1670 = vlaneseq
    %v1671 = vshrl.u32 %v1670, 7
    %v1672 = vsub.s32 0, %v1671
    %v1673 = vrot.slane %v1659, %v1672
    %v1674 = vlaneseq
    %v1675 = vshrl.u32 %v1674, 7
    %v1676 = vsub.s32 4, %v1675
    %v1677 = vrot.slane %v1659, %v1676
    %v1678 = vsel %vm821, %v1673, %v1665
    %v1679 = vsel %vm821, %v1677, %v1669
    %v1682 = vsel %vm826, %v1678, 0.0
    %v1683 = vsel %vm828, %v1679, 0.0
    %v1684 = vadd.f32 %v1682, %v1683
    %1685 = vadd.xlane.f32.xlu0 %v1684
    %v1686 = vpop.xlane.xlu0 %1685
    %v1687 = vsel %vm826, %v1686, 0.0
    %v1688 = vrot.slane %v1687, 4
    %v1689 = vadd.f32 %v1687, %v1688
    %v1690 = vrot.slane %v1689, 2
    %v1691 = vadd.f32 %v1689, %v1690
    %v1692 = vrot.slane %v1691, 1
    %v1693 = vadd.f32 %v1691, %v1692
    %v1694 = vmul.f32 %v1693, 0.0025510204
    %v1695 = vadd.f32 %v1694, 1e-05
    %v1696 = vrsqrt.pop %v1695
    %v1697 = vstv %s1615
    %v1698 = vmul.f32 %v1697, %v1696
    %v1699 = vmul.f32 %v1653, %v1698
    %v1700 = vstv %s1616
    %v1701 = vsub.f32 %v1700, %v1699
    %v1702 = vmul.f32 %v1613, %v1698
    %v1703 = vmul.f32 %v1614, %v1698
    %v1704 = vadd.f32 %v1702, %v1701
    %v1705 = vadd.f32 %v1703, %v1701
    %v1706 = vmax.f32 %v1704, 0.0
    %v1707 = vmax.f32 %v1705, 0.0
    %s1708 = sld [smem:[#allocation2 + $0x2]]
    %v1709 = vstv %s1708
    %v1710 = vmul.f32 %v63, %v1709
    %v1711 = vmul.f32 %v64, %v1709
    %v1712 = vadd.f32 %v1710, 0.0
    %v1713 = vadd.f32 %v1711, 0.0
    %s1714 = sld [smem:[#allocation2 + $0x6]]
    %v1715 = vstv %s1714
    %v1716 = vmul.f32 %v63, %v1715
    %v1717 = vmul.f32 %v64, %v1715
    %v1720 = vrot.slane %v1716, 5
    %v1721 = vrot.slane %v1720, 4
    %v1722 = vrot.slane %v1717, 5
    %v1723 = vrot.slane %v1722, 4
    %v1726 = vadd.f32 %v1712, %v1721
    %v1727 = vadd.f32 %v1713, %v1723
    %s1728 = sld [smem:[#allocation2 + $0xa]]
    %v1729 = vstv %s1728
    %v1730 = vmul.f32 %v63, %v1729
    %v1731 = vmul.f32 %v64, %v1729
    %v1734 = vrot.slane %v1730, 6
    %v1735 = vrot.slane %v1734, 4
    %v1736 = vrot.slane %v1731, 6
    %v1737 = vrot.slane %v1736, 4
    %v1740 = vadd.f32 %v1726, %v1735
    %v1741 = vadd.f32 %v1727, %v1737
    %s1742 = sld [smem:[#allocation2 + $0xe]]
    %v1743 = vstv %s1742
    %v1744 = vmul.f32 %v63, %v1743
    %v1745 = vmul.f32 %v64, %v1743
    %v1748 = vrot.slane %v1744, 7
    %v1749 = vrot.slane %v1748, 4
    %v1750 = vrot.slane %v1745, 7
    %v1751 = vrot.slane %v1750, 4
    %v1754 = vadd.f32 %v1740, %v1749
    %v1755 = vadd.f32 %v1741, %v1751
    %s1756 = sld [smem:[#allocation2 + $0x12]]
    %v1757 = vstv %s1756
    %v1758 = vmul.f32 %v63, %v1757
    %v1759 = vmul.f32 %v64, %v1757
    %1762 = vrot.lane.b32.xlu0 %v1758, 127
    %v1763 = vpop.permute.xlu0 %1762
    %1764 = vrot.lane.b32.xlu0 %v1759, 127
    %v1765 = vpop.permute.xlu0 %1764
    %v1766 = vrot.slane %v1763, 4
    %v1767 = vrot.slane %v1765, 4
    %v1768 = vsel %vm125, %v1763, %v1766
    %v1769 = vsel %vm125, %v1765, %v1767
    %v1772 = vadd.f32 %v1754, %v1768
    %v1773 = vadd.f32 %v1755, %v1769
    %s1774 = sld [smem:[#allocation2 + $0x16]]
    %v1775 = vstv %s1774
    %v1776 = vmul.f32 %v63, %v1775
    %v1777 = vmul.f32 %v64, %v1775
    %v1780 = vrot.slane %v1776, 5
    %v1781 = vrot.slane %v1780, 4
    %v1782 = vrot.slane %v1777, 5
    %v1783 = vrot.slane %v1782, 4
    %1784 = vrot.lane.b32.xlu0 %v1781, 127
    %v1785 = vpop.permute.xlu0 %1784
    %1786 = vrot.lane.b32.xlu0 %v1783, 127
    %v1787 = vpop.permute.xlu0 %1786
    %v1788 = vrot.slane %v1785, 4
    %v1789 = vrot.slane %v1787, 4
    %v1790 = vsel %vm125, %v1785, %v1788
    %v1791 = vsel %vm125, %v1787, %v1789
    %v1794 = vadd.f32 %v1772, %v1790
    %v1795 = vadd.f32 %v1773, %v1791
    %s1796 = sld [smem:[#allocation2 + $0x1a]]
    %v1797 = vstv %s1796
    %v1798 = vmul.f32 %v63, %v1797
    %v1799 = vmul.f32 %v64, %v1797
    %v1802 = vrot.slane %v1798, 6
    %v1803 = vrot.slane %v1802, 4
    %v1804 = vrot.slane %v1799, 6
    %v1805 = vrot.slane %v1804, 4
    %1806 = vrot.lane.b32.xlu0 %v1803, 127
    %v1807 = vpop.permute.xlu0 %1806
    %1808 = vrot.lane.b32.xlu0 %v1805, 127
    %v1809 = vpop.permute.xlu0 %1808
    %v1810 = vrot.slane %v1807, 4
    %v1811 = vrot.slane %v1809, 4
    %v1812 = vsel %vm125, %v1807, %v1810
    %v1813 = vsel %vm125, %v1809, %v1811
    %v1816 = vadd.f32 %v1794, %v1812
    %v1817 = vadd.f32 %v1795, %v1813
    %s1818 = sld [smem:[#allocation2 + $0x1e]]
    %v1819 = vstv %s1818
    %v1820 = vmul.f32 %v63, %v1819
    %v1821 = vmul.f32 %v64, %v1819
    %v1824 = vrot.slane %v1820, 7
    %v1825 = vrot.slane %v1824, 4
    %v1826 = vrot.slane %v1821, 7
    %v1827 = vrot.slane %v1826, 4
    %1828 = vrot.lane.b32.xlu0 %v1825, 127
    %v1829 = vpop.permute.xlu0 %1828
    %1830 = vrot.lane.b32.xlu0 %v1827, 127
    %v1831 = vpop.permute.xlu0 %1830
    %v1832 = vrot.slane %v1829, 4
    %v1833 = vrot.slane %v1831, 4
    %v1834 = vsel %vm125, %v1829, %v1832
    %v1835 = vsel %vm125, %v1831, %v1833
    %v1838 = vadd.f32 %v1816, %v1834
    %v1839 = vadd.f32 %v1817, %v1835
    %s1840 = sld [smem:[#allocation2 + $0x22]]
    %v1841 = vstv %s1840
    %v1842 = vmul.f32 %v63, %v1841
    %v1843 = vmul.f32 %v64, %v1841
    %1846 = vrot.lane.b32.xlu0 %v1842, 126
    %v1847 = vpop.permute.xlu0 %1846
    %1848 = vrot.lane.b32.xlu0 %v1843, 126
    %v1849 = vpop.permute.xlu0 %1848
    %v1850 = vrot.slane %v1847, 4
    %v1851 = vrot.slane %v1849, 4
    %v1852 = vsel %vm210, %v1847, %v1850
    %v1853 = vsel %vm210, %v1849, %v1851
    %v1856 = vadd.f32 %v1838, %v1852
    %v1857 = vadd.f32 %v1839, %v1853
    %s1858 = sld [smem:[#allocation2 + $0x26]]
    %v1859 = vstv %s1858
    %v1860 = vmul.f32 %v63, %v1859
    %v1861 = vmul.f32 %v64, %v1859
    %v1864 = vrot.slane %v1860, 5
    %v1865 = vrot.slane %v1864, 4
    %v1866 = vrot.slane %v1861, 5
    %v1867 = vrot.slane %v1866, 4
    %1868 = vrot.lane.b32.xlu0 %v1865, 126
    %v1869 = vpop.permute.xlu0 %1868
    %1870 = vrot.lane.b32.xlu0 %v1867, 126
    %v1871 = vpop.permute.xlu0 %1870
    %v1872 = vrot.slane %v1869, 4
    %v1873 = vrot.slane %v1871, 4
    %v1874 = vsel %vm210, %v1869, %v1872
    %v1875 = vsel %vm210, %v1871, %v1873
    %v1878 = vadd.f32 %v1856, %v1874
    %v1879 = vadd.f32 %v1857, %v1875
    %s1880 = sld [smem:[#allocation2 + $0x2a]]
    %v1881 = vstv %s1880
    %v1882 = vmul.f32 %v63, %v1881
    %v1883 = vmul.f32 %v64, %v1881
    %v1886 = vrot.slane %v1882, 6
    %v1887 = vrot.slane %v1886, 4
    %v1888 = vrot.slane %v1883, 6
    %v1889 = vrot.slane %v1888, 4
    %1890 = vrot.lane.b32.xlu0 %v1887, 126
    %v1891 = vpop.permute.xlu0 %1890
    %1892 = vrot.lane.b32.xlu0 %v1889, 126
    %v1893 = vpop.permute.xlu0 %1892
    %v1894 = vrot.slane %v1891, 4
    %v1895 = vrot.slane %v1893, 4
    %v1896 = vsel %vm210, %v1891, %v1894
    %v1897 = vsel %vm210, %v1893, %v1895
    %v1900 = vadd.f32 %v1878, %v1896
    %v1901 = vadd.f32 %v1879, %v1897
    %s1902 = sld [smem:[#allocation2 + $0x2e]]
    %v1903 = vstv %s1902
    %v1904 = vmul.f32 %v63, %v1903
    %v1905 = vmul.f32 %v64, %v1903
    %v1908 = vrot.slane %v1904, 7
    %v1909 = vrot.slane %v1908, 4
    %v1910 = vrot.slane %v1905, 7
    %v1911 = vrot.slane %v1910, 4
    %1912 = vrot.lane.b32.xlu0 %v1909, 126
    %v1913 = vpop.permute.xlu0 %1912
    %1914 = vrot.lane.b32.xlu0 %v1911, 126
    %v1915 = vpop.permute.xlu0 %1914
    %v1916 = vrot.slane %v1913, 4
    %v1917 = vrot.slane %v1915, 4
    %v1918 = vsel %vm210, %v1913, %v1916
    %v1919 = vsel %vm210, %v1915, %v1917
    %v1922 = vadd.f32 %v1900, %v1918
    %v1923 = vadd.f32 %v1901, %v1919
    %s1924 = sld [smem:[#allocation2 + $0x32]]
    %v1925 = vstv %s1924
    %v1926 = vmul.f32 %v63, %v1925
    %v1927 = vmul.f32 %v64, %v1925
    %1930 = vrot.lane.b32.xlu0 %v1926, 112
    %v1931 = vpop.permute.xlu0 %1930
    %1932 = vrot.lane.b32.xlu0 %v1927, 112
    %v1933 = vpop.permute.xlu0 %1932
    %v1934 = vrot.slane %v1931, 4
    %v1935 = vrot.slane %v1933, 4
    %v1936 = vsel %vm295, %v1931, %v1934
    %v1937 = vsel %vm295, %v1933, %v1935
    %v1940 = vadd.f32 %v1922, %v1936
    %v1941 = vadd.f32 %v1923, %v1937
    %s1942 = sld [smem:[#allocation2 + $0x36]]
    %v1943 = vstv %s1942
    %v1944 = vmul.f32 %v63, %v1943
    %v1945 = vmul.f32 %v64, %v1943
    %v1948 = vrot.slane %v1944, 5
    %v1949 = vrot.slane %v1948, 4
    %v1950 = vrot.slane %v1945, 5
    %v1951 = vrot.slane %v1950, 4
    %1952 = vrot.lane.b32.xlu0 %v1949, 112
    %v1953 = vpop.permute.xlu0 %1952
    %1954 = vrot.lane.b32.xlu0 %v1951, 112
    %v1955 = vpop.permute.xlu0 %1954
    %v1956 = vrot.slane %v1953, 4
    %v1957 = vrot.slane %v1955, 4
    %v1958 = vsel %vm295, %v1953, %v1956
    %v1959 = vsel %vm295, %v1955, %v1957
    %v1962 = vadd.f32 %v1940, %v1958
    %v1963 = vadd.f32 %v1941, %v1959
    %s1964 = sld [smem:[#allocation2 + $0x3a]]
    %v1965 = vstv %s1964
    %v1966 = vmul.f32 %v63, %v1965
    %v1967 = vmul.f32 %v64, %v1965
    %v1970 = vrot.slane %v1966, 6
    %v1971 = vrot.slane %v1970, 4
    %v1972 = vrot.slane %v1967, 6
    %v1973 = vrot.slane %v1972, 4
    %1974 = vrot.lane.b32.xlu0 %v1971, 112
    %v1975 = vpop.permute.xlu0 %1974
    %1976 = vrot.lane.b32.xlu0 %v1973, 112
    %v1977 = vpop.permute.xlu0 %1976
    %v1978 = vrot.slane %v1975, 4
    %v1979 = vrot.slane %v1977, 4
    %v1980 = vsel %vm295, %v1975, %v1978
    %v1981 = vsel %vm295, %v1977, %v1979
    %v1984 = vadd.f32 %v1962, %v1980
    %v1985 = vadd.f32 %v1963, %v1981
    %s1986 = sld [smem:[#allocation2 + $0x3e]]
    %v1987 = vstv %s1986
    %v1988 = vmul.f32 %v63, %v1987
    %v1989 = vmul.f32 %v64, %v1987
    %v1992 = vrot.slane %v1988, 7
    %v1993 = vrot.slane %v1992, 4
    %v1994 = vrot.slane %v1989, 7
    %v1995 = vrot.slane %v1994, 4
    %1996 = vrot.lane.b32.xlu0 %v1993, 112
    %v1997 = vpop.permute.xlu0 %1996
    %1998 = vrot.lane.b32.xlu0 %v1995, 112
    %v1999 = vpop.permute.xlu0 %1998
    %v2000 = vrot.slane %v1997, 4
    %v2001 = vrot.slane %v1999, 4
    %v2002 = vsel %vm295, %v1997, %v2000
    %v2003 = vsel %vm295, %v1999, %v2001
    %v2006 = vadd.f32 %v1984, %v2002
    %v2007 = vadd.f32 %v1985, %v2003
    %s2008 = sld [smem:[#allocation2 + $0x42]]
    %v2009 = vstv %s2008
    %v2010 = vmul.f32 %v63, %v2009
    %v2011 = vmul.f32 %v64, %v2009
    %2014 = vrot.lane.b32.xlu0 %v2010, 111
    %v2015 = vpop.permute.xlu0 %2014
    %2016 = vrot.lane.b32.xlu0 %v2011, 111
    %v2017 = vpop.permute.xlu0 %2016
    %v2018 = vrot.slane %v2015, 4
    %v2019 = vrot.slane %v2017, 4
    %v2020 = vsel %vm380, %v2015, %v2018
    %v2021 = vsel %vm380, %v2017, %v2019
    %v2024 = vadd.f32 %v2006, %v2020
    %v2025 = vadd.f32 %v2007, %v2021
    %s2026 = sld [smem:[#allocation2 + $0x46]]
    %v2027 = vstv %s2026
    %v2028 = vmul.f32 %v63, %v2027
    %v2029 = vmul.f32 %v64, %v2027
    %v2032 = vrot.slane %v2028, 5
    %v2033 = vrot.slane %v2032, 4
    %v2034 = vrot.slane %v2029, 5
    %v2035 = vrot.slane %v2034, 4
    %2036 = vrot.lane.b32.xlu0 %v2033, 111
    %v2037 = vpop.permute.xlu0 %2036
    %2038 = vrot.lane.b32.xlu0 %v2035, 111
    %v2039 = vpop.permute.xlu0 %2038
    %v2040 = vrot.slane %v2037, 4
    %v2041 = vrot.slane %v2039, 4
    %v2042 = vsel %vm380, %v2037, %v2040
    %v2043 = vsel %vm380, %v2039, %v2041
    %v2046 = vadd.f32 %v2024, %v2042
    %v2047 = vadd.f32 %v2025, %v2043
    %s2048 = sld [smem:[#allocation2 + $0x4a]]
    %v2049 = vstv %s2048
    %v2050 = vmul.f32 %v63, %v2049
    %v2051 = vmul.f32 %v64, %v2049
    %v2054 = vrot.slane %v2050, 6
    %v2055 = vrot.slane %v2054, 4
    %v2056 = vrot.slane %v2051, 6
    %v2057 = vrot.slane %v2056, 4
    %2058 = vrot.lane.b32.xlu0 %v2055, 111
    %v2059 = vpop.permute.xlu0 %2058
    %2060 = vrot.lane.b32.xlu0 %v2057, 111
    %v2061 = vpop.permute.xlu0 %2060
    %v2062 = vrot.slane %v2059, 4
    %v2063 = vrot.slane %v2061, 4
    %v2064 = vsel %vm380, %v2059, %v2062
    %v2065 = vsel %vm380, %v2061, %v2063
    %v2068 = vadd.f32 %v2046, %v2064
    %v2069 = vadd.f32 %v2047, %v2065
    %s2070 = sld [smem:[#allocation2 + $0x4e]]
    %v2071 = vstv %s2070
    %v2072 = vmul.f32 %v63, %v2071
    %v2073 = vmul.f32 %v64, %v2071
    %v2076 = vrot.slane %v2072, 7
    %v2077 = vrot.slane %v2076, 4
    %v2078 = vrot.slane %v2073, 7
    %v2079 = vrot.slane %v2078, 4
    %2080 = vrot.lane.b32.xlu0 %v2077, 111
    %v2081 = vpop.permute.xlu0 %2080
    %2082 = vrot.lane.b32.xlu0 %v2079, 111
    %v2083 = vpop.permute.xlu0 %2082
    %v2084 = vrot.slane %v2081, 4
    %v2085 = vrot.slane %v2083, 4
    %v2086 = vsel %vm380, %v2081, %v2084
    %v2087 = vsel %vm380, %v2083, %v2085
    %v2090 = vadd.f32 %v2068, %v2086
    %v2091 = vadd.f32 %v2069, %v2087
    %s2092 = sld [smem:[#allocation2 + $0x52]]
    %v2093 = vstv %s2092
    %v2094 = vmul.f32 %v63, %v2093
    %v2095 = vmul.f32 %v64, %v2093
    %2098 = vrot.lane.b32.xlu0 %v2094, 110
    %v2099 = vpop.permute.xlu0 %2098
    %2100 = vrot.lane.b32.xlu0 %v2095, 110
    %v2101 = vpop.permute.xlu0 %2100
    %v2102 = vrot.slane %v2099, 4
    %v2103 = vrot.slane %v2101, 4
    %v2104 = vsel %vm465, %v2099, %v2102
    %v2105 = vsel %vm465, %v2101, %v2103
    %v2108 = vadd.f32 %v2090, %v2104
    %v2109 = vadd.f32 %v2091, %v2105
    %s2110 = sld [smem:[#allocation2 + $0x56]]
    %v2111 = vstv %s2110
    %v2112 = vmul.f32 %v63, %v2111
    %v2113 = vmul.f32 %v64, %v2111
    %v2116 = vrot.slane %v2112, 5
    %v2117 = vrot.slane %v2116, 4
    %v2118 = vrot.slane %v2113, 5
    %v2119 = vrot.slane %v2118, 4
    %2120 = vrot.lane.b32.xlu0 %v2117, 110
    %v2121 = vpop.permute.xlu0 %2120
    %2122 = vrot.lane.b32.xlu0 %v2119, 110
    %v2123 = vpop.permute.xlu0 %2122
    %v2124 = vrot.slane %v2121, 4
    %v2125 = vrot.slane %v2123, 4
    %v2126 = vsel %vm465, %v2121, %v2124
    %v2127 = vsel %vm465, %v2123, %v2125
    %v2130 = vadd.f32 %v2108, %v2126
    %v2131 = vadd.f32 %v2109, %v2127
    %s2132 = sld [smem:[#allocation2 + $0x5a]]
    %v2133 = vstv %s2132
    %v2134 = vmul.f32 %v63, %v2133
    %v2135 = vmul.f32 %v64, %v2133
    %v2138 = vrot.slane %v2134, 6
    %v2139 = vrot.slane %v2138, 4
    %v2140 = vrot.slane %v2135, 6
    %v2141 = vrot.slane %v2140, 4
    %2142 = vrot.lane.b32.xlu0 %v2139, 110
    %v2143 = vpop.permute.xlu0 %2142
    %2144 = vrot.lane.b32.xlu0 %v2141, 110
    %v2145 = vpop.permute.xlu0 %2144
    %v2146 = vrot.slane %v2143, 4
    %v2147 = vrot.slane %v2145, 4
    %v2148 = vsel %vm465, %v2143, %v2146
    %v2149 = vsel %vm465, %v2145, %v2147
    %v2152 = vadd.f32 %v2130, %v2148
    %v2153 = vadd.f32 %v2131, %v2149
    %s2154 = sld [smem:[#allocation2 + $0x5e]]
    %v2155 = vstv %s2154
    %v2156 = vmul.f32 %v63, %v2155
    %v2157 = vmul.f32 %v64, %v2155
    %v2160 = vrot.slane %v2156, 7
    %v2161 = vrot.slane %v2160, 4
    %v2162 = vrot.slane %v2157, 7
    %v2163 = vrot.slane %v2162, 4
    %2164 = vrot.lane.b32.xlu0 %v2161, 110
    %v2165 = vpop.permute.xlu0 %2164
    %2166 = vrot.lane.b32.xlu0 %v2163, 110
    %v2167 = vpop.permute.xlu0 %2166
    %v2168 = vrot.slane %v2165, 4
    %v2169 = vrot.slane %v2167, 4
    %v2170 = vsel %vm465, %v2165, %v2168
    %v2171 = vsel %vm465, %v2167, %v2169
    %v2174 = vadd.f32 %v2152, %v2170
    %v2175 = vadd.f32 %v2153, %v2171
    %s2176 = sld [smem:[#allocation2 + $0x62]]
    %v2177 = vstv %s2176
    %v2178 = vmul.f32 %v63, %v2177
    %v2179 = vmul.f32 %v64, %v2177
    %2182 = vrot.lane.b32.xlu0 %v2178, 96
    %v2183 = vpop.permute.xlu0 %2182
    %2184 = vrot.lane.b32.xlu0 %v2179, 96
    %v2185 = vpop.permute.xlu0 %2184
    %v2186 = vrot.slane %v2183, 4
    %v2187 = vrot.slane %v2185, 4
    %v2188 = vsel %vm550, %v2183, %v2186
    %v2189 = vsel %vm550, %v2185, %v2187
    %v2192 = vadd.f32 %v2174, %v2188
    %v2193 = vadd.f32 %v2175, %v2189
    %s2194 = sld [smem:[#allocation2 + $0x66]]
    %v2195 = vstv %s2194
    %v2196 = vmul.f32 %v63, %v2195
    %v2197 = vmul.f32 %v64, %v2195
    %v2200 = vrot.slane %v2196, 5
    %v2201 = vrot.slane %v2200, 4
    %v2202 = vrot.slane %v2197, 5
    %v2203 = vrot.slane %v2202, 4
    %2204 = vrot.lane.b32.xlu0 %v2201, 96
    %v2205 = vpop.permute.xlu0 %2204
    %2206 = vrot.lane.b32.xlu0 %v2203, 96
    %v2207 = vpop.permute.xlu0 %2206
    %v2208 = vrot.slane %v2205, 4
    %v2209 = vrot.slane %v2207, 4
    %v2210 = vsel %vm550, %v2205, %v2208
    %v2211 = vsel %vm550, %v2207, %v2209
    %v2214 = vadd.f32 %v2192, %v2210
    %v2215 = vadd.f32 %v2193, %v2211
    %s2216 = sld [smem:[#allocation2 + $0x6a]]
    %v2217 = vstv %s2216
    %v2218 = vmul.f32 %v63, %v2217
    %v2219 = vmul.f32 %v64, %v2217
    %v2222 = vrot.slane %v2218, 6
    %v2223 = vrot.slane %v2222, 4
    %v2224 = vrot.slane %v2219, 6
    %v2225 = vrot.slane %v2224, 4
    %2226 = vrot.lane.b32.xlu0 %v2223, 96
    %v2227 = vpop.permute.xlu0 %2226
    %2228 = vrot.lane.b32.xlu0 %v2225, 96
    %v2229 = vpop.permute.xlu0 %2228
    %v2230 = vrot.slane %v2227, 4
    %v2231 = vrot.slane %v2229, 4
    %v2232 = vsel %vm550, %v2227, %v2230
    %v2233 = vsel %vm550, %v2229, %v2231
    %v2236 = vadd.f32 %v2214, %v2232
    %v2237 = vadd.f32 %v2215, %v2233
    %s2238 = sld [smem:[#allocation2 + $0x6e]]
    %v2239 = vstv %s2238
    %v2240 = vmul.f32 %v63, %v2239
    %v2241 = vmul.f32 %v64, %v2239
    %v2244 = vrot.slane %v2240, 7
    %v2245 = vrot.slane %v2244, 4
    %v2246 = vrot.slane %v2241, 7
    %v2247 = vrot.slane %v2246, 4
    %2248 = vrot.lane.b32.xlu0 %v2245, 96
    %v2249 = vpop.permute.xlu0 %2248
    %2250 = vrot.lane.b32.xlu0 %v2247, 96
    %v2251 = vpop.permute.xlu0 %2250
    %v2252 = vrot.slane %v2249, 4
    %v2253 = vrot.slane %v2251, 4
    %v2254 = vsel %vm550, %v2249, %v2252
    %v2255 = vsel %vm550, %v2251, %v2253
    %v2258 = vadd.f32 %v2236, %v2254
    %v2259 = vadd.f32 %v2237, %v2255
    %s2260 = sld [smem:[#allocation2 + $0x72]]
    %v2261 = vstv %s2260
    %v2262 = vmul.f32 %v63, %v2261
    %v2263 = vmul.f32 %v64, %v2261
    %2266 = vrot.lane.b32.xlu0 %v2262, 95
    %v2267 = vpop.permute.xlu0 %2266
    %2268 = vrot.lane.b32.xlu0 %v2263, 95
    %v2269 = vpop.permute.xlu0 %2268
    %v2270 = vrot.slane %v2267, 4
    %v2271 = vrot.slane %v2269, 4
    %v2272 = vsel %vm635, %v2267, %v2270
    %v2273 = vsel %vm635, %v2269, %v2271
    %v2276 = vadd.f32 %v2258, %v2272
    %v2277 = vadd.f32 %v2259, %v2273
    %s2278 = sld [smem:[#allocation2 + $0x76]]
    %v2279 = vstv %s2278
    %v2280 = vmul.f32 %v63, %v2279
    %v2281 = vmul.f32 %v64, %v2279
    %v2284 = vrot.slane %v2280, 5
    %v2285 = vrot.slane %v2284, 4
    %v2286 = vrot.slane %v2281, 5
    %v2287 = vrot.slane %v2286, 4
    %2288 = vrot.lane.b32.xlu0 %v2285, 95
    %v2289 = vpop.permute.xlu0 %2288
    %2290 = vrot.lane.b32.xlu0 %v2287, 95
    %v2291 = vpop.permute.xlu0 %2290
    %v2292 = vrot.slane %v2289, 4
    %v2293 = vrot.slane %v2291, 4
    %v2294 = vsel %vm635, %v2289, %v2292
    %v2295 = vsel %vm635, %v2291, %v2293
    %v2298 = vadd.f32 %v2276, %v2294
    %v2299 = vadd.f32 %v2277, %v2295
    %s2300 = sld [smem:[#allocation2 + $0x7a]]
    %v2301 = vstv %s2300
    %v2302 = vmul.f32 %v63, %v2301
    %v2303 = vmul.f32 %v64, %v2301
    %v2306 = vrot.slane %v2302, 6
    %v2307 = vrot.slane %v2306, 4
    %v2308 = vrot.slane %v2303, 6
    %v2309 = vrot.slane %v2308, 4
    %2310 = vrot.lane.b32.xlu0 %v2307, 95
    %v2311 = vpop.permute.xlu0 %2310
    %2312 = vrot.lane.b32.xlu0 %v2309, 95
    %v2313 = vpop.permute.xlu0 %2312
    %v2314 = vrot.slane %v2311, 4
    %v2315 = vrot.slane %v2313, 4
    %v2316 = vsel %vm635, %v2311, %v2314
    %v2317 = vsel %vm635, %v2313, %v2315
    %v2320 = vadd.f32 %v2298, %v2316
    %v2321 = vadd.f32 %v2299, %v2317
    %s2322 = sld [smem:[#allocation2 + $0x7e]]
    %v2323 = vstv %s2322
    %v2324 = vmul.f32 %v63, %v2323
    %v2325 = vmul.f32 %v64, %v2323
    %v2328 = vrot.slane %v2324, 7
    %v2329 = vrot.slane %v2328, 4
    %v2330 = vrot.slane %v2325, 7
    %v2331 = vrot.slane %v2330, 4
    %2332 = vrot.lane.b32.xlu0 %v2329, 95
    %v2333 = vpop.permute.xlu0 %2332
    %2334 = vrot.lane.b32.xlu0 %v2331, 95
    %v2335 = vpop.permute.xlu0 %2334
    %v2336 = vrot.slane %v2333, 4
    %v2337 = vrot.slane %v2335, 4
    %v2338 = vsel %vm635, %v2333, %v2336
    %v2339 = vsel %vm635, %v2335, %v2337
    %v2342 = vadd.f32 %v2320, %v2338
    %v2343 = vadd.f32 %v2321, %v2339
    %s2344 = sld [smem:[#allocation2 + $0x82]]
    %v2345 = vstv %s2344
    %v2346 = vmul.f32 %v63, %v2345
    %v2347 = vmul.f32 %v64, %v2345
    %2350 = vrot.lane.b32.xlu0 %v2346, 94
    %v2351 = vpop.permute.xlu0 %2350
    %2352 = vrot.lane.b32.xlu0 %v2347, 94
    %v2353 = vpop.permute.xlu0 %2352
    %v2354 = vrot.slane %v2351, 4
    %v2355 = vrot.slane %v2353, 4
    %v2356 = vsel %vm720, %v2351, %v2354
    %v2357 = vsel %vm720, %v2353, %v2355
    %v2360 = vadd.f32 %v2342, %v2356
    %v2361 = vadd.f32 %v2343, %v2357
    %s2362 = sld [smem:[#allocation2 + $0x86]]
    %v2363 = vstv %s2362
    %v2364 = vmul.f32 %v63, %v2363
    %v2365 = vmul.f32 %v64, %v2363
    %v2368 = vrot.slane %v2364, 5
    %v2369 = vrot.slane %v2368, 4
    %v2370 = vrot.slane %v2365, 5
    %v2371 = vrot.slane %v2370, 4
    %2372 = vrot.lane.b32.xlu0 %v2369, 94
    %v2373 = vpop.permute.xlu0 %2372
    %2374 = vrot.lane.b32.xlu0 %v2371, 94
    %v2375 = vpop.permute.xlu0 %2374
    %v2376 = vrot.slane %v2373, 4
    %v2377 = vrot.slane %v2375, 4
    %v2378 = vsel %vm720, %v2373, %v2376
    %v2379 = vsel %vm720, %v2375, %v2377
    %v2382 = vadd.f32 %v2360, %v2378
    %v2383 = vadd.f32 %v2361, %v2379
    %s2384 = sld [smem:[#allocation2 + $0x8a]]
    %v2385 = vstv %s2384
    %v2386 = vmul.f32 %v63, %v2385
    %v2387 = vmul.f32 %v64, %v2385
    %v2390 = vrot.slane %v2386, 6
    %v2391 = vrot.slane %v2390, 4
    %v2392 = vrot.slane %v2387, 6
    %v2393 = vrot.slane %v2392, 4
    %2394 = vrot.lane.b32.xlu0 %v2391, 94
    %v2395 = vpop.permute.xlu0 %2394
    %2396 = vrot.lane.b32.xlu0 %v2393, 94
    %v2397 = vpop.permute.xlu0 %2396
    %v2398 = vrot.slane %v2395, 4
    %v2399 = vrot.slane %v2397, 4
    %v2400 = vsel %vm720, %v2395, %v2398
    %v2401 = vsel %vm720, %v2397, %v2399
    %v2404 = vadd.f32 %v2382, %v2400
    %v2405 = vadd.f32 %v2383, %v2401
    %s2406 = sld [smem:[#allocation2 + $0x8e]]
    %v2407 = vstv %s2406
    %v2408 = vmul.f32 %v63, %v2407
    %v2409 = vmul.f32 %v64, %v2407
    %v2412 = vrot.slane %v2408, 7
    %v2413 = vrot.slane %v2412, 4
    %v2414 = vrot.slane %v2409, 7
    %v2415 = vrot.slane %v2414, 4
    %2416 = vrot.lane.b32.xlu0 %v2413, 94
    %v2417 = vpop.permute.xlu0 %2416
    %2418 = vrot.lane.b32.xlu0 %v2415, 94
    %v2419 = vpop.permute.xlu0 %2418
    %v2420 = vrot.slane %v2417, 4
    %v2421 = vrot.slane %v2419, 4
    %v2422 = vsel %vm720, %v2417, %v2420
    %v2423 = vsel %vm720, %v2419, %v2421
    %v2426 = vadd.f32 %v2404, %v2422
    %v2427 = vadd.f32 %v2405, %v2423
    %s2428 = sld [smem:[#allocation2 + $0x122]]
    %s2429 = sld [smem:[#allocation2 + $0x126]]
    %v2430 = vmul.f32 %v2426, %v797
    %v2431 = vmul.f32 %v2427, %v798
    %v2434 = vlaneseq
    %v2435 = vshrl.u32 %v2434, 7
    %v2436 = vsub.s32 0, %v2435
    %v2437 = vrot.slane %v2430, %v2436
    %v2438 = vlaneseq
    %v2439 = vshrl.u32 %v2438, 7
    %v2440 = vsub.s32 4, %v2439
    %v2441 = vrot.slane %v2430, %v2440
    %v2442 = vlaneseq
    %v2443 = vshrl.u32 %v2442, 7
    %v2444 = vsub.s32 0, %v2443
    %v2445 = vrot.slane %v2431, %v2444
    %v2446 = vlaneseq
    %v2447 = vshrl.u32 %v2446, 7
    %v2448 = vsub.s32 4, %v2447
    %v2449 = vrot.slane %v2431, %v2448
    %v2450 = vsel %vm821, %v2445, %v2437
    %v2451 = vsel %vm821, %v2449, %v2441
    %v2454 = vsel %vm826, %v2450, 0.0
    %v2455 = vsel %vm828, %v2451, 0.0
    %v2456 = vadd.f32 %v2454, %v2455
    %2457 = vadd.xlane.f32.xlu0 %v2456
    %v2458 = vpop.xlane.xlu0 %2457
    %v2459 = vsel %vm826, %v2458, 0.0
    %v2460 = vrot.slane %v2459, 4
    %v2461 = vadd.f32 %v2459, %v2460
    %v2462 = vrot.slane %v2461, 2
    %v2463 = vadd.f32 %v2461, %v2462
    %v2464 = vrot.slane %v2463, 1
    %v2465 = vadd.f32 %v2463, %v2464
    %v2466 = vmul.f32 %v2465, 0.0025510204
    %v2467 = vsub.f32 %v2426, %v2466
    %v2468 = vsub.f32 %v2427, %v2466
    %v2469 = vmul.f32 %v2467, %v797
    %v2470 = vmul.f32 %v2468, %v798
    %v2471 = vmul.f32 %v2469, %v2469
    %v2472 = vmul.f32 %v2470, %v2470
    %v2475 = vlaneseq
    %v2476 = vshrl.u32 %v2475, 7
    %v2477 = vsub.s32 0, %v2476
    %v2478 = vrot.slane %v2471, %v2477
    %v2479 = vlaneseq
    %v2480 = vshrl.u32 %v2479, 7
    %v2481 = vsub.s32 4, %v2480
    %v2482 = vrot.slane %v2471, %v2481
    %v2483 = vlaneseq
    %v2484 = vshrl.u32 %v2483, 7
    %v2485 = vsub.s32 0, %v2484
    %v2486 = vrot.slane %v2472, %v2485
    %v2487 = vlaneseq
    %v2488 = vshrl.u32 %v2487, 7
    %v2489 = vsub.s32 4, %v2488
    %v2490 = vrot.slane %v2472, %v2489
    %v2491 = vsel %vm821, %v2486, %v2478
    %v2492 = vsel %vm821, %v2490, %v2482
    %v2495 = vsel %vm826, %v2491, 0.0
    %v2496 = vsel %vm828, %v2492, 0.0
    %v2497 = vadd.f32 %v2495, %v2496
    %2498 = vadd.xlane.f32.xlu0 %v2497
    %v2499 = vpop.xlane.xlu0 %2498
    %v2500 = vsel %vm826, %v2499, 0.0
    %v2501 = vrot.slane %v2500, 4
    %v2502 = vadd.f32 %v2500, %v2501
    %v2503 = vrot.slane %v2502, 2
    %v2504 = vadd.f32 %v2502, %v2503
    %v2505 = vrot.slane %v2504, 1
    %v2506 = vadd.f32 %v2504, %v2505
    %v2507 = vmul.f32 %v2506, 0.0025510204
    %v2508 = vadd.f32 %v2507, 1e-05
    %v2509 = vrsqrt.pop %v2508
    %v2510 = vstv %s2428
    %v2511 = vmul.f32 %v2510, %v2509
    %v2512 = vmul.f32 %v2466, %v2511
    %v2513 = vstv %s2429
    %v2514 = vsub.f32 %v2513, %v2512
    %v2515 = vmul.f32 %v2426, %v2511
    %v2516 = vmul.f32 %v2427, %v2511
    %v2517 = vadd.f32 %v2515, %v2514
    %v2518 = vadd.f32 %v2516, %v2514
    %v2519 = vmax.f32 %v2517, 0.0
    %v2520 = vmax.f32 %v2518, 0.0
    %s2521 = sld [smem:[#allocation2 + $0x3]]
    %v2522 = vstv %s2521
    %v2523 = vmul.f32 %v63, %v2522
    %v2524 = vmul.f32 %v64, %v2522
    %v2525 = vadd.f32 %v2523, 0.0
    %v2526 = vadd.f32 %v2524, 0.0
    %s2527 = sld [smem:[#allocation2 + $0x7]]
    %v2528 = vstv %s2527
    %v2529 = vmul.f32 %v63, %v2528
    %v2530 = vmul.f32 %v64, %v2528
    %v2533 = vrot.slane %v2529, 5
    %v2534 = vrot.slane %v2533, 4
    %v2535 = vrot.slane %v2530, 5
    %v2536 = vrot.slane %v2535, 4
    %v2539 = vadd.f32 %v2525, %v2534
    %v2540 = vadd.f32 %v2526, %v2536
    %s2541 = sld [smem:[#allocation2 + $0xb]]
    %v2542 = vstv %s2541
    %v2543 = vmul.f32 %v63, %v2542
    %v2544 = vmul.f32 %v64, %v2542
    %v2547 = vrot.slane %v2543, 6
    %v2548 = vrot.slane %v2547, 4
    %v2549 = vrot.slane %v2544, 6
    %v2550 = vrot.slane %v2549, 4
    %v2553 = vadd.f32 %v2539, %v2548
    %v2554 = vadd.f32 %v2540, %v2550
    %s2555 = sld [smem:[#allocation2 + $0xf]]
    %v2556 = vstv %s2555
    %v2557 = vmul.f32 %v63, %v2556
    %v2558 = vmul.f32 %v64, %v2556
    %v2561 = vrot.slane %v2557, 7
    %v2562 = vrot.slane %v2561, 4
    %v2563 = vrot.slane %v2558, 7
    %v2564 = vrot.slane %v2563, 4
    %v2567 = vadd.f32 %v2553, %v2562
    %v2568 = vadd.f32 %v2554, %v2564
    %s2569 = sld [smem:[#allocation2 + $0x13]]
    %v2570 = vstv %s2569
    %v2571 = vmul.f32 %v63, %v2570
    %v2572 = vmul.f32 %v64, %v2570
    %2575 = vrot.lane.b32.xlu0 %v2571, 127
    %v2576 = vpop.permute.xlu0 %2575
    %2577 = vrot.lane.b32.xlu0 %v2572, 127
    %v2578 = vpop.permute.xlu0 %2577
    %v2579 = vrot.slane %v2576, 4
    %v2580 = vrot.slane %v2578, 4
    %v2581 = vsel %vm125, %v2576, %v2579
    %v2582 = vsel %vm125, %v2578, %v2580
    %v2585 = vadd.f32 %v2567, %v2581
    %v2586 = vadd.f32 %v2568, %v2582
    %s2587 = sld [smem:[#allocation2 + $0x17]]
    %v2588 = vstv %s2587
    %v2589 = vmul.f32 %v63, %v2588
    %v2590 = vmul.f32 %v64, %v2588
    %v2593 = vrot.slane %v2589, 5
    %v2594 = vrot.slane %v2593, 4
    %v2595 = vrot.slane %v2590, 5
    %v2596 = vrot.slane %v2595, 4
    %2597 = vrot.lane.b32.xlu0 %v2594, 127
    %v2598 = vpop.permute.xlu0 %2597
    %2599 = vrot.lane.b32.xlu0 %v2596, 127
    %v2600 = vpop.permute.xlu0 %2599
    %v2601 = vrot.slane %v2598, 4
    %v2602 = vrot.slane %v2600, 4
    %v2603 = vsel %vm125, %v2598, %v2601
    %v2604 = vsel %vm125, %v2600, %v2602
    %v2607 = vadd.f32 %v2585, %v2603
    %v2608 = vadd.f32 %v2586, %v2604
    %s2609 = sld [smem:[#allocation2 + $0x1b]]
    %v2610 = vstv %s2609
    %v2611 = vmul.f32 %v63, %v2610
    %v2612 = vmul.f32 %v64, %v2610
    %v2615 = vrot.slane %v2611, 6
    %v2616 = vrot.slane %v2615, 4
    %v2617 = vrot.slane %v2612, 6
    %v2618 = vrot.slane %v2617, 4
    %2619 = vrot.lane.b32.xlu0 %v2616, 127
    %v2620 = vpop.permute.xlu0 %2619
    %2621 = vrot.lane.b32.xlu0 %v2618, 127
    %v2622 = vpop.permute.xlu0 %2621
    %v2623 = vrot.slane %v2620, 4
    %v2624 = vrot.slane %v2622, 4
    %v2625 = vsel %vm125, %v2620, %v2623
    %v2626 = vsel %vm125, %v2622, %v2624
    %v2629 = vadd.f32 %v2607, %v2625
    %v2630 = vadd.f32 %v2608, %v2626
    %s2631 = sld [smem:[#allocation2 + $0x1f]]
    %v2632 = vstv %s2631
    %v2633 = vmul.f32 %v63, %v2632
    %v2634 = vmul.f32 %v64, %v2632
    %v2637 = vrot.slane %v2633, 7
    %v2638 = vrot.slane %v2637, 4
    %v2639 = vrot.slane %v2634, 7
    %v2640 = vrot.slane %v2639, 4
    %2641 = vrot.lane.b32.xlu0 %v2638, 127
    %v2642 = vpop.permute.xlu0 %2641
    %2643 = vrot.lane.b32.xlu0 %v2640, 127
    %v2644 = vpop.permute.xlu0 %2643
    %v2645 = vrot.slane %v2642, 4
    %v2646 = vrot.slane %v2644, 4
    %v2647 = vsel %vm125, %v2642, %v2645
    %v2648 = vsel %vm125, %v2644, %v2646
    %v2651 = vadd.f32 %v2629, %v2647
    %v2652 = vadd.f32 %v2630, %v2648
    %s2653 = sld [smem:[#allocation2 + $0x23]]
    %v2654 = vstv %s2653
    %v2655 = vmul.f32 %v63, %v2654
    %v2656 = vmul.f32 %v64, %v2654
    %2659 = vrot.lane.b32.xlu0 %v2655, 126
    %v2660 = vpop.permute.xlu0 %2659
    %2661 = vrot.lane.b32.xlu0 %v2656, 126
    %v2662 = vpop.permute.xlu0 %2661
    %v2663 = vrot.slane %v2660, 4
    %v2664 = vrot.slane %v2662, 4
    %v2665 = vsel %vm210, %v2660, %v2663
    %v2666 = vsel %vm210, %v2662, %v2664
    %v2669 = vadd.f32 %v2651, %v2665
    %v2670 = vadd.f32 %v2652, %v2666
    %s2671 = sld [smem:[#allocation2 + $0x27]]
    %v2672 = vstv %s2671
    %v2673 = vmul.f32 %v63, %v2672
    %v2674 = vmul.f32 %v64, %v2672
    %v2677 = vrot.slane %v2673, 5
    %v2678 = vrot.slane %v2677, 4
    %v2679 = vrot.slane %v2674, 5
    %v2680 = vrot.slane %v2679, 4
    %2681 = vrot.lane.b32.xlu0 %v2678, 126
    %v2682 = vpop.permute.xlu0 %2681
    %2683 = vrot.lane.b32.xlu0 %v2680, 126
    %v2684 = vpop.permute.xlu0 %2683
    %v2685 = vrot.slane %v2682, 4
    %v2686 = vrot.slane %v2684, 4
    %v2687 = vsel %vm210, %v2682, %v2685
    %v2688 = vsel %vm210, %v2684, %v2686
    %v2691 = vadd.f32 %v2669, %v2687
    %v2692 = vadd.f32 %v2670, %v2688
    %s2693 = sld [smem:[#allocation2 + $0x2b]]
    %v2694 = vstv %s2693
    %v2695 = vmul.f32 %v63, %v2694
    %v2696 = vmul.f32 %v64, %v2694
    %v2699 = vrot.slane %v2695, 6
    %v2700 = vrot.slane %v2699, 4
    %v2701 = vrot.slane %v2696, 6
    %v2702 = vrot.slane %v2701, 4
    %2703 = vrot.lane.b32.xlu0 %v2700, 126
    %v2704 = vpop.permute.xlu0 %2703
    %2705 = vrot.lane.b32.xlu0 %v2702, 126
    %v2706 = vpop.permute.xlu0 %2705
    %v2707 = vrot.slane %v2704, 4
    %v2708 = vrot.slane %v2706, 4
    %v2709 = vsel %vm210, %v2704, %v2707
    %v2710 = vsel %vm210, %v2706, %v2708
    %v2713 = vadd.f32 %v2691, %v2709
    %v2714 = vadd.f32 %v2692, %v2710
    %s2715 = sld [smem:[#allocation2 + $0x2f]]
    %v2716 = vstv %s2715
    %v2717 = vmul.f32 %v63, %v2716
    %v2718 = vmul.f32 %v64, %v2716
    %v2721 = vrot.slane %v2717, 7
    %v2722 = vrot.slane %v2721, 4
    %v2723 = vrot.slane %v2718, 7
    %v2724 = vrot.slane %v2723, 4
    %2725 = vrot.lane.b32.xlu0 %v2722, 126
    %v2726 = vpop.permute.xlu0 %2725
    %2727 = vrot.lane.b32.xlu0 %v2724, 126
    %v2728 = vpop.permute.xlu0 %2727
    %v2729 = vrot.slane %v2726, 4
    %v2730 = vrot.slane %v2728, 4
    %v2731 = vsel %vm210, %v2726, %v2729
    %v2732 = vsel %vm210, %v2728, %v2730
    %v2735 = vadd.f32 %v2713, %v2731
    %v2736 = vadd.f32 %v2714, %v2732
    %s2737 = sld [smem:[#allocation2 + $0x33]]
    %v2738 = vstv %s2737
    %v2739 = vmul.f32 %v63, %v2738
    %v2740 = vmul.f32 %v64, %v2738
    %2743 = vrot.lane.b32.xlu0 %v2739, 112
    %v2744 = vpop.permute.xlu0 %2743
    %2745 = vrot.lane.b32.xlu0 %v2740, 112
    %v2746 = vpop.permute.xlu0 %2745
    %v2747 = vrot.slane %v2744, 4
    %v2748 = vrot.slane %v2746, 4
    %v2749 = vsel %vm295, %v2744, %v2747
    %v2750 = vsel %vm295, %v2746, %v2748
    %v2753 = vadd.f32 %v2735, %v2749
    %v2754 = vadd.f32 %v2736, %v2750
    %s2755 = sld [smem:[#allocation2 + $0x37]]
    %v2756 = vstv %s2755
    %v2757 = vmul.f32 %v63, %v2756
    %v2758 = vmul.f32 %v64, %v2756
    %v2761 = vrot.slane %v2757, 5
    %v2762 = vrot.slane %v2761, 4
    %v2763 = vrot.slane %v2758, 5
    %v2764 = vrot.slane %v2763, 4
    %2765 = vrot.lane.b32.xlu0 %v2762, 112
    %v2766 = vpop.permute.xlu0 %2765
    %2767 = vrot.lane.b32.xlu0 %v2764, 112
    %v2768 = vpop.permute.xlu0 %2767
    %v2769 = vrot.slane %v2766, 4
    %v2770 = vrot.slane %v2768, 4
    %v2771 = vsel %vm295, %v2766, %v2769
    %v2772 = vsel %vm295, %v2768, %v2770
    %v2775 = vadd.f32 %v2753, %v2771
    %v2776 = vadd.f32 %v2754, %v2772
    %s2777 = sld [smem:[#allocation2 + $0x3b]]
    %v2778 = vstv %s2777
    %v2779 = vmul.f32 %v63, %v2778
    %v2780 = vmul.f32 %v64, %v2778
    %v2783 = vrot.slane %v2779, 6
    %v2784 = vrot.slane %v2783, 4
    %v2785 = vrot.slane %v2780, 6
    %v2786 = vrot.slane %v2785, 4
    %2787 = vrot.lane.b32.xlu0 %v2784, 112
    %v2788 = vpop.permute.xlu0 %2787
    %2789 = vrot.lane.b32.xlu0 %v2786, 112
    %v2790 = vpop.permute.xlu0 %2789
    %v2791 = vrot.slane %v2788, 4
    %v2792 = vrot.slane %v2790, 4
    %v2793 = vsel %vm295, %v2788, %v2791
    %v2794 = vsel %vm295, %v2790, %v2792
    %v2797 = vadd.f32 %v2775, %v2793
    %v2798 = vadd.f32 %v2776, %v2794
    %s2799 = sld [smem:[#allocation2 + $0x3f]]
    %v2800 = vstv %s2799
    %v2801 = vmul.f32 %v63, %v2800
    %v2802 = vmul.f32 %v64, %v2800
    %v2805 = vrot.slane %v2801, 7
    %v2806 = vrot.slane %v2805, 4
    %v2807 = vrot.slane %v2802, 7
    %v2808 = vrot.slane %v2807, 4
    %2809 = vrot.lane.b32.xlu0 %v2806, 112
    %v2810 = vpop.permute.xlu0 %2809
    %2811 = vrot.lane.b32.xlu0 %v2808, 112
    %v2812 = vpop.permute.xlu0 %2811
    %v2813 = vrot.slane %v2810, 4
    %v2814 = vrot.slane %v2812, 4
    %v2815 = vsel %vm295, %v2810, %v2813
    %v2816 = vsel %vm295, %v2812, %v2814
    %v2819 = vadd.f32 %v2797, %v2815
    %v2820 = vadd.f32 %v2798, %v2816
    %s2821 = sld [smem:[#allocation2 + $0x43]]
    %v2822 = vstv %s2821
    %v2823 = vmul.f32 %v63, %v2822
    %v2824 = vmul.f32 %v64, %v2822
    %2827 = vrot.lane.b32.xlu0 %v2823, 111
    %v2828 = vpop.permute.xlu0 %2827
    %2829 = vrot.lane.b32.xlu0 %v2824, 111
    %v2830 = vpop.permute.xlu0 %2829
    %v2831 = vrot.slane %v2828, 4
    %v2832 = vrot.slane %v2830, 4
    %v2833 = vsel %vm380, %v2828, %v2831
    %v2834 = vsel %vm380, %v2830, %v2832
    %v2837 = vadd.f32 %v2819, %v2833
    %v2838 = vadd.f32 %v2820, %v2834
    %s2839 = sld [smem:[#allocation2 + $0x47]]
    %v2840 = vstv %s2839
    %v2841 = vmul.f32 %v63, %v2840
    %v2842 = vmul.f32 %v64, %v2840
    %v2845 = vrot.slane %v2841, 5
    %v2846 = vrot.slane %v2845, 4
    %v2847 = vrot.slane %v2842, 5
    %v2848 = vrot.slane %v2847, 4
    %2849 = vrot.lane.b32.xlu0 %v2846, 111
    %v2850 = vpop.permute.xlu0 %2849
    %2851 = vrot.lane.b32.xlu0 %v2848, 111
    %v2852 = vpop.permute.xlu0 %2851
    %v2853 = vrot.slane %v2850, 4
    %v2854 = vrot.slane %v2852, 4
    %v2855 = vsel %vm380, %v2850, %v2853
    %v2856 = vsel %vm380, %v2852, %v2854
    %v2859 = vadd.f32 %v2837, %v2855
    %v2860 = vadd.f32 %v2838, %v2856
    %s2861 = sld [smem:[#allocation2 + $0x4b]]
    %v2862 = vstv %s2861
    %v2863 = vmul.f32 %v63, %v2862
    %v2864 = vmul.f32 %v64, %v2862
    %v2867 = vrot.slane %v2863, 6
    %v2868 = vrot.slane %v2867, 4
    %v2869 = vrot.slane %v2864, 6
    %v2870 = vrot.slane %v2869, 4
    %2871 = vrot.lane.b32.xlu0 %v2868, 111
    %v2872 = vpop.permute.xlu0 %2871
    %2873 = vrot.lane.b32.xlu0 %v2870, 111
    %v2874 = vpop.permute.xlu0 %2873
    %v2875 = vrot.slane %v2872, 4
    %v2876 = vrot.slane %v2874, 4
    %v2877 = vsel %vm380, %v2872, %v2875
    %v2878 = vsel %vm380, %v2874, %v2876
    %v2881 = vadd.f32 %v2859, %v2877
    %v2882 = vadd.f32 %v2860, %v2878
    %s2883 = sld [smem:[#allocation2 + $0x4f]]
    %v2884 = vstv %s2883
    %v2885 = vmul.f32 %v63, %v2884
    %v2886 = vmul.f32 %v64, %v2884
    %v2889 = vrot.slane %v2885, 7
    %v2890 = vrot.slane %v2889, 4
    %v2891 = vrot.slane %v2886, 7
    %v2892 = vrot.slane %v2891, 4
    %2893 = vrot.lane.b32.xlu0 %v2890, 111
    %v2894 = vpop.permute.xlu0 %2893
    %2895 = vrot.lane.b32.xlu0 %v2892, 111
    %v2896 = vpop.permute.xlu0 %2895
    %v2897 = vrot.slane %v2894, 4
    %v2898 = vrot.slane %v2896, 4
    %v2899 = vsel %vm380, %v2894, %v2897
    %v2900 = vsel %vm380, %v2896, %v2898
    %v2903 = vadd.f32 %v2881, %v2899
    %v2904 = vadd.f32 %v2882, %v2900
    %s2905 = sld [smem:[#allocation2 + $0x53]]
    %v2906 = vstv %s2905
    %v2907 = vmul.f32 %v63, %v2906
    %v2908 = vmul.f32 %v64, %v2906
    %2911 = vrot.lane.b32.xlu0 %v2907, 110
    %v2912 = vpop.permute.xlu0 %2911
    %2913 = vrot.lane.b32.xlu0 %v2908, 110
    %v2914 = vpop.permute.xlu0 %2913
    %v2915 = vrot.slane %v2912, 4
    %v2916 = vrot.slane %v2914, 4
    %v2917 = vsel %vm465, %v2912, %v2915
    %v2918 = vsel %vm465, %v2914, %v2916
    %v2921 = vadd.f32 %v2903, %v2917
    %v2922 = vadd.f32 %v2904, %v2918
    %s2923 = sld [smem:[#allocation2 + $0x57]]
    %v2924 = vstv %s2923
    %v2925 = vmul.f32 %v63, %v2924
    %v2926 = vmul.f32 %v64, %v2924
    %v2929 = vrot.slane %v2925, 5
    %v2930 = vrot.slane %v2929, 4
    %v2931 = vrot.slane %v2926, 5
    %v2932 = vrot.slane %v2931, 4
    %2933 = vrot.lane.b32.xlu0 %v2930, 110
    %v2934 = vpop.permute.xlu0 %2933
    %2935 = vrot.lane.b32.xlu0 %v2932, 110
    %v2936 = vpop.permute.xlu0 %2935
    %v2937 = vrot.slane %v2934, 4
    %v2938 = vrot.slane %v2936, 4
    %v2939 = vsel %vm465, %v2934, %v2937
    %v2940 = vsel %vm465, %v2936, %v2938
    %v2943 = vadd.f32 %v2921, %v2939
    %v2944 = vadd.f32 %v2922, %v2940
    %s2945 = sld [smem:[#allocation2 + $0x5b]]
    %v2946 = vstv %s2945
    %v2947 = vmul.f32 %v63, %v2946
    %v2948 = vmul.f32 %v64, %v2946
    %v2951 = vrot.slane %v2947, 6
    %v2952 = vrot.slane %v2951, 4
    %v2953 = vrot.slane %v2948, 6
    %v2954 = vrot.slane %v2953, 4
    %2955 = vrot.lane.b32.xlu0 %v2952, 110
    %v2956 = vpop.permute.xlu0 %2955
    %2957 = vrot.lane.b32.xlu0 %v2954, 110
    %v2958 = vpop.permute.xlu0 %2957
    %v2959 = vrot.slane %v2956, 4
    %v2960 = vrot.slane %v2958, 4
    %v2961 = vsel %vm465, %v2956, %v2959
    %v2962 = vsel %vm465, %v2958, %v2960
    %v2965 = vadd.f32 %v2943, %v2961
    %v2966 = vadd.f32 %v2944, %v2962
    %s2967 = sld [smem:[#allocation2 + $0x5f]]
    %v2968 = vstv %s2967
    %v2969 = vmul.f32 %v63, %v2968
    %v2970 = vmul.f32 %v64, %v2968
    %v2973 = vrot.slane %v2969, 7
    %v2974 = vrot.slane %v2973, 4
    %v2975 = vrot.slane %v2970, 7
    %v2976 = vrot.slane %v2975, 4
    %2977 = vrot.lane.b32.xlu0 %v2974, 110
    %v2978 = vpop.permute.xlu0 %2977
    %2979 = vrot.lane.b32.xlu0 %v2976, 110
    %v2980 = vpop.permute.xlu0 %2979
    %v2981 = vrot.slane %v2978, 4
    %v2982 = vrot.slane %v2980, 4
    %v2983 = vsel %vm465, %v2978, %v2981
    %v2984 = vsel %vm465, %v2980, %v2982
    %v2987 = vadd.f32 %v2965, %v2983
    %v2988 = vadd.f32 %v2966, %v2984
    %s2989 = sld [smem:[#allocation2 + $0x63]]
    %v2990 = vstv %s2989
    %v2991 = vmul.f32 %v63, %v2990
    %v2992 = vmul.f32 %v64, %v2990
    %2995 = vrot.lane.b32.xlu0 %v2991, 96
    %v2996 = vpop.permute.xlu0 %2995
    %2997 = vrot.lane.b32.xlu0 %v2992, 96
    %v2998 = vpop.permute.xlu0 %2997
    %v2999 = vrot.slane %v2996, 4
    %v3000 = vrot.slane %v2998, 4
    %v3001 = vsel %vm550, %v2996, %v2999
    %v3002 = vsel %vm550, %v2998, %v3000
    %v3005 = vadd.f32 %v2987, %v3001
    %v3006 = vadd.f32 %v2988, %v3002
    %s3007 = sld [smem:[#allocation2 + $0x67]]
    %v3008 = vstv %s3007
    %v3009 = vmul.f32 %v63, %v3008
    %v3010 = vmul.f32 %v64, %v3008
    %v3013 = vrot.slane %v3009, 5
    %v3014 = vrot.slane %v3013, 4
    %v3015 = vrot.slane %v3010, 5
    %v3016 = vrot.slane %v3015, 4
    %3017 = vrot.lane.b32.xlu0 %v3014, 96
    %v3018 = vpop.permute.xlu0 %3017
    %3019 = vrot.lane.b32.xlu0 %v3016, 96
    %v3020 = vpop.permute.xlu0 %3019
    %v3021 = vrot.slane %v3018, 4
    %v3022 = vrot.slane %v3020, 4
    %v3023 = vsel %vm550, %v3018, %v3021
    %v3024 = vsel %vm550, %v3020, %v3022
    %v3027 = vadd.f32 %v3005, %v3023
    %v3028 = vadd.f32 %v3006, %v3024
    %s3029 = sld [smem:[#allocation2 + $0x6b]]
    %v3030 = vstv %s3029
    %v3031 = vmul.f32 %v63, %v3030
    %v3032 = vmul.f32 %v64, %v3030
    %v3035 = vrot.slane %v3031, 6
    %v3036 = vrot.slane %v3035, 4
    %v3037 = vrot.slane %v3032, 6
    %v3038 = vrot.slane %v3037, 4
    %3039 = vrot.lane.b32.xlu0 %v3036, 96
    %v3040 = vpop.permute.xlu0 %3039
    %3041 = vrot.lane.b32.xlu0 %v3038, 96
    %v3042 = vpop.permute.xlu0 %3041
    %v3043 = vrot.slane %v3040, 4
    %v3044 = vrot.slane %v3042, 4
    %v3045 = vsel %vm550, %v3040, %v3043
    %v3046 = vsel %vm550, %v3042, %v3044
    %v3049 = vadd.f32 %v3027, %v3045
    %v3050 = vadd.f32 %v3028, %v3046
    %s3051 = sld [smem:[#allocation2 + $0x6f]]
    %v3052 = vstv %s3051
    %v3053 = vmul.f32 %v63, %v3052
    %v3054 = vmul.f32 %v64, %v3052
    %v3057 = vrot.slane %v3053, 7
    %v3058 = vrot.slane %v3057, 4
    %v3059 = vrot.slane %v3054, 7
    %v3060 = vrot.slane %v3059, 4
    %3061 = vrot.lane.b32.xlu0 %v3058, 96
    %v3062 = vpop.permute.xlu0 %3061
    %3063 = vrot.lane.b32.xlu0 %v3060, 96
    %v3064 = vpop.permute.xlu0 %3063
    %v3065 = vrot.slane %v3062, 4
    %v3066 = vrot.slane %v3064, 4
    %v3067 = vsel %vm550, %v3062, %v3065
    %v3068 = vsel %vm550, %v3064, %v3066
    %v3071 = vadd.f32 %v3049, %v3067
    %v3072 = vadd.f32 %v3050, %v3068
    %s3073 = sld [smem:[#allocation2 + $0x73]]
    %v3074 = vstv %s3073
    %v3075 = vmul.f32 %v63, %v3074
    %v3076 = vmul.f32 %v64, %v3074
    %3079 = vrot.lane.b32.xlu0 %v3075, 95
    %v3080 = vpop.permute.xlu0 %3079
    %3081 = vrot.lane.b32.xlu0 %v3076, 95
    %v3082 = vpop.permute.xlu0 %3081
    %v3083 = vrot.slane %v3080, 4
    %v3084 = vrot.slane %v3082, 4
    %v3085 = vsel %vm635, %v3080, %v3083
    %v3086 = vsel %vm635, %v3082, %v3084
    %v3089 = vadd.f32 %v3071, %v3085
    %v3090 = vadd.f32 %v3072, %v3086
    %s3091 = sld [smem:[#allocation2 + $0x77]]
    %v3092 = vstv %s3091
    %v3093 = vmul.f32 %v63, %v3092
    %v3094 = vmul.f32 %v64, %v3092
    %v3097 = vrot.slane %v3093, 5
    %v3098 = vrot.slane %v3097, 4
    %v3099 = vrot.slane %v3094, 5
    %v3100 = vrot.slane %v3099, 4
    %3101 = vrot.lane.b32.xlu0 %v3098, 95
    %v3102 = vpop.permute.xlu0 %3101
    %3103 = vrot.lane.b32.xlu0 %v3100, 95
    %v3104 = vpop.permute.xlu0 %3103
    %v3105 = vrot.slane %v3102, 4
    %v3106 = vrot.slane %v3104, 4
    %v3107 = vsel %vm635, %v3102, %v3105
    %v3108 = vsel %vm635, %v3104, %v3106
    %v3111 = vadd.f32 %v3089, %v3107
    %v3112 = vadd.f32 %v3090, %v3108
    %s3113 = sld [smem:[#allocation2 + $0x7b]]
    %v3114 = vstv %s3113
    %v3115 = vmul.f32 %v63, %v3114
    %v3116 = vmul.f32 %v64, %v3114
    %v3119 = vrot.slane %v3115, 6
    %v3120 = vrot.slane %v3119, 4
    %v3121 = vrot.slane %v3116, 6
    %v3122 = vrot.slane %v3121, 4
    %3123 = vrot.lane.b32.xlu0 %v3120, 95
    %v3124 = vpop.permute.xlu0 %3123
    %3125 = vrot.lane.b32.xlu0 %v3122, 95
    %v3126 = vpop.permute.xlu0 %3125
    %v3127 = vrot.slane %v3124, 4
    %v3128 = vrot.slane %v3126, 4
    %v3129 = vsel %vm635, %v3124, %v3127
    %v3130 = vsel %vm635, %v3126, %v3128
    %v3133 = vadd.f32 %v3111, %v3129
    %v3134 = vadd.f32 %v3112, %v3130
    %s3135 = sld [smem:[#allocation2 + $0x7f]]
    %v3136 = vstv %s3135
    %v3137 = vmul.f32 %v63, %v3136
    %v3138 = vmul.f32 %v64, %v3136
    %v3141 = vrot.slane %v3137, 7
    %v3142 = vrot.slane %v3141, 4
    %v3143 = vrot.slane %v3138, 7
    %v3144 = vrot.slane %v3143, 4
    %3145 = vrot.lane.b32.xlu0 %v3142, 95
    %v3146 = vpop.permute.xlu0 %3145
    %3147 = vrot.lane.b32.xlu0 %v3144, 95
    %v3148 = vpop.permute.xlu0 %3147
    %v3149 = vrot.slane %v3146, 4
    %v3150 = vrot.slane %v3148, 4
    %v3151 = vsel %vm635, %v3146, %v3149
    %v3152 = vsel %vm635, %v3148, %v3150
    %v3155 = vadd.f32 %v3133, %v3151
    %v3156 = vadd.f32 %v3134, %v3152
    %s3157 = sld [smem:[#allocation2 + $0x83]]
    %v3158 = vstv %s3157
    %v3159 = vmul.f32 %v63, %v3158
    %v3160 = vmul.f32 %v64, %v3158
    %3163 = vrot.lane.b32.xlu0 %v3159, 94
    %v3164 = vpop.permute.xlu0 %3163
    %3165 = vrot.lane.b32.xlu0 %v3160, 94
    %v3166 = vpop.permute.xlu0 %3165
    %v3167 = vrot.slane %v3164, 4
    %v3168 = vrot.slane %v3166, 4
    %v3169 = vsel %vm720, %v3164, %v3167
    %v3170 = vsel %vm720, %v3166, %v3168
    %v3173 = vadd.f32 %v3155, %v3169
    %v3174 = vadd.f32 %v3156, %v3170
    %s3175 = sld [smem:[#allocation2 + $0x87]]
    %v3176 = vstv %s3175
    %v3177 = vmul.f32 %v63, %v3176
    %v3178 = vmul.f32 %v64, %v3176
    %v3181 = vrot.slane %v3177, 5
    %v3182 = vrot.slane %v3181, 4
    %v3183 = vrot.slane %v3178, 5
    %v3184 = vrot.slane %v3183, 4
    %3185 = vrot.lane.b32.xlu0 %v3182, 94
    %v3186 = vpop.permute.xlu0 %3185
    %3187 = vrot.lane.b32.xlu0 %v3184, 94
    %v3188 = vpop.permute.xlu0 %3187
    %v3189 = vrot.slane %v3186, 4
    %v3190 = vrot.slane %v3188, 4
    %v3191 = vsel %vm720, %v3186, %v3189
    %v3192 = vsel %vm720, %v3188, %v3190
    %v3195 = vadd.f32 %v3173, %v3191
    %v3196 = vadd.f32 %v3174, %v3192
    %s3197 = sld [smem:[#allocation2 + $0x8b]]
    %v3198 = vstv %s3197
    %v3199 = vmul.f32 %v63, %v3198
    %v3200 = vmul.f32 %v64, %v3198
    %v3203 = vrot.slane %v3199, 6
    %v3204 = vrot.slane %v3203, 4
    %v3205 = vrot.slane %v3200, 6
    %v3206 = vrot.slane %v3205, 4
    %3207 = vrot.lane.b32.xlu0 %v3204, 94
    %v3208 = vpop.permute.xlu0 %3207
    %3209 = vrot.lane.b32.xlu0 %v3206, 94
    %v3210 = vpop.permute.xlu0 %3209
    %v3211 = vrot.slane %v3208, 4
    %v3212 = vrot.slane %v3210, 4
    %v3213 = vsel %vm720, %v3208, %v3211
    %v3214 = vsel %vm720, %v3210, %v3212
    %v3217 = vadd.f32 %v3195, %v3213
    %v3218 = vadd.f32 %v3196, %v3214
    %s3219 = sld [smem:[#allocation2 + $0x8f]]
    %v3220 = vstv %s3219
    %v3221 = vmul.f32 %v63, %v3220
    %v3222 = vmul.f32 %v64, %v3220
    %v3225 = vrot.slane %v3221, 7
    %v3226 = vrot.slane %v3225, 4
    %v3227 = vrot.slane %v3222, 7
    %v3228 = vrot.slane %v3227, 4
    %3229 = vrot.lane.b32.xlu0 %v3226, 94
    %v3230 = vpop.permute.xlu0 %3229
    %3231 = vrot.lane.b32.xlu0 %v3228, 94
    %v3232 = vpop.permute.xlu0 %3231
    %v3233 = vrot.slane %v3230, 4
    %v3234 = vrot.slane %v3232, 4
    %v3235 = vsel %vm720, %v3230, %v3233
    %v3236 = vsel %vm720, %v3232, %v3234
    %v3239 = vadd.f32 %v3217, %v3235
    %v3240 = vadd.f32 %v3218, %v3236
    %s3241 = sld [smem:[#allocation2 + $0x123]]
    %s3242 = sld [smem:[#allocation2 + $0x127]]
    %v3243 = vmul.f32 %v3239, %v797
    %v3244 = vmul.f32 %v3240, %v798
    %v3247 = vlaneseq
    %v3248 = vshrl.u32 %v3247, 7
    %v3249 = vsub.s32 0, %v3248
    %v3250 = vrot.slane %v3243, %v3249
    %v3251 = vlaneseq
    %v3252 = vshrl.u32 %v3251, 7
    %v3253 = vsub.s32 4, %v3252
    %v3254 = vrot.slane %v3243, %v3253
    %v3255 = vlaneseq
    %v3256 = vshrl.u32 %v3255, 7
    %v3257 = vsub.s32 0, %v3256
    %v3258 = vrot.slane %v3244, %v3257
    %v3259 = vlaneseq
    %v3260 = vshrl.u32 %v3259, 7
    %v3261 = vsub.s32 4, %v3260
    %v3262 = vrot.slane %v3244, %v3261
    %v3263 = vsel %vm821, %v3258, %v3250
    %v3264 = vsel %vm821, %v3262, %v3254
    %v3267 = vsel %vm826, %v3263, 0.0
    %v3268 = vsel %vm828, %v3264, 0.0
    %v3269 = vadd.f32 %v3267, %v3268
    %3270 = vadd.xlane.f32.xlu0 %v3269
    %v3271 = vpop.xlane.xlu0 %3270
    %v3272 = vsel %vm826, %v3271, 0.0
    %v3273 = vrot.slane %v3272, 4
    %v3274 = vadd.f32 %v3272, %v3273
    %v3275 = vrot.slane %v3274, 2
    %v3276 = vadd.f32 %v3274, %v3275
    %v3277 = vrot.slane %v3276, 1
    %v3278 = vadd.f32 %v3276, %v3277
    %v3279 = vmul.f32 %v3278, 0.0025510204
    %v3280 = vsub.f32 %v3239, %v3279
    %v3281 = vsub.f32 %v3240, %v3279
    %v3282 = vmul.f32 %v3280, %v797
    %v3283 = vmul.f32 %v3281, %v798
    %v3284 = vmul.f32 %v3282, %v3282
    %v3285 = vmul.f32 %v3283, %v3283
    %v3288 = vlaneseq
    %v3289 = vshrl.u32 %v3288, 7
    %v3290 = vsub.s32 0, %v3289
    %v3291 = vrot.slane %v3284, %v3290
    %v3292 = vlaneseq
    %v3293 = vshrl.u32 %v3292, 7
    %v3294 = vsub.s32 4, %v3293
    %v3295 = vrot.slane %v3284, %v3294
    %v3296 = vlaneseq
    %v3297 = vshrl.u32 %v3296, 7
    %v3298 = vsub.s32 0, %v3297
    %v3299 = vrot.slane %v3285, %v3298
    %v3300 = vlaneseq
    %v3301 = vshrl.u32 %v3300, 7
    %v3302 = vsub.s32 4, %v3301
    %v3303 = vrot.slane %v3285, %v3302
    %v3304 = vsel %vm821, %v3299, %v3291
    %v3305 = vsel %vm821, %v3303, %v3295
    %v3308 = vsel %vm826, %v3304, 0.0
    %v3309 = vsel %vm828, %v3305, 0.0
    %v3310 = vadd.f32 %v3308, %v3309
    %3311 = vadd.xlane.f32.xlu0 %v3310
    %v3312 = vpop.xlane.xlu0 %3311
    %v3313 = vsel %vm826, %v3312, 0.0
    %v3314 = vrot.slane %v3313, 4
    %v3315 = vadd.f32 %v3313, %v3314
    %v3316 = vrot.slane %v3315, 2
    %v3317 = vadd.f32 %v3315, %v3316
    %v3318 = vrot.slane %v3317, 1
    %v3319 = vadd.f32 %v3317, %v3318
    %v3320 = vmul.f32 %v3319, 0.0025510204
    %v3321 = vadd.f32 %v3320, 1e-05
    %v3322 = vrsqrt.pop %v3321
    %v3323 = vstv %s3241
    %v3324 = vmul.f32 %v3323, %v3322
    %v3325 = vmul.f32 %v3279, %v3324
    %v3326 = vstv %s3242
    %v3327 = vsub.f32 %v3326, %v3325
    %v3328 = vmul.f32 %v3239, %v3324
    %v3329 = vmul.f32 %v3240, %v3324
    %v3330 = vadd.f32 %v3328, %v3327
    %v3331 = vadd.f32 %v3329, %v3327
    %v3332 = vmax.f32 %v3330, 0.0
    %v3333 = vmax.f32 %v3331, 0.0
    %s3334 = sld [smem:[#allocation2 + $0x90]]
    %v3335 = vstv %s3334
    %v3336 = vmul.f32 %v893, %v3335
    %v3337 = vmul.f32 %v894, %v3335
    %v3338 = vadd.f32 %v3336, 0.0
    %v3339 = vadd.f32 %v3337, 0.0
    %s3340 = sld [smem:[#allocation2 + $0x94]]
    %v3341 = vstv %s3340
    %v3342 = vmul.f32 %v1706, %v3341
    %v3343 = vmul.f32 %v1707, %v3341
    %v3344 = vadd.f32 %v3338, %v3342
    %v3345 = vadd.f32 %v3339, %v3343
    %s3346 = sld [smem:[#allocation2 + $0x98]]
    %v3347 = vstv %s3346
    %v3348 = vmul.f32 %v2519, %v3347
    %v3349 = vmul.f32 %v2520, %v3347
    %v3350 = vadd.f32 %v3344, %v3348
    %v3351 = vadd.f32 %v3345, %v3349
    %s3352 = sld [smem:[#allocation2 + $0x9c]]
    %v3353 = vstv %s3352
    %v3354 = vmul.f32 %v3332, %v3353
    %v3355 = vmul.f32 %v3333, %v3353
    %v3356 = vadd.f32 %v3350, %v3354
    %v3357 = vadd.f32 %v3351, %v3355
    %s3358 = sld [smem:[#allocation2 + $0xa0]]
    %v3359 = vstv %s3358
    %v3360 = vmul.f32 %v893, %v3359
    %v3361 = vmul.f32 %v894, %v3359
    %3364 = vrot.lane.b32.xlu0 %v3360, 127
    %v3365 = vpop.permute.xlu0 %3364
    %3366 = vrot.lane.b32.xlu0 %v3361, 127
    %v3367 = vpop.permute.xlu0 %3366
    %v3368 = vrot.slane %v3365, 4
    %v3369 = vrot.slane %v3367, 4
    %v3370 = vsel %vm125, %v3365, %v3368
    %v3371 = vsel %vm125, %v3367, %v3369
    %v3374 = vadd.f32 %v3356, %v3370
    %v3375 = vadd.f32 %v3357, %v3371
    %s3376 = sld [smem:[#allocation2 + $0xa4]]
    %v3377 = vstv %s3376
    %v3378 = vmul.f32 %v1706, %v3377
    %v3379 = vmul.f32 %v1707, %v3377
    %3382 = vrot.lane.b32.xlu0 %v3378, 127
    %v3383 = vpop.permute.xlu0 %3382
    %3384 = vrot.lane.b32.xlu0 %v3379, 127
    %v3385 = vpop.permute.xlu0 %3384
    %v3386 = vrot.slane %v3383, 4
    %v3387 = vrot.slane %v3385, 4
    %v3388 = vsel %vm125, %v3383, %v3386
    %v3389 = vsel %vm125, %v3385, %v3387
    %v3392 = vadd.f32 %v3374, %v3388
    %v3393 = vadd.f32 %v3375, %v3389
    %s3394 = sld [smem:[#allocation2 + $0xa8]]
    %v3395 = vstv %s3394
    %v3396 = vmul.f32 %v2519, %v3395
    %v3397 = vmul.f32 %v2520, %v3395
    %3400 = vrot.lane.b32.xlu0 %v3396, 127
    %v3401 = vpop.permute.xlu0 %3400
    %3402 = vrot.lane.b32.xlu0 %v3397, 127
    %v3403 = vpop.permute.xlu0 %3402
    %v3404 = vrot.slane %v3401, 4
    %v3405 = vrot.slane %v3403, 4
    %v3406 = vsel %vm125, %v3401, %v3404
    %v3407 = vsel %vm125, %v3403, %v3405
    %v3410 = vadd.f32 %v3392, %v3406
    %v3411 = vadd.f32 %v3393, %v3407
    %s3412 = sld [smem:[#allocation2 + $0xac]]
    %v3413 = vstv %s3412
    %v3414 = vmul.f32 %v3332, %v3413
    %v3415 = vmul.f32 %v3333, %v3413
    %3418 = vrot.lane.b32.xlu0 %v3414, 127
    %v3419 = vpop.permute.xlu0 %3418
    %3420 = vrot.lane.b32.xlu0 %v3415, 127
    %v3421 = vpop.permute.xlu0 %3420
    %v3422 = vrot.slane %v3419, 4
    %v3423 = vrot.slane %v3421, 4
    %v3424 = vsel %vm125, %v3419, %v3422
    %v3425 = vsel %vm125, %v3421, %v3423
    %v3428 = vadd.f32 %v3410, %v3424
    %v3429 = vadd.f32 %v3411, %v3425
    %s3430 = sld [smem:[#allocation2 + $0xb0]]
    %v3431 = vstv %s3430
    %v3432 = vmul.f32 %v893, %v3431
    %v3433 = vmul.f32 %v894, %v3431
    %3436 = vrot.lane.b32.xlu0 %v3432, 126
    %v3437 = vpop.permute.xlu0 %3436
    %3438 = vrot.lane.b32.xlu0 %v3433, 126
    %v3439 = vpop.permute.xlu0 %3438
    %v3440 = vrot.slane %v3437, 4
    %v3441 = vrot.slane %v3439, 4
    %v3442 = vsel %vm210, %v3437, %v3440
    %v3443 = vsel %vm210, %v3439, %v3441
    %v3446 = vadd.f32 %v3428, %v3442
    %v3447 = vadd.f32 %v3429, %v3443
    %s3448 = sld [smem:[#allocation2 + $0xb4]]
    %v3449 = vstv %s3448
    %v3450 = vmul.f32 %v1706, %v3449
    %v3451 = vmul.f32 %v1707, %v3449
    %3454 = vrot.lane.b32.xlu0 %v3450, 126
    %v3455 = vpop.permute.xlu0 %3454
    %3456 = vrot.lane.b32.xlu0 %v3451, 126
    %v3457 = vpop.permute.xlu0 %3456
    %v3458 = vrot.slane %v3455, 4
    %v3459 = vrot.slane %v3457, 4
    %v3460 = vsel %vm210, %v3455, %v3458
    %v3461 = vsel %vm210, %v3457, %v3459
    %v3464 = vadd.f32 %v3446, %v3460
    %v3465 = vadd.f32 %v3447, %v3461
    %s3466 = sld [smem:[#allocation2 + $0xb8]]
    %v3467 = vstv %s3466
    %v3468 = vmul.f32 %v2519, %v3467
    %v3469 = vmul.f32 %v2520, %v3467
    %3472 = vrot.lane.b32.xlu0 %v3468, 126
    %v3473 = vpop.permute.xlu0 %3472
    %3474 = vrot.lane.b32.xlu0 %v3469, 126
    %v3475 = vpop.permute.xlu0 %3474
    %v3476 = vrot.slane %v3473, 4
    %v3477 = vrot.slane %v3475, 4
    %v3478 = vsel %vm210, %v3473, %v3476
    %v3479 = vsel %vm210, %v3475, %v3477
    %v3482 = vadd.f32 %v3464, %v3478
    %v3483 = vadd.f32 %v3465, %v3479
    %s3484 = sld [smem:[#allocation2 + $0xbc]]
    %v3485 = vstv %s3484
    %v3486 = vmul.f32 %v3332, %v3485
    %v3487 = vmul.f32 %v3333, %v3485
    %3490 = vrot.lane.b32.xlu0 %v3486, 126
    %v3491 = vpop.permute.xlu0 %3490
    %3492 = vrot.lane.b32.xlu0 %v3487, 126
    %v3493 = vpop.permute.xlu0 %3492
    %v3494 = vrot.slane %v3491, 4
    %v3495 = vrot.slane %v3493, 4
    %v3496 = vsel %vm210, %v3491, %v3494
    %v3497 = vsel %vm210, %v3493, %v3495
    %v3500 = vadd.f32 %v3482, %v3496
    %v3501 = vadd.f32 %v3483, %v3497
    %s3502 = sld [smem:[#allocation2 + $0xc0]]
    %v3503 = vstv %s3502
    %v3504 = vmul.f32 %v893, %v3503
    %v3505 = vmul.f32 %v894, %v3503
    %3508 = vrot.lane.b32.xlu0 %v3504, 112
    %v3509 = vpop.permute.xlu0 %3508
    %3510 = vrot.lane.b32.xlu0 %v3505, 112
    %v3511 = vpop.permute.xlu0 %3510
    %v3512 = vrot.slane %v3509, 4
    %v3513 = vrot.slane %v3511, 4
    %v3514 = vsel %vm295, %v3509, %v3512
    %v3515 = vsel %vm295, %v3511, %v3513
    %v3518 = vadd.f32 %v3500, %v3514
    %v3519 = vadd.f32 %v3501, %v3515
    %s3520 = sld [smem:[#allocation2 + $0xc4]]
    %v3521 = vstv %s3520
    %v3522 = vmul.f32 %v1706, %v3521
    %v3523 = vmul.f32 %v1707, %v3521
    %3526 = vrot.lane.b32.xlu0 %v3522, 112
    %v3527 = vpop.permute.xlu0 %3526
    %3528 = vrot.lane.b32.xlu0 %v3523, 112
    %v3529 = vpop.permute.xlu0 %3528
    %v3530 = vrot.slane %v3527, 4
    %v3531 = vrot.slane %v3529, 4
    %v3532 = vsel %vm295, %v3527, %v3530
    %v3533 = vsel %vm295, %v3529, %v3531
    %v3536 = vadd.f32 %v3518, %v3532
    %v3537 = vadd.f32 %v3519, %v3533
    %s3538 = sld [smem:[#allocation2 + $0xc8]]
    %v3539 = vstv %s3538
    %v3540 = vmul.f32 %v2519, %v3539
    %v3541 = vmul.f32 %v2520, %v3539
    %3544 = vrot.lane.b32.xlu0 %v3540, 112
    %v3545 = vpop.permute.xlu0 %3544
    %3546 = vrot.lane.b32.xlu0 %v3541, 112
    %v3547 = vpop.permute.xlu0 %3546
    %v3548 = vrot.slane %v3545, 4
    %v3549 = vrot.slane %v3547, 4
    %v3550 = vsel %vm295, %v3545, %v3548
    %v3551 = vsel %vm295, %v3547, %v3549
    %v3554 = vadd.f32 %v3536, %v3550
    %v3555 = vadd.f32 %v3537, %v3551
    %s3556 = sld [smem:[#allocation2 + $0xcc]]
    %v3557 = vstv %s3556
    %v3558 = vmul.f32 %v3332, %v3557
    %v3559 = vmul.f32 %v3333, %v3557
    %3562 = vrot.lane.b32.xlu0 %v3558, 112
    %v3563 = vpop.permute.xlu0 %3562
    %3564 = vrot.lane.b32.xlu0 %v3559, 112
    %v3565 = vpop.permute.xlu0 %3564
    %v3566 = vrot.slane %v3563, 4
    %v3567 = vrot.slane %v3565, 4
    %v3568 = vsel %vm295, %v3563, %v3566
    %v3569 = vsel %vm295, %v3565, %v3567
    %v3572 = vadd.f32 %v3554, %v3568
    %v3573 = vadd.f32 %v3555, %v3569
    %s3574 = sld [smem:[#allocation2 + $0xd0]]
    %v3575 = vstv %s3574
    %v3576 = vmul.f32 %v893, %v3575
    %v3577 = vmul.f32 %v894, %v3575
    %3580 = vrot.lane.b32.xlu0 %v3576, 111
    %v3581 = vpop.permute.xlu0 %3580
    %3582 = vrot.lane.b32.xlu0 %v3577, 111
    %v3583 = vpop.permute.xlu0 %3582
    %v3584 = vrot.slane %v3581, 4
    %v3585 = vrot.slane %v3583, 4
    %v3586 = vsel %vm380, %v3581, %v3584
    %v3587 = vsel %vm380, %v3583, %v3585
    %v3590 = vadd.f32 %v3572, %v3586
    %v3591 = vadd.f32 %v3573, %v3587
    %s3592 = sld [smem:[#allocation2 + $0xd4]]
    %v3593 = vstv %s3592
    %v3594 = vmul.f32 %v1706, %v3593
    %v3595 = vmul.f32 %v1707, %v3593
    %3598 = vrot.lane.b32.xlu0 %v3594, 111
    %v3599 = vpop.permute.xlu0 %3598
    %3600 = vrot.lane.b32.xlu0 %v3595, 111
    %v3601 = vpop.permute.xlu0 %3600
    %v3602 = vrot.slane %v3599, 4
    %v3603 = vrot.slane %v3601, 4
    %v3604 = vsel %vm380, %v3599, %v3602
    %v3605 = vsel %vm380, %v3601, %v3603
    %v3608 = vadd.f32 %v3590, %v3604
    %v3609 = vadd.f32 %v3591, %v3605
    %s3610 = sld [smem:[#allocation2 + $0xd8]]
    %v3611 = vstv %s3610
    %v3612 = vmul.f32 %v2519, %v3611
    %v3613 = vmul.f32 %v2520, %v3611
    %3616 = vrot.lane.b32.xlu0 %v3612, 111
    %v3617 = vpop.permute.xlu0 %3616
    %3618 = vrot.lane.b32.xlu0 %v3613, 111
    %v3619 = vpop.permute.xlu0 %3618
    %v3620 = vrot.slane %v3617, 4
    %v3621 = vrot.slane %v3619, 4
    %v3622 = vsel %vm380, %v3617, %v3620
    %v3623 = vsel %vm380, %v3619, %v3621
    %v3626 = vadd.f32 %v3608, %v3622
    %v3627 = vadd.f32 %v3609, %v3623
    %s3628 = sld [smem:[#allocation2 + $0xdc]]
    %v3629 = vstv %s3628
    %v3630 = vmul.f32 %v3332, %v3629
    %v3631 = vmul.f32 %v3333, %v3629
    %3634 = vrot.lane.b32.xlu0 %v3630, 111
    %v3635 = vpop.permute.xlu0 %3634
    %3636 = vrot.lane.b32.xlu0 %v3631, 111
    %v3637 = vpop.permute.xlu0 %3636
    %v3638 = vrot.slane %v3635, 4
    %v3639 = vrot.slane %v3637, 4
    %v3640 = vsel %vm380, %v3635, %v3638
    %v3641 = vsel %vm380, %v3637, %v3639
    %v3644 = vadd.f32 %v3626, %v3640
    %v3645 = vadd.f32 %v3627, %v3641
    %s3646 = sld [smem:[#allocation2 + $0xe0]]
    %v3647 = vstv %s3646
    %v3648 = vmul.f32 %v893, %v3647
    %v3649 = vmul.f32 %v894, %v3647
    %3652 = vrot.lane.b32.xlu0 %v3648, 110
    %v3653 = vpop.permute.xlu0 %3652
    %3654 = vrot.lane.b32.xlu0 %v3649, 110
    %v3655 = vpop.permute.xlu0 %3654
    %v3656 = vrot.slane %v3653, 4
    %v3657 = vrot.slane %v3655, 4
    %v3658 = vsel %vm465, %v3653, %v3656
    %v3659 = vsel %vm465, %v3655, %v3657
    %v3662 = vadd.f32 %v3644, %v3658
    %v3663 = vadd.f32 %v3645, %v3659
    %s3664 = sld [smem:[#allocation2 + $0xe4]]
    %v3665 = vstv %s3664
    %v3666 = vmul.f32 %v1706, %v3665
    %v3667 = vmul.f32 %v1707, %v3665
    %3670 = vrot.lane.b32.xlu0 %v3666, 110
    %v3671 = vpop.permute.xlu0 %3670
    %3672 = vrot.lane.b32.xlu0 %v3667, 110
    %v3673 = vpop.permute.xlu0 %3672
    %v3674 = vrot.slane %v3671, 4
    %v3675 = vrot.slane %v3673, 4
    %v3676 = vsel %vm465, %v3671, %v3674
    %v3677 = vsel %vm465, %v3673, %v3675
    %v3680 = vadd.f32 %v3662, %v3676
    %v3681 = vadd.f32 %v3663, %v3677
    %s3682 = sld [smem:[#allocation2 + $0xe8]]
    %v3683 = vstv %s3682
    %v3684 = vmul.f32 %v2519, %v3683
    %v3685 = vmul.f32 %v2520, %v3683
    %3688 = vrot.lane.b32.xlu0 %v3684, 110
    %v3689 = vpop.permute.xlu0 %3688
    %3690 = vrot.lane.b32.xlu0 %v3685, 110
    %v3691 = vpop.permute.xlu0 %3690
    %v3692 = vrot.slane %v3689, 4
    %v3693 = vrot.slane %v3691, 4
    %v3694 = vsel %vm465, %v3689, %v3692
    %v3695 = vsel %vm465, %v3691, %v3693
    %v3698 = vadd.f32 %v3680, %v3694
    %v3699 = vadd.f32 %v3681, %v3695
    %s3700 = sld [smem:[#allocation2 + $0xec]]
    %v3701 = vstv %s3700
    %v3702 = vmul.f32 %v3332, %v3701
    %v3703 = vmul.f32 %v3333, %v3701
    %3706 = vrot.lane.b32.xlu0 %v3702, 110
    %v3707 = vpop.permute.xlu0 %3706
    %3708 = vrot.lane.b32.xlu0 %v3703, 110
    %v3709 = vpop.permute.xlu0 %3708
    %v3710 = vrot.slane %v3707, 4
    %v3711 = vrot.slane %v3709, 4
    %v3712 = vsel %vm465, %v3707, %v3710
    %v3713 = vsel %vm465, %v3709, %v3711
    %v3716 = vadd.f32 %v3698, %v3712
    %v3717 = vadd.f32 %v3699, %v3713
    %s3718 = sld [smem:[#allocation2 + $0xf0]]
    %v3719 = vstv %s3718
    %v3720 = vmul.f32 %v893, %v3719
    %v3721 = vmul.f32 %v894, %v3719
    %3724 = vrot.lane.b32.xlu0 %v3720, 96
    %v3725 = vpop.permute.xlu0 %3724
    %3726 = vrot.lane.b32.xlu0 %v3721, 96
    %v3727 = vpop.permute.xlu0 %3726
    %v3728 = vrot.slane %v3725, 4
    %v3729 = vrot.slane %v3727, 4
    %v3730 = vsel %vm550, %v3725, %v3728
    %v3731 = vsel %vm550, %v3727, %v3729
    %v3734 = vadd.f32 %v3716, %v3730
    %v3735 = vadd.f32 %v3717, %v3731
    %s3736 = sld [smem:[#allocation2 + $0xf4]]
    %v3737 = vstv %s3736
    %v3738 = vmul.f32 %v1706, %v3737
    %v3739 = vmul.f32 %v1707, %v3737
    %3742 = vrot.lane.b32.xlu0 %v3738, 96
    %v3743 = vpop.permute.xlu0 %3742
    %3744 = vrot.lane.b32.xlu0 %v3739, 96
    %v3745 = vpop.permute.xlu0 %3744
    %v3746 = vrot.slane %v3743, 4
    %v3747 = vrot.slane %v3745, 4
    %v3748 = vsel %vm550, %v3743, %v3746
    %v3749 = vsel %vm550, %v3745, %v3747
    %v3752 = vadd.f32 %v3734, %v3748
    %v3753 = vadd.f32 %v3735, %v3749
    %s3754 = sld [smem:[#allocation2 + $0xf8]]
    %v3755 = vstv %s3754
    %v3756 = vmul.f32 %v2519, %v3755
    %v3757 = vmul.f32 %v2520, %v3755
    %3760 = vrot.lane.b32.xlu0 %v3756, 96
    %v3761 = vpop.permute.xlu0 %3760
    %3762 = vrot.lane.b32.xlu0 %v3757, 96
    %v3763 = vpop.permute.xlu0 %3762
    %v3764 = vrot.slane %v3761, 4
    %v3765 = vrot.slane %v3763, 4
    %v3766 = vsel %vm550, %v3761, %v3764
    %v3767 = vsel %vm550, %v3763, %v3765
    %v3770 = vadd.f32 %v3752, %v3766
    %v3771 = vadd.f32 %v3753, %v3767
    %s3772 = sld [smem:[#allocation2 + $0xfc]]
    %v3773 = vstv %s3772
    %v3774 = vmul.f32 %v3332, %v3773
    %v3775 = vmul.f32 %v3333, %v3773
    %3778 = vrot.lane.b32.xlu0 %v3774, 96
    %v3779 = vpop.permute.xlu0 %3778
    %3780 = vrot.lane.b32.xlu0 %v3775, 96
    %v3781 = vpop.permute.xlu0 %3780
    %v3782 = vrot.slane %v3779, 4
    %v3783 = vrot.slane %v3781, 4
    %v3784 = vsel %vm550, %v3779, %v3782
    %v3785 = vsel %vm550, %v3781, %v3783
    %v3788 = vadd.f32 %v3770, %v3784
    %v3789 = vadd.f32 %v3771, %v3785
    %s3790 = sld [smem:[#allocation2 + $0x100]]
    %v3791 = vstv %s3790
    %v3792 = vmul.f32 %v893, %v3791
    %v3793 = vmul.f32 %v894, %v3791
    %3796 = vrot.lane.b32.xlu0 %v3792, 95
    %v3797 = vpop.permute.xlu0 %3796
    %3798 = vrot.lane.b32.xlu0 %v3793, 95
    %v3799 = vpop.permute.xlu0 %3798
    %v3800 = vrot.slane %v3797, 4
    %v3801 = vrot.slane %v3799, 4
    %v3802 = vsel %vm635, %v3797, %v3800
    %v3803 = vsel %vm635, %v3799, %v3801
    %v3806 = vadd.f32 %v3788, %v3802
    %v3807 = vadd.f32 %v3789, %v3803
    %s3808 = sld [smem:[#allocation2 + $0x104]]
    %v3809 = vstv %s3808
    %v3810 = vmul.f32 %v1706, %v3809
    %v3811 = vmul.f32 %v1707, %v3809
    %3814 = vrot.lane.b32.xlu0 %v3810, 95
    %v3815 = vpop.permute.xlu0 %3814
    %3816 = vrot.lane.b32.xlu0 %v3811, 95
    %v3817 = vpop.permute.xlu0 %3816
    %v3818 = vrot.slane %v3815, 4
    %v3819 = vrot.slane %v3817, 4
    %v3820 = vsel %vm635, %v3815, %v3818
    %v3821 = vsel %vm635, %v3817, %v3819
    %v3824 = vadd.f32 %v3806, %v3820
    %v3825 = vadd.f32 %v3807, %v3821
    %s3826 = sld [smem:[#allocation2 + $0x108]]
    %v3827 = vstv %s3826
    %v3828 = vmul.f32 %v2519, %v3827
    %v3829 = vmul.f32 %v2520, %v3827
    %3832 = vrot.lane.b32.xlu0 %v3828, 95
    %v3833 = vpop.permute.xlu0 %3832
    %3834 = vrot.lane.b32.xlu0 %v3829, 95
    %v3835 = vpop.permute.xlu0 %3834
    %v3836 = vrot.slane %v3833, 4
    %v3837 = vrot.slane %v3835, 4
    %v3838 = vsel %vm635, %v3833, %v3836
    %v3839 = vsel %vm635, %v3835, %v3837
    %v3842 = vadd.f32 %v3824, %v3838
    %v3843 = vadd.f32 %v3825, %v3839
    %s3844 = sld [smem:[#allocation2 + $0x10c]]
    %v3845 = vstv %s3844
    %v3846 = vmul.f32 %v3332, %v3845
    %v3847 = vmul.f32 %v3333, %v3845
    %3850 = vrot.lane.b32.xlu0 %v3846, 95
    %v3851 = vpop.permute.xlu0 %3850
    %3852 = vrot.lane.b32.xlu0 %v3847, 95
    %v3853 = vpop.permute.xlu0 %3852
    %v3854 = vrot.slane %v3851, 4
    %v3855 = vrot.slane %v3853, 4
    %v3856 = vsel %vm635, %v3851, %v3854
    %v3857 = vsel %vm635, %v3853, %v3855
    %v3860 = vadd.f32 %v3842, %v3856
    %v3861 = vadd.f32 %v3843, %v3857
    %s3862 = sld [smem:[#allocation2 + $0x110]]
    %v3863 = vstv %s3862
    %v3864 = vmul.f32 %v893, %v3863
    %v3865 = vmul.f32 %v894, %v3863
    %3868 = vrot.lane.b32.xlu0 %v3864, 94
    %v3869 = vpop.permute.xlu0 %3868
    %3870 = vrot.lane.b32.xlu0 %v3865, 94
    %v3871 = vpop.permute.xlu0 %3870
    %v3872 = vrot.slane %v3869, 4
    %v3873 = vrot.slane %v3871, 4
    %v3874 = vsel %vm720, %v3869, %v3872
    %v3875 = vsel %vm720, %v3871, %v3873
    %v3878 = vadd.f32 %v3860, %v3874
    %v3879 = vadd.f32 %v3861, %v3875
    %s3880 = sld [smem:[#allocation2 + $0x114]]
    %v3881 = vstv %s3880
    %v3882 = vmul.f32 %v1706, %v3881
    %v3883 = vmul.f32 %v1707, %v3881
    %3886 = vrot.lane.b32.xlu0 %v3882, 94
    %v3887 = vpop.permute.xlu0 %3886
    %3888 = vrot.lane.b32.xlu0 %v3883, 94
    %v3889 = vpop.permute.xlu0 %3888
    %v3890 = vrot.slane %v3887, 4
    %v3891 = vrot.slane %v3889, 4
    %v3892 = vsel %vm720, %v3887, %v3890
    %v3893 = vsel %vm720, %v3889, %v3891
    %v3896 = vadd.f32 %v3878, %v3892
    %v3897 = vadd.f32 %v3879, %v3893
    %s3898 = sld [smem:[#allocation2 + $0x118]]
    %v3899 = vstv %s3898
    %v3900 = vmul.f32 %v2519, %v3899
    %v3901 = vmul.f32 %v2520, %v3899
    %3904 = vrot.lane.b32.xlu0 %v3900, 94
    %v3905 = vpop.permute.xlu0 %3904
    %3906 = vrot.lane.b32.xlu0 %v3901, 94
    %v3907 = vpop.permute.xlu0 %3906
    %v3908 = vrot.slane %v3905, 4
    %v3909 = vrot.slane %v3907, 4
    %v3910 = vsel %vm720, %v3905, %v3908
    %v3911 = vsel %vm720, %v3907, %v3909
    %v3914 = vadd.f32 %v3896, %v3910
    %v3915 = vadd.f32 %v3897, %v3911
    %s3916 = sld [smem:[#allocation2 + $0x11c]]
    %v3917 = vstv %s3916
    %v3918 = vmul.f32 %v3332, %v3917
    %v3919 = vmul.f32 %v3333, %v3917
    %3922 = vrot.lane.b32.xlu0 %v3918, 94
    %v3923 = vpop.permute.xlu0 %3922
    %3924 = vrot.lane.b32.xlu0 %v3919, 94
    %v3925 = vpop.permute.xlu0 %3924
    %v3926 = vrot.slane %v3923, 4
    %v3927 = vrot.slane %v3925, 4
    %v3928 = vsel %vm720, %v3923, %v3926
    %v3929 = vsel %vm720, %v3925, %v3927
    %v3932 = vadd.f32 %v3914, %v3928
    %v3933 = vadd.f32 %v3915, %v3929
    %s3934 = sld [smem:[#allocation2 + $0x128]]
    %s3935 = sld [smem:[#allocation2 + $0x12c]]
    %v3938 = vcombine.low %v61, %v62
    %v3939 = vrot.slane %v3938, 1
    %v3942 = vmul.f32 %v3932, %v3938
    %v3943 = vmul.f32 %v3933, %v3939
    %v3946 = vlaneseq
    %v3947 = vshrl.u32 %v3946, 7
    %v3948 = vsub.s32 0, %v3947
    %v3949 = vrot.slane %v3942, %v3948
    %v3950 = vlaneseq
    %v3951 = vshrl.u32 %v3950, 7
    %v3952 = vsub.s32 4, %v3951
    %v3953 = vrot.slane %v3942, %v3952
    %v3954 = vlaneseq
    %v3955 = vshrl.u32 %v3954, 7
    %v3956 = vsub.s32 0, %v3955
    %v3957 = vrot.slane %v3943, %v3956
    %v3958 = vlaneseq
    %v3959 = vshrl.u32 %v3958, 7
    %v3960 = vsub.s32 4, %v3959
    %v3961 = vrot.slane %v3943, %v3960
    %v3962 = vsel %vm821, %v3957, %v3949
    %v3963 = vsel %vm821, %v3961, %v3953
    %v3966 = vsel %vm826, %v3962, 0.0
    %vm3967 = vcmask 484352
    %v3968 = vsel %vm3967, %v3963, 0.0
    %v3969 = vadd.f32 %v3966, %v3968
    %3970 = vadd.xlane.f32.xlu0 %v3969
    %v3971 = vpop.xlane.xlu0 %3970
    %v3972 = vsel %vm826, %v3971, 0.0
    %v3973 = vrot.slane %v3972, 4
    %v3974 = vadd.f32 %v3972, %v3973
    %v3975 = vrot.slane %v3974, 2
    %v3976 = vadd.f32 %v3974, %v3975
    %v3977 = vrot.slane %v3976, 1
    %v3978 = vadd.f32 %v3976, %v3977
    %v3979 = vmul.f32 %v3978, 0.0034722222
    %v3980 = vsub.f32 %v3932, %v3979
    %v3981 = vsub.f32 %v3933, %v3979
    %v3982 = vmul.f32 %v3980, %v3938
    %v3983 = vmul.f32 %v3981, %v3939
    %v3984 = vmul.f32 %v3982, %v3982
    %v3985 = vmul.f32 %v3983, %v3983
    %v3988 = vlaneseq
    %v3989 = vshrl.u32 %v3988, 7
    %v3990 = vsub.s32 0, %v3989
    %v3991 = vrot.slane %v3984, %v3990
    %v3992 = vlaneseq
    %v3993 = vshrl.u32 %v3992, 7
    %v3994 = vsub.s32 4, %v3993
    %v3995 = vrot.slane %v3984, %v3994
    %v3996 = vlaneseq
    %v3997 = vshrl.u32 %v3996, 7
    %v3998 = vsub.s32 0, %v3997
    %v3999 = vrot.slane %v3985, %v3998
    %v4000 = vlaneseq
    %v4001 = vshrl.u32 %v4000, 7
    %v4002 = vsub.s32 4, %v4001
    %v4003 = vrot.slane %v3985, %v4002
    %v4004 = vsel %vm821, %v3999, %v3991
    %v4005 = vsel %vm821, %v4003, %v3995
    %v4008 = vsel %vm826, %v4004, 0.0
    %v4009 = vsel %vm3967, %v4005, 0.0
    %v4010 = vadd.f32 %v4008, %v4009
    %4011 = vadd.xlane.f32.xlu0 %v4010
    %v4012 = vpop.xlane.xlu0 %4011
    %v4013 = vsel %vm826, %v4012, 0.0
    %v4014 = vrot.slane %v4013, 4
    %v4015 = vadd.f32 %v4013, %v4014
    %v4016 = vrot.slane %v4015, 2
    %v4017 = vadd.f32 %v4015, %v4016
    %v4018 = vrot.slane %v4017, 1
    %v4019 = vadd.f32 %v4017, %v4018
    %v4020 = vmul.f32 %v4019, 0.0034722222
    %v4021 = vadd.f32 %v4020, 1e-05
    %v4022 = vrsqrt.pop %v4021
    %v4023 = vstv %s3934
    %v4024 = vmul.f32 %v4023, %v4022
    %v4025 = vmul.f32 %v3979, %v4024
    %v4026 = vstv %s3935
    %v4027 = vsub.f32 %v4026, %v4025
    %v4028 = vmul.f32 %v3932, %v4024
    %v4029 = vmul.f32 %v3933, %v4024
    %v4030 = vadd.f32 %v4028, %v4027
    %v4031 = vadd.f32 %v4029, %v4027
    %4034 = vrot.lane.b32.xlu0 %v63, 94
    %v4035 = vpop.permute.xlu0 %4034
    %4036 = vrot.lane.b32.xlu0 %v64, 94
    %v4037 = vpop.permute.xlu0 %4036
    %v4038 = vrot.slane %v4035, 4
    %v4039 = vrot.slane %v4037, 4
    %v4040 = vsel %vm720, %v4035, %v4038
    %v4041 = vsel %vm720, %v4037, %v4039
    %v4044 = vadd.f32 %v4030, %v4040
    %v4045 = vadd.f32 %v4031, %v4041
    %v4049 = vunpack.c.l.s4 1983009808
    %v4050 = vunpack.c.0.s8 %v4049
    %v4051 = vlaneseq
    %v4052 = vshrl.u32 %v4051, 7
    %v4053 = vsub.s32 %v4050, %v4052
    %v4054 = vrot.slane %v4044, %v4053
    %v4056 = vunpack.c.l.s4 1983009808
    %v4057 = vunpack.c.0.s8 %v4056
    %v4058 = vlaneseq
    %v4059 = vshrl.u32 %v4058, 7
    %v4060 = vsub.s32 %v4057, %v4059
    %v4061 = vrot.slane %v4045, %v4060
    %vm4062 = vcmask 1044484
    %v4063 = vsel %vm4062, %v4054, %v4054
    %vm4064 = vcmask 1046534
    %v4065 = vsel %vm4064, %v4054, %v4063
    %v4066 = vrot.slane %v4061, 7
    %v4067 = vsel %vm821, %v4066, %v4065
    %vm4068 = vcmask 1043459
    %v4069 = vsel %vm4068, %v4066, %v4067
    %vm4070 = vcmask 1045509
    %v4071 = vsel %vm4070, %v4066, %v4069
    %vm4072 = vcmask 1047559
    %v4073 = vsel %vm4072, %v4066, %v4071
    %vm4075 = vcmask 486402
    %vm4076 = vmor %vm4075, %vm826
    %4077 = vst.msk [vmem:[%s2] sm:$0xf] %vm4076, %v4073
    %s4078 = sld [smem:[#allocation2 + $0x91]]
    %v4079 = vstv %s4078
    %v4080 = vmul.f32 %v893, %v4079
    %v4081 = vmul.f32 %v894, %v4079
    %v4082 = vadd.f32 %v4080, 0.0
    %v4083 = vadd.f32 %v4081, 0.0
    %s4084 = sld [smem:[#allocation2 + $0x95]]
    %v4085 = vstv %s4084
    %v4086 = vmul.f32 %v1706, %v4085
    %v4087 = vmul.f32 %v1707, %v4085
    %v4088 = vadd.f32 %v4082, %v4086
    %v4089 = vadd.f32 %v4083, %v4087
    %s4090 = sld [smem:[#allocation2 + $0x99]]
    %v4091 = vstv %s4090
    %v4092 = vmul.f32 %v2519, %v4091
    %v4093 = vmul.f32 %v2520, %v4091
    %v4094 = vadd.f32 %v4088, %v4092
    %v4095 = vadd.f32 %v4089, %v4093
    %s4096 = sld [smem:[#allocation2 + $0x9d]]
    %v4097 = vstv %s4096
    %v4098 = vmul.f32 %v3332, %v4097
    %v4099 = vmul.f32 %v3333, %v4097
    %v4100 = vadd.f32 %v4094, %v4098
    %v4101 = vadd.f32 %v4095, %v4099
    %s4102 = sld [smem:[#allocation2 + $0xa1]]
    %v4103 = vstv %s4102
    %v4104 = vmul.f32 %v893, %v4103
    %v4105 = vmul.f32 %v894, %v4103
    %4108 = vrot.lane.b32.xlu0 %v4104, 127
    %v4109 = vpop.permute.xlu0 %4108
    %4110 = vrot.lane.b32.xlu0 %v4105, 127
    %v4111 = vpop.permute.xlu0 %4110
    %v4112 = vrot.slane %v4109, 4
    %v4113 = vrot.slane %v4111, 4
    %v4114 = vsel %vm125, %v4109, %v4112
    %v4115 = vsel %vm125, %v4111, %v4113
    %v4118 = vadd.f32 %v4100, %v4114
    %v4119 = vadd.f32 %v4101, %v4115
    %s4120 = sld [smem:[#allocation2 + $0xa5]]
    %v4121 = vstv %s4120
    %v4122 = vmul.f32 %v1706, %v4121
    %v4123 = vmul.f32 %v1707, %v4121
    %4126 = vrot.lane.b32.xlu0 %v4122, 127
    %v4127 = vpop.permute.xlu0 %4126
    %4128 = vrot.lane.b32.xlu0 %v4123, 127
    %v4129 = vpop.permute.xlu0 %4128
    %v4130 = vrot.slane %v4127, 4
    %v4131 = vrot.slane %v4129, 4
    %v4132 = vsel %vm125, %v4127, %v4130
    %v4133 = vsel %vm125, %v4129, %v4131
    %v4136 = vadd.f32 %v4118, %v4132
    %v4137 = vadd.f32 %v4119, %v4133
    %s4138 = sld [smem:[#allocation2 + $0xa9]]
    %v4139 = vstv %s4138
    %v4140 = vmul.f32 %v2519, %v4139
    %v4141 = vmul.f32 %v2520, %v4139
    %4144 = vrot.lane.b32.xlu0 %v4140, 127
    %v4145 = vpop.permute.xlu0 %4144
    %4146 = vrot.lane.b32.xlu0 %v4141, 127
    %v4147 = vpop.permute.xlu0 %4146
    %v4148 = vrot.slane %v4145, 4
    %v4149 = vrot.slane %v4147, 4
    %v4150 = vsel %vm125, %v4145, %v4148
    %v4151 = vsel %vm125, %v4147, %v4149
    %v4154 = vadd.f32 %v4136, %v4150
    %v4155 = vadd.f32 %v4137, %v4151
    %s4156 = sld [smem:[#allocation2 + $0xad]]
    %v4157 = vstv %s4156
    %v4158 = vmul.f32 %v3332, %v4157
    %v4159 = vmul.f32 %v3333, %v4157
    %4162 = vrot.lane.b32.xlu0 %v4158, 127
    %v4163 = vpop.permute.xlu0 %4162
    %4164 = vrot.lane.b32.xlu0 %v4159, 127
    %v4165 = vpop.permute.xlu0 %4164
    %v4166 = vrot.slane %v4163, 4
    %v4167 = vrot.slane %v4165, 4
    %v4168 = vsel %vm125, %v4163, %v4166
    %v4169 = vsel %vm125, %v4165, %v4167
    %v4172 = vadd.f32 %v4154, %v4168
    %v4173 = vadd.f32 %v4155, %v4169
    %s4174 = sld [smem:[#allocation2 + $0xb1]]
    %v4175 = vstv %s4174
    %v4176 = vmul.f32 %v893, %v4175
    %v4177 = vmul.f32 %v894, %v4175
    %4180 = vrot.lane.b32.xlu0 %v4176, 126
    %v4181 = vpop.permute.xlu0 %4180
    %4182 = vrot.lane.b32.xlu0 %v4177, 126
    %v4183 = vpop.permute.xlu0 %4182
    %v4184 = vrot.slane %v4181, 4
    %v4185 = vrot.slane %v4183, 4
    %v4186 = vsel %vm210, %v4181, %v4184
    %v4187 = vsel %vm210, %v4183, %v4185
    %v4190 = vadd.f32 %v4172, %v4186
    %v4191 = vadd.f32 %v4173, %v4187
    %s4192 = sld [smem:[#allocation2 + $0xb5]]
    %v4193 = vstv %s4192
    %v4194 = vmul.f32 %v1706, %v4193
    %v4195 = vmul.f32 %v1707, %v4193
    %4198 = vrot.lane.b32.xlu0 %v4194, 126
    %v4199 = vpop.permute.xlu0 %4198
    %4200 = vrot.lane.b32.xlu0 %v4195, 126
    %v4201 = vpop.permute.xlu0 %4200
    %v4202 = vrot.slane %v4199, 4
    %v4203 = vrot.slane %v4201, 4
    %v4204 = vsel %vm210, %v4199, %v4202
    %v4205 = vsel %vm210, %v4201, %v4203
    %v4208 = vadd.f32 %v4190, %v4204
    %v4209 = vadd.f32 %v4191, %v4205
    %s4210 = sld [smem:[#allocation2 + $0xb9]]
    %v4211 = vstv %s4210
    %v4212 = vmul.f32 %v2519, %v4211
    %v4213 = vmul.f32 %v2520, %v4211
    %4216 = vrot.lane.b32.xlu0 %v4212, 126
    %v4217 = vpop.permute.xlu0 %4216
    %4218 = vrot.lane.b32.xlu0 %v4213, 126
    %v4219 = vpop.permute.xlu0 %4218
    %v4220 = vrot.slane %v4217, 4
    %v4221 = vrot.slane %v4219, 4
    %v4222 = vsel %vm210, %v4217, %v4220
    %v4223 = vsel %vm210, %v4219, %v4221
    %v4226 = vadd.f32 %v4208, %v4222
    %v4227 = vadd.f32 %v4209, %v4223
    %s4228 = sld [smem:[#allocation2 + $0xbd]]
    %v4229 = vstv %s4228
    %v4230 = vmul.f32 %v3332, %v4229
    %v4231 = vmul.f32 %v3333, %v4229
    %4234 = vrot.lane.b32.xlu0 %v4230, 126
    %v4235 = vpop.permute.xlu0 %4234
    %4236 = vrot.lane.b32.xlu0 %v4231, 126
    %v4237 = vpop.permute.xlu0 %4236
    %v4238 = vrot.slane %v4235, 4
    %v4239 = vrot.slane %v4237, 4
    %v4240 = vsel %vm210, %v4235, %v4238
    %v4241 = vsel %vm210, %v4237, %v4239
    %v4244 = vadd.f32 %v4226, %v4240
    %v4245 = vadd.f32 %v4227, %v4241
    %s4246 = sld [smem:[#allocation2 + $0xc1]]
    %v4247 = vstv %s4246
    %v4248 = vmul.f32 %v893, %v4247
    %v4249 = vmul.f32 %v894, %v4247
    %4252 = vrot.lane.b32.xlu0 %v4248, 112
    %v4253 = vpop.permute.xlu0 %4252
    %4254 = vrot.lane.b32.xlu0 %v4249, 112
    %v4255 = vpop.permute.xlu0 %4254
    %v4256 = vrot.slane %v4253, 4
    %v4257 = vrot.slane %v4255, 4
    %v4258 = vsel %vm295, %v4253, %v4256
    %v4259 = vsel %vm295, %v4255, %v4257
    %v4262 = vadd.f32 %v4244, %v4258
    %v4263 = vadd.f32 %v4245, %v4259
    %s4264 = sld [smem:[#allocation2 + $0xc5]]
    %v4265 = vstv %s4264
    %v4266 = vmul.f32 %v1706, %v4265
    %v4267 = vmul.f32 %v1707, %v4265
    %4270 = vrot.lane.b32.xlu0 %v4266, 112
    %v4271 = vpop.permute.xlu0 %4270
    %4272 = vrot.lane.b32.xlu0 %v4267, 112
    %v4273 = vpop.permute.xlu0 %4272
    %v4274 = vrot.slane %v4271, 4
    %v4275 = vrot.slane %v4273, 4
    %v4276 = vsel %vm295, %v4271, %v4274
    %v4277 = vsel %vm295, %v4273, %v4275
    %v4280 = vadd.f32 %v4262, %v4276
    %v4281 = vadd.f32 %v4263, %v4277
    %s4282 = sld [smem:[#allocation2 + $0xc9]]
    %v4283 = vstv %s4282
    %v4284 = vmul.f32 %v2519, %v4283
    %v4285 = vmul.f32 %v2520, %v4283
    %4288 = vrot.lane.b32.xlu0 %v4284, 112
    %v4289 = vpop.permute.xlu0 %4288
    %4290 = vrot.lane.b32.xlu0 %v4285, 112
    %v4291 = vpop.permute.xlu0 %4290
    %v4292 = vrot.slane %v4289, 4
    %v4293 = vrot.slane %v4291, 4
    %v4294 = vsel %vm295, %v4289, %v4292
    %v4295 = vsel %vm295, %v4291, %v4293
    %v4298 = vadd.f32 %v4280, %v4294
    %v4299 = vadd.f32 %v4281, %v4295
    %s4300 = sld [smem:[#allocation2 + $0xcd]]
    %v4301 = vstv %s4300
    %v4302 = vmul.f32 %v3332, %v4301
    %v4303 = vmul.f32 %v3333, %v4301
    %4306 = vrot.lane.b32.xlu0 %v4302, 112
    %v4307 = vpop.permute.xlu0 %4306
    %4308 = vrot.lane.b32.xlu0 %v4303, 112
    %v4309 = vpop.permute.xlu0 %4308
    %v4310 = vrot.slane %v4307, 4
    %v4311 = vrot.slane %v4309, 4
    %v4312 = vsel %vm295, %v4307, %v4310
    %v4313 = vsel %vm295, %v4309, %v4311
    %v4316 = vadd.f32 %v4298, %v4312
    %v4317 = vadd.f32 %v4299, %v4313
    %s4318 = sld [smem:[#allocation2 + $0xd1]]
    %v4319 = vstv %s4318
    %v4320 = vmul.f32 %v893, %v4319
    %v4321 = vmul.f32 %v894, %v4319
    %4324 = vrot.lane.b32.xlu0 %v4320, 111
    %v4325 = vpop.permute.xlu0 %4324
    %4326 = vrot.lane.b32.xlu0 %v4321, 111
    %v4327 = vpop.permute.xlu0 %4326
    %v4328 = vrot.slane %v4325, 4
    %v4329 = vrot.slane %v4327, 4
    %v4330 = vsel %vm380, %v4325, %v4328
    %v4331 = vsel %vm380, %v4327, %v4329
    %v4334 = vadd.f32 %v4316, %v4330
    %v4335 = vadd.f32 %v4317, %v4331
    %s4336 = sld [smem:[#allocation2 + $0xd5]]
    %v4337 = vstv %s4336
    %v4338 = vmul.f32 %v1706, %v4337
    %v4339 = vmul.f32 %v1707, %v4337
    %4342 = vrot.lane.b32.xlu0 %v4338, 111
    %v4343 = vpop.permute.xlu0 %4342
    %4344 = vrot.lane.b32.xlu0 %v4339, 111
    %v4345 = vpop.permute.xlu0 %4344
    %v4346 = vrot.slane %v4343, 4
    %v4347 = vrot.slane %v4345, 4
    %v4348 = vsel %vm380, %v4343, %v4346
    %v4349 = vsel %vm380, %v4345, %v4347
    %v4352 = vadd.f32 %v4334, %v4348
    %v4353 = vadd.f32 %v4335, %v4349
    %s4354 = sld [smem:[#allocation2 + $0xd9]]
    %v4355 = vstv %s4354
    %v4356 = vmul.f32 %v2519, %v4355
    %v4357 = vmul.f32 %v2520, %v4355
    %4360 = vrot.lane.b32.xlu0 %v4356, 111
    %v4361 = vpop.permute.xlu0 %4360
    %4362 = vrot.lane.b32.xlu0 %v4357, 111
    %v4363 = vpop.permute.xlu0 %4362
    %v4364 = vrot.slane %v4361, 4
    %v4365 = vrot.slane %v4363, 4
    %v4366 = vsel %vm380, %v4361, %v4364
    %v4367 = vsel %vm380, %v4363, %v4365
    %v4370 = vadd.f32 %v4352, %v4366
    %v4371 = vadd.f32 %v4353, %v4367
    %s4372 = sld [smem:[#allocation2 + $0xdd]]
    %v4373 = vstv %s4372
    %v4374 = vmul.f32 %v3332, %v4373
    %v4375 = vmul.f32 %v3333, %v4373
    %4378 = vrot.lane.b32.xlu0 %v4374, 111
    %v4379 = vpop.permute.xlu0 %4378
    %4380 = vrot.lane.b32.xlu0 %v4375, 111
    %v4381 = vpop.permute.xlu0 %4380
    %v4382 = vrot.slane %v4379, 4
    %v4383 = vrot.slane %v4381, 4
    %v4384 = vsel %vm380, %v4379, %v4382
    %v4385 = vsel %vm380, %v4381, %v4383
    %v4388 = vadd.f32 %v4370, %v4384
    %v4389 = vadd.f32 %v4371, %v4385
    %s4390 = sld [smem:[#allocation2 + $0xe1]]
    %v4391 = vstv %s4390
    %v4392 = vmul.f32 %v893, %v4391
    %v4393 = vmul.f32 %v894, %v4391
    %4396 = vrot.lane.b32.xlu0 %v4392, 110
    %v4397 = vpop.permute.xlu0 %4396
    %4398 = vrot.lane.b32.xlu0 %v4393, 110
    %v4399 = vpop.permute.xlu0 %4398
    %v4400 = vrot.slane %v4397, 4
    %v4401 = vrot.slane %v4399, 4
    %v4402 = vsel %vm465, %v4397, %v4400
    %v4403 = vsel %vm465, %v4399, %v4401
    %v4406 = vadd.f32 %v4388, %v4402
    %v4407 = vadd.f32 %v4389, %v4403
    %s4408 = sld [smem:[#allocation2 + $0xe5]]
    %v4409 = vstv %s4408
    %v4410 = vmul.f32 %v1706, %v4409
    %v4411 = vmul.f32 %v1707, %v4409
    %4414 = vrot.lane.b32.xlu0 %v4410, 110
    %v4415 = vpop.permute.xlu0 %4414
    %4416 = vrot.lane.b32.xlu0 %v4411, 110
    %v4417 = vpop.permute.xlu0 %4416
    %v4418 = vrot.slane %v4415, 4
    %v4419 = vrot.slane %v4417, 4
    %v4420 = vsel %vm465, %v4415, %v4418
    %v4421 = vsel %vm465, %v4417, %v4419
    %v4424 = vadd.f32 %v4406, %v4420
    %v4425 = vadd.f32 %v4407, %v4421
    %s4426 = sld [smem:[#allocation2 + $0xe9]]
    %v4427 = vstv %s4426
    %v4428 = vmul.f32 %v2519, %v4427
    %v4429 = vmul.f32 %v2520, %v4427
    %4432 = vrot.lane.b32.xlu0 %v4428, 110
    %v4433 = vpop.permute.xlu0 %4432
    %4434 = vrot.lane.b32.xlu0 %v4429, 110
    %v4435 = vpop.permute.xlu0 %4434
    %v4436 = vrot.slane %v4433, 4
    %v4437 = vrot.slane %v4435, 4
    %v4438 = vsel %vm465, %v4433, %v4436
    %v4439 = vsel %vm465, %v4435, %v4437
    %v4442 = vadd.f32 %v4424, %v4438
    %v4443 = vadd.f32 %v4425, %v4439
    %s4444 = sld [smem:[#allocation2 + $0xed]]
    %v4445 = vstv %s4444
    %v4446 = vmul.f32 %v3332, %v4445
    %v4447 = vmul.f32 %v3333, %v4445
    %4450 = vrot.lane.b32.xlu0 %v4446, 110
    %v4451 = vpop.permute.xlu0 %4450
    %4452 = vrot.lane.b32.xlu0 %v4447, 110
    %v4453 = vpop.permute.xlu0 %4452
    %v4454 = vrot.slane %v4451, 4
    %v4455 = vrot.slane %v4453, 4
    %v4456 = vsel %vm465, %v4451, %v4454
    %v4457 = vsel %vm465, %v4453, %v4455
    %v4460 = vadd.f32 %v4442, %v4456
    %v4461 = vadd.f32 %v4443, %v4457
    %s4462 = sld [smem:[#allocation2 + $0xf1]]
    %v4463 = vstv %s4462
    %v4464 = vmul.f32 %v893, %v4463
    %v4465 = vmul.f32 %v894, %v4463
    %4468 = vrot.lane.b32.xlu0 %v4464, 96
    %v4469 = vpop.permute.xlu0 %4468
    %4470 = vrot.lane.b32.xlu0 %v4465, 96
    %v4471 = vpop.permute.xlu0 %4470
    %v4472 = vrot.slane %v4469, 4
    %v4473 = vrot.slane %v4471, 4
    %v4474 = vsel %vm550, %v4469, %v4472
    %v4475 = vsel %vm550, %v4471, %v4473
    %v4478 = vadd.f32 %v4460, %v4474
    %v4479 = vadd.f32 %v4461, %v4475
    %s4480 = sld [smem:[#allocation2 + $0xf5]]
    %v4481 = vstv %s4480
    %v4482 = vmul.f32 %v1706, %v4481
    %v4483 = vmul.f32 %v1707, %v4481
    %4486 = vrot.lane.b32.xlu0 %v4482, 96
    %v4487 = vpop.permute.xlu0 %4486
    %4488 = vrot.lane.b32.xlu0 %v4483, 96
    %v4489 = vpop.permute.xlu0 %4488
    %v4490 = vrot.slane %v4487, 4
    %v4491 = vrot.slane %v4489, 4
    %v4492 = vsel %vm550, %v4487, %v4490
    %v4493 = vsel %vm550, %v4489, %v4491
    %v4496 = vadd.f32 %v4478, %v4492
    %v4497 = vadd.f32 %v4479, %v4493
    %s4498 = sld [smem:[#allocation2 + $0xf9]]
    %v4499 = vstv %s4498
    %v4500 = vmul.f32 %v2519, %v4499
    %v4501 = vmul.f32 %v2520, %v4499
    %4504 = vrot.lane.b32.xlu0 %v4500, 96
    %v4505 = vpop.permute.xlu0 %4504
    %4506 = vrot.lane.b32.xlu0 %v4501, 96
    %v4507 = vpop.permute.xlu0 %4506
    %v4508 = vrot.slane %v4505, 4
    %v4509 = vrot.slane %v4507, 4
    %v4510 = vsel %vm550, %v4505, %v4508
    %v4511 = vsel %vm550, %v4507, %v4509
    %v4514 = vadd.f32 %v4496, %v4510
    %v4515 = vadd.f32 %v4497, %v4511
    %s4516 = sld [smem:[#allocation2 + $0xfd]]
    %v4517 = vstv %s4516
    %v4518 = vmul.f32 %v3332, %v4517
    %v4519 = vmul.f32 %v3333, %v4517
    %4522 = vrot.lane.b32.xlu0 %v4518, 96
    %v4523 = vpop.permute.xlu0 %4522
    %4524 = vrot.lane.b32.xlu0 %v4519, 96
    %v4525 = vpop.permute.xlu0 %4524
    %v4526 = vrot.slane %v4523, 4
    %v4527 = vrot.slane %v4525, 4
    %v4528 = vsel %vm550, %v4523, %v4526
    %v4529 = vsel %vm550, %v4525, %v4527
    %v4532 = vadd.f32 %v4514, %v4528
    %v4533 = vadd.f32 %v4515, %v4529
    %s4534 = sld [smem:[#allocation2 + $0x101]]
    %v4535 = vstv %s4534
    %v4536 = vmul.f32 %v893, %v4535
    %v4537 = vmul.f32 %v894, %v4535
    %4540 = vrot.lane.b32.xlu0 %v4536, 95
    %v4541 = vpop.permute.xlu0 %4540
    %4542 = vrot.lane.b32.xlu0 %v4537, 95
    %v4543 = vpop.permute.xlu0 %4542
    %v4544 = vrot.slane %v4541, 4
    %v4545 = vrot.slane %v4543, 4
    %v4546 = vsel %vm635, %v4541, %v4544
    %v4547 = vsel %vm635, %v4543, %v4545
    %v4550 = vadd.f32 %v4532, %v4546
    %v4551 = vadd.f32 %v4533, %v4547
    %s4552 = sld [smem:[#allocation2 + $0x105]]
    %v4553 = vstv %s4552
    %v4554 = vmul.f32 %v1706, %v4553
    %v4555 = vmul.f32 %v1707, %v4553
    %4558 = vrot.lane.b32.xlu0 %v4554, 95
    %v4559 = vpop.permute.xlu0 %4558
    %4560 = vrot.lane.b32.xlu0 %v4555, 95
    %v4561 = vpop.permute.xlu0 %4560
    %v4562 = vrot.slane %v4559, 4
    %v4563 = vrot.slane %v4561, 4
    %v4564 = vsel %vm635, %v4559, %v4562
    %v4565 = vsel %vm635, %v4561, %v4563
    %v4568 = vadd.f32 %v4550, %v4564
    %v4569 = vadd.f32 %v4551, %v4565
    %s4570 = sld [smem:[#allocation2 + $0x109]]
    %v4571 = vstv %s4570
    %v4572 = vmul.f32 %v2519, %v4571
    %v4573 = vmul.f32 %v2520, %v4571
    %4576 = vrot.lane.b32.xlu0 %v4572, 95
    %v4577 = vpop.permute.xlu0 %4576
    %4578 = vrot.lane.b32.xlu0 %v4573, 95
    %v4579 = vpop.permute.xlu0 %4578
    %v4580 = vrot.slane %v4577, 4
    %v4581 = vrot.slane %v4579, 4
    %v4582 = vsel %vm635, %v4577, %v4580
    %v4583 = vsel %vm635, %v4579, %v4581
    %v4586 = vadd.f32 %v4568, %v4582
    %v4587 = vadd.f32 %v4569, %v4583
    %s4588 = sld [smem:[#allocation2 + $0x10d]]
    %v4589 = vstv %s4588
    %v4590 = vmul.f32 %v3332, %v4589
    %v4591 = vmul.f32 %v3333, %v4589
    %4594 = vrot.lane.b32.xlu0 %v4590, 95
    %v4595 = vpop.permute.xlu0 %4594
    %4596 = vrot.lane.b32.xlu0 %v4591, 95
    %v4597 = vpop.permute.xlu0 %4596
    %v4598 = vrot.slane %v4595, 4
    %v4599 = vrot.slane %v4597, 4
    %v4600 = vsel %vm635, %v4595, %v4598
    %v4601 = vsel %vm635, %v4597, %v4599
    %v4604 = vadd.f32 %v4586, %v4600
    %v4605 = vadd.f32 %v4587, %v4601
    %s4606 = sld [smem:[#allocation2 + $0x111]]
    %v4607 = vstv %s4606
    %v4608 = vmul.f32 %v893, %v4607
    %v4609 = vmul.f32 %v894, %v4607
    %4612 = vrot.lane.b32.xlu0 %v4608, 94
    %v4613 = vpop.permute.xlu0 %4612
    %4614 = vrot.lane.b32.xlu0 %v4609, 94
    %v4615 = vpop.permute.xlu0 %4614
    %v4616 = vrot.slane %v4613, 4
    %v4617 = vrot.slane %v4615, 4
    %v4618 = vsel %vm720, %v4613, %v4616
    %v4619 = vsel %vm720, %v4615, %v4617
    %v4622 = vadd.f32 %v4604, %v4618
    %v4623 = vadd.f32 %v4605, %v4619
    %s4624 = sld [smem:[#allocation2 + $0x115]]
    %v4625 = vstv %s4624
    %v4626 = vmul.f32 %v1706, %v4625
    %v4627 = vmul.f32 %v1707, %v4625
    %4630 = vrot.lane.b32.xlu0 %v4626, 94
    %v4631 = vpop.permute.xlu0 %4630
    %4632 = vrot.lane.b32.xlu0 %v4627, 94
    %v4633 = vpop.permute.xlu0 %4632
    %v4634 = vrot.slane %v4631, 4
    %v4635 = vrot.slane %v4633, 4
    %v4636 = vsel %vm720, %v4631, %v4634
    %v4637 = vsel %vm720, %v4633, %v4635
    %v4640 = vadd.f32 %v4622, %v4636
    %v4641 = vadd.f32 %v4623, %v4637
    %s4642 = sld [smem:[#allocation2 + $0x119]]
    %v4643 = vstv %s4642
    %v4644 = vmul.f32 %v2519, %v4643
    %v4645 = vmul.f32 %v2520, %v4643
    %4648 = vrot.lane.b32.xlu0 %v4644, 94
    %v4649 = vpop.permute.xlu0 %4648
    %4650 = vrot.lane.b32.xlu0 %v4645, 94
    %v4651 = vpop.permute.xlu0 %4650
    %v4652 = vrot.slane %v4649, 4
    %v4653 = vrot.slane %v4651, 4
    %v4654 = vsel %vm720, %v4649, %v4652
    %v4655 = vsel %vm720, %v4651, %v4653
    %v4658 = vadd.f32 %v4640, %v4654
    %v4659 = vadd.f32 %v4641, %v4655
    %s4660 = sld [smem:[#allocation2 + $0x11d]]
    %v4661 = vstv %s4660
    %v4662 = vmul.f32 %v3332, %v4661
    %v4663 = vmul.f32 %v3333, %v4661
    %4666 = vrot.lane.b32.xlu0 %v4662, 94
    %v4667 = vpop.permute.xlu0 %4666
    %4668 = vrot.lane.b32.xlu0 %v4663, 94
    %v4669 = vpop.permute.xlu0 %4668
    %v4670 = vrot.slane %v4667, 4
    %v4671 = vrot.slane %v4669, 4
    %v4672 = vsel %vm720, %v4667, %v4670
    %v4673 = vsel %vm720, %v4669, %v4671
    %v4676 = vadd.f32 %v4658, %v4672
    %v4677 = vadd.f32 %v4659, %v4673
    %s4678 = sld [smem:[#allocation2 + $0x129]]
    %s4679 = sld [smem:[#allocation2 + $0x12d]]
    %v4680 = vmul.f32 %v4676, %v3938
    %v4681 = vmul.f32 %v4677, %v3939
    %v4684 = vlaneseq
    %v4685 = vshrl.u32 %v4684, 7
    %v4686 = vsub.s32 0, %v4685
    %v4687 = vrot.slane %v4680, %v4686
    %v4688 = vlaneseq
    %v4689 = vshrl.u32 %v4688, 7
    %v4690 = vsub.s32 4, %v4689
    %v4691 = vrot.slane %v4680, %v4690
    %v4692 = vlaneseq
    %v4693 = vshrl.u32 %v4692, 7
    %v4694 = vsub.s32 0, %v4693
    %v4695 = vrot.slane %v4681, %v4694
    %v4696 = vlaneseq
    %v4697 = vshrl.u32 %v4696, 7
    %v4698 = vsub.s32 4, %v4697
    %v4699 = vrot.slane %v4681, %v4698
    %v4700 = vsel %vm821, %v4695, %v4687
    %v4701 = vsel %vm821, %v4699, %v4691
    %v4704 = vsel %vm826, %v4700, 0.0
    %v4705 = vsel %vm3967, %v4701, 0.0
    %v4706 = vadd.f32 %v4704, %v4705
    %4707 = vadd.xlane.f32.xlu0 %v4706
    %v4708 = vpop.xlane.xlu0 %4707
    %v4709 = vsel %vm826, %v4708, 0.0
    %v4710 = vrot.slane %v4709, 4
    %v4711 = vadd.f32 %v4709, %v4710
    %v4712 = vrot.slane %v4711, 2
    %v4713 = vadd.f32 %v4711, %v4712
    %v4714 = vrot.slane %v4713, 1
    %v4715 = vadd.f32 %v4713, %v4714
    %v4716 = vmul.f32 %v4715, 0.0034722222
    %v4717 = vsub.f32 %v4676, %v4716
    %v4718 = vsub.f32 %v4677, %v4716
    %v4719 = vmul.f32 %v4717, %v3938
    %v4720 = vmul.f32 %v4718, %v3939
    %v4721 = vmul.f32 %v4719, %v4719
    %v4722 = vmul.f32 %v4720, %v4720
    %v4725 = vlaneseq
    %v4726 = vshrl.u32 %v4725, 7
    %v4727 = vsub.s32 0, %v4726
    %v4728 = vrot.slane %v4721, %v4727
    %v4729 = vlaneseq
    %v4730 = vshrl.u32 %v4729, 7
    %v4731 = vsub.s32 4, %v4730
    %v4732 = vrot.slane %v4721, %v4731
    %v4733 = vlaneseq
    %v4734 = vshrl.u32 %v4733, 7
    %v4735 = vsub.s32 0, %v4734
    %v4736 = vrot.slane %v4722, %v4735
    %v4737 = vlaneseq
    %v4738 = vshrl.u32 %v4737, 7
    %v4739 = vsub.s32 4, %v4738
    %v4740 = vrot.slane %v4722, %v4739
    %v4741 = vsel %vm821, %v4736, %v4728
    %v4742 = vsel %vm821, %v4740, %v4732
    %v4745 = vsel %vm826, %v4741, 0.0
    %v4746 = vsel %vm3967, %v4742, 0.0
    %v4747 = vadd.f32 %v4745, %v4746
    %4748 = vadd.xlane.f32.xlu0 %v4747
    %v4749 = vpop.xlane.xlu0 %4748
    %v4750 = vsel %vm826, %v4749, 0.0
    %v4751 = vrot.slane %v4750, 4
    %v4752 = vadd.f32 %v4750, %v4751
    %v4753 = vrot.slane %v4752, 2
    %v4754 = vadd.f32 %v4752, %v4753
    %v4755 = vrot.slane %v4754, 1
    %v4756 = vadd.f32 %v4754, %v4755
    %v4757 = vmul.f32 %v4756, 0.0034722222
    %v4758 = vadd.f32 %v4757, 1e-05
    %v4759 = vrsqrt.pop %v4758
    %v4760 = vstv %s4678
    %v4761 = vmul.f32 %v4760, %v4759
    %v4762 = vmul.f32 %v4716, %v4761
    %v4763 = vstv %s4679
    %v4764 = vsub.f32 %v4763, %v4762
    %v4765 = vmul.f32 %v4676, %v4761
    %v4766 = vmul.f32 %v4677, %v4761
    %v4767 = vadd.f32 %v4765, %v4764
    %v4768 = vadd.f32 %v4766, %v4764
    %v4769 = vrot.slane %v63, 5
    %v4770 = vrot.slane %v4769, 4
    %v4771 = vrot.slane %v64, 5
    %v4772 = vrot.slane %v4771, 4
    %4773 = vrot.lane.b32.xlu0 %v4770, 94
    %v4774 = vpop.permute.xlu0 %4773
    %4775 = vrot.lane.b32.xlu0 %v4772, 94
    %v4776 = vpop.permute.xlu0 %4775
    %v4777 = vrot.slane %v4774, 4
    %v4778 = vrot.slane %v4776, 4
    %v4779 = vsel %vm720, %v4774, %v4777
    %v4780 = vsel %vm720, %v4776, %v4778
    %v4783 = vadd.f32 %v4767, %v4779
    %v4784 = vadd.f32 %v4768, %v4780
    %v4788 = vunpack.c.l.s4 1983009808
    %v4789 = vunpack.c.0.s8 %v4788
    %v4790 = vlaneseq
    %v4791 = vshrl.u32 %v4790, 7
    %v4792 = vsub.s32 %v4789, %v4791
    %v4793 = vrot.slane %v4783, %v4792
    %v4795 = vunpack.c.l.s4 1983009808
    %v4796 = vunpack.c.0.s8 %v4795
    %v4797 = vlaneseq
    %v4798 = vshrl.u32 %v4797, 7
    %v4799 = vsub.s32 %v4796, %v4798
    %v4800 = vrot.slane %v4784, %v4799
    %v4801 = vsel %vm4062, %v4793, %v4793
    %v4802 = vsel %vm4064, %v4793, %v4801
    %v4803 = vrot.slane %v4800, 7
    %v4804 = vsel %vm821, %v4803, %v4802
    %v4805 = vsel %vm4068, %v4803, %v4804
    %v4806 = vsel %vm4070, %v4803, %v4805
    %v4807 = vsel %vm4072, %v4803, %v4806
    %s4809 = scalar_lea.vmem %s2, 4
    %4810 = vst.msk [vmem:[%s4809] sm:$0xf] %vm4076, %v4807
    %s4811 = sld [smem:[#allocation2 + $0x92]]
    %v4812 = vstv %s4811
    %v4813 = vmul.f32 %v893, %v4812
    %v4814 = vmul.f32 %v894, %v4812
    %v4815 = vadd.f32 %v4813, 0.0
    %v4816 = vadd.f32 %v4814, 0.0
    %s4817 = sld [smem:[#allocation2 + $0x96]]
    %v4818 = vstv %s4817
    %v4819 = vmul.f32 %v1706, %v4818
    %v4820 = vmul.f32 %v1707, %v4818
    %v4821 = vadd.f32 %v4815, %v4819
    %v4822 = vadd.f32 %v4816, %v4820
    %s4823 = sld [smem:[#allocation2 + $0x9a]]
    %v4824 = vstv %s4823
    %v4825 = vmul.f32 %v2519, %v4824
    %v4826 = vmul.f32 %v2520, %v4824
    %v4827 = vadd.f32 %v4821, %v4825
    %v4828 = vadd.f32 %v4822, %v4826
    %s4829 = sld [smem:[#allocation2 + $0x9e]]
    %v4830 = vstv %s4829
    %v4831 = vmul.f32 %v3332, %v4830
    %v4832 = vmul.f32 %v3333, %v4830
    %v4833 = vadd.f32 %v4827, %v4831
    %v4834 = vadd.f32 %v4828, %v4832
    %s4835 = sld [smem:[#allocation2 + $0xa2]]
    %v4836 = vstv %s4835
    %v4837 = vmul.f32 %v893, %v4836
    %v4838 = vmul.f32 %v894, %v4836
    %4841 = vrot.lane.b32.xlu0 %v4837, 127
    %v4842 = vpop.permute.xlu0 %4841
    %4843 = vrot.lane.b32.xlu0 %v4838, 127
    %v4844 = vpop.permute.xlu0 %4843
    %v4845 = vrot.slane %v4842, 4
    %v4846 = vrot.slane %v4844, 4
    %v4847 = vsel %vm125, %v4842, %v4845
    %v4848 = vsel %vm125, %v4844, %v4846
    %v4851 = vadd.f32 %v4833, %v4847
    %v4852 = vadd.f32 %v4834, %v4848
    %s4853 = sld [smem:[#allocation2 + $0xa6]]
    %v4854 = vstv %s4853
    %v4855 = vmul.f32 %v1706, %v4854
    %v4856 = vmul.f32 %v1707, %v4854
    %4859 = vrot.lane.b32.xlu0 %v4855, 127
    %v4860 = vpop.permute.xlu0 %4859
    %4861 = vrot.lane.b32.xlu0 %v4856, 127
    %v4862 = vpop.permute.xlu0 %4861
    %v4863 = vrot.slane %v4860, 4
    %v4864 = vrot.slane %v4862, 4
    %v4865 = vsel %vm125, %v4860, %v4863
    %v4866 = vsel %vm125, %v4862, %v4864
    %v4869 = vadd.f32 %v4851, %v4865
    %v4870 = vadd.f32 %v4852, %v4866
    %s4871 = sld [smem:[#allocation2 + $0xaa]]
    %v4872 = vstv %s4871
    %v4873 = vmul.f32 %v2519, %v4872
    %v4874 = vmul.f32 %v2520, %v4872
    %4877 = vrot.lane.b32.xlu0 %v4873, 127
    %v4878 = vpop.permute.xlu0 %4877
    %4879 = vrot.lane.b32.xlu0 %v4874, 127
    %v4880 = vpop.permute.xlu0 %4879
    %v4881 = vrot.slane %v4878, 4
    %v4882 = vrot.slane %v4880, 4
    %v4883 = vsel %vm125, %v4878, %v4881
    %v4884 = vsel %vm125, %v4880, %v4882
    %v4887 = vadd.f32 %v4869, %v4883
    %v4888 = vadd.f32 %v4870, %v4884
    %s4889 = sld [smem:[#allocation2 + $0xae]]
    %v4890 = vstv %s4889
    %v4891 = vmul.f32 %v3332, %v4890
    %v4892 = vmul.f32 %v3333, %v4890
    %4895 = vrot.lane.b32.xlu0 %v4891, 127
    %v4896 = vpop.permute.xlu0 %4895
    %4897 = vrot.lane.b32.xlu0 %v4892, 127
    %v4898 = vpop.permute.xlu0 %4897
    %v4899 = vrot.slane %v4896, 4
    %v4900 = vrot.slane %v4898, 4
    %v4901 = vsel %vm125, %v4896, %v4899
    %v4902 = vsel %vm125, %v4898, %v4900
    %v4905 = vadd.f32 %v4887, %v4901
    %v4906 = vadd.f32 %v4888, %v4902
    %s4907 = sld [smem:[#allocation2 + $0xb2]]
    %v4908 = vstv %s4907
    %v4909 = vmul.f32 %v893, %v4908
    %v4910 = vmul.f32 %v894, %v4908
    %4913 = vrot.lane.b32.xlu0 %v4909, 126
    %v4914 = vpop.permute.xlu0 %4913
    %4915 = vrot.lane.b32.xlu0 %v4910, 126
    %v4916 = vpop.permute.xlu0 %4915
    %v4917 = vrot.slane %v4914, 4
    %v4918 = vrot.slane %v4916, 4
    %v4919 = vsel %vm210, %v4914, %v4917
    %v4920 = vsel %vm210, %v4916, %v4918
    %v4923 = vadd.f32 %v4905, %v4919
    %v4924 = vadd.f32 %v4906, %v4920
    %s4925 = sld [smem:[#allocation2 + $0xb6]]
    %v4926 = vstv %s4925
    %v4927 = vmul.f32 %v1706, %v4926
    %v4928 = vmul.f32 %v1707, %v4926
    %4931 = vrot.lane.b32.xlu0 %v4927, 126
    %v4932 = vpop.permute.xlu0 %4931
    %4933 = vrot.lane.b32.xlu0 %v4928, 126
    %v4934 = vpop.permute.xlu0 %4933
    %v4935 = vrot.slane %v4932, 4
    %v4936 = vrot.slane %v4934, 4
    %v4937 = vsel %vm210, %v4932, %v4935
    %v4938 = vsel %vm210, %v4934, %v4936
    %v4941 = vadd.f32 %v4923, %v4937
    %v4942 = vadd.f32 %v4924, %v4938
    %s4943 = sld [smem:[#allocation2 + $0xba]]
    %v4944 = vstv %s4943
    %v4945 = vmul.f32 %v2519, %v4944
    %v4946 = vmul.f32 %v2520, %v4944
    %4949 = vrot.lane.b32.xlu0 %v4945, 126
    %v4950 = vpop.permute.xlu0 %4949
    %4951 = vrot.lane.b32.xlu0 %v4946, 126
    %v4952 = vpop.permute.xlu0 %4951
    %v4953 = vrot.slane %v4950, 4
    %v4954 = vrot.slane %v4952, 4
    %v4955 = vsel %vm210, %v4950, %v4953
    %v4956 = vsel %vm210, %v4952, %v4954
    %v4959 = vadd.f32 %v4941, %v4955
    %v4960 = vadd.f32 %v4942, %v4956
    %s4961 = sld [smem:[#allocation2 + $0xbe]]
    %v4962 = vstv %s4961
    %v4963 = vmul.f32 %v3332, %v4962
    %v4964 = vmul.f32 %v3333, %v4962
    %4967 = vrot.lane.b32.xlu0 %v4963, 126
    %v4968 = vpop.permute.xlu0 %4967
    %4969 = vrot.lane.b32.xlu0 %v4964, 126
    %v4970 = vpop.permute.xlu0 %4969
    %v4971 = vrot.slane %v4968, 4
    %v4972 = vrot.slane %v4970, 4
    %v4973 = vsel %vm210, %v4968, %v4971
    %v4974 = vsel %vm210, %v4970, %v4972
    %v4977 = vadd.f32 %v4959, %v4973
    %v4978 = vadd.f32 %v4960, %v4974
    %s4979 = sld [smem:[#allocation2 + $0xc2]]
    %v4980 = vstv %s4979
    %v4981 = vmul.f32 %v893, %v4980
    %v4982 = vmul.f32 %v894, %v4980
    %4985 = vrot.lane.b32.xlu0 %v4981, 112
    %v4986 = vpop.permute.xlu0 %4985
    %4987 = vrot.lane.b32.xlu0 %v4982, 112
    %v4988 = vpop.permute.xlu0 %4987
    %v4989 = vrot.slane %v4986, 4
    %v4990 = vrot.slane %v4988, 4
    %v4991 = vsel %vm295, %v4986, %v4989
    %v4992 = vsel %vm295, %v4988, %v4990
    %v4995 = vadd.f32 %v4977, %v4991
    %v4996 = vadd.f32 %v4978, %v4992
    %s4997 = sld [smem:[#allocation2 + $0xc6]]
    %v4998 = vstv %s4997
    %v4999 = vmul.f32 %v1706, %v4998
    %v5000 = vmul.f32 %v1707, %v4998
    %5003 = vrot.lane.b32.xlu0 %v4999, 112
    %v5004 = vpop.permute.xlu0 %5003
    %5005 = vrot.lane.b32.xlu0 %v5000, 112
    %v5006 = vpop.permute.xlu0 %5005
    %v5007 = vrot.slane %v5004, 4
    %v5008 = vrot.slane %v5006, 4
    %v5009 = vsel %vm295, %v5004, %v5007
    %v5010 = vsel %vm295, %v5006, %v5008
    %v5013 = vadd.f32 %v4995, %v5009
    %v5014 = vadd.f32 %v4996, %v5010
    %s5015 = sld [smem:[#allocation2 + $0xca]]
    %v5016 = vstv %s5015
    %v5017 = vmul.f32 %v2519, %v5016
    %v5018 = vmul.f32 %v2520, %v5016
    %5021 = vrot.lane.b32.xlu0 %v5017, 112
    %v5022 = vpop.permute.xlu0 %5021
    %5023 = vrot.lane.b32.xlu0 %v5018, 112
    %v5024 = vpop.permute.xlu0 %5023
    %v5025 = vrot.slane %v5022, 4
    %v5026 = vrot.slane %v5024, 4
    %v5027 = vsel %vm295, %v5022, %v5025
    %v5028 = vsel %vm295, %v5024, %v5026
    %v5031 = vadd.f32 %v5013, %v5027
    %v5032 = vadd.f32 %v5014, %v5028
    %s5033 = sld [smem:[#allocation2 + $0xce]]
    %v5034 = vstv %s5033
    %v5035 = vmul.f32 %v3332, %v5034
    %v5036 = vmul.f32 %v3333, %v5034
    %5039 = vrot.lane.b32.xlu0 %v5035, 112
    %v5040 = vpop.permute.xlu0 %5039
    %5041 = vrot.lane.b32.xlu0 %v5036, 112
    %v5042 = vpop.permute.xlu0 %5041
    %v5043 = vrot.slane %v5040, 4
    %v5044 = vrot.slane %v5042, 4
    %v5045 = vsel %vm295, %v5040, %v5043
    %v5046 = vsel %vm295, %v5042, %v5044
    %v5049 = vadd.f32 %v5031, %v5045
    %v5050 = vadd.f32 %v5032, %v5046
    %s5051 = sld [smem:[#allocation2 + $0xd2]]
    %v5052 = vstv %s5051
    %v5053 = vmul.f32 %v893, %v5052
    %v5054 = vmul.f32 %v894, %v5052
    %5057 = vrot.lane.b32.xlu0 %v5053, 111
    %v5058 = vpop.permute.xlu0 %5057
    %5059 = vrot.lane.b32.xlu0 %v5054, 111
    %v5060 = vpop.permute.xlu0 %5059
    %v5061 = vrot.slane %v5058, 4
    %v5062 = vrot.slane %v5060, 4
    %v5063 = vsel %vm380, %v5058, %v5061
    %v5064 = vsel %vm380, %v5060, %v5062
    %v5067 = vadd.f32 %v5049, %v5063
    %v5068 = vadd.f32 %v5050, %v5064
    %s5069 = sld [smem:[#allocation2 + $0xd6]]
    %v5070 = vstv %s5069
    %v5071 = vmul.f32 %v1706, %v5070
    %v5072 = vmul.f32 %v1707, %v5070
    %5075 = vrot.lane.b32.xlu0 %v5071, 111
    %v5076 = vpop.permute.xlu0 %5075
    %5077 = vrot.lane.b32.xlu0 %v5072, 111
    %v5078 = vpop.permute.xlu0 %5077
    %v5079 = vrot.slane %v5076, 4
    %v5080 = vrot.slane %v5078, 4
    %v5081 = vsel %vm380, %v5076, %v5079
    %v5082 = vsel %vm380, %v5078, %v5080
    %v5085 = vadd.f32 %v5067, %v5081
    %v5086 = vadd.f32 %v5068, %v5082
    %s5087 = sld [smem:[#allocation2 + $0xda]]
    %v5088 = vstv %s5087
    %v5089 = vmul.f32 %v2519, %v5088
    %v5090 = vmul.f32 %v2520, %v5088
    %5093 = vrot.lane.b32.xlu0 %v5089, 111
    %v5094 = vpop.permute.xlu0 %5093
    %5095 = vrot.lane.b32.xlu0 %v5090, 111
    %v5096 = vpop.permute.xlu0 %5095
    %v5097 = vrot.slane %v5094, 4
    %v5098 = vrot.slane %v5096, 4
    %v5099 = vsel %vm380, %v5094, %v5097
    %v5100 = vsel %vm380, %v5096, %v5098
    %v5103 = vadd.f32 %v5085, %v5099
    %v5104 = vadd.f32 %v5086, %v5100
    %s5105 = sld [smem:[#allocation2 + $0xde]]
    %v5106 = vstv %s5105
    %v5107 = vmul.f32 %v3332, %v5106
    %v5108 = vmul.f32 %v3333, %v5106
    %5111 = vrot.lane.b32.xlu0 %v5107, 111
    %v5112 = vpop.permute.xlu0 %5111
    %5113 = vrot.lane.b32.xlu0 %v5108, 111
    %v5114 = vpop.permute.xlu0 %5113
    %v5115 = vrot.slane %v5112, 4
    %v5116 = vrot.slane %v5114, 4
    %v5117 = vsel %vm380, %v5112, %v5115
    %v5118 = vsel %vm380, %v5114, %v5116
    %v5121 = vadd.f32 %v5103, %v5117
    %v5122 = vadd.f32 %v5104, %v5118
    %s5123 = sld [smem:[#allocation2 + $0xe2]]
    %v5124 = vstv %s5123
    %v5125 = vmul.f32 %v893, %v5124
    %v5126 = vmul.f32 %v894, %v5124
    %5129 = vrot.lane.b32.xlu0 %v5125, 110
    %v5130 = vpop.permute.xlu0 %5129
    %5131 = vrot.lane.b32.xlu0 %v5126, 110
    %v5132 = vpop.permute.xlu0 %5131
    %v5133 = vrot.slane %v5130, 4
    %v5134 = vrot.slane %v5132, 4
    %v5135 = vsel %vm465, %v5130, %v5133
    %v5136 = vsel %vm465, %v5132, %v5134
    %v5139 = vadd.f32 %v5121, %v5135
    %v5140 = vadd.f32 %v5122, %v5136
    %s5141 = sld [smem:[#allocation2 + $0xe6]]
    %v5142 = vstv %s5141
    %v5143 = vmul.f32 %v1706, %v5142
    %v5144 = vmul.f32 %v1707, %v5142
    %5147 = vrot.lane.b32.xlu0 %v5143, 110
    %v5148 = vpop.permute.xlu0 %5147
    %5149 = vrot.lane.b32.xlu0 %v5144, 110
    %v5150 = vpop.permute.xlu0 %5149
    %v5151 = vrot.slane %v5148, 4
    %v5152 = vrot.slane %v5150, 4
    %v5153 = vsel %vm465, %v5148, %v5151
    %v5154 = vsel %vm465, %v5150, %v5152
    %v5157 = vadd.f32 %v5139, %v5153
    %v5158 = vadd.f32 %v5140, %v5154
    %s5159 = sld [smem:[#allocation2 + $0xea]]
    %v5160 = vstv %s5159
    %v5161 = vmul.f32 %v2519, %v5160
    %v5162 = vmul.f32 %v2520, %v5160
    %5165 = vrot.lane.b32.xlu0 %v5161, 110
    %v5166 = vpop.permute.xlu0 %5165
    %5167 = vrot.lane.b32.xlu0 %v5162, 110
    %v5168 = vpop.permute.xlu0 %5167
    %v5169 = vrot.slane %v5166, 4
    %v5170 = vrot.slane %v5168, 4
    %v5171 = vsel %vm465, %v5166, %v5169
    %v5172 = vsel %vm465, %v5168, %v5170
    %v5175 = vadd.f32 %v5157, %v5171
    %v5176 = vadd.f32 %v5158, %v5172
    %s5177 = sld [smem:[#allocation2 + $0xee]]
    %v5178 = vstv %s5177
    %v5179 = vmul.f32 %v3332, %v5178
    %v5180 = vmul.f32 %v3333, %v5178
    %5183 = vrot.lane.b32.xlu0 %v5179, 110
    %v5184 = vpop.permute.xlu0 %5183
    %5185 = vrot.lane.b32.xlu0 %v5180, 110
    %v5186 = vpop.permute.xlu0 %5185
    %v5187 = vrot.slane %v5184, 4
    %v5188 = vrot.slane %v5186, 4
    %v5189 = vsel %vm465, %v5184, %v5187
    %v5190 = vsel %vm465, %v5186, %v5188
    %v5193 = vadd.f32 %v5175, %v5189
    %v5194 = vadd.f32 %v5176, %v5190
    %s5195 = sld [smem:[#allocation2 + $0xf2]]
    %v5196 = vstv %s5195
    %v5197 = vmul.f32 %v893, %v5196
    %v5198 = vmul.f32 %v894, %v5196
    %5201 = vrot.lane.b32.xlu0 %v5197, 96
    %v5202 = vpop.permute.xlu0 %5201
    %5203 = vrot.lane.b32.xlu0 %v5198, 96
    %v5204 = vpop.permute.xlu0 %5203
    %v5205 = vrot.slane %v5202, 4
    %v5206 = vrot.slane %v5204, 4
    %v5207 = vsel %vm550, %v5202, %v5205
    %v5208 = vsel %vm550, %v5204, %v5206
    %v5211 = vadd.f32 %v5193, %v5207
    %v5212 = vadd.f32 %v5194, %v5208
    %s5213 = sld [smem:[#allocation2 + $0xf6]]
    %v5214 = vstv %s5213
    %v5215 = vmul.f32 %v1706, %v5214
    %v5216 = vmul.f32 %v1707, %v5214
    %5219 = vrot.lane.b32.xlu0 %v5215, 96
    %v5220 = vpop.permute.xlu0 %5219
    %5221 = vrot.lane.b32.xlu0 %v5216, 96
    %v5222 = vpop.permute.xlu0 %5221
    %v5223 = vrot.slane %v5220, 4
    %v5224 = vrot.slane %v5222, 4
    %v5225 = vsel %vm550, %v5220, %v5223
    %v5226 = vsel %vm550, %v5222, %v5224
    %v5229 = vadd.f32 %v5211, %v5225
    %v5230 = vadd.f32 %v5212, %v5226
    %s5231 = sld [smem:[#allocation2 + $0xfa]]
    %v5232 = vstv %s5231
    %v5233 = vmul.f32 %v2519, %v5232
    %v5234 = vmul.f32 %v2520, %v5232
    %5237 = vrot.lane.b32.xlu0 %v5233, 96
    %v5238 = vpop.permute.xlu0 %5237
    %5239 = vrot.lane.b32.xlu0 %v5234, 96
    %v5240 = vpop.permute.xlu0 %5239
    %v5241 = vrot.slane %v5238, 4
    %v5242 = vrot.slane %v5240, 4
    %v5243 = vsel %vm550, %v5238, %v5241
    %v5244 = vsel %vm550, %v5240, %v5242
    %v5247 = vadd.f32 %v5229, %v5243
    %v5248 = vadd.f32 %v5230, %v5244
    %s5249 = sld [smem:[#allocation2 + $0xfe]]
    %v5250 = vstv %s5249
    %v5251 = vmul.f32 %v3332, %v5250
    %v5252 = vmul.f32 %v3333, %v5250
    %5255 = vrot.lane.b32.xlu0 %v5251, 96
    %v5256 = vpop.permute.xlu0 %5255
    %5257 = vrot.lane.b32.xlu0 %v5252, 96
    %v5258 = vpop.permute.xlu0 %5257
    %v5259 = vrot.slane %v5256, 4
    %v5260 = vrot.slane %v5258, 4
    %v5261 = vsel %vm550, %v5256, %v5259
    %v5262 = vsel %vm550, %v5258, %v5260
    %v5265 = vadd.f32 %v5247, %v5261
    %v5266 = vadd.f32 %v5248, %v5262
    %s5267 = sld [smem:[#allocation2 + $0x102]]
    %v5268 = vstv %s5267
    %v5269 = vmul.f32 %v893, %v5268
    %v5270 = vmul.f32 %v894, %v5268
    %5273 = vrot.lane.b32.xlu0 %v5269, 95
    %v5274 = vpop.permute.xlu0 %5273
    %5275 = vrot.lane.b32.xlu0 %v5270, 95
    %v5276 = vpop.permute.xlu0 %5275
    %v5277 = vrot.slane %v5274, 4
    %v5278 = vrot.slane %v5276, 4
    %v5279 = vsel %vm635, %v5274, %v5277
    %v5280 = vsel %vm635, %v5276, %v5278
    %v5283 = vadd.f32 %v5265, %v5279
    %v5284 = vadd.f32 %v5266, %v5280
    %s5285 = sld [smem:[#allocation2 + $0x106]]
    %v5286 = vstv %s5285
    %v5287 = vmul.f32 %v1706, %v5286
    %v5288 = vmul.f32 %v1707, %v5286
    %5291 = vrot.lane.b32.xlu0 %v5287, 95
    %v5292 = vpop.permute.xlu0 %5291
    %5293 = vrot.lane.b32.xlu0 %v5288, 95
    %v5294 = vpop.permute.xlu0 %5293
    %v5295 = vrot.slane %v5292, 4
    %v5296 = vrot.slane %v5294, 4
    %v5297 = vsel %vm635, %v5292, %v5295
    %v5298 = vsel %vm635, %v5294, %v5296
    %v5301 = vadd.f32 %v5283, %v5297
    %v5302 = vadd.f32 %v5284, %v5298
    %s5303 = sld [smem:[#allocation2 + $0x10a]]
    %v5304 = vstv %s5303
    %v5305 = vmul.f32 %v2519, %v5304
    %v5306 = vmul.f32 %v2520, %v5304
    %5309 = vrot.lane.b32.xlu0 %v5305, 95
    %v5310 = vpop.permute.xlu0 %5309
    %5311 = vrot.lane.b32.xlu0 %v5306, 95
    %v5312 = vpop.permute.xlu0 %5311
    %v5313 = vrot.slane %v5310, 4
    %v5314 = vrot.slane %v5312, 4
    %v5315 = vsel %vm635, %v5310, %v5313
    %v5316 = vsel %vm635, %v5312, %v5314
    %v5319 = vadd.f32 %v5301, %v5315
    %v5320 = vadd.f32 %v5302, %v5316
    %s5321 = sld [smem:[#allocation2 + $0x10e]]
    %v5322 = vstv %s5321
    %v5323 = vmul.f32 %v3332, %v5322
    %v5324 = vmul.f32 %v3333, %v5322
    %5327 = vrot.lane.b32.xlu0 %v5323, 95
    %v5328 = vpop.permute.xlu0 %5327
    %5329 = vrot.lane.b32.xlu0 %v5324, 95
    %v5330 = vpop.permute.xlu0 %5329
    %v5331 = vrot.slane %v5328, 4
    %v5332 = vrot.slane %v5330, 4
    %v5333 = vsel %vm635, %v5328, %v5331
    %v5334 = vsel %vm635, %v5330, %v5332
    %v5337 = vadd.f32 %v5319, %v5333
    %v5338 = vadd.f32 %v5320, %v5334
    %s5339 = sld [smem:[#allocation2 + $0x112]]
    %v5340 = vstv %s5339
    %v5341 = vmul.f32 %v893, %v5340
    %v5342 = vmul.f32 %v894, %v5340
    %5345 = vrot.lane.b32.xlu0 %v5341, 94
    %v5346 = vpop.permute.xlu0 %5345
    %5347 = vrot.lane.b32.xlu0 %v5342, 94
    %v5348 = vpop.permute.xlu0 %5347
    %v5349 = vrot.slane %v5346, 4
    %v5350 = vrot.slane %v5348, 4
    %v5351 = vsel %vm720, %v5346, %v5349
    %v5352 = vsel %vm720, %v5348, %v5350
    %v5355 = vadd.f32 %v5337, %v5351
    %v5356 = vadd.f32 %v5338, %v5352
    %s5357 = sld [smem:[#allocation2 + $0x116]]
    %v5358 = vstv %s5357
    %v5359 = vmul.f32 %v1706, %v5358
    %v5360 = vmul.f32 %v1707, %v5358
    %5363 = vrot.lane.b32.xlu0 %v5359, 94
    %v5364 = vpop.permute.xlu0 %5363
    %5365 = vrot.lane.b32.xlu0 %v5360, 94
    %v5366 = vpop.permute.xlu0 %5365
    %v5367 = vrot.slane %v5364, 4
    %v5368 = vrot.slane %v5366, 4
    %v5369 = vsel %vm720, %v5364, %v5367
    %v5370 = vsel %vm720, %v5366, %v5368
    %v5373 = vadd.f32 %v5355, %v5369
    %v5374 = vadd.f32 %v5356, %v5370
    %s5375 = sld [smem:[#allocation2 + $0x11a]]
    %v5376 = vstv %s5375
    %v5377 = vmul.f32 %v2519, %v5376
    %v5378 = vmul.f32 %v2520, %v5376
    %5381 = vrot.lane.b32.xlu0 %v5377, 94
    %v5382 = vpop.permute.xlu0 %5381
    %5383 = vrot.lane.b32.xlu0 %v5378, 94
    %v5384 = vpop.permute.xlu0 %5383
    %v5385 = vrot.slane %v5382, 4
    %v5386 = vrot.slane %v5384, 4
    %v5387 = vsel %vm720, %v5382, %v5385
    %v5388 = vsel %vm720, %v5384, %v5386
    %v5391 = vadd.f32 %v5373, %v5387
    %v5392 = vadd.f32 %v5374, %v5388
    %s5393 = sld [smem:[#allocation2 + $0x11e]]
    %v5394 = vstv %s5393
    %v5395 = vmul.f32 %v3332, %v5394
    %v5396 = vmul.f32 %v3333, %v5394
    %5399 = vrot.lane.b32.xlu0 %v5395, 94
    %v5400 = vpop.permute.xlu0 %5399
    %5401 = vrot.lane.b32.xlu0 %v5396, 94
    %v5402 = vpop.permute.xlu0 %5401
    %v5403 = vrot.slane %v5400, 4
    %v5404 = vrot.slane %v5402, 4
    %v5405 = vsel %vm720, %v5400, %v5403
    %v5406 = vsel %vm720, %v5402, %v5404
    %v5409 = vadd.f32 %v5391, %v5405
    %v5410 = vadd.f32 %v5392, %v5406
    %s5411 = sld [smem:[#allocation2 + $0x12a]]
    %s5412 = sld [smem:[#allocation2 + $0x12e]]
    %v5413 = vmul.f32 %v5409, %v3938
    %v5414 = vmul.f32 %v5410, %v3939
    %v5417 = vlaneseq
    %v5418 = vshrl.u32 %v5417, 7
    %v5419 = vsub.s32 0, %v5418
    %v5420 = vrot.slane %v5413, %v5419
    %v5421 = vlaneseq
    %v5422 = vshrl.u32 %v5421, 7
    %v5423 = vsub.s32 4, %v5422
    %v5424 = vrot.slane %v5413, %v5423
    %v5425 = vlaneseq
    %v5426 = vshrl.u32 %v5425, 7
    %v5427 = vsub.s32 0, %v5426
    %v5428 = vrot.slane %v5414, %v5427
    %v5429 = vlaneseq
    %v5430 = vshrl.u32 %v5429, 7
    %v5431 = vsub.s32 4, %v5430
    %v5432 = vrot.slane %v5414, %v5431
    %v5433 = vsel %vm821, %v5428, %v5420
    %v5434 = vsel %vm821, %v5432, %v5424
    %v5437 = vsel %vm826, %v5433, 0.0
    %v5438 = vsel %vm3967, %v5434, 0.0
    %v5439 = vadd.f32 %v5437, %v5438
    %5440 = vadd.xlane.f32.xlu0 %v5439
    %v5441 = vpop.xlane.xlu0 %5440
    %v5442 = vsel %vm826, %v5441, 0.0
    %v5443 = vrot.slane %v5442, 4
    %v5444 = vadd.f32 %v5442, %v5443
    %v5445 = vrot.slane %v5444, 2
    %v5446 = vadd.f32 %v5444, %v5445
    %v5447 = vrot.slane %v5446, 1
    %v5448 = vadd.f32 %v5446, %v5447
    %v5449 = vmul.f32 %v5448, 0.0034722222
    %v5450 = vsub.f32 %v5409, %v5449
    %v5451 = vsub.f32 %v5410, %v5449
    %v5452 = vmul.f32 %v5450, %v3938
    %v5453 = vmul.f32 %v5451, %v3939
    %v5454 = vmul.f32 %v5452, %v5452
    %v5455 = vmul.f32 %v5453, %v5453
    %v5458 = vlaneseq
    %v5459 = vshrl.u32 %v5458, 7
    %v5460 = vsub.s32 0, %v5459
    %v5461 = vrot.slane %v5454, %v5460
    %v5462 = vlaneseq
    %v5463 = vshrl.u32 %v5462, 7
    %v5464 = vsub.s32 4, %v5463
    %v5465 = vrot.slane %v5454, %v5464
    %v5466 = vlaneseq
    %v5467 = vshrl.u32 %v5466, 7
    %v5468 = vsub.s32 0, %v5467
    %v5469 = vrot.slane %v5455, %v5468
    %v5470 = vlaneseq
    %v5471 = vshrl.u32 %v5470, 7
    %v5472 = vsub.s32 4, %v5471
    %v5473 = vrot.slane %v5455, %v5472
    %v5474 = vsel %vm821, %v5469, %v5461
    %v5475 = vsel %vm821, %v5473, %v5465
    %v5478 = vsel %vm826, %v5474, 0.0
    %v5479 = vsel %vm3967, %v5475, 0.0
    %v5480 = vadd.f32 %v5478, %v5479
    %5481 = vadd.xlane.f32.xlu0 %v5480
    %v5482 = vpop.xlane.xlu0 %5481
    %v5483 = vsel %vm826, %v5482, 0.0
    %v5484 = vrot.slane %v5483, 4
    %v5485 = vadd.f32 %v5483, %v5484
    %v5486 = vrot.slane %v5485, 2
    %v5487 = vadd.f32 %v5485, %v5486
    %v5488 = vrot.slane %v5487, 1
    %v5489 = vadd.f32 %v5487, %v5488
    %v5490 = vmul.f32 %v5489, 0.0034722222
    %v5491 = vadd.f32 %v5490, 1e-05
    %v5492 = vrsqrt.pop %v5491
    %v5493 = vstv %s5411
    %v5494 = vmul.f32 %v5493, %v5492
    %v5495 = vmul.f32 %v5449, %v5494
    %v5496 = vstv %s5412
    %v5497 = vsub.f32 %v5496, %v5495
    %v5498 = vmul.f32 %v5409, %v5494
    %v5499 = vmul.f32 %v5410, %v5494
    %v5500 = vadd.f32 %v5498, %v5497
    %v5501 = vadd.f32 %v5499, %v5497
    %v5502 = vrot.slane %v63, 6
    %v5503 = vrot.slane %v5502, 4
    %v5504 = vrot.slane %v64, 6
    %v5505 = vrot.slane %v5504, 4
    %5506 = vrot.lane.b32.xlu0 %v5503, 94
    %v5507 = vpop.permute.xlu0 %5506
    %5508 = vrot.lane.b32.xlu0 %v5505, 94
    %v5509 = vpop.permute.xlu0 %5508
    %v5510 = vrot.slane %v5507, 4
    %v5511 = vrot.slane %v5509, 4
    %v5512 = vsel %vm720, %v5507, %v5510
    %v5513 = vsel %vm720, %v5509, %v5511
    %v5516 = vadd.f32 %v5500, %v5512
    %v5517 = vadd.f32 %v5501, %v5513
    %v5521 = vunpack.c.l.s4 1983009808
    %v5522 = vunpack.c.0.s8 %v5521
    %v5523 = vlaneseq
    %v5524 = vshrl.u32 %v5523, 7
    %v5525 = vsub.s32 %v5522, %v5524
    %v5526 = vrot.slane %v5516, %v5525
    %v5528 = vunpack.c.l.s4 1983009808
    %v5529 = vunpack.c.0.s8 %v5528
    %v5530 = vlaneseq
    %v5531 = vshrl.u32 %v5530, 7
    %v5532 = vsub.s32 %v5529, %v5531
    %v5533 = vrot.slane %v5517, %v5532
    %v5534 = vsel %vm4062, %v5526, %v5526
    %v5535 = vsel %vm4064, %v5526, %v5534
    %v5536 = vrot.slane %v5533, 7
    %v5537 = vsel %vm821, %v5536, %v5535
    %v5538 = vsel %vm4068, %v5536, %v5537
    %v5539 = vsel %vm4070, %v5536, %v5538
    %v5540 = vsel %vm4072, %v5536, %v5539
    %s5542 = scalar_lea.vmem %s2, 8
    %5543 = vst.msk [vmem:[%s5542] sm:$0xf] %vm4076, %v5540
    %s5544 = sld [smem:[#allocation2 + $0x93]]
    %v5545 = vstv %s5544
    %v5546 = vmul.f32 %v893, %v5545
    %v5547 = vmul.f32 %v894, %v5545
    %v5548 = vadd.f32 %v5546, 0.0
    %v5549 = vadd.f32 %v5547, 0.0
    %s5550 = sld [smem:[#allocation2 + $0x97]]
    %v5551 = vstv %s5550
    %v5552 = vmul.f32 %v1706, %v5551
    %v5553 = vmul.f32 %v1707, %v5551
    %v5554 = vadd.f32 %v5548, %v5552
    %v5555 = vadd.f32 %v5549, %v5553
    %s5556 = sld [smem:[#allocation2 + $0x9b]]
    %v5557 = vstv %s5556
    %v5558 = vmul.f32 %v2519, %v5557
    %v5559 = vmul.f32 %v2520, %v5557
    %v5560 = vadd.f32 %v5554, %v5558
    %v5561 = vadd.f32 %v5555, %v5559
    %s5562 = sld [smem:[#allocation2 + $0x9f]]
    %v5563 = vstv %s5562
    %v5564 = vmul.f32 %v3332, %v5563
    %v5565 = vmul.f32 %v3333, %v5563
    %v5566 = vadd.f32 %v5560, %v5564
    %v5567 = vadd.f32 %v5561, %v5565
    %s5568 = sld [smem:[#allocation2 + $0xa3]]
    %v5569 = vstv %s5568
    %v5570 = vmul.f32 %v893, %v5569
    %v5571 = vmul.f32 %v894, %v5569
    %5574 = vrot.lane.b32.xlu0 %v5570, 127
    %v5575 = vpop.permute.xlu0 %5574
    %5576 = vrot.lane.b32.xlu0 %v5571, 127
    %v5577 = vpop.permute.xlu0 %5576
    %v5578 = vrot.slane %v5575, 4
    %v5579 = vrot.slane %v5577, 4
    %v5580 = vsel %vm125, %v5575, %v5578
    %v5581 = vsel %vm125, %v5577, %v5579
    %v5584 = vadd.f32 %v5566, %v5580
    %v5585 = vadd.f32 %v5567, %v5581
    %s5586 = sld [smem:[#allocation2 + $0xa7]]
    %v5587 = vstv %s5586
    %v5588 = vmul.f32 %v1706, %v5587
    %v5589 = vmul.f32 %v1707, %v5587
    %5592 = vrot.lane.b32.xlu0 %v5588, 127
    %v5593 = vpop.permute.xlu0 %5592
    %5594 = vrot.lane.b32.xlu0 %v5589, 127
    %v5595 = vpop.permute.xlu0 %5594
    %v5596 = vrot.slane %v5593, 4
    %v5597 = vrot.slane %v5595, 4
    %v5598 = vsel %vm125, %v5593, %v5596
    %v5599 = vsel %vm125, %v5595, %v5597
    %v5602 = vadd.f32 %v5584, %v5598
    %v5603 = vadd.f32 %v5585, %v5599
    %s5604 = sld [smem:[#allocation2 + $0xab]]
    %v5605 = vstv %s5604
    %v5606 = vmul.f32 %v2519, %v5605
    %v5607 = vmul.f32 %v2520, %v5605
    %5610 = vrot.lane.b32.xlu0 %v5606, 127
    %v5611 = vpop.permute.xlu0 %5610
    %5612 = vrot.lane.b32.xlu0 %v5607, 127
    %v5613 = vpop.permute.xlu0 %5612
    %v5614 = vrot.slane %v5611, 4
    %v5615 = vrot.slane %v5613, 4
    %v5616 = vsel %vm125, %v5611, %v5614
    %v5617 = vsel %vm125, %v5613, %v5615
    %v5620 = vadd.f32 %v5602, %v5616
    %v5621 = vadd.f32 %v5603, %v5617
    %s5622 = sld [smem:[#allocation2 + $0xaf]]
    %v5623 = vstv %s5622
    %v5624 = vmul.f32 %v3332, %v5623
    %v5625 = vmul.f32 %v3333, %v5623
    %5628 = vrot.lane.b32.xlu0 %v5624, 127
    %v5629 = vpop.permute.xlu0 %5628
    %5630 = vrot.lane.b32.xlu0 %v5625, 127
    %v5631 = vpop.permute.xlu0 %5630
    %v5632 = vrot.slane %v5629, 4
    %v5633 = vrot.slane %v5631, 4
    %v5634 = vsel %vm125, %v5629, %v5632
    %v5635 = vsel %vm125, %v5631, %v5633
    %v5638 = vadd.f32 %v5620, %v5634
    %v5639 = vadd.f32 %v5621, %v5635
    %s5640 = sld [smem:[#allocation2 + $0xb3]]
    %v5641 = vstv %s5640
    %v5642 = vmul.f32 %v893, %v5641
    %v5643 = vmul.f32 %v894, %v5641
    %5646 = vrot.lane.b32.xlu0 %v5642, 126
    %v5647 = vpop.permute.xlu0 %5646
    %5648 = vrot.lane.b32.xlu0 %v5643, 126
    %v5649 = vpop.permute.xlu0 %5648
    %v5650 = vrot.slane %v5647, 4
    %v5651 = vrot.slane %v5649, 4
    %v5652 = vsel %vm210, %v5647, %v5650
    %v5653 = vsel %vm210, %v5649, %v5651
    %v5656 = vadd.f32 %v5638, %v5652
    %v5657 = vadd.f32 %v5639, %v5653
    %s5658 = sld [smem:[#allocation2 + $0xb7]]
    %v5659 = vstv %s5658
    %v5660 = vmul.f32 %v1706, %v5659
    %v5661 = vmul.f32 %v1707, %v5659
    %5664 = vrot.lane.b32.xlu0 %v5660, 126
    %v5665 = vpop.permute.xlu0 %5664
    %5666 = vrot.lane.b32.xlu0 %v5661, 126
    %v5667 = vpop.permute.xlu0 %5666
    %v5668 = vrot.slane %v5665, 4
    %v5669 = vrot.slane %v5667, 4
    %v5670 = vsel %vm210, %v5665, %v5668
    %v5671 = vsel %vm210, %v5667, %v5669
    %v5674 = vadd.f32 %v5656, %v5670
    %v5675 = vadd.f32 %v5657, %v5671
    %s5676 = sld [smem:[#allocation2 + $0xbb]]
    %v5677 = vstv %s5676
    %v5678 = vmul.f32 %v2519, %v5677
    %v5679 = vmul.f32 %v2520, %v5677
    %5682 = vrot.lane.b32.xlu0 %v5678, 126
    %v5683 = vpop.permute.xlu0 %5682
    %5684 = vrot.lane.b32.xlu0 %v5679, 126
    %v5685 = vpop.permute.xlu0 %5684
    %v5686 = vrot.slane %v5683, 4
    %v5687 = vrot.slane %v5685, 4
    %v5688 = vsel %vm210, %v5683, %v5686
    %v5689 = vsel %vm210, %v5685, %v5687
    %v5692 = vadd.f32 %v5674, %v5688
    %v5693 = vadd.f32 %v5675, %v5689
    %s5694 = sld [smem:[#allocation2 + $0xbf]]
    %v5695 = vstv %s5694
    %v5696 = vmul.f32 %v3332, %v5695
    %v5697 = vmul.f32 %v3333, %v5695
    %5700 = vrot.lane.b32.xlu0 %v5696, 126
    %v5701 = vpop.permute.xlu0 %5700
    %5702 = vrot.lane.b32.xlu0 %v5697, 126
    %v5703 = vpop.permute.xlu0 %5702
    %v5704 = vrot.slane %v5701, 4
    %v5705 = vrot.slane %v5703, 4
    %v5706 = vsel %vm210, %v5701, %v5704
    %v5707 = vsel %vm210, %v5703, %v5705
    %v5710 = vadd.f32 %v5692, %v5706
    %v5711 = vadd.f32 %v5693, %v5707
    %s5712 = sld [smem:[#allocation2 + $0xc3]]
    %v5713 = vstv %s5712
    %v5714 = vmul.f32 %v893, %v5713
    %v5715 = vmul.f32 %v894, %v5713
    %5718 = vrot.lane.b32.xlu0 %v5714, 112
    %v5719 = vpop.permute.xlu0 %5718
    %5720 = vrot.lane.b32.xlu0 %v5715, 112
    %v5721 = vpop.permute.xlu0 %5720
    %v5722 = vrot.slane %v5719, 4
    %v5723 = vrot.slane %v5721, 4
    %v5724 = vsel %vm295, %v5719, %v5722
    %v5725 = vsel %vm295, %v5721, %v5723
    %v5728 = vadd.f32 %v5710, %v5724
    %v5729 = vadd.f32 %v5711, %v5725
    %s5730 = sld [smem:[#allocation2 + $0xc7]]
    %v5731 = vstv %s5730
    %v5732 = vmul.f32 %v1706, %v5731
    %v5733 = vmul.f32 %v1707, %v5731
    %5736 = vrot.lane.b32.xlu0 %v5732, 112
    %v5737 = vpop.permute.xlu0 %5736
    %5738 = vrot.lane.b32.xlu0 %v5733, 112
    %v5739 = vpop.permute.xlu0 %5738
    %v5740 = vrot.slane %v5737, 4
    %v5741 = vrot.slane %v5739, 4
    %v5742 = vsel %vm295, %v5737, %v5740
    %v5743 = vsel %vm295, %v5739, %v5741
    %v5746 = vadd.f32 %v5728, %v5742
    %v5747 = vadd.f32 %v5729, %v5743
    %s5748 = sld [smem:[#allocation2 + $0xcb]]
    %v5749 = vstv %s5748
    %v5750 = vmul.f32 %v2519, %v5749
    %v5751 = vmul.f32 %v2520, %v5749
    %5754 = vrot.lane.b32.xlu0 %v5750, 112
    %v5755 = vpop.permute.xlu0 %5754
    %5756 = vrot.lane.b32.xlu0 %v5751, 112
    %v5757 = vpop.permute.xlu0 %5756
    %v5758 = vrot.slane %v5755, 4
    %v5759 = vrot.slane %v5757, 4
    %v5760 = vsel %vm295, %v5755, %v5758
    %v5761 = vsel %vm295, %v5757, %v5759
    %v5764 = vadd.f32 %v5746, %v5760
    %v5765 = vadd.f32 %v5747, %v5761
    %s5766 = sld [smem:[#allocation2 + $0xcf]]
    %v5767 = vstv %s5766
    %v5768 = vmul.f32 %v3332, %v5767
    %v5769 = vmul.f32 %v3333, %v5767
    %5772 = vrot.lane.b32.xlu0 %v5768, 112
    %v5773 = vpop.permute.xlu0 %5772
    %5774 = vrot.lane.b32.xlu0 %v5769, 112
    %v5775 = vpop.permute.xlu0 %5774
    %v5776 = vrot.slane %v5773, 4
    %v5777 = vrot.slane %v5775, 4
    %v5778 = vsel %vm295, %v5773, %v5776
    %v5779 = vsel %vm295, %v5775, %v5777
    %v5782 = vadd.f32 %v5764, %v5778
    %v5783 = vadd.f32 %v5765, %v5779
    %s5784 = sld [smem:[#allocation2 + $0xd3]]
    %v5785 = vstv %s5784
    %v5786 = vmul.f32 %v893, %v5785
    %v5787 = vmul.f32 %v894, %v5785
    %5790 = vrot.lane.b32.xlu0 %v5786, 111
    %v5791 = vpop.permute.xlu0 %5790
    %5792 = vrot.lane.b32.xlu0 %v5787, 111
    %v5793 = vpop.permute.xlu0 %5792
    %v5794 = vrot.slane %v5791, 4
    %v5795 = vrot.slane %v5793, 4
    %v5796 = vsel %vm380, %v5791, %v5794
    %v5797 = vsel %vm380, %v5793, %v5795
    %v5800 = vadd.f32 %v5782, %v5796
    %v5801 = vadd.f32 %v5783, %v5797
    %s5802 = sld [smem:[#allocation2 + $0xd7]]
    %v5803 = vstv %s5802
    %v5804 = vmul.f32 %v1706, %v5803
    %v5805 = vmul.f32 %v1707, %v5803
    %5808 = vrot.lane.b32.xlu0 %v5804, 111
    %v5809 = vpop.permute.xlu0 %5808
    %5810 = vrot.lane.b32.xlu0 %v5805, 111
    %v5811 = vpop.permute.xlu0 %5810
    %v5812 = vrot.slane %v5809, 4
    %v5813 = vrot.slane %v5811, 4
    %v5814 = vsel %vm380, %v5809, %v5812
    %v5815 = vsel %vm380, %v5811, %v5813
    %v5818 = vadd.f32 %v5800, %v5814
    %v5819 = vadd.f32 %v5801, %v5815
    %s5820 = sld [smem:[#allocation2 + $0xdb]]
    %v5821 = vstv %s5820
    %v5822 = vmul.f32 %v2519, %v5821
    %v5823 = vmul.f32 %v2520, %v5821
    %5826 = vrot.lane.b32.xlu0 %v5822, 111
    %v5827 = vpop.permute.xlu0 %5826
    %5828 = vrot.lane.b32.xlu0 %v5823, 111
    %v5829 = vpop.permute.xlu0 %5828
    %v5830 = vrot.slane %v5827, 4
    %v5831 = vrot.slane %v5829, 4
    %v5832 = vsel %vm380, %v5827, %v5830
    %v5833 = vsel %vm380, %v5829, %v5831
    %v5836 = vadd.f32 %v5818, %v5832
    %v5837 = vadd.f32 %v5819, %v5833
    %s5838 = sld [smem:[#allocation2 + $0xdf]]
    %v5839 = vstv %s5838
    %v5840 = vmul.f32 %v3332, %v5839
    %v5841 = vmul.f32 %v3333, %v5839
    %5844 = vrot.lane.b32.xlu0 %v5840, 111
    %v5845 = vpop.permute.xlu0 %5844
    %5846 = vrot.lane.b32.xlu0 %v5841, 111
    %v5847 = vpop.permute.xlu0 %5846
    %v5848 = vrot.slane %v5845, 4
    %v5849 = vrot.slane %v5847, 4
    %v5850 = vsel %vm380, %v5845, %v5848
    %v5851 = vsel %vm380, %v5847, %v5849
    %v5854 = vadd.f32 %v5836, %v5850
    %v5855 = vadd.f32 %v5837, %v5851
    %s5856 = sld [smem:[#allocation2 + $0xe3]]
    %v5857 = vstv %s5856
    %v5858 = vmul.f32 %v893, %v5857
    %v5859 = vmul.f32 %v894, %v5857
    %5862 = vrot.lane.b32.xlu0 %v5858, 110
    %v5863 = vpop.permute.xlu0 %5862
    %5864 = vrot.lane.b32.xlu0 %v5859, 110
    %v5865 = vpop.permute.xlu0 %5864
    %v5866 = vrot.slane %v5863, 4
    %v5867 = vrot.slane %v5865, 4
    %v5868 = vsel %vm465, %v5863, %v5866
    %v5869 = vsel %vm465, %v5865, %v5867
    %v5872 = vadd.f32 %v5854, %v5868
    %v5873 = vadd.f32 %v5855, %v5869
    %s5874 = sld [smem:[#allocation2 + $0xe7]]
    %v5875 = vstv %s5874
    %v5876 = vmul.f32 %v1706, %v5875
    %v5877 = vmul.f32 %v1707, %v5875
    %5880 = vrot.lane.b32.xlu0 %v5876, 110
    %v5881 = vpop.permute.xlu0 %5880
    %5882 = vrot.lane.b32.xlu0 %v5877, 110
    %v5883 = vpop.permute.xlu0 %5882
    %v5884 = vrot.slane %v5881, 4
    %v5885 = vrot.slane %v5883, 4
    %v5886 = vsel %vm465, %v5881, %v5884
    %v5887 = vsel %vm465, %v5883, %v5885
    %v5890 = vadd.f32 %v5872, %v5886
    %v5891 = vadd.f32 %v5873, %v5887
    %s5892 = sld [smem:[#allocation2 + $0xeb]]
    %v5893 = vstv %s5892
    %v5894 = vmul.f32 %v2519, %v5893
    %v5895 = vmul.f32 %v2520, %v5893
    %5898 = vrot.lane.b32.xlu0 %v5894, 110
    %v5899 = vpop.permute.xlu0 %5898
    %5900 = vrot.lane.b32.xlu0 %v5895, 110
    %v5901 = vpop.permute.xlu0 %5900
    %v5902 = vrot.slane %v5899, 4
    %v5903 = vrot.slane %v5901, 4
    %v5904 = vsel %vm465, %v5899, %v5902
    %v5905 = vsel %vm465, %v5901, %v5903
    %v5908 = vadd.f32 %v5890, %v5904
    %v5909 = vadd.f32 %v5891, %v5905
    %s5910 = sld [smem:[#allocation2 + $0xef]]
    %v5911 = vstv %s5910
    %v5912 = vmul.f32 %v3332, %v5911
    %v5913 = vmul.f32 %v3333, %v5911
    %5916 = vrot.lane.b32.xlu0 %v5912, 110
    %v5917 = vpop.permute.xlu0 %5916
    %5918 = vrot.lane.b32.xlu0 %v5913, 110
    %v5919 = vpop.permute.xlu0 %5918
    %v5920 = vrot.slane %v5917, 4
    %v5921 = vrot.slane %v5919, 4
    %v5922 = vsel %vm465, %v5917, %v5920
    %v5923 = vsel %vm465, %v5919, %v5921
    %v5926 = vadd.f32 %v5908, %v5922
    %v5927 = vadd.f32 %v5909, %v5923
    %s5928 = sld [smem:[#allocation2 + $0xf3]]
    %v5929 = vstv %s5928
    %v5930 = vmul.f32 %v893, %v5929
    %v5931 = vmul.f32 %v894, %v5929
    %5934 = vrot.lane.b32.xlu0 %v5930, 96
    %v5935 = vpop.permute.xlu0 %5934
    %5936 = vrot.lane.b32.xlu0 %v5931, 96
    %v5937 = vpop.permute.xlu0 %5936
    %v5938 = vrot.slane %v5935, 4
    %v5939 = vrot.slane %v5937, 4
    %v5940 = vsel %vm550, %v5935, %v5938
    %v5941 = vsel %vm550, %v5937, %v5939
    %v5944 = vadd.f32 %v5926, %v5940
    %v5945 = vadd.f32 %v5927, %v5941
    %s5946 = sld [smem:[#allocation2 + $0xf7]]
    %v5947 = vstv %s5946
    %v5948 = vmul.f32 %v1706, %v5947
    %v5949 = vmul.f32 %v1707, %v5947
    %5952 = vrot.lane.b32.xlu0 %v5948, 96
    %v5953 = vpop.permute.xlu0 %5952
    %5954 = vrot.lane.b32.xlu0 %v5949, 96
    %v5955 = vpop.permute.xlu0 %5954
    %v5956 = vrot.slane %v5953, 4
    %v5957 = vrot.slane %v5955, 4
    %v5958 = vsel %vm550, %v5953, %v5956
    %v5959 = vsel %vm550, %v5955, %v5957
    %v5962 = vadd.f32 %v5944, %v5958
    %v5963 = vadd.f32 %v5945, %v5959
    %s5964 = sld [smem:[#allocation2 + $0xfb]]
    %v5965 = vstv %s5964
    %v5966 = vmul.f32 %v2519, %v5965
    %v5967 = vmul.f32 %v2520, %v5965
    %5970 = vrot.lane.b32.xlu0 %v5966, 96
    %v5971 = vpop.permute.xlu0 %5970
    %5972 = vrot.lane.b32.xlu0 %v5967, 96
    %v5973 = vpop.permute.xlu0 %5972
    %v5974 = vrot.slane %v5971, 4
    %v5975 = vrot.slane %v5973, 4
    %v5976 = vsel %vm550, %v5971, %v5974
    %v5977 = vsel %vm550, %v5973, %v5975
    %v5980 = vadd.f32 %v5962, %v5976
    %v5981 = vadd.f32 %v5963, %v5977
    %s5982 = sld [smem:[#allocation2 + $0xff]]
    %v5983 = vstv %s5982
    %v5984 = vmul.f32 %v3332, %v5983
    %v5985 = vmul.f32 %v3333, %v5983
    %5988 = vrot.lane.b32.xlu0 %v5984, 96
    %v5989 = vpop.permute.xlu0 %5988
    %5990 = vrot.lane.b32.xlu0 %v5985, 96
    %v5991 = vpop.permute.xlu0 %5990
    %v5992 = vrot.slane %v5989, 4
    %v5993 = vrot.slane %v5991, 4
    %v5994 = vsel %vm550, %v5989, %v5992
    %v5995 = vsel %vm550, %v5991, %v5993
    %v5998 = vadd.f32 %v5980, %v5994
    %v5999 = vadd.f32 %v5981, %v5995
    %s6000 = sld [smem:[#allocation2 + $0x103]]
    %v6001 = vstv %s6000
    %v6002 = vmul.f32 %v893, %v6001
    %v6003 = vmul.f32 %v894, %v6001
    %6006 = vrot.lane.b32.xlu0 %v6002, 95
    %v6007 = vpop.permute.xlu0 %6006
    %6008 = vrot.lane.b32.xlu0 %v6003, 95
    %v6009 = vpop.permute.xlu0 %6008
    %v6010 = vrot.slane %v6007, 4
    %v6011 = vrot.slane %v6009, 4
    %v6012 = vsel %vm635, %v6007, %v6010
    %v6013 = vsel %vm635, %v6009, %v6011
    %v6016 = vadd.f32 %v5998, %v6012
    %v6017 = vadd.f32 %v5999, %v6013
    %s6018 = sld [smem:[#allocation2 + $0x107]]
    %v6019 = vstv %s6018
    %v6020 = vmul.f32 %v1706, %v6019
    %v6021 = vmul.f32 %v1707, %v6019
    %6024 = vrot.lane.b32.xlu0 %v6020, 95
    %v6025 = vpop.permute.xlu0 %6024
    %6026 = vrot.lane.b32.xlu0 %v6021, 95
    %v6027 = vpop.permute.xlu0 %6026
    %v6028 = vrot.slane %v6025, 4
    %v6029 = vrot.slane %v6027, 4
    %v6030 = vsel %vm635, %v6025, %v6028
    %v6031 = vsel %vm635, %v6027, %v6029
    %v6034 = vadd.f32 %v6016, %v6030
    %v6035 = vadd.f32 %v6017, %v6031
    %s6036 = sld [smem:[#allocation2 + $0x10b]]
    %v6037 = vstv %s6036
    %v6038 = vmul.f32 %v2519, %v6037
    %v6039 = vmul.f32 %v2520, %v6037
    %6042 = vrot.lane.b32.xlu0 %v6038, 95
    %v6043 = vpop.permute.xlu0 %6042
    %6044 = vrot.lane.b32.xlu0 %v6039, 95
    %v6045 = vpop.permute.xlu0 %6044
    %v6046 = vrot.slane %v6043, 4
    %v6047 = vrot.slane %v6045, 4
    %v6048 = vsel %vm635, %v6043, %v6046
    %v6049 = vsel %vm635, %v6045, %v6047
    %v6052 = vadd.f32 %v6034, %v6048
    %v6053 = vadd.f32 %v6035, %v6049
    %s6054 = sld [smem:[#allocation2 + $0x10f]]
    %v6055 = vstv %s6054
    %v6056 = vmul.f32 %v3332, %v6055
    %v6057 = vmul.f32 %v3333, %v6055
    %6060 = vrot.lane.b32.xlu0 %v6056, 95
    %v6061 = vpop.permute.xlu0 %6060
    %6062 = vrot.lane.b32.xlu0 %v6057, 95
    %v6063 = vpop.permute.xlu0 %6062
    %v6064 = vrot.slane %v6061, 4
    %v6065 = vrot.slane %v6063, 4
    %v6066 = vsel %vm635, %v6061, %v6064
    %v6067 = vsel %vm635, %v6063, %v6065
    %v6070 = vadd.f32 %v6052, %v6066
    %v6071 = vadd.f32 %v6053, %v6067
    %s6072 = sld [smem:[#allocation2 + $0x113]]
    %v6073 = vstv %s6072
    %v6074 = vmul.f32 %v893, %v6073
    %v6075 = vmul.f32 %v894, %v6073
    %6078 = vrot.lane.b32.xlu0 %v6074, 94
    %v6079 = vpop.permute.xlu0 %6078
    %6080 = vrot.lane.b32.xlu0 %v6075, 94
    %v6081 = vpop.permute.xlu0 %6080
    %v6082 = vrot.slane %v6079, 4
    %v6083 = vrot.slane %v6081, 4
    %v6084 = vsel %vm720, %v6079, %v6082
    %v6085 = vsel %vm720, %v6081, %v6083
    %v6088 = vadd.f32 %v6070, %v6084
    %v6089 = vadd.f32 %v6071, %v6085
    %s6090 = sld [smem:[#allocation2 + $0x117]]
    %v6091 = vstv %s6090
    %v6092 = vmul.f32 %v1706, %v6091
    %v6093 = vmul.f32 %v1707, %v6091
    %6096 = vrot.lane.b32.xlu0 %v6092, 94
    %v6097 = vpop.permute.xlu0 %6096
    %6098 = vrot.lane.b32.xlu0 %v6093, 94
    %v6099 = vpop.permute.xlu0 %6098
    %v6100 = vrot.slane %v6097, 4
    %v6101 = vrot.slane %v6099, 4
    %v6102 = vsel %vm720, %v6097, %v6100
    %v6103 = vsel %vm720, %v6099, %v6101
    %v6106 = vadd.f32 %v6088, %v6102
    %v6107 = vadd.f32 %v6089, %v6103
    %s6108 = sld [smem:[#allocation2 + $0x11b]]
    %v6109 = vstv %s6108
    %v6110 = vmul.f32 %v2519, %v6109
    %v6111 = vmul.f32 %v2520, %v6109
    %6114 = vrot.lane.b32.xlu0 %v6110, 94
    %v6115 = vpop.permute.xlu0 %6114
    %6116 = vrot.lane.b32.xlu0 %v6111, 94
    %v6117 = vpop.permute.xlu0 %6116
    %v6118 = vrot.slane %v6115, 4
    %v6119 = vrot.slane %v6117, 4
    %v6120 = vsel %vm720, %v6115, %v6118
    %v6121 = vsel %vm720, %v6117, %v6119
    %v6124 = vadd.f32 %v6106, %v6120
    %v6125 = vadd.f32 %v6107, %v6121
    %s6126 = sld [smem:[#allocation2 + $0x11f]]
    %v6127 = vstv %s6126
    %v6128 = vmul.f32 %v3332, %v6127
    %v6129 = vmul.f32 %v3333, %v6127
    %6132 = vrot.lane.b32.xlu0 %v6128, 94
    %v6133 = vpop.permute.xlu0 %6132
    %6134 = vrot.lane.b32.xlu0 %v6129, 94
    %v6135 = vpop.permute.xlu0 %6134
    %v6136 = vrot.slane %v6133, 4
    %v6137 = vrot.slane %v6135, 4
    %v6138 = vsel %vm720, %v6133, %v6136
    %v6139 = vsel %vm720, %v6135, %v6137
    %v6142 = vadd.f32 %v6124, %v6138
    %v6143 = vadd.f32 %v6125, %v6139
    %s6144 = sld [smem:[#allocation2 + $0x12b]]
    %s6145 = sld [smem:[#allocation2 + $0x12f]]
    %v6146 = vmul.f32 %v6142, %v3938
    %v6147 = vmul.f32 %v6143, %v3939
    %v6150 = vlaneseq
    %v6151 = vshrl.u32 %v6150, 7
    %v6152 = vsub.s32 0, %v6151
    %v6153 = vrot.slane %v6146, %v6152
    %v6154 = vlaneseq
    %v6155 = vshrl.u32 %v6154, 7
    %v6156 = vsub.s32 4, %v6155
    %v6157 = vrot.slane %v6146, %v6156
    %v6158 = vlaneseq
    %v6159 = vshrl.u32 %v6158, 7
    %v6160 = vsub.s32 0, %v6159
    %v6161 = vrot.slane %v6147, %v6160
    %v6162 = vlaneseq
    %v6163 = vshrl.u32 %v6162, 7
    %v6164 = vsub.s32 4, %v6163
    %v6165 = vrot.slane %v6147, %v6164
    %v6166 = vsel %vm821, %v6161, %v6153
    %v6167 = vsel %vm821, %v6165, %v6157
    %v6170 = vsel %vm826, %v6166, 0.0
    %v6171 = vsel %vm3967, %v6167, 0.0
    %v6172 = vadd.f32 %v6170, %v6171
    %6173 = vadd.xlane.f32.xlu0 %v6172
    %v6174 = vpop.xlane.xlu0 %6173
    %v6175 = vsel %vm826, %v6174, 0.0
    %v6176 = vrot.slane %v6175, 4
    %v6177 = vadd.f32 %v6175, %v6176
    %v6178 = vrot.slane %v6177, 2
    %v6179 = vadd.f32 %v6177, %v6178
    %v6180 = vrot.slane %v6179, 1
    %v6181 = vadd.f32 %v6179, %v6180
    %v6182 = vmul.f32 %v6181, 0.0034722222
    %v6183 = vsub.f32 %v6142, %v6182
    %v6184 = vsub.f32 %v6143, %v6182
    %v6185 = vmul.f32 %v6183, %v3938
    %v6186 = vmul.f32 %v6184, %v3939
    %v6187 = vmul.f32 %v6185, %v6185
    %v6188 = vmul.f32 %v6186, %v6186
    %v6191 = vlaneseq
    %v6192 = vshrl.u32 %v6191, 7
    %v6193 = vsub.s32 0, %v6192
    %v6194 = vrot.slane %v6187, %v6193
    %v6195 = vlaneseq
    %v6196 = vshrl.u32 %v6195, 7
    %v6197 = vsub.s32 4, %v6196
    %v6198 = vrot.slane %v6187, %v6197
    %v6199 = vlaneseq
    %v6200 = vshrl.u32 %v6199, 7
    %v6201 = vsub.s32 0, %v6200
    %v6202 = vrot.slane %v6188, %v6201
    %v6203 = vlaneseq
    %v6204 = vshrl.u32 %v6203, 7
    %v6205 = vsub.s32 4, %v6204
    %v6206 = vrot.slane %v6188, %v6205
    %v6207 = vsel %vm821, %v6202, %v6194
    %v6208 = vsel %vm821, %v6206, %v6198
    %v6211 = vsel %vm826, %v6207, 0.0
    %v6212 = vsel %vm3967, %v6208, 0.0
    %v6213 = vadd.f32 %v6211, %v6212
    %6214 = vadd.xlane.f32.xlu0 %v6213
    %v6215 = vpop.xlane.xlu0 %6214
    %v6216 = vsel %vm826, %v6215, 0.0
    %v6217 = vrot.slane %v6216, 4
    %v6218 = vadd.f32 %v6216, %v6217
    %v6219 = vrot.slane %v6218, 2
    %v6220 = vadd.f32 %v6218, %v6219
    %v6221 = vrot.slane %v6220, 1
    %v6222 = vadd.f32 %v6220, %v6221
    %v6223 = vmul.f32 %v6222, 0.0034722222
    %v6224 = vadd.f32 %v6223, 1e-05
    %v6225 = vrsqrt.pop %v6224
    %v6226 = vstv %s6144
    %v6227 = vmul.f32 %v6226, %v6225
    %v6228 = vmul.f32 %v6182, %v6227
    %v6229 = vstv %s6145
    %v6230 = vsub.f32 %v6229, %v6228
    %v6231 = vmul.f32 %v6142, %v6227
    %v6232 = vmul.f32 %v6143, %v6227
    %v6233 = vadd.f32 %v6231, %v6230
    %v6234 = vadd.f32 %v6232, %v6230
    %v6235 = vrot.slane %v63, 7
    %v6236 = vrot.slane %v6235, 4
    %v6237 = vrot.slane %v64, 7
    %v6238 = vrot.slane %v6237, 4
    %6239 = vrot.lane.b32.xlu0 %v6236, 94
    %v6240 = vpop.permute.xlu0 %6239
    %6241 = vrot.lane.b32.xlu0 %v6238, 94
    %v6242 = vpop.permute.xlu0 %6241
    %v6243 = vrot.slane %v6240, 4
    %v6244 = vrot.slane %v6242, 4
    %v6245 = vsel %vm720, %v6240, %v6243
    %v6246 = vsel %vm720, %v6242, %v6244
    %v6249 = vadd.f32 %v6233, %v6245
    %v6250 = vadd.f32 %v6234, %v6246
    %v6254 = vunpack.c.l.s4 1983009808
    %v6255 = vunpack.c.0.s8 %v6254
    %v6256 = vlaneseq
    %v6257 = vshrl.u32 %v6256, 7
    %v6258 = vsub.s32 %v6255, %v6257
    %v6259 = vrot.slane %v6249, %v6258
    %v6261 = vunpack.c.l.s4 1983009808
    %v6262 = vunpack.c.0.s8 %v6261
    %v6263 = vlaneseq
    %v6264 = vshrl.u32 %v6263, 7
    %v6265 = vsub.s32 %v6262, %v6264
    %v6266 = vrot.slane %v6250, %v6265
    %v6267 = vsel %vm4062, %v6259, %v6259
    %v6268 = vsel %vm4064, %v6259, %v6267
    %v6269 = vrot.slane %v6266, 7
    %v6270 = vsel %vm821, %v6269, %v6268
    %v6271 = vsel %vm4068, %v6269, %v6270
    %v6272 = vsel %vm4070, %v6269, %v6271
    %v6273 = vsel %vm4072, %v6269, %v6272
    %s6275 = scalar_lea.vmem %s2, 12
    %6276 = vst.msk [vmem:[%s6275] sm:$0xf] %vm4076, %v6273
    // Predicated region
    $region14: #{residual_block.1} parent=1 // pred_check
      _
    $region15: #{residual_block.1} parent=1 // pred_check_branch
      %6278 = sbr.rel (0) target = $region17
    $region16: #{residual_block.1} parent=1 // pred_region
      _
    $region17: #{residual_block.1} parent=1 // pred_fallthru
      _
    // Predicated region
    $region18: #{residual_block.1} parent=1 // pred_check
      _
    $region19: #{residual_block.1} parent=1 // pred_check_branch
      %6280 = sbr.rel (0) target = $region21
    $region20: #{residual_block.1} parent=1 // pred_region
      _
    $region21: #{residual_block.1} parent=1 // pred_fallthru
      _
    %6281 = vsyncpa [#allocation3], 1

</llo_original>
